<compile_context>
chip_gen: v5e
topology: v5e:2x2
jax: 0.10.0
libtpu: 0.0.40
codegen_flags: <defaults>
</compile_context>

<pallas_src>
import jax
import jax.numpy as jnp
from jax import lax
from jax.experimental import pallas as pl
from jax.experimental.pallas import tpu as pltpu

# ------------------------------ static geometry ------------------------------ #
H_IN = 44
C_IN = 3
BLK = H_IN // 4          # 11 space-to-depth(4) blocks per side
OH1 = BLK - 1            # 10 conv1 output size
WB1 = OH1 // 2           # 5  paired conv1 column blocks
OH2 = OH1 // 2 - 1       # 4  conv2 output size
OH3 = OH2 - 2            # 2  conv3 output size
K1 = 8 * 8 * C_IN        # 192 conv1 patch depth
K1P = 2 * K1             # 384 column-paired conv1 patch depth
FEAT = 64 * OH3 * OH3    # 256 flattened features
MAX_TB = 128             # batch tile (multiple of 8); ~12 MB VMEM at 128 (fits all gens)


# ------------------------------- fused kernel ------------------------------- #

def _fused_critic_kernel(x_ref, w1_ref, b1_ref, w2_ref, b2_ref,
                         w3_ref, b3_ref, wv_ref, bv_ref, o_ref,
                         a1_ref, acc2_ref, a2_ref):
    f32 = jnp.float32
    bf16 = jnp.bfloat16
    tb = o_ref.shape[0]

    # hoisted small constants (avoid re-emitting broadcasts inside unrolled loops)
    b1 = b1_ref[...]                      # (1, 64)
    b2 = b2_ref[...]                      # (1, 64)
    b3 = b3_ref[...]                      # (1, 64)

    # ---- conv1: (44,44,3) -> (10,10,32), k=8, s=4 (column-paired: 64 lanes = (ws, co))
    # x_ref[0, oh] is a plain (5*tb, 384) slab: rows = (wb, n), lanes = (ws, kh, kw, ci)
    for oh in range(OH1):
        lhs = x_ref[0, oh]                                          # (WB1*tb, 384) bf16
        acc = jnp.dot(lhs, w1_ref[...], preferred_element_type=f32)
        a1_ref[oh // 2, oh % 2] = jnp.maximum(acc + b1, 0.0).astype(bf16)

    # ---- conv2: (10,10,32) -> (4,4,64), k=4, s=2 --------------------------------
    # a1_ref[hb, hs] rows = (wb, n), lanes = (ws, ci); output row 2*oh2+kh -> (hb, hs).
    # 8 taps of K=64 per output row (kh in [0,4), column-block kwb in {0,1}).
    for oh2 in range(OH2):
        for kh in range(4):
            for kwb in range(2):
                t = kh * 2 + kwb
                lhs = a1_ref[oh2 + kh // 2, kh % 2,
                             kwb * tb:(kwb + OH2) * tb]             # (OH2*tb, 64) bf16
                part = jnp.dot(lhs, w2_ref[t], preferred_element_type=f32)
                if t == 0:
                    acc2_ref[oh2] = part
                else:
                    acc2_ref[oh2] = acc2_ref[oh2] + part
        a2_ref[oh2] = jnp.maximum(acc2_ref[oh2] + b2, 0.0).astype(bf16)

    # ---- conv3: (4,4,64) -> (2,2,64), k=3, s=1  + fused value head (VPU) --------
    wv = wv_ref[...]                                                # (OH3, OH3, 1, 64) f32
    v_acc = jnp.zeros((tb, 1), f32)
    for oh3 in range(OH3):
        acc = jnp.zeros((OH3 * tb, 64), f32)
        for kh in range(3):
            for kw in range(3):
                lhs = a2_ref[oh3 + kh, kw * tb:(kw + OH3) * tb]     # (OH3*tb, 64) bf16
                acc = acc + jnp.dot(lhs, w3_ref[kh * 3 + kw],
                                    preferred_element_type=f32)
        feat = jnp.maximum(acc + b3, 0.0).reshape(OH3, tb, 64)      # (ow3, n, c) f32
        prod = feat * wv[oh3]                                       # bcast over n
        v_acc = v_acc + jnp.sum(jnp.sum(prod, axis=2, keepdims=True), axis=0)

    o_ref[...] = jnp.tanh(v_acc + bv_ref[...])                      # Linear(256,1) + Tanh


# ------------------------------ wrapper / prep ------------------------------ #

def _prep_params(p):
    """One-time re-layout of PyTorch-layout parameters into kernel layout (bf16 matmuls)."""
    f32 = jnp.float32
    bf16 = jnp.bfloat16
    # conv1: (co,ci,kh,kw) -> rows (kh,kw,ci); block-diagonal over the two column
    # phases ws so one dot produces two adjacent output columns -> 64 lanes = (ws, co).
    w1k = jnp.transpose(p["w1"], (2, 3, 1, 0)).reshape(K1, 32)
    w1p = jnp.zeros((K1P, 64), f32)
    w1p = w1p.at[:K1, :32].set(w1k)
    w1p = w1p.at[K1:, 32:].set(w1k)
    b1p = jnp.concatenate([p["b1"], p["b1"]]).reshape(1, 64)
    # conv2: 8 taps (kh, kwb); rows per tap ordered (ws, ci) to match a1's 64-lane layout.
    w2p = jnp.transpose(p["w2"], (2, 3, 1, 0)).reshape(4, 2, 2, 32, 64).reshape(8, 64, 64)
    # conv3: 9 taps (kh, kw); rows = ci.
    w3p = jnp.transpose(p["w3"], (2, 3, 1, 0)).reshape(9, 64, 64)
    # value head: PyTorch flattens NCHW (c,h,w); kernel features are (h, w, n, c).
    wv = p["wv"].reshape(64, OH3, OH3).transpose(1, 2, 0).reshape(OH3, OH3, 1, 64)
    return dict(
        w1=w1p.astype(bf16), b1=b1p.astype(f32),
        w2=w2p.astype(bf16), b2=p["b2"].reshape(1, 64).astype(f32),
        w3=w3p.astype(bf16), b3=p["b3"].reshape(1, 64).astype(f32),
        wv=wv.astype(f32), bv=p["bv"].reshape(1, 1).astype(f32),
    )


def _prep_obs(obs, tb):
    """NCHW obs -> conv1-unfolded, column-paired, batch-tile-major bf16 slab."""
    if obs.ndim == 5:
        obs = obs.reshape((-1,) + obs.shape[2:])
    n, c, h, w = obs.shape
    assert c == C_IN and h == H_IN and w == H_IN, (n, c, h, w)
    x = jnp.transpose(obs, (0, 2, 3, 1))                            # NHWC
    blocks = x.reshape(n, BLK, 4, BLK, 4, C_IN)                     # (n, hb, hp, wb, wp, c)
    pieces = [blocks[:, bh:bh + OH1, :, bw:bw + OH1, :, :]
              for bh in range(2) for bw in range(2)]
    p = jnp.stack(pieces, axis=0).reshape(2, 2, n, OH1, 4, OH1, 4, C_IN)
    # (bh, bw, n, oh, hp, ow, wp, c) -> (n, oh, ow, bh, hp, bw, wp, c) == (n, oh, ow, kh, kw, c)
    p = p.transpose(2, 3, 5, 0, 4, 1, 6, 7).reshape(n, OH1, OH1, K1)
    # pair adjacent output columns: lanes become (ws, kh, kw, c) = 384
    p = p.reshape(n, OH1, WB1, K1P)
    n_pad = ((n + tb - 1) // tb) * tb
    if n_pad != n:
        p = jnp.pad(p, ((0, n_pad - n), (0, 0), (0, 0), (0, 0)))
    nt = n_pad // tb
    # batch-tile-major -> one contiguous DMA slab per grid step
    p = p.reshape(nt, tb, OH1, WB1, K1P).transpose(0, 2, 3, 1, 4)
    p = p.reshape(nt, OH1, WB1 * tb, K1P)                           # rows = (wb, n)
    return p.astype(jnp.bfloat16), n, n_pad


def _critic_pallas(xp, kp, tb, n_pad):
    nt = n_pad // tb
    flops = int(2 * n_pad * (OH1 * OH1 * K1 * 32 + OH2 * OH2 * 512 * 64
                             + OH3 * OH3 * 576 * 64 + FEAT))
    bytes_accessed = int(xp.size * xp.dtype.itemsize
                         + sum(int(v.size) * v.dtype.itemsize for v in kp.values())
                         + n_pad * 4)
    return pl.pallas_call(
        _fused_critic_kernel,
        out_shape=jax.ShapeDtypeStruct((n_pad, 1), jnp.float32),
        grid=(nt,),
        in_specs=[
            pl.BlockSpec((1, OH1, WB1 * tb, K1P), lambda i: (i, 0, 0, 0)),
            pl.BlockSpec((K1P, 64), lambda i: (0, 0)),
            pl.BlockSpec((1, 64), lambda i: (0, 0)),
            pl.BlockSpec((8, 64, 64), lambda i: (0, 0, 0)),
            pl.BlockSpec((1, 64), lambda i: (0, 0)),
            pl.BlockSpec((9, 64, 64), lambda i: (0, 0, 0)),
            pl.BlockSpec((1, 64), lambda i: (0, 0)),
            pl.BlockSpec((OH3, OH3, 1, 64), lambda i: (0, 0, 0, 0)),
            pl.BlockSpec((1, 1), lambda i: (0, 0)),
        ],
        out_specs=pl.BlockSpec((tb, 1), lambda i: (i, 0)),
        scratch_shapes=[
            pltpu.VMEM((WB1, 2, WB1 * tb, 64), jnp.bfloat16),   # a1   (conv1 activations)
            pltpu.VMEM((OH2, OH2 * tb, 64), jnp.float32),       # acc2 (conv2 accumulator)
            pltpu.VMEM((OH2, OH2 * tb, 64), jnp.bfloat16),      # a2   (conv2 activations)
        ],
        compiler_params=pltpu.CompilerParams(
            dimension_semantics=("parallel",),
            vmem_limit_bytes=32 * 1024 * 1024),
        cost_estimate=pl.CostEstimate(
            flops=flops, transcendentals=n_pad, bytes_accessed=bytes_accessed),
    )(xp, kp["w1"], kp["b1"], kp["w2"], kp["b2"],
      kp["w3"], kp["b3"], kp["wv"], kp["bv"])


def _select_tb(n):
    # Batch tile: multiple of 8, as large as possible up to MAX_TB.
    # (On v7x, large batches naturally give nt >= 2 so both TensorCores are used.)
    return min(MAX_TB, ((n + 7) // 8) * 8)


def mlp_central_critic_v2_forward(prepped_params, obs):
    n = obs.shape[0] * obs.shape[1] if obs.ndim == 5 else obs.shape[0]
    tb = _select_tb(n)
    xp, n, n_pad = _prep_obs(obs, tb)
    v = _critic_pallas(xp, prepped_params, tb, n_pad)
    return v[:n]                                                    # (B*A, 1)


# ------------------------- plain-XLA reference (check) ----------------------- #

def _reference_forward(params, obs):
    if obs.ndim == 5:
        obs = obs.reshape((-1,) + obs.shape[2:])
    dn = ("NCHW", "OIHW", "NCHW")
    hi = lax.Precision.HIGHEST
    y = lax.conv_general_dilated(obs, params["w1"], (4, 4), "VALID",
                                 dimension_numbers=dn, precision=hi)
    y = jax.nn.relu(y + params["b1"].reshape(1, 32, 1, 1))
    y = lax.conv_general_dilated(y, params["w2"], (2, 2), "VALID",
                                 dimension_numbers=dn, precision=hi)
    y = jax.nn.relu(y + params["b2"].reshape(1, 64, 1, 1))
    y = lax.conv_general_dilated(y, params["w3"], (1, 1), "VALID",
                                 dimension_numbers=dn, precision=hi)
    y = jax.nn.relu(y + params["b3"].reshape(1, 64, 1, 1))
    feat = y.reshape(y.shape[0], -1)                                # NCHW flatten (c,h,w)
    v = jnp.dot(feat, params["wv"].T, precision=hi) + params["bv"]
    return jnp.tanh(v)


# ---------------------------- deterministic init ---------------------------- #

def init_params(key):
    """Kaiming-uniform(a=sqrt(5))-equivalent: U(-1/sqrt(fan_in), 1/sqrt(fan_in))."""
    def u(k, shape, fan_in):
        bound = 1.0 / (fan_in ** 0.5)
        return jax.random.uniform(k, shape, jnp.float32, -bound, bound)

    ks = jax.random.split(key, 8)
    return {
        "w1": u(ks[0], (32, 3, 8, 8), 3 * 8 * 8),
        "b1": u(ks[1], (32,), 3 * 8 * 8),
        "w2": u(ks[2], (64, 32, 4, 4), 32 * 4 * 4),
        "b2": u(ks[3], (64,), 32 * 4 * 4),
        "w3": u(ks[4], (64, 64, 3, 3), 64 * 3 * 3),
        "b3": u(ks[5], (64,), 64 * 3 * 3),
        "wv": u(ks[6], (1, FEAT), FEAT),   # PyTorch Linear weight (out, in)
        "bv": u(ks[7], (1,), FEAT),
    }


# ----------------------------------- main ----------------------------------- #

if __name__ == "__main__":
    key = jax.random.PRNGKey(0)
    k_obs, k_par = jax.random.split(key)

    B, A = 2, 5                                  # n_agents = 5 as in the module
    obs = jax.random.normal(k_obs, (B, A, C_IN, H_IN, H_IN), dtype=jnp.float32)

    params = init_params(k_par)
    prepped = _prep_params(params)               # one-time weight re-layout (not per step)

    fwd = jax.jit(mlp_central_critic_v2_forward)
    v = fwd(prepped, obs)
    jax.block_until_ready(v)
    assert v.shape == (B * A, 1), v.shape

    # correctness check vs an independent XLA reference (loose tol: bf16 matmul inputs)
    v_ref = _reference_forward(params, obs)
    err = float(jnp.max(jnp.abs(v - v_ref)))
    assert err < 0.1, f"max abs error vs reference: {err}"

    print("KERNEL_OK")
</pallas_src>

<mosaic_0001>
module attributes {stable_mosaic.version = 11 : i64} {
  func.func @_fused_critic_kernel(%arg0: i32, %arg1: memref<1x10x80x384xbf16, #tpu.memory_space<vmem>>, %arg2: memref<384x64xbf16, #tpu.memory_space<vmem>>, %arg3: memref<1x64xf32, #tpu.memory_space<vmem>>, %arg4: memref<8x64x64xbf16, #tpu.memory_space<vmem>>, %arg5: memref<1x64xf32, #tpu.memory_space<vmem>>, %arg6: memref<9x64x64xbf16, #tpu.memory_space<vmem>>, %arg7: memref<1x64xf32, #tpu.memory_space<vmem>>, %arg8: memref<2x2x1x64xf32, #tpu.memory_space<vmem>>, %arg9: memref<1x1xf32, #tpu.memory_space<vmem>>, %arg10: memref<16x1xf32, #tpu.memory_space<vmem>>, %arg11: memref<5x2x80x64xbf16, #tpu.memory_space<vmem>>, %arg12: memref<4x64x64xf32, #tpu.memory_space<vmem>>, %arg13: memref<4x64x64xbf16, #tpu.memory_space<vmem>>) attributes {dimension_semantics = [#tpu.dimension_semantics<parallel>], iteration_bounds = array<i64: 1>, scalar_prefetch = 0 : i64, scratch_operands = 3 : i64, tpu.core_type = #tpu.core_type<tc>, window_params = [{transform_indices = @transform_0, window_bounds = array<i64: 1, 10, 80, 384>}, {pipeline_mode = #tpu.pipeline_mode<synchronous>, transform_indices = @transform_1, window_bounds = array<i64: 384, 64>}, {pipeline_mode = #tpu.pipeline_mode<synchronous>, transform_indices = @transform_2, window_bounds = array<i64: 1, 64>}, {pipeline_mode = #tpu.pipeline_mode<synchronous>, transform_indices = @transform_3, window_bounds = array<i64: 8, 64, 64>}, {pipeline_mode = #tpu.pipeline_mode<synchronous>, transform_indices = @transform_4, window_bounds = array<i64: 1, 64>}, {pipeline_mode = #tpu.pipeline_mode<synchronous>, transform_indices = @transform_5, window_bounds = array<i64: 9, 64, 64>}, {pipeline_mode = #tpu.pipeline_mode<synchronous>, transform_indices = @transform_6, window_bounds = array<i64: 1, 64>}, {pipeline_mode = #tpu.pipeline_mode<synchronous>, transform_indices = @transform_7, window_bounds = array<i64: 2, 2, 1, 64>}, {pipeline_mode = #tpu.pipeline_mode<synchronous>, transform_indices = @transform_8, window_bounds = array<i64: 1, 1>}, {transform_indices = @transform_9, window_bounds = array<i64: 16, 1>}]} {
    %c0 = arith.constant 0 : index
    %c0_0 = arith.constant 0 : index
    %0 = vector.load %arg3[%c0, %c0_0] : memref<1x64xf32, #tpu.memory_space<vmem>>, vector<1x64xf32>
    %c0_1 = arith.constant 0 : index
    %c0_2 = arith.constant 0 : index
    %1 = vector.load %arg5[%c0_1, %c0_2] : memref<1x64xf32, #tpu.memory_space<vmem>>, vector<1x64xf32>
    %c0_3 = arith.constant 0 : index
    %c0_4 = arith.constant 0 : index
    %2 = vector.load %arg7[%c0_3, %c0_4] : memref<1x64xf32, #tpu.memory_space<vmem>>, vector<1x64xf32>
    %c0_5 = arith.constant 0 : index
    %c0_6 = arith.constant 0 : index
    %c0_7 = arith.constant 0 : index
    %c0_8 = arith.constant 0 : index
    %3 = vector.load %arg1[%c0_5, %c0_6, %c0_7, %c0_8] : memref<1x10x80x384xbf16, #tpu.memory_space<vmem>>, vector<1x1x80x384xbf16>
    %4 = vector.shape_cast %3 : vector<1x1x80x384xbf16> to vector<80x384xbf16>
    %c0_9 = arith.constant 0 : index
    %c0_10 = arith.constant 0 : index
    %5 = vector.load %arg2[%c0_9, %c0_10] : memref<384x64xbf16, #tpu.memory_space<vmem>>, vector<384x64xbf16>
    %cst = arith.constant dense<0.000000e+00> : vector<80x64xf32>
    %6 = tpu.matmul %4, %5, %cst {dimension_numbers = #tpu.dot_dimension_numbers<[1], [0], [0], [1], [0, 0, 1, 1], [], []>} : vector<80x384xbf16>, vector<384x64xbf16>, vector<80x64xf32> -> vector<80x64xf32>
    %7 = vector.broadcast %0 : vector<1x64xf32> to vector<80x64xf32>
    %8 = arith.addf %6, %7 : vector<80x64xf32>
    %cst_11 = arith.constant 0.000000e+00 : f32
    %9 = vector.broadcast %cst_11 : f32 to vector<80x64xf32>
    %10 = arith.maximumf %8, %9 : vector<80x64xf32>
    %11 = arith.truncf %10 : vector<80x64xf32> to vector<80x64xbf16>
    %c0_12 = arith.constant 0 : index
    %c0_13 = arith.constant 0 : index
    %c0_14 = arith.constant 0 : index
    %c0_15 = arith.constant 0 : index
    %12 = vector.load %arg11[%c0_12, %c0_13, %c0_14, %c0_15] : memref<5x2x80x64xbf16, #tpu.memory_space<vmem>>, vector<1x1x80x64xbf16>
    %13 = vector.shape_cast %12 : vector<1x1x80x64xbf16> to vector<80x64xbf16>
    %14 = vector.shape_cast %11 : vector<80x64xbf16> to vector<1x1x80x64xbf16>
    tpu.vector_store %arg11[%c0_12, %c0_13, %c0_14, %c0_15], %14 {strides = array<i32>} : memref<5x2x80x64xbf16, #tpu.memory_space<vmem>>, vector<1x1x80x64xbf16>,
    %c0_16 = arith.constant 0 : index
    %c1 = arith.constant 1 : index
    %c0_17 = arith.constant 0 : index
    %c0_18 = arith.constant 0 : index
    %15 = vector.load %arg1[%c0_16, %c1, %c0_17, %c0_18] : memref<1x10x80x384xbf16, #tpu.memory_space<vmem>>, vector<1x1x80x384xbf16>
    %16 = vector.shape_cast %15 : vector<1x1x80x384xbf16> to vector<80x384xbf16>
    %c0_19 = arith.constant 0 : index
    %c0_20 = arith.constant 0 : index
    %17 = vector.load %arg2[%c0_19, %c0_20] : memref<384x64xbf16, #tpu.memory_space<vmem>>, vector<384x64xbf16>
    %cst_21 = arith.constant dense<0.000000e+00> : vector<80x64xf32>
    %18 = tpu.matmul %16, %17, %cst_21 {dimension_numbers = #tpu.dot_dimension_numbers<[1], [0], [0], [1], [0, 0, 1, 1], [], []>} : vector<80x384xbf16>, vector<384x64xbf16>, vector<80x64xf32> -> vector<80x64xf32>
    %19 = vector.broadcast %0 : vector<1x64xf32> to vector<80x64xf32>
    %20 = arith.addf %18, %19 : vector<80x64xf32>
    %cst_22 = arith.constant 0.000000e+00 : f32
    %21 = vector.broadcast %cst_22 : f32 to vector<80x64xf32>
    %22 = arith.maximumf %20, %21 : vector<80x64xf32>
    %23 = arith.truncf %22 : vector<80x64xf32> to vector<80x64xbf16>
    %c0_23 = arith.constant 0 : index
    %c1_24 = arith.constant 1 : index
    %c0_25 = arith.constant 0 : index
    %c0_26 = arith.constant 0 : index
    %24 = vector.load %arg11[%c0_23, %c1_24, %c0_25, %c0_26] : memref<5x2x80x64xbf16, #tpu.memory_space<vmem>>, vector<1x1x80x64xbf16>
    %25 = vector.shape_cast %24 : vector<1x1x80x64xbf16> to vector<80x64xbf16>
    %26 = vector.shape_cast %23 : vector<80x64xbf16> to vector<1x1x80x64xbf16>
    tpu.vector_store %arg11[%c0_23, %c1_24, %c0_25, %c0_26], %26 {strides = array<i32>} : memref<5x2x80x64xbf16, #tpu.memory_space<vmem>>, vector<1x1x80x64xbf16>,
    %c0_27 = arith.constant 0 : index
    %c2 = arith.constant 2 : index
    %c0_28 = arith.constant 0 : index
    %c0_29 = arith.constant 0 : index
    %27 = vector.load %arg1[%c0_27, %c2, %c0_28, %c0_29] : memref<1x10x80x384xbf16, #tpu.memory_space<vmem>>, vector<1x1x80x384xbf16>
    %28 = vector.shape_cast %27 : vector<1x1x80x384xbf16> to vector<80x384xbf16>
    %c0_30 = arith.constant 0 : index
    %c0_31 = arith.constant 0 : index
    %29 = vector.load %arg2[%c0_30, %c0_31] : memref<384x64xbf16, #tpu.memory_space<vmem>>, vector<384x64xbf16>
    %cst_32 = arith.constant dense<0.000000e+00> : vector<80x64xf32>
    %30 = tpu.matmul %28, %29, %cst_32 {dimension_numbers = #tpu.dot_dimension_numbers<[1], [0], [0], [1], [0, 0, 1, 1], [], []>} : vector<80x384xbf16>, vector<384x64xbf16>, vector<80x64xf32> -> vector<80x64xf32>
    %31 = vector.broadcast %0 : vector<1x64xf32> to vector<80x64xf32>
    %32 = arith.addf %30, %31 : vector<80x64xf32>
    %cst_33 = arith.constant 0.000000e+00 : f32
    %33 = vector.broadcast %cst_33 : f32 to vector<80x64xf32>
    %34 = arith.maximumf %32, %33 : vector<80x64xf32>
    %35 = arith.truncf %34 : vector<80x64xf32> to vector<80x64xbf16>
    %c1_34 = arith.constant 1 : index
    %c0_35 = arith.constant 0 : index
    %c0_36 = arith.constant 0 : index
    %c0_37 = arith.constant 0 : index
    %36 = vector.load %arg11[%c1_34, %c0_35, %c0_36, %c0_37] : memref<5x2x80x64xbf16, #tpu.memory_space<vmem>>, vector<1x1x80x64xbf16>
    %37 = vector.shape_cast %36 : vector<1x1x80x64xbf16> to vector<80x64xbf16>
    %38 = vector.shape_cast %35 : vector<80x64xbf16> to vector<1x1x80x64xbf16>
    tpu.vector_store %arg11[%c1_34, %c0_35, %c0_36, %c0_37], %38 {strides = array<i32>} : memref<5x2x80x64xbf16, #tpu.memory_space<vmem>>, vector<1x1x80x64xbf16>,
    %c0_38 = arith.constant 0 : index
    %c3 = arith.constant 3 : index
    %c0_39 = arith.constant 0 : index
    %c0_40 = arith.constant 0 : index
    %39 = vector.load %arg1[%c0_38, %c3, %c0_39, %c0_40] : memref<1x10x80x384xbf16, #tpu.memory_space<vmem>>, vector<1x1x80x384xbf16>
    %40 = vector.shape_cast %39 : vector<1x1x80x384xbf16> to vector<80x384xbf16>
    %c0_41 = arith.constant 0 : index
    %c0_42 = arith.constant 0 : index
    %41 = vector.load %arg2[%c0_41, %c0_42] : memref<384x64xbf16, #tpu.memory_space<vmem>>, vector<384x64xbf16>
    %cst_43 = arith.constant dense<0.000000e+00> : vector<80x64xf32>
    %42 = tpu.matmul %40, %41, %cst_43 {dimension_numbers = #tpu.dot_dimension_numbers<[1], [0], [0], [1], [0, 0, 1, 1], [], []>} : vector<80x384xbf16>, vector<384x64xbf16>, vector<80x64xf32> -> vector<80x64xf32>
    %43 = vector.broadcast %0 : vector<1x64xf32> to vector<80x64xf32>
    %44 = arith.addf %42, %43 : vector<80x64xf32>
    %cst_44 = arith.constant 0.000000e+00 : f32
    %45 = vector.broadcast %cst_44 : f32 to vector<80x64xf32>
    %46 = arith.maximumf %44, %45 : vector<80x64xf32>
    %47 = arith.truncf %46 : vector<80x64xf32> to vector<80x64xbf16>
    %c1_45 = arith.constant 1 : index
    %c1_46 = arith.constant 1 : index
    %c0_47 = arith.constant 0 : index
    %c0_48 = arith.constant 0 : index
    %48 = vector.load %arg11[%c1_45, %c1_46, %c0_47, %c0_48] : memref<5x2x80x64xbf16, #tpu.memory_space<vmem>>, vector<1x1x80x64xbf16>
    %49 = vector.shape_cast %48 : vector<1x1x80x64xbf16> to vector<80x64xbf16>
    %50 = vector.shape_cast %47 : vector<80x64xbf16> to vector<1x1x80x64xbf16>
    tpu.vector_store %arg11[%c1_45, %c1_46, %c0_47, %c0_48], %50 {strides = array<i32>} : memref<5x2x80x64xbf16, #tpu.memory_space<vmem>>, vector<1x1x80x64xbf16>,
    %c0_49 = arith.constant 0 : index
    %c4 = arith.constant 4 : index
    %c0_50 = arith.constant 0 : index
    %c0_51 = arith.constant 0 : index
    %51 = vector.load %arg1[%c0_49, %c4, %c0_50, %c0_51] : memref<1x10x80x384xbf16, #tpu.memory_space<vmem>>, vector<1x1x80x384xbf16>
    %52 = vector.shape_cast %51 : vector<1x1x80x384xbf16> to vector<80x384xbf16>
    %c0_52 = arith.constant 0 : index
    %c0_53 = arith.constant 0 : index
    %53 = vector.load %arg2[%c0_52, %c0_53] : memref<384x64xbf16, #tpu.memory_space<vmem>>, vector<384x64xbf16>
    %cst_54 = arith.constant dense<0.000000e+00> : vector<80x64xf32>
    %54 = tpu.matmul %52, %53, %cst_54 {dimension_numbers = #tpu.dot_dimension_numbers<[1], [0], [0], [1], [0, 0, 1, 1], [], []>} : vector<80x384xbf16>, vector<384x64xbf16>, vector<80x64xf32> -> vector<80x64xf32>
    %55 = vector.broadcast %0 : vector<1x64xf32> to vector<80x64xf32>
    %56 = arith.addf %54, %55 : vector<80x64xf32>
    %cst_55 = arith.constant 0.000000e+00 : f32
    %57 = vector.broadcast %cst_55 : f32 to vector<80x64xf32>
    %58 = arith.maximumf %56, %57 : vector<80x64xf32>
    %59 = arith.truncf %58 : vector<80x64xf32> to vector<80x64xbf16>
    %c2_56 = arith.constant 2 : index
    %c0_57 = arith.constant 0 : index
    %c0_58 = arith.constant 0 : index
    %c0_59 = arith.constant 0 : index
    %60 = vector.load %arg11[%c2_56, %c0_57, %c0_58, %c0_59] : memref<5x2x80x64xbf16, #tpu.memory_space<vmem>>, vector<1x1x80x64xbf16>
    %61 = vector.shape_cast %60 : vector<1x1x80x64xbf16> to vector<80x64xbf16>
    %62 = vector.shape_cast %59 : vector<80x64xbf16> to vector<1x1x80x64xbf16>
    tpu.vector_store %arg11[%c2_56, %c0_57, %c0_58, %c0_59], %62 {strides = array<i32>} : memref<5x2x80x64xbf16, #tpu.memory_space<vmem>>, vector<1x1x80x64xbf16>,
    %c0_60 = arith.constant 0 : index
    %c5 = arith.constant 5 : index
    %c0_61 = arith.constant 0 : index
    %c0_62 = arith.constant 0 : index
    %63 = vector.load %arg1[%c0_60, %c5, %c0_61, %c0_62] : memref<1x10x80x384xbf16, #tpu.memory_space<vmem>>, vector<1x1x80x384xbf16>
    %64 = vector.shape_cast %63 : vector<1x1x80x384xbf16> to vector<80x384xbf16>
    %c0_63 = arith.constant 0 : index
    %c0_64 = arith.constant 0 : index
    %65 = vector.load %arg2[%c0_63, %c0_64] : memref<384x64xbf16, #tpu.memory_space<vmem>>, vector<384x64xbf16>
    %cst_65 = arith.constant dense<0.000000e+00> : vector<80x64xf32>
    %66 = tpu.matmul %64, %65, %cst_65 {dimension_numbers = #tpu.dot_dimension_numbers<[1], [0], [0], [1], [0, 0, 1, 1], [], []>} : vector<80x384xbf16>, vector<384x64xbf16>, vector<80x64xf32> -> vector<80x64xf32>
    %67 = vector.broadcast %0 : vector<1x64xf32> to vector<80x64xf32>
    %68 = arith.addf %66, %67 : vector<80x64xf32>
    %cst_66 = arith.constant 0.000000e+00 : f32
    %69 = vector.broadcast %cst_66 : f32 to vector<80x64xf32>
    %70 = arith.maximumf %68, %69 : vector<80x64xf32>
    %71 = arith.truncf %70 : vector<80x64xf32> to vector<80x64xbf16>
    %c2_67 = arith.constant 2 : index
    %c1_68 = arith.constant 1 : index
    %c0_69 = arith.constant 0 : index
    %c0_70 = arith.constant 0 : index
    %72 = vector.load %arg11[%c2_67, %c1_68, %c0_69, %c0_70] : memref<5x2x80x64xbf16, #tpu.memory_space<vmem>>, vector<1x1x80x64xbf16>
    %73 = vector.shape_cast %72 : vector<1x1x80x64xbf16> to vector<80x64xbf16>
    %74 = vector.shape_cast %71 : vector<80x64xbf16> to vector<1x1x80x64xbf16>
    tpu.vector_store %arg11[%c2_67, %c1_68, %c0_69, %c0_70], %74 {strides = array<i32>} : memref<5x2x80x64xbf16, #tpu.memory_space<vmem>>, vector<1x1x80x64xbf16>,
    %c0_71 = arith.constant 0 : index
    %c6 = arith.constant 6 : index
    %c0_72 = arith.constant 0 : index
    %c0_73 = arith.constant 0 : index
    %75 = vector.load %arg1[%c0_71, %c6, %c0_72, %c0_73] : memref<1x10x80x384xbf16, #tpu.memory_space<vmem>>, vector<1x1x80x384xbf16>
    %76 = vector.shape_cast %75 : vector<1x1x80x384xbf16> to vector<80x384xbf16>
    %c0_74 = arith.constant 0 : index
    %c0_75 = arith.constant 0 : index
    %77 = vector.load %arg2[%c0_74, %c0_75] : memref<384x64xbf16, #tpu.memory_space<vmem>>, vector<384x64xbf16>
    %cst_76 = arith.constant dense<0.000000e+00> : vector<80x64xf32>
    %78 = tpu.matmul %76, %77, %cst_76 {dimension_numbers = #tpu.dot_dimension_numbers<[1], [0], [0], [1], [0, 0, 1, 1], [], []>} : vector<80x384xbf16>, vector<384x64xbf16>, vector<80x64xf32> -> vector<80x64xf32>
    %79 = vector.broadcast %0 : vector<1x64xf32> to vector<80x64xf32>
    %80 = arith.addf %78, %79 : vector<80x64xf32>
    %cst_77 = arith.constant 0.000000e+00 : f32
    %81 = vector.broadcast %cst_77 : f32 to vector<80x64xf32>
    %82 = arith.maximumf %80, %81 : vector<80x64xf32>
    %83 = arith.truncf %82 : vector<80x64xf32> to vector<80x64xbf16>
    %c3_78 = arith.constant 3 : index
    %c0_79 = arith.constant 0 : index
    %c0_80 = arith.constant 0 : index
    %c0_81 = arith.constant 0 : index
    %84 = vector.load %arg11[%c3_78, %c0_79, %c0_80, %c0_81] : memref<5x2x80x64xbf16, #tpu.memory_space<vmem>>, vector<1x1x80x64xbf16>
    %85 = vector.shape_cast %84 : vector<1x1x80x64xbf16> to vector<80x64xbf16>
    %86 = vector.shape_cast %83 : vector<80x64xbf16> to vector<1x1x80x64xbf16>
    tpu.vector_store %arg11[%c3_78, %c0_79, %c0_80, %c0_81], %86 {strides = array<i32>} : memref<5x2x80x64xbf16, #tpu.memory_space<vmem>>, vector<1x1x80x64xbf16>,
    %c0_82 = arith.constant 0 : index
    %c7 = arith.constant 7 : index
    %c0_83 = arith.constant 0 : index
    %c0_84 = arith.constant 0 : index
    %87 = vector.load %arg1[%c0_82, %c7, %c0_83, %c0_84] : memref<1x10x80x384xbf16, #tpu.memory_space<vmem>>, vector<1x1x80x384xbf16>
    %88 = vector.shape_cast %87 : vector<1x1x80x384xbf16> to vector<80x384xbf16>
    %c0_85 = arith.constant 0 : index
    %c0_86 = arith.constant 0 : index
    %89 = vector.load %arg2[%c0_85, %c0_86] : memref<384x64xbf16, #tpu.memory_space<vmem>>, vector<384x64xbf16>
    %cst_87 = arith.constant dense<0.000000e+00> : vector<80x64xf32>
    %90 = tpu.matmul %88, %89, %cst_87 {dimension_numbers = #tpu.dot_dimension_numbers<[1], [0], [0], [1], [0, 0, 1, 1], [], []>} : vector<80x384xbf16>, vector<384x64xbf16>, vector<80x64xf32> -> vector<80x64xf32>
    %91 = vector.broadcast %0 : vector<1x64xf32> to vector<80x64xf32>
    %92 = arith.addf %90, %91 : vector<80x64xf32>
    %cst_88 = arith.constant 0.000000e+00 : f32
    %93 = vector.broadcast %cst_88 : f32 to vector<80x64xf32>
    %94 = arith.maximumf %92, %93 : vector<80x64xf32>
    %95 = arith.truncf %94 : vector<80x64xf32> to vector<80x64xbf16>
    %c3_89 = arith.constant 3 : index
    %c1_90 = arith.constant 1 : index
    %c0_91 = arith.constant 0 : index
    %c0_92 = arith.constant 0 : index
    %96 = vector.load %arg11[%c3_89, %c1_90, %c0_91, %c0_92] : memref<5x2x80x64xbf16, #tpu.memory_space<vmem>>, vector<1x1x80x64xbf16>
    %97 = vector.shape_cast %96 : vector<1x1x80x64xbf16> to vector<80x64xbf16>
    %98 = vector.shape_cast %95 : vector<80x64xbf16> to vector<1x1x80x64xbf16>
    tpu.vector_store %arg11[%c3_89, %c1_90, %c0_91, %c0_92], %98 {strides = array<i32>} : memref<5x2x80x64xbf16, #tpu.memory_space<vmem>>, vector<1x1x80x64xbf16>,
    %c0_93 = arith.constant 0 : index
    %c8 = arith.constant 8 : index
    %c0_94 = arith.constant 0 : index
    %c0_95 = arith.constant 0 : index
    %99 = vector.load %arg1[%c0_93, %c8, %c0_94, %c0_95] : memref<1x10x80x384xbf16, #tpu.memory_space<vmem>>, vector<1x1x80x384xbf16>
    %100 = vector.shape_cast %99 : vector<1x1x80x384xbf16> to vector<80x384xbf16>
    %c0_96 = arith.constant 0 : index
    %c0_97 = arith.constant 0 : index
    %101 = vector.load %arg2[%c0_96, %c0_97] : memref<384x64xbf16, #tpu.memory_space<vmem>>, vector<384x64xbf16>
    %cst_98 = arith.constant dense<0.000000e+00> : vector<80x64xf32>
    %102 = tpu.matmul %100, %101, %cst_98 {dimension_numbers = #tpu.dot_dimension_numbers<[1], [0], [0], [1], [0, 0, 1, 1], [], []>} : vector<80x384xbf16>, vector<384x64xbf16>, vector<80x64xf32> -> vector<80x64xf32>
    %103 = vector.broadcast %0 : vector<1x64xf32> to vector<80x64xf32>
    %104 = arith.addf %102, %103 : vector<80x64xf32>
    %cst_99 = arith.constant 0.000000e+00 : f32
    %105 = vector.broadcast %cst_99 : f32 to vector<80x64xf32>
    %106 = arith.maximumf %104, %105 : vector<80x64xf32>
    %107 = arith.truncf %106 : vector<80x64xf32> to vector<80x64xbf16>
    %c4_100 = arith.constant 4 : index
    %c0_101 = arith.constant 0 : index
    %c0_102 = arith.constant 0 : index
    %c0_103 = arith.constant 0 : index
    %108 = vector.load %arg11[%c4_100, %c0_101, %c0_102, %c0_103] : memref<5x2x80x64xbf16, #tpu.memory_space<vmem>>, vector<1x1x80x64xbf16>
    %109 = vector.shape_cast %108 : vector<1x1x80x64xbf16> to vector<80x64xbf16>
    %110 = vector.shape_cast %107 : vector<80x64xbf16> to vector<1x1x80x64xbf16>
    tpu.vector_store %arg11[%c4_100, %c0_101, %c0_102, %c0_103], %110 {strides = array<i32>} : memref<5x2x80x64xbf16, #tpu.memory_space<vmem>>, vector<1x1x80x64xbf16>,
    %c0_104 = arith.constant 0 : index
    %c9 = arith.constant 9 : index
    %c0_105 = arith.constant 0 : index
    %c0_106 = arith.constant 0 : index
    %111 = vector.load %arg1[%c0_104, %c9, %c0_105, %c0_106] : memref<1x10x80x384xbf16, #tpu.memory_space<vmem>>, vector<1x1x80x384xbf16>
    %112 = vector.shape_cast %111 : vector<1x1x80x384xbf16> to vector<80x384xbf16>
    %c0_107 = arith.constant 0 : index
    %c0_108 = arith.constant 0 : index
    %113 = vector.load %arg2[%c0_107, %c0_108] : memref<384x64xbf16, #tpu.memory_space<vmem>>, vector<384x64xbf16>
    %cst_109 = arith.constant dense<0.000000e+00> : vector<80x64xf32>
    %114 = tpu.matmul %112, %113, %cst_109 {dimension_numbers = #tpu.dot_dimension_numbers<[1], [0], [0], [1], [0, 0, 1, 1], [], []>} : vector<80x384xbf16>, vector<384x64xbf16>, vector<80x64xf32> -> vector<80x64xf32>
    %115 = vector.broadcast %0 : vector<1x64xf32> to vector<80x64xf32>
    %116 = arith.addf %114, %115 : vector<80x64xf32>
    %cst_110 = arith.constant 0.000000e+00 : f32
    %117 = vector.broadcast %cst_110 : f32 to vector<80x64xf32>
    %118 = arith.maximumf %116, %117 : vector<80x64xf32>
    %119 = arith.truncf %118 : vector<80x64xf32> to vector<80x64xbf16>
    %c4_111 = arith.constant 4 : index
    %c1_112 = arith.constant 1 : index
    %c0_113 = arith.constant 0 : index
    %c0_114 = arith.constant 0 : index
    %120 = vector.load %arg11[%c4_111, %c1_112, %c0_113, %c0_114] : memref<5x2x80x64xbf16, #tpu.memory_space<vmem>>, vector<1x1x80x64xbf16>
    %121 = vector.shape_cast %120 : vector<1x1x80x64xbf16> to vector<80x64xbf16>
    %122 = vector.shape_cast %119 : vector<80x64xbf16> to vector<1x1x80x64xbf16>
    tpu.vector_store %arg11[%c4_111, %c1_112, %c0_113, %c0_114], %122 {strides = array<i32>} : memref<5x2x80x64xbf16, #tpu.memory_space<vmem>>, vector<1x1x80x64xbf16>,
    %c0_115 = arith.constant 0 : index
    %c0_116 = arith.constant 0 : index
    %c0_117 = arith.constant 0 : index
    %c0_118 = arith.constant 0 : index
    %123 = vector.load %arg11[%c0_115, %c0_116, %c0_117, %c0_118] : memref<5x2x80x64xbf16, #tpu.memory_space<vmem>>, vector<1x1x64x64xbf16>
    %124 = vector.shape_cast %123 : vector<1x1x64x64xbf16> to vector<64x64xbf16>
    %c0_119 = arith.constant 0 : index
    %c0_120 = arith.constant 0 : index
    %c0_121 = arith.constant 0 : index
    %125 = vector.load %arg4[%c0_119, %c0_120, %c0_121] : memref<8x64x64xbf16, #tpu.memory_space<vmem>>, vector<1x64x64xbf16>
    %126 = vector.shape_cast %125 : vector<1x64x64xbf16> to vector<64x64xbf16>
    %cst_122 = arith.constant dense<0.000000e+00> : vector<64x64xf32>
    %127 = tpu.matmul %124, %126, %cst_122 {dimension_numbers = #tpu.dot_dimension_numbers<[1], [0], [0], [1], [0, 0, 1, 1], [], []>} : vector<64x64xbf16>, vector<64x64xbf16>, vector<64x64xf32> -> vector<64x64xf32>
    %c0_123 = arith.constant 0 : index
    %c0_124 = arith.constant 0 : index
    %c0_125 = arith.constant 0 : index
    %128 = vector.load %arg12[%c0_123, %c0_124, %c0_125] : memref<4x64x64xf32, #tpu.memory_space<vmem>>, vector<1x64x64xf32>
    %129 = vector.shape_cast %128 : vector<1x64x64xf32> to vector<64x64xf32>
    %130 = vector.shape_cast %127 : vector<64x64xf32> to vector<1x64x64xf32>
    tpu.vector_store %arg12[%c0_123, %c0_124, %c0_125], %130 {strides = array<i32>} : memref<4x64x64xf32, #tpu.memory_space<vmem>>, vector<1x64x64xf32>,
    %c0_126 = arith.constant 0 : index
    %c0_127 = arith.constant 0 : index
    %c16 = arith.constant 16 : index
    %c0_128 = arith.constant 0 : index
    %131 = vector.load %arg11[%c0_126, %c0_127, %c16, %c0_128] : memref<5x2x80x64xbf16, #tpu.memory_space<vmem>>, vector<1x1x64x64xbf16>
    %132 = vector.shape_cast %131 : vector<1x1x64x64xbf16> to vector<64x64xbf16>
    %c1_129 = arith.constant 1 : index
    %c0_130 = arith.constant 0 : index
    %c0_131 = arith.constant 0 : index
    %133 = vector.load %arg4[%c1_129, %c0_130, %c0_131] : memref<8x64x64xbf16, #tpu.memory_space<vmem>>, vector<1x64x64xbf16>
    %134 = vector.shape_cast %133 : vector<1x64x64xbf16> to vector<64x64xbf16>
    %cst_132 = arith.constant dense<0.000000e+00> : vector<64x64xf32>
    %135 = tpu.matmul %132, %134, %cst_132 {dimension_numbers = #tpu.dot_dimension_numbers<[1], [0], [0], [1], [0, 0, 1, 1], [], []>} : vector<64x64xbf16>, vector<64x64xbf16>, vector<64x64xf32> -> vector<64x64xf32>
    %c0_133 = arith.constant 0 : index
    %c0_134 = arith.constant 0 : index
    %c0_135 = arith.constant 0 : index
    %136 = vector.load %arg12[%c0_133, %c0_134, %c0_135] : memref<4x64x64xf32, #tpu.memory_space<vmem>>, vector<1x64x64xf32>
    %137 = vector.shape_cast %136 : vector<1x64x64xf32> to vector<64x64xf32>
    %138 = arith.addf %137, %135 : vector<64x64xf32>
    %c0_136 = arith.constant 0 : index
    %c0_137 = arith.constant 0 : index
    %c0_138 = arith.constant 0 : index
    %139 = vector.load %arg12[%c0_136, %c0_137, %c0_138] : memref<4x64x64xf32, #tpu.memory_space<vmem>>, vector<1x64x64xf32>
    %140 = vector.shape_cast %139 : vector<1x64x64xf32> to vector<64x64xf32>
    %141 = vector.shape_cast %138 : vector<64x64xf32> to vector<1x64x64xf32>
    tpu.vector_store %arg12[%c0_136, %c0_137, %c0_138], %141 {strides = array<i32>} : memref<4x64x64xf32, #tpu.memory_space<vmem>>, vector<1x64x64xf32>,
    %c0_139 = arith.constant 0 : index
    %c1_140 = arith.constant 1 : index
    %c0_141 = arith.constant 0 : index
    %c0_142 = arith.constant 0 : index
    %142 = vector.load %arg11[%c0_139, %c1_140, %c0_141, %c0_142] : memref<5x2x80x64xbf16, #tpu.memory_space<vmem>>, vector<1x1x64x64xbf16>
    %143 = vector.shape_cast %142 : vector<1x1x64x64xbf16> to vector<64x64xbf16>
    %c2_143 = arith.constant 2 : index
    %c0_144 = arith.constant 0 : index
    %c0_145 = arith.constant 0 : index
    %144 = vector.load %arg4[%c2_143, %c0_144, %c0_145] : memref<8x64x64xbf16, #tpu.memory_space<vmem>>, vector<1x64x64xbf16>
    %145 = vector.shape_cast %144 : vector<1x64x64xbf16> to vector<64x64xbf16>
    %cst_146 = arith.constant dense<0.000000e+00> : vector<64x64xf32>
    %146 = tpu.matmul %143, %145, %cst_146 {dimension_numbers = #tpu.dot_dimension_numbers<[1], [0], [0], [1], [0, 0, 1, 1], [], []>} : vector<64x64xbf16>, vector<64x64xbf16>, vector<64x64xf32> -> vector<64x64xf32>
    %c0_147 = arith.constant 0 : index
    %c0_148 = arith.constant 0 : index
    %c0_149 = arith.constant 0 : index
    %147 = vector.load %arg12[%c0_147, %c0_148, %c0_149] : memref<4x64x64xf32, #tpu.memory_space<vmem>>, vector<1x64x64xf32>
    %148 = vector.shape_cast %147 : vector<1x64x64xf32> to vector<64x64xf32>
    %149 = arith.addf %148, %146 : vector<64x64xf32>
    %c0_150 = arith.constant 0 : index
    %c0_151 = arith.constant 0 : index
    %c0_152 = arith.constant 0 : index
    %150 = vector.load %arg12[%c0_150, %c0_151, %c0_152] : memref<4x64x64xf32, #tpu.memory_space<vmem>>, vector<1x64x64xf32>
    %151 = vector.shape_cast %150 : vector<1x64x64xf32> to vector<64x64xf32>
    %152 = vector.shape_cast %149 : vector<64x64xf32> to vector<1x64x64xf32>
    tpu.vector_store %arg12[%c0_150, %c0_151, %c0_152], %152 {strides = array<i32>} : memref<4x64x64xf32, #tpu.memory_space<vmem>>, vector<1x64x64xf32>,
    %c0_153 = arith.constant 0 : index
    %c1_154 = arith.constant 1 : index
    %c16_155 = arith.constant 16 : index
    %c0_156 = arith.constant 0 : index
    %153 = vector.load %arg11[%c0_153, %c1_154, %c16_155, %c0_156] : memref<5x2x80x64xbf16, #tpu.memory_space<vmem>>, vector<1x1x64x64xbf16>
    %154 = vector.shape_cast %153 : vector<1x1x64x64xbf16> to vector<64x64xbf16>
    %c3_157 = arith.constant 3 : index
    %c0_158 = arith.constant 0 : index
    %c0_159 = arith.constant 0 : index
    %155 = vector.load %arg4[%c3_157, %c0_158, %c0_159] : memref<8x64x64xbf16, #tpu.memory_space<vmem>>, vector<1x64x64xbf16>
    %156 = vector.shape_cast %155 : vector<1x64x64xbf16> to vector<64x64xbf16>
    %cst_160 = arith.constant dense<0.000000e+00> : vector<64x64xf32>
    %157 = tpu.matmul %154, %156, %cst_160 {dimension_numbers = #tpu.dot_dimension_numbers<[1], [0], [0], [1], [0, 0, 1, 1], [], []>} : vector<64x64xbf16>, vector<64x64xbf16>, vector<64x64xf32> -> vector<64x64xf32>
    %c0_161 = arith.constant 0 : index
    %c0_162 = arith.constant 0 : index
    %c0_163 = arith.constant 0 : index
    %158 = vector.load %arg12[%c0_161, %c0_162, %c0_163] : memref<4x64x64xf32, #tpu.memory_space<vmem>>, vector<1x64x64xf32>
    %159 = vector.shape_cast %158 : vector<1x64x64xf32> to vector<64x64xf32>
    %160 = arith.addf %159, %157 : vector<64x64xf32>
    %c0_164 = arith.constant 0 : index
    %c0_165 = arith.constant 0 : index
    %c0_166 = arith.constant 0 : index
    %161 = vector.load %arg12[%c0_164, %c0_165, %c0_166] : memref<4x64x64xf32, #tpu.memory_space<vmem>>, vector<1x64x64xf32>
    %162 = vector.shape_cast %161 : vector<1x64x64xf32> to vector<64x64xf32>
    %163 = vector.shape_cast %160 : vector<64x64xf32> to vector<1x64x64xf32>
    tpu.vector_store %arg12[%c0_164, %c0_165, %c0_166], %163 {strides = array<i32>} : memref<4x64x64xf32, #tpu.memory_space<vmem>>, vector<1x64x64xf32>,
    %c1_167 = arith.constant 1 : index
    %c0_168 = arith.constant 0 : index
    %c0_169 = arith.constant 0 : index
    %c0_170 = arith.constant 0 : index
    %164 = vector.load %arg11[%c1_167, %c0_168, %c0_169, %c0_170] : memref<5x2x80x64xbf16, #tpu.memory_space<vmem>>, vector<1x1x64x64xbf16>
    %165 = vector.shape_cast %164 : vector<1x1x64x64xbf16> to vector<64x64xbf16>
    %c4_171 = arith.constant 4 : index
    %c0_172 = arith.constant 0 : index
    %c0_173 = arith.constant 0 : index
    %166 = vector.load %arg4[%c4_171, %c0_172, %c0_173] : memref<8x64x64xbf16, #tpu.memory_space<vmem>>, vector<1x64x64xbf16>
    %167 = vector.shape_cast %166 : vector<1x64x64xbf16> to vector<64x64xbf16>
    %cst_174 = arith.constant dense<0.000000e+00> : vector<64x64xf32>
    %168 = tpu.matmul %165, %167, %cst_174 {dimension_numbers = #tpu.dot_dimension_numbers<[1], [0], [0], [1], [0, 0, 1, 1], [], []>} : vector<64x64xbf16>, vector<64x64xbf16>, vector<64x64xf32> -> vector<64x64xf32>
    %c0_175 = arith.constant 0 : index
    %c0_176 = arith.constant 0 : index
    %c0_177 = arith.constant 0 : index
    %169 = vector.load %arg12[%c0_175, %c0_176, %c0_177] : memref<4x64x64xf32, #tpu.memory_space<vmem>>, vector<1x64x64xf32>
    %170 = vector.shape_cast %169 : vector<1x64x64xf32> to vector<64x64xf32>
    %171 = arith.addf %170, %168 : vector<64x64xf32>
    %c0_178 = arith.constant 0 : index
    %c0_179 = arith.constant 0 : index
    %c0_180 = arith.constant 0 : index
    %172 = vector.load %arg12[%c0_178, %c0_179, %c0_180] : memref<4x64x64xf32, #tpu.memory_space<vmem>>, vector<1x64x64xf32>
    %173 = vector.shape_cast %172 : vector<1x64x64xf32> to vector<64x64xf32>
    %174 = vector.shape_cast %171 : vector<64x64xf32> to vector<1x64x64xf32>
    tpu.vector_store %arg12[%c0_178, %c0_179, %c0_180], %174 {strides = array<i32>} : memref<4x64x64xf32, #tpu.memory_space<vmem>>, vector<1x64x64xf32>,
    %c1_181 = arith.constant 1 : index
    %c0_182 = arith.constant 0 : index
    %c16_183 = arith.constant 16 : index
    %c0_184 = arith.constant 0 : index
    %175 = vector.load %arg11[%c1_181, %c0_182, %c16_183, %c0_184] : memref<5x2x80x64xbf16, #tpu.memory_space<vmem>>, vector<1x1x64x64xbf16>
    %176 = vector.shape_cast %175 : vector<1x1x64x64xbf16> to vector<64x64xbf16>
    %c5_185 = arith.constant 5 : index
    %c0_186 = arith.constant 0 : index
    %c0_187 = arith.constant 0 : index
    %177 = vector.load %arg4[%c5_185, %c0_186, %c0_187] : memref<8x64x64xbf16, #tpu.memory_space<vmem>>, vector<1x64x64xbf16>
    %178 = vector.shape_cast %177 : vector<1x64x64xbf16> to vector<64x64xbf16>
    %cst_188 = arith.constant dense<0.000000e+00> : vector<64x64xf32>
    %179 = tpu.matmul %176, %178, %cst_188 {dimension_numbers = #tpu.dot_dimension_numbers<[1], [0], [0], [1], [0, 0, 1, 1], [], []>} : vector<64x64xbf16>, vector<64x64xbf16>, vector<64x64xf32> -> vector<64x64xf32>
    %c0_189 = arith.constant 0 : index
    %c0_190 = arith.constant 0 : index
    %c0_191 = arith.constant 0 : index
    %180 = vector.load %arg12[%c0_189, %c0_190, %c0_191] : memref<4x64x64xf32, #tpu.memory_space<vmem>>, vector<1x64x64xf32>
    %181 = vector.shape_cast %180 : vector<1x64x64xf32> to vector<64x64xf32>
    %182 = arith.addf %181, %179 : vector<64x64xf32>
    %c0_192 = arith.constant 0 : index
    %c0_193 = arith.constant 0 : index
    %c0_194 = arith.constant 0 : index
    %183 = vector.load %arg12[%c0_192, %c0_193, %c0_194] : memref<4x64x64xf32, #tpu.memory_space<vmem>>, vector<1x64x64xf32>
    %184 = vector.shape_cast %183 : vector<1x64x64xf32> to vector<64x64xf32>
    %185 = vector.shape_cast %182 : vector<64x64xf32> to vector<1x64x64xf32>
    tpu.vector_store %arg12[%c0_192, %c0_193, %c0_194], %185 {strides = array<i32>} : memref<4x64x64xf32, #tpu.memory_space<vmem>>, vector<1x64x64xf32>,
    %c1_195 = arith.constant 1 : index
    %c1_196 = arith.constant 1 : index
    %c0_197 = arith.constant 0 : index
    %c0_198 = arith.constant 0 : index
    %186 = vector.load %arg11[%c1_195, %c1_196, %c0_197, %c0_198] : memref<5x2x80x64xbf16, #tpu.memory_space<vmem>>, vector<1x1x64x64xbf16>
    %187 = vector.shape_cast %186 : vector<1x1x64x64xbf16> to vector<64x64xbf16>
    %c6_199 = arith.constant 6 : index
    %c0_200 = arith.constant 0 : index
    %c0_201 = arith.constant 0 : index
    %188 = vector.load %arg4[%c6_199, %c0_200, %c0_201] : memref<8x64x64xbf16, #tpu.memory_space<vmem>>, vector<1x64x64xbf16>
    %189 = vector.shape_cast %188 : vector<1x64x64xbf16> to vector<64x64xbf16>
    %cst_202 = arith.constant dense<0.000000e+00> : vector<64x64xf32>
    %190 = tpu.matmul %187, %189, %cst_202 {dimension_numbers = #tpu.dot_dimension_numbers<[1], [0], [0], [1], [0, 0, 1, 1], [], []>} : vector<64x64xbf16>, vector<64x64xbf16>, vector<64x64xf32> -> vector<64x64xf32>
    %c0_203 = arith.constant 0 : index
    %c0_204 = arith.constant 0 : index
    %c0_205 = arith.constant 0 : index
    %191 = vector.load %arg12[%c0_203, %c0_204, %c0_205] : memref<4x64x64xf32, #tpu.memory_space<vmem>>, vector<1x64x64xf32>
    %192 = vector.shape_cast %191 : vector<1x64x64xf32> to vector<64x64xf32>
    %193 = arith.addf %192, %190 : vector<64x64xf32>
    %c0_206 = arith.constant 0 : index
    %c0_207 = arith.constant 0 : index
    %c0_208 = arith.constant 0 : index
    %194 = vector.load %arg12[%c0_206, %c0_207, %c0_208] : memref<4x64x64xf32, #tpu.memory_space<vmem>>, vector<1x64x64xf32>
    %195 = vector.shape_cast %194 : vector<1x64x64xf32> to vector<64x64xf32>
    %196 = vector.shape_cast %193 : vector<64x64xf32> to vector<1x64x64xf32>
    tpu.vector_store %arg12[%c0_206, %c0_207, %c0_208], %196 {strides = array<i32>} : memref<4x64x64xf32, #tpu.memory_space<vmem>>, vector<1x64x64xf32>,
    %c1_209 = arith.constant 1 : index
    %c1_210 = arith.constant 1 : index
    %c16_211 = arith.constant 16 : index
    %c0_212 = arith.constant 0 : index
    %197 = vector.load %arg11[%c1_209, %c1_210, %c16_211, %c0_212] : memref<5x2x80x64xbf16, #tpu.memory_space<vmem>>, vector<1x1x64x64xbf16>
    %198 = vector.shape_cast %197 : vector<1x1x64x64xbf16> to vector<64x64xbf16>
    %c7_213 = arith.constant 7 : index
    %c0_214 = arith.constant 0 : index
    %c0_215 = arith.constant 0 : index
    %199 = vector.load %arg4[%c7_213, %c0_214, %c0_215] : memref<8x64x64xbf16, #tpu.memory_space<vmem>>, vector<1x64x64xbf16>
    %200 = vector.shape_cast %199 : vector<1x64x64xbf16> to vector<64x64xbf16>
    %cst_216 = arith.constant dense<0.000000e+00> : vector<64x64xf32>
    %201 = tpu.matmul %198, %200, %cst_216 {dimension_numbers = #tpu.dot_dimension_numbers<[1], [0], [0], [1], [0, 0, 1, 1], [], []>} : vector<64x64xbf16>, vector<64x64xbf16>, vector<64x64xf32> -> vector<64x64xf32>
    %c0_217 = arith.constant 0 : index
    %c0_218 = arith.constant 0 : index
    %c0_219 = arith.constant 0 : index
    %202 = vector.load %arg12[%c0_217, %c0_218, %c0_219] : memref<4x64x64xf32, #tpu.memory_space<vmem>>, vector<1x64x64xf32>
    %203 = vector.shape_cast %202 : vector<1x64x64xf32> to vector<64x64xf32>
    %204 = arith.addf %203, %201 : vector<64x64xf32>
    %c0_220 = arith.constant 0 : index
    %c0_221 = arith.constant 0 : index
    %c0_222 = arith.constant 0 : index
    %205 = vector.load %arg12[%c0_220, %c0_221, %c0_222] : memref<4x64x64xf32, #tpu.memory_space<vmem>>, vector<1x64x64xf32>
    %206 = vector.shape_cast %205 : vector<1x64x64xf32> to vector<64x64xf32>
    %207 = vector.shape_cast %204 : vector<64x64xf32> to vector<1x64x64xf32>
    tpu.vector_store %arg12[%c0_220, %c0_221, %c0_222], %207 {strides = array<i32>} : memref<4x64x64xf32, #tpu.memory_space<vmem>>, vector<1x64x64xf32>,
    %c0_223 = arith.constant 0 : index
    %c0_224 = arith.constant 0 : index
    %c0_225 = arith.constant 0 : index
    %208 = vector.load %arg12[%c0_223, %c0_224, %c0_225] : memref<4x64x64xf32, #tpu.memory_space<vmem>>, vector<1x64x64xf32>
    %209 = vector.shape_cast %208 : vector<1x64x64xf32> to vector<64x64xf32>
    %210 = vector.broadcast %1 : vector<1x64xf32> to vector<64x64xf32>
    %211 = arith.addf %209, %210 : vector<64x64xf32>
    %cst_226 = arith.constant 0.000000e+00 : f32
    %212 = vector.broadcast %cst_226 : f32 to vector<64x64xf32>
    %213 = arith.maximumf %211, %212 : vector<64x64xf32>
    %214 = arith.truncf %213 : vector<64x64xf32> to vector<64x64xbf16>
    %c0_227 = arith.constant 0 : index
    %c0_228 = arith.constant 0 : index
    %c0_229 = arith.constant 0 : index
    %215 = vector.load %arg13[%c0_227, %c0_228, %c0_229] : memref<4x64x64xbf16, #tpu.memory_space<vmem>>, vector<1x64x64xbf16>
    %216 = vector.shape_cast %215 : vector<1x64x64xbf16> to vector<64x64xbf16>
    %217 = vector.shape_cast %214 : vector<64x64xbf16> to vector<1x64x64xbf16>
    tpu.vector_store %arg13[%c0_227, %c0_228, %c0_229], %217 {strides = array<i32>} : memref<4x64x64xbf16, #tpu.memory_space<vmem>>, vector<1x64x64xbf16>,
    %c1_230 = arith.constant 1 : index
    %c0_231 = arith.constant 0 : index
    %c0_232 = arith.constant 0 : index
    %c0_233 = arith.constant 0 : index
    %218 = vector.load %arg11[%c1_230, %c0_231, %c0_232, %c0_233] : memref<5x2x80x64xbf16, #tpu.memory_space<vmem>>, vector<1x1x64x64xbf16>
    %219 = vector.shape_cast %218 : vector<1x1x64x64xbf16> to vector<64x64xbf16>
    %c0_234 = arith.constant 0 : index
    %c0_235 = arith.constant 0 : index
    %c0_236 = arith.constant 0 : index
    %220 = vector.load %arg4[%c0_234, %c0_235, %c0_236] : memref<8x64x64xbf16, #tpu.memory_space<vmem>>, vector<1x64x64xbf16>
    %221 = vector.shape_cast %220 : vector<1x64x64xbf16> to vector<64x64xbf16>
    %cst_237 = arith.constant dense<0.000000e+00> : vector<64x64xf32>
    %222 = tpu.matmul %219, %221, %cst_237 {dimension_numbers = #tpu.dot_dimension_numbers<[1], [0], [0], [1], [0, 0, 1, 1], [], []>} : vector<64x64xbf16>, vector<64x64xbf16>, vector<64x64xf32> -> vector<64x64xf32>
    %c1_238 = arith.constant 1 : index
    %c0_239 = arith.constant 0 : index
    %c0_240 = arith.constant 0 : index
    %223 = vector.load %arg12[%c1_238, %c0_239, %c0_240] : memref<4x64x64xf32, #tpu.memory_space<vmem>>, vector<1x64x64xf32>
    %224 = vector.shape_cast %223 : vector<1x64x64xf32> to vector<64x64xf32>
    %225 = vector.shape_cast %222 : vector<64x64xf32> to vector<1x64x64xf32>
    tpu.vector_store %arg12[%c1_238, %c0_239, %c0_240], %225 {strides = array<i32>} : memref<4x64x64xf32, #tpu.memory_space<vmem>>, vector<1x64x64xf32>,
    %c1_241 = arith.constant 1 : index
    %c0_242 = arith.constant 0 : index
    %c16_243 = arith.constant 16 : index
    %c0_244 = arith.constant 0 : index
    %226 = vector.load %arg11[%c1_241, %c0_242, %c16_243, %c0_244] : memref<5x2x80x64xbf16, #tpu.memory_space<vmem>>, vector<1x1x64x64xbf16>
    %227 = vector.shape_cast %226 : vector<1x1x64x64xbf16> to vector<64x64xbf16>
    %c1_245 = arith.constant 1 : index
    %c0_246 = arith.constant 0 : index
    %c0_247 = arith.constant 0 : index
    %228 = vector.load %arg4[%c1_245, %c0_246, %c0_247] : memref<8x64x64xbf16, #tpu.memory_space<vmem>>, vector<1x64x64xbf16>
    %229 = vector.shape_cast %228 : vector<1x64x64xbf16> to vector<64x64xbf16>
    %cst_248 = arith.constant dense<0.000000e+00> : vector<64x64xf32>
    %230 = tpu.matmul %227, %229, %cst_248 {dimension_numbers = #tpu.dot_dimension_numbers<[1], [0], [0], [1], [0, 0, 1, 1], [], []>} : vector<64x64xbf16>, vector<64x64xbf16>, vector<64x64xf32> -> vector<64x64xf32>
    %c1_249 = arith.constant 1 : index
    %c0_250 = arith.constant 0 : index
    %c0_251 = arith.constant 0 : index
    %231 = vector.load %arg12[%c1_249, %c0_250, %c0_251] : memref<4x64x64xf32, #tpu.memory_space<vmem>>, vector<1x64x64xf32>
    %232 = vector.shape_cast %231 : vector<1x64x64xf32> to vector<64x64xf32>
    %233 = arith.addf %232, %230 : vector<64x64xf32>
    %c1_252 = arith.constant 1 : index
    %c0_253 = arith.constant 0 : index
    %c0_254 = arith.constant 0 : index
    %234 = vector.load %arg12[%c1_252, %c0_253, %c0_254] : memref<4x64x64xf32, #tpu.memory_space<vmem>>, vector<1x64x64xf32>
    %235 = vector.shape_cast %234 : vector<1x64x64xf32> to vector<64x64xf32>
    %236 = vector.shape_cast %233 : vector<64x64xf32> to vector<1x64x64xf32>
    tpu.vector_store %arg12[%c1_252, %c0_253, %c0_254], %236 {strides = array<i32>} : memref<4x64x64xf32, #tpu.memory_space<vmem>>, vector<1x64x64xf32>,
    %c1_255 = arith.constant 1 : index
    %c1_256 = arith.constant 1 : index
    %c0_257 = arith.constant 0 : index
    %c0_258 = arith.constant 0 : index
    %237 = vector.load %arg11[%c1_255, %c1_256, %c0_257, %c0_258] : memref<5x2x80x64xbf16, #tpu.memory_space<vmem>>, vector<1x1x64x64xbf16>
    %238 = vector.shape_cast %237 : vector<1x1x64x64xbf16> to vector<64x64xbf16>
    %c2_259 = arith.constant 2 : index
    %c0_260 = arith.constant 0 : index
    %c0_261 = arith.constant 0 : index
    %239 = vector.load %arg4[%c2_259, %c0_260, %c0_261] : memref<8x64x64xbf16, #tpu.memory_space<vmem>>, vector<1x64x64xbf16>
    %240 = vector.shape_cast %239 : vector<1x64x64xbf16> to vector<64x64xbf16>
    %cst_262 = arith.constant dense<0.000000e+00> : vector<64x64xf32>
    %241 = tpu.matmul %238, %240, %cst_262 {dimension_numbers = #tpu.dot_dimension_numbers<[1], [0], [0], [1], [0, 0, 1, 1], [], []>} : vector<64x64xbf16>, vector<64x64xbf16>, vector<64x64xf32> -> vector<64x64xf32>
    %c1_263 = arith.constant 1 : index
    %c0_264 = arith.constant 0 : index
    %c0_265 = arith.constant 0 : index
    %242 = vector.load %arg12[%c1_263, %c0_264, %c0_265] : memref<4x64x64xf32, #tpu.memory_space<vmem>>, vector<1x64x64xf32>
    %243 = vector.shape_cast %242 : vector<1x64x64xf32> to vector<64x64xf32>
    %244 = arith.addf %243, %241 : vector<64x64xf32>
    %c1_266 = arith.constant 1 : index
    %c0_267 = arith.constant 0 : index
    %c0_268 = arith.constant 0 : index
    %245 = vector.load %arg12[%c1_266, %c0_267, %c0_268] : memref<4x64x64xf32, #tpu.memory_space<vmem>>, vector<1x64x64xf32>
    %246 = vector.shape_cast %245 : vector<1x64x64xf32> to vector<64x64xf32>
    %247 = vector.shape_cast %244 : vector<64x64xf32> to vector<1x64x64xf32>
    tpu.vector_store %arg12[%c1_266, %c0_267, %c0_268], %247 {strides = array<i32>} : memref<4x64x64xf32, #tpu.memory_space<vmem>>, vector<1x64x64xf32>,
    %c1_269 = arith.constant 1 : index
    %c1_270 = arith.constant 1 : index
    %c16_271 = arith.constant 16 : index
    %c0_272 = arith.constant 0 : index
    %248 = vector.load %arg11[%c1_269, %c1_270, %c16_271, %c0_272] : memref<5x2x80x64xbf16, #tpu.memory_space<vmem>>, vector<1x1x64x64xbf16>
    %249 = vector.shape_cast %248 : vector<1x1x64x64xbf16> to vector<64x64xbf16>
    %c3_273 = arith.constant 3 : index
    %c0_274 = arith.constant 0 : index
    %c0_275 = arith.constant 0 : index
    %250 = vector.load %arg4[%c3_273, %c0_274, %c0_275] : memref<8x64x64xbf16, #tpu.memory_space<vmem>>, vector<1x64x64xbf16>
    %251 = vector.shape_cast %250 : vector<1x64x64xbf16> to vector<64x64xbf16>
    %cst_276 = arith.constant dense<0.000000e+00> : vector<64x64xf32>
    %252 = tpu.matmul %249, %251, %cst_276 {dimension_numbers = #tpu.dot_dimension_numbers<[1], [0], [0], [1], [0, 0, 1, 1], [], []>} : vector<64x64xbf16>, vector<64x64xbf16>, vector<64x64xf32> -> vector<64x64xf32>
    %c1_277 = arith.constant 1 : index
    %c0_278 = arith.constant 0 : index
    %c0_279 = arith.constant 0 : index
    %253 = vector.load %arg12[%c1_277, %c0_278, %c0_279] : memref<4x64x64xf32, #tpu.memory_space<vmem>>, vector<1x64x64xf32>
    %254 = vector.shape_cast %253 : vector<1x64x64xf32> to vector<64x64xf32>
    %255 = arith.addf %254, %252 : vector<64x64xf32>
    %c1_280 = arith.constant 1 : index
    %c0_281 = arith.constant 0 : index
    %c0_282 = arith.constant 0 : index
    %256 = vector.load %arg12[%c1_280, %c0_281, %c0_282] : memref<4x64x64xf32, #tpu.memory_space<vmem>>, vector<1x64x64xf32>
    %257 = vector.shape_cast %256 : vector<1x64x64xf32> to vector<64x64xf32>
    %258 = vector.shape_cast %255 : vector<64x64xf32> to vector<1x64x64xf32>
    tpu.vector_store %arg12[%c1_280, %c0_281, %c0_282], %258 {strides = array<i32>} : memref<4x64x64xf32, #tpu.memory_space<vmem>>, vector<1x64x64xf32>,
    %c2_283 = arith.constant 2 : index
    %c0_284 = arith.constant 0 : index
    %c0_285 = arith.constant 0 : index
    %c0_286 = arith.constant 0 : index
    %259 = vector.load %arg11[%c2_283, %c0_284, %c0_285, %c0_286] : memref<5x2x80x64xbf16, #tpu.memory_space<vmem>>, vector<1x1x64x64xbf16>
    %260 = vector.shape_cast %259 : vector<1x1x64x64xbf16> to vector<64x64xbf16>
    %c4_287 = arith.constant 4 : index
    %c0_288 = arith.constant 0 : index
    %c0_289 = arith.constant 0 : index
    %261 = vector.load %arg4[%c4_287, %c0_288, %c0_289] : memref<8x64x64xbf16, #tpu.memory_space<vmem>>, vector<1x64x64xbf16>
    %262 = vector.shape_cast %261 : vector<1x64x64xbf16> to vector<64x64xbf16>
    %cst_290 = arith.constant dense<0.000000e+00> : vector<64x64xf32>
    %263 = tpu.matmul %260, %262, %cst_290 {dimension_numbers = #tpu.dot_dimension_numbers<[1], [0], [0], [1], [0, 0, 1, 1], [], []>} : vector<64x64xbf16>, vector<64x64xbf16>, vector<64x64xf32> -> vector<64x64xf32>
    %c1_291 = arith.constant 1 : index
    %c0_292 = arith.constant 0 : index
    %c0_293 = arith.constant 0 : index
    %264 = vector.load %arg12[%c1_291, %c0_292, %c0_293] : memref<4x64x64xf32, #tpu.memory_space<vmem>>, vector<1x64x64xf32>
    %265 = vector.shape_cast %264 : vector<1x64x64xf32> to vector<64x64xf32>
    %266 = arith.addf %265, %263 : vector<64x64xf32>
    %c1_294 = arith.constant 1 : index
    %c0_295 = arith.constant 0 : index
    %c0_296 = arith.constant 0 : index
    %267 = vector.load %arg12[%c1_294, %c0_295, %c0_296] : memref<4x64x64xf32, #tpu.memory_space<vmem>>, vector<1x64x64xf32>
    %268 = vector.shape_cast %267 : vector<1x64x64xf32> to vector<64x64xf32>
    %269 = vector.shape_cast %266 : vector<64x64xf32> to vector<1x64x64xf32>
    tpu.vector_store %arg12[%c1_294, %c0_295, %c0_296], %269 {strides = array<i32>} : memref<4x64x64xf32, #tpu.memory_space<vmem>>, vector<1x64x64xf32>,
    %c2_297 = arith.constant 2 : index
    %c0_298 = arith.constant 0 : index
    %c16_299 = arith.constant 16 : index
    %c0_300 = arith.constant 0 : index
    %270 = vector.load %arg11[%c2_297, %c0_298, %c16_299, %c0_300] : memref<5x2x80x64xbf16, #tpu.memory_space<vmem>>, vector<1x1x64x64xbf16>
    %271 = vector.shape_cast %270 : vector<1x1x64x64xbf16> to vector<64x64xbf16>
    %c5_301 = arith.constant 5 : index
    %c0_302 = arith.constant 0 : index
    %c0_303 = arith.constant 0 : index
    %272 = vector.load %arg4[%c5_301, %c0_302, %c0_303] : memref<8x64x64xbf16, #tpu.memory_space<vmem>>, vector<1x64x64xbf16>
    %273 = vector.shape_cast %272 : vector<1x64x64xbf16> to vector<64x64xbf16>
    %cst_304 = arith.constant dense<0.000000e+00> : vector<64x64xf32>
    %274 = tpu.matmul %271, %273, %cst_304 {dimension_numbers = #tpu.dot_dimension_numbers<[1], [0], [0], [1], [0, 0, 1, 1], [], []>} : vector<64x64xbf16>, vector<64x64xbf16>, vector<64x64xf32> -> vector<64x64xf32>
    %c1_305 = arith.constant 1 : index
    %c0_306 = arith.constant 0 : index
    %c0_307 = arith.constant 0 : index
    %275 = vector.load %arg12[%c1_305, %c0_306, %c0_307] : memref<4x64x64xf32, #tpu.memory_space<vmem>>, vector<1x64x64xf32>
    %276 = vector.shape_cast %275 : vector<1x64x64xf32> to vector<64x64xf32>
    %277 = arith.addf %276, %274 : vector<64x64xf32>
    %c1_308 = arith.constant 1 : index
    %c0_309 = arith.constant 0 : index
    %c0_310 = arith.constant 0 : index
    %278 = vector.load %arg12[%c1_308, %c0_309, %c0_310] : memref<4x64x64xf32, #tpu.memory_space<vmem>>, vector<1x64x64xf32>
    %279 = vector.shape_cast %278 : vector<1x64x64xf32> to vector<64x64xf32>
    %280 = vector.shape_cast %277 : vector<64x64xf32> to vector<1x64x64xf32>
    tpu.vector_store %arg12[%c1_308, %c0_309, %c0_310], %280 {strides = array<i32>} : memref<4x64x64xf32, #tpu.memory_space<vmem>>, vector<1x64x64xf32>,
    %c2_311 = arith.constant 2 : index
    %c1_312 = arith.constant 1 : index
    %c0_313 = arith.constant 0 : index
    %c0_314 = arith.constant 0 : index
    %281 = vector.load %arg11[%c2_311, %c1_312, %c0_313, %c0_314] : memref<5x2x80x64xbf16, #tpu.memory_space<vmem>>, vector<1x1x64x64xbf16>
    %282 = vector.shape_cast %281 : vector<1x1x64x64xbf16> to vector<64x64xbf16>
    %c6_315 = arith.constant 6 : index
    %c0_316 = arith.constant 0 : index
    %c0_317 = arith.constant 0 : index
    %283 = vector.load %arg4[%c6_315, %c0_316, %c0_317] : memref<8x64x64xbf16, #tpu.memory_space<vmem>>, vector<1x64x64xbf16>
    %284 = vector.shape_cast %283 : vector<1x64x64xbf16> to vector<64x64xbf16>
    %cst_318 = arith.constant dense<0.000000e+00> : vector<64x64xf32>
    %285 = tpu.matmul %282, %284, %cst_318 {dimension_numbers = #tpu.dot_dimension_numbers<[1], [0], [0], [1], [0, 0, 1, 1], [], []>} : vector<64x64xbf16>, vector<64x64xbf16>, vector<64x64xf32> -> vector<64x64xf32>
    %c1_319 = arith.constant 1 : index
    %c0_320 = arith.constant 0 : index
    %c0_321 = arith.constant 0 : index
    %286 = vector.load %arg12[%c1_319, %c0_320, %c0_321] : memref<4x64x64xf32, #tpu.memory_space<vmem>>, vector<1x64x64xf32>
    %287 = vector.shape_cast %286 : vector<1x64x64xf32> to vector<64x64xf32>
    %288 = arith.addf %287, %285 : vector<64x64xf32>
    %c1_322 = arith.constant 1 : index
    %c0_323 = arith.constant 0 : index
    %c0_324 = arith.constant 0 : index
    %289 = vector.load %arg12[%c1_322, %c0_323, %c0_324] : memref<4x64x64xf32, #tpu.memory_space<vmem>>, vector<1x64x64xf32>
    %290 = vector.shape_cast %289 : vector<1x64x64xf32> to vector<64x64xf32>
    %291 = vector.shape_cast %288 : vector<64x64xf32> to vector<1x64x64xf32>
    tpu.vector_store %arg12[%c1_322, %c0_323, %c0_324], %291 {strides = array<i32>} : memref<4x64x64xf32, #tpu.memory_space<vmem>>, vector<1x64x64xf32>,
    %c2_325 = arith.constant 2 : index
    %c1_326 = arith.constant 1 : index
    %c16_327 = arith.constant 16 : index
    %c0_328 = arith.constant 0 : index
    %292 = vector.load %arg11[%c2_325, %c1_326, %c16_327, %c0_328] : memref<5x2x80x64xbf16, #tpu.memory_space<vmem>>, vector<1x1x64x64xbf16>
    %293 = vector.shape_cast %292 : vector<1x1x64x64xbf16> to vector<64x64xbf16>
    %c7_329 = arith.constant 7 : index
    %c0_330 = arith.constant 0 : index
    %c0_331 = arith.constant 0 : index
    %294 = vector.load %arg4[%c7_329, %c0_330, %c0_331] : memref<8x64x64xbf16, #tpu.memory_space<vmem>>, vector<1x64x64xbf16>
    %295 = vector.shape_cast %294 : vector<1x64x64xbf16> to vector<64x64xbf16>
    %cst_332 = arith.constant dense<0.000000e+00> : vector<64x64xf32>
    %296 = tpu.matmul %293, %295, %cst_332 {dimension_numbers = #tpu.dot_dimension_numbers<[1], [0], [0], [1], [0, 0, 1, 1], [], []>} : vector<64x64xbf16>, vector<64x64xbf16>, vector<64x64xf32> -> vector<64x64xf32>
    %c1_333 = arith.constant 1 : index
    %c0_334 = arith.constant 0 : index
    %c0_335 = arith.constant 0 : index
    %297 = vector.load %arg12[%c1_333, %c0_334, %c0_335] : memref<4x64x64xf32, #tpu.memory_space<vmem>>, vector<1x64x64xf32>
    %298 = vector.shape_cast %297 : vector<1x64x64xf32> to vector<64x64xf32>
    %299 = arith.addf %298, %296 : vector<64x64xf32>
    %c1_336 = arith.constant 1 : index
    %c0_337 = arith.constant 0 : index
    %c0_338 = arith.constant 0 : index
    %300 = vector.load %arg12[%c1_336, %c0_337, %c0_338] : memref<4x64x64xf32, #tpu.memory_space<vmem>>, vector<1x64x64xf32>
    %301 = vector.shape_cast %300 : vector<1x64x64xf32> to vector<64x64xf32>
    %302 = vector.shape_cast %299 : vector<64x64xf32> to vector<1x64x64xf32>
    tpu.vector_store %arg12[%c1_336, %c0_337, %c0_338], %302 {strides = array<i32>} : memref<4x64x64xf32, #tpu.memory_space<vmem>>, vector<1x64x64xf32>,
    %c1_339 = arith.constant 1 : index
    %c0_340 = arith.constant 0 : index
    %c0_341 = arith.constant 0 : index
    %303 = vector.load %arg12[%c1_339, %c0_340, %c0_341] : memref<4x64x64xf32, #tpu.memory_space<vmem>>, vector<1x64x64xf32>
    %304 = vector.shape_cast %303 : vector<1x64x64xf32> to vector<64x64xf32>
    %305 = vector.broadcast %1 : vector<1x64xf32> to vector<64x64xf32>
    %306 = arith.addf %304, %305 : vector<64x64xf32>
    %cst_342 = arith.constant 0.000000e+00 : f32
    %307 = vector.broadcast %cst_342 : f32 to vector<64x64xf32>
    %308 = arith.maximumf %306, %307 : vector<64x64xf32>
    %309 = arith.truncf %308 : vector<64x64xf32> to vector<64x64xbf16>
    %c1_343 = arith.constant 1 : index
    %c0_344 = arith.constant 0 : index
    %c0_345 = arith.constant 0 : index
    %310 = vector.load %arg13[%c1_343, %c0_344, %c0_345] : memref<4x64x64xbf16, #tpu.memory_space<vmem>>, vector<1x64x64xbf16>
    %311 = vector.shape_cast %310 : vector<1x64x64xbf16> to vector<64x64xbf16>
    %312 = vector.shape_cast %309 : vector<64x64xbf16> to vector<1x64x64xbf16>
    tpu.vector_store %arg13[%c1_343, %c0_344, %c0_345], %312 {strides = array<i32>} : memref<4x64x64xbf16, #tpu.memory_space<vmem>>, vector<1x64x64xbf16>,
    %c2_346 = arith.constant 2 : index
    %c0_347 = arith.constant 0 : index
    %c0_348 = arith.constant 0 : index
    %c0_349 = arith.constant 0 : index
    %313 = vector.load %arg11[%c2_346, %c0_347, %c0_348, %c0_349] : memref<5x2x80x64xbf16, #tpu.memory_space<vmem>>, vector<1x1x64x64xbf16>
    %314 = vector.shape_cast %313 : vector<1x1x64x64xbf16> to vector<64x64xbf16>
    %c0_350 = arith.constant 0 : index
    %c0_351 = arith.constant 0 : index
    %c0_352 = arith.constant 0 : index
    %315 = vector.load %arg4[%c0_350, %c0_351, %c0_352] : memref<8x64x64xbf16, #tpu.memory_space<vmem>>, vector<1x64x64xbf16>
    %316 = vector.shape_cast %315 : vector<1x64x64xbf16> to vector<64x64xbf16>
    %cst_353 = arith.constant dense<0.000000e+00> : vector<64x64xf32>
    %317 = tpu.matmul %314, %316, %cst_353 {dimension_numbers = #tpu.dot_dimension_numbers<[1], [0], [0], [1], [0, 0, 1, 1], [], []>} : vector<64x64xbf16>, vector<64x64xbf16>, vector<64x64xf32> -> vector<64x64xf32>
    %c2_354 = arith.constant 2 : index
    %c0_355 = arith.constant 0 : index
    %c0_356 = arith.constant 0 : index
    %318 = vector.load %arg12[%c2_354, %c0_355, %c0_356] : memref<4x64x64xf32, #tpu.memory_space<vmem>>, vector<1x64x64xf32>
    %319 = vector.shape_cast %318 : vector<1x64x64xf32> to vector<64x64xf32>
    %320 = vector.shape_cast %317 : vector<64x64xf32> to vector<1x64x64xf32>
    tpu.vector_store %arg12[%c2_354, %c0_355, %c0_356], %320 {strides = array<i32>} : memref<4x64x64xf32, #tpu.memory_space<vmem>>, vector<1x64x64xf32>,
    %c2_357 = arith.constant 2 : index
    %c0_358 = arith.constant 0 : index
    %c16_359 = arith.constant 16 : index
    %c0_360 = arith.constant 0 : index
    %321 = vector.load %arg11[%c2_357, %c0_358, %c16_359, %c0_360] : memref<5x2x80x64xbf16, #tpu.memory_space<vmem>>, vector<1x1x64x64xbf16>
    %322 = vector.shape_cast %321 : vector<1x1x64x64xbf16> to vector<64x64xbf16>
    %c1_361 = arith.constant 1 : index
    %c0_362 = arith.constant 0 : index
    %c0_363 = arith.constant 0 : index
    %323 = vector.load %arg4[%c1_361, %c0_362, %c0_363] : memref<8x64x64xbf16, #tpu.memory_space<vmem>>, vector<1x64x64xbf16>
    %324 = vector.shape_cast %323 : vector<1x64x64xbf16> to vector<64x64xbf16>
    %cst_364 = arith.constant dense<0.000000e+00> : vector<64x64xf32>
    %325 = tpu.matmul %322, %324, %cst_364 {dimension_numbers = #tpu.dot_dimension_numbers<[1], [0], [0], [1], [0, 0, 1, 1], [], []>} : vector<64x64xbf16>, vector<64x64xbf16>, vector<64x64xf32> -> vector<64x64xf32>
    %c2_365 = arith.constant 2 : index
    %c0_366 = arith.constant 0 : index
    %c0_367 = arith.constant 0 : index
    %326 = vector.load %arg12[%c2_365, %c0_366, %c0_367] : memref<4x64x64xf32, #tpu.memory_space<vmem>>, vector<1x64x64xf32>
    %327 = vector.shape_cast %326 : vector<1x64x64xf32> to vector<64x64xf32>
    %328 = arith.addf %327, %325 : vector<64x64xf32>
    %c2_368 = arith.constant 2 : index
    %c0_369 = arith.constant 0 : index
    %c0_370 = arith.constant 0 : index
    %329 = vector.load %arg12[%c2_368, %c0_369, %c0_370] : memref<4x64x64xf32, #tpu.memory_space<vmem>>, vector<1x64x64xf32>
    %330 = vector.shape_cast %329 : vector<1x64x64xf32> to vector<64x64xf32>
    %331 = vector.shape_cast %328 : vector<64x64xf32> to vector<1x64x64xf32>
    tpu.vector_store %arg12[%c2_368, %c0_369, %c0_370], %331 {strides = array<i32>} : memref<4x64x64xf32, #tpu.memory_space<vmem>>, vector<1x64x64xf32>,
    %c2_371 = arith.constant 2 : index
    %c1_372 = arith.constant 1 : index
    %c0_373 = arith.constant 0 : index
    %c0_374 = arith.constant 0 : index
    %332 = vector.load %arg11[%c2_371, %c1_372, %c0_373, %c0_374] : memref<5x2x80x64xbf16, #tpu.memory_space<vmem>>, vector<1x1x64x64xbf16>
    %333 = vector.shape_cast %332 : vector<1x1x64x64xbf16> to vector<64x64xbf16>
    %c2_375 = arith.constant 2 : index
    %c0_376 = arith.constant 0 : index
    %c0_377 = arith.constant 0 : index
    %334 = vector.load %arg4[%c2_375, %c0_376, %c0_377] : memref<8x64x64xbf16, #tpu.memory_space<vmem>>, vector<1x64x64xbf16>
    %335 = vector.shape_cast %334 : vector<1x64x64xbf16> to vector<64x64xbf16>
    %cst_378 = arith.constant dense<0.000000e+00> : vector<64x64xf32>
    %336 = tpu.matmul %333, %335, %cst_378 {dimension_numbers = #tpu.dot_dimension_numbers<[1], [0], [0], [1], [0, 0, 1, 1], [], []>} : vector<64x64xbf16>, vector<64x64xbf16>, vector<64x64xf32> -> vector<64x64xf32>
    %c2_379 = arith.constant 2 : index
    %c0_380 = arith.constant 0 : index
    %c0_381 = arith.constant 0 : index
    %337 = vector.load %arg12[%c2_379, %c0_380, %c0_381] : memref<4x64x64xf32, #tpu.memory_space<vmem>>, vector<1x64x64xf32>
    %338 = vector.shape_cast %337 : vector<1x64x64xf32> to vector<64x64xf32>
    %339 = arith.addf %338, %336 : vector<64x64xf32>
    %c2_382 = arith.constant 2 : index
    %c0_383 = arith.constant 0 : index
    %c0_384 = arith.constant 0 : index
    %340 = vector.load %arg12[%c2_382, %c0_383, %c0_384] : memref<4x64x64xf32, #tpu.memory_space<vmem>>, vector<1x64x64xf32>
    %341 = vector.shape_cast %340 : vector<1x64x64xf32> to vector<64x64xf32>
    %342 = vector.shape_cast %339 : vector<64x64xf32> to vector<1x64x64xf32>
    tpu.vector_store %arg12[%c2_382, %c0_383, %c0_384], %342 {strides = array<i32>} : memref<4x64x64xf32, #tpu.memory_space<vmem>>, vector<1x64x64xf32>,
    %c2_385 = arith.constant 2 : index
    %c1_386 = arith.constant 1 : index
    %c16_387 = arith.constant 16 : index
    %c0_388 = arith.constant 0 : index
    %343 = vector.load %arg11[%c2_385, %c1_386, %c16_387, %c0_388] : memref<5x2x80x64xbf16, #tpu.memory_space<vmem>>, vector<1x1x64x64xbf16>
    %344 = vector.shape_cast %343 : vector<1x1x64x64xbf16> to vector<64x64xbf16>
    %c3_389 = arith.constant 3 : index
    %c0_390 = arith.constant 0 : index
    %c0_391 = arith.constant 0 : index
    %345 = vector.load %arg4[%c3_389, %c0_390, %c0_391] : memref<8x64x64xbf16, #tpu.memory_space<vmem>>, vector<1x64x64xbf16>
    %346 = vector.shape_cast %345 : vector<1x64x64xbf16> to vector<64x64xbf16>
    %cst_392 = arith.constant dense<0.000000e+00> : vector<64x64xf32>
    %347 = tpu.matmul %344, %346, %cst_392 {dimension_numbers = #tpu.dot_dimension_numbers<[1], [0], [0], [1], [0, 0, 1, 1], [], []>} : vector<64x64xbf16>, vector<64x64xbf16>, vector<64x64xf32> -> vector<64x64xf32>
    %c2_393 = arith.constant 2 : index
    %c0_394 = arith.constant 0 : index
    %c0_395 = arith.constant 0 : index
    %348 = vector.load %arg12[%c2_393, %c0_394, %c0_395] : memref<4x64x64xf32, #tpu.memory_space<vmem>>, vector<1x64x64xf32>
    %349 = vector.shape_cast %348 : vector<1x64x64xf32> to vector<64x64xf32>
    %350 = arith.addf %349, %347 : vector<64x64xf32>
    %c2_396 = arith.constant 2 : index
    %c0_397 = arith.constant 0 : index
    %c0_398 = arith.constant 0 : index
    %351 = vector.load %arg12[%c2_396, %c0_397, %c0_398] : memref<4x64x64xf32, #tpu.memory_space<vmem>>, vector<1x64x64xf32>
    %352 = vector.shape_cast %351 : vector<1x64x64xf32> to vector<64x64xf32>
    %353 = vector.shape_cast %350 : vector<64x64xf32> to vector<1x64x64xf32>
    tpu.vector_store %arg12[%c2_396, %c0_397, %c0_398], %353 {strides = array<i32>} : memref<4x64x64xf32, #tpu.memory_space<vmem>>, vector<1x64x64xf32>,
    %c3_399 = arith.constant 3 : index
    %c0_400 = arith.constant 0 : index
    %c0_401 = arith.constant 0 : index
    %c0_402 = arith.constant 0 : index
    %354 = vector.load %arg11[%c3_399, %c0_400, %c0_401, %c0_402] : memref<5x2x80x64xbf16, #tpu.memory_space<vmem>>, vector<1x1x64x64xbf16>
    %355 = vector.shape_cast %354 : vector<1x1x64x64xbf16> to vector<64x64xbf16>
    %c4_403 = arith.constant 4 : index
    %c0_404 = arith.constant 0 : index
    %c0_405 = arith.constant 0 : index
    %356 = vector.load %arg4[%c4_403, %c0_404, %c0_405] : memref<8x64x64xbf16, #tpu.memory_space<vmem>>, vector<1x64x64xbf16>
    %357 = vector.shape_cast %356 : vector<1x64x64xbf16> to vector<64x64xbf16>
    %cst_406 = arith.constant dense<0.000000e+00> : vector<64x64xf32>
    %358 = tpu.matmul %355, %357, %cst_406 {dimension_numbers = #tpu.dot_dimension_numbers<[1], [0], [0], [1], [0, 0, 1, 1], [], []>} : vector<64x64xbf16>, vector<64x64xbf16>, vector<64x64xf32> -> vector<64x64xf32>
    %c2_407 = arith.constant 2 : index
    %c0_408 = arith.constant 0 : index
    %c0_409 = arith.constant 0 : index
    %359 = vector.load %arg12[%c2_407, %c0_408, %c0_409] : memref<4x64x64xf32, #tpu.memory_space<vmem>>, vector<1x64x64xf32>
    %360 = vector.shape_cast %359 : vector<1x64x64xf32> to vector<64x64xf32>
    %361 = arith.addf %360, %358 : vector<64x64xf32>
    %c2_410 = arith.constant 2 : index
    %c0_411 = arith.constant 0 : index
    %c0_412 = arith.constant 0 : index
    %362 = vector.load %arg12[%c2_410, %c0_411, %c0_412] : memref<4x64x64xf32, #tpu.memory_space<vmem>>, vector<1x64x64xf32>
    %363 = vector.shape_cast %362 : vector<1x64x64xf32> to vector<64x64xf32>
    %364 = vector.shape_cast %361 : vector<64x64xf32> to vector<1x64x64xf32>
    tpu.vector_store %arg12[%c2_410, %c0_411, %c0_412], %364 {strides = array<i32>} : memref<4x64x64xf32, #tpu.memory_space<vmem>>, vector<1x64x64xf32>,
    %c3_413 = arith.constant 3 : index
    %c0_414 = arith.constant 0 : index
    %c16_415 = arith.constant 16 : index
    %c0_416 = arith.constant 0 : index
    %365 = vector.load %arg11[%c3_413, %c0_414, %c16_415, %c0_416] : memref<5x2x80x64xbf16, #tpu.memory_space<vmem>>, vector<1x1x64x64xbf16>
    %366 = vector.shape_cast %365 : vector<1x1x64x64xbf16> to vector<64x64xbf16>
    %c5_417 = arith.constant 5 : index
    %c0_418 = arith.constant 0 : index
    %c0_419 = arith.constant 0 : index
    %367 = vector.load %arg4[%c5_417, %c0_418, %c0_419] : memref<8x64x64xbf16, #tpu.memory_space<vmem>>, vector<1x64x64xbf16>
    %368 = vector.shape_cast %367 : vector<1x64x64xbf16> to vector<64x64xbf16>
    %cst_420 = arith.constant dense<0.000000e+00> : vector<64x64xf32>
    %369 = tpu.matmul %366, %368, %cst_420 {dimension_numbers = #tpu.dot_dimension_numbers<[1], [0], [0], [1], [0, 0, 1, 1], [], []>} : vector<64x64xbf16>, vector<64x64xbf16>, vector<64x64xf32> -> vector<64x64xf32>
    %c2_421 = arith.constant 2 : index
    %c0_422 = arith.constant 0 : index
    %c0_423 = arith.constant 0 : index
    %370 = vector.load %arg12[%c2_421, %c0_422, %c0_423] : memref<4x64x64xf32, #tpu.memory_space<vmem>>, vector<1x64x64xf32>
    %371 = vector.shape_cast %370 : vector<1x64x64xf32> to vector<64x64xf32>
    %372 = arith.addf %371, %369 : vector<64x64xf32>
    %c2_424 = arith.constant 2 : index
    %c0_425 = arith.constant 0 : index
    %c0_426 = arith.constant 0 : index
    %373 = vector.load %arg12[%c2_424, %c0_425, %c0_426] : memref<4x64x64xf32, #tpu.memory_space<vmem>>, vector<1x64x64xf32>
    %374 = vector.shape_cast %373 : vector<1x64x64xf32> to vector<64x64xf32>
    %375 = vector.shape_cast %372 : vector<64x64xf32> to vector<1x64x64xf32>
    tpu.vector_store %arg12[%c2_424, %c0_425, %c0_426], %375 {strides = array<i32>} : memref<4x64x64xf32, #tpu.memory_space<vmem>>, vector<1x64x64xf32>,
    %c3_427 = arith.constant 3 : index
    %c1_428 = arith.constant 1 : index
    %c0_429 = arith.constant 0 : index
    %c0_430 = arith.constant 0 : index
    %376 = vector.load %arg11[%c3_427, %c1_428, %c0_429, %c0_430] : memref<5x2x80x64xbf16, #tpu.memory_space<vmem>>, vector<1x1x64x64xbf16>
    %377 = vector.shape_cast %376 : vector<1x1x64x64xbf16> to vector<64x64xbf16>
    %c6_431 = arith.constant 6 : index
    %c0_432 = arith.constant 0 : index
    %c0_433 = arith.constant 0 : index
    %378 = vector.load %arg4[%c6_431, %c0_432, %c0_433] : memref<8x64x64xbf16, #tpu.memory_space<vmem>>, vector<1x64x64xbf16>
    %379 = vector.shape_cast %378 : vector<1x64x64xbf16> to vector<64x64xbf16>
    %cst_434 = arith.constant dense<0.000000e+00> : vector<64x64xf32>
    %380 = tpu.matmul %377, %379, %cst_434 {dimension_numbers = #tpu.dot_dimension_numbers<[1], [0], [0], [1], [0, 0, 1, 1], [], []>} : vector<64x64xbf16>, vector<64x64xbf16>, vector<64x64xf32> -> vector<64x64xf32>
    %c2_435 = arith.constant 2 : index
    %c0_436 = arith.constant 0 : index
    %c0_437 = arith.constant 0 : index
    %381 = vector.load %arg12[%c2_435, %c0_436, %c0_437] : memref<4x64x64xf32, #tpu.memory_space<vmem>>, vector<1x64x64xf32>
    %382 = vector.shape_cast %381 : vector<1x64x64xf32> to vector<64x64xf32>
    %383 = arith.addf %382, %380 : vector<64x64xf32>
    %c2_438 = arith.constant 2 : index
    %c0_439 = arith.constant 0 : index
    %c0_440 = arith.constant 0 : index
    %384 = vector.load %arg12[%c2_438, %c0_439, %c0_440] : memref<4x64x64xf32, #tpu.memory_space<vmem>>, vector<1x64x64xf32>
    %385 = vector.shape_cast %384 : vector<1x64x64xf32> to vector<64x64xf32>
    %386 = vector.shape_cast %383 : vector<64x64xf32> to vector<1x64x64xf32>
    tpu.vector_store %arg12[%c2_438, %c0_439, %c0_440], %386 {strides = array<i32>} : memref<4x64x64xf32, #tpu.memory_space<vmem>>, vector<1x64x64xf32>,
    %c3_441 = arith.constant 3 : index
    %c1_442 = arith.constant 1 : index
    %c16_443 = arith.constant 16 : index
    %c0_444 = arith.constant 0 : index
    %387 = vector.load %arg11[%c3_441, %c1_442, %c16_443, %c0_444] : memref<5x2x80x64xbf16, #tpu.memory_space<vmem>>, vector<1x1x64x64xbf16>
    %388 = vector.shape_cast %387 : vector<1x1x64x64xbf16> to vector<64x64xbf16>
    %c7_445 = arith.constant 7 : index
    %c0_446 = arith.constant 0 : index
    %c0_447 = arith.constant 0 : index
    %389 = vector.load %arg4[%c7_445, %c0_446, %c0_447] : memref<8x64x64xbf16, #tpu.memory_space<vmem>>, vector<1x64x64xbf16>
    %390 = vector.shape_cast %389 : vector<1x64x64xbf16> to vector<64x64xbf16>
    %cst_448 = arith.constant dense<0.000000e+00> : vector<64x64xf32>
    %391 = tpu.matmul %388, %390, %cst_448 {dimension_numbers = #tpu.dot_dimension_numbers<[1], [0], [0], [1], [0, 0, 1, 1], [], []>} : vector<64x64xbf16>, vector<64x64xbf16>, vector<64x64xf32> -> vector<64x64xf32>
    %c2_449 = arith.constant 2 : index
    %c0_450 = arith.constant 0 : index
    %c0_451 = arith.constant 0 : index
    %392 = vector.load %arg12[%c2_449, %c0_450, %c0_451] : memref<4x64x64xf32, #tpu.memory_space<vmem>>, vector<1x64x64xf32>
    %393 = vector.shape_cast %392 : vector<1x64x64xf32> to vector<64x64xf32>
    %394 = arith.addf %393, %391 : vector<64x64xf32>
    %c2_452 = arith.constant 2 : index
    %c0_453 = arith.constant 0 : index
    %c0_454 = arith.constant 0 : index
    %395 = vector.load %arg12[%c2_452, %c0_453, %c0_454] : memref<4x64x64xf32, #tpu.memory_space<vmem>>, vector<1x64x64xf32>
    %396 = vector.shape_cast %395 : vector<1x64x64xf32> to vector<64x64xf32>
    %397 = vector.shape_cast %394 : vector<64x64xf32> to vector<1x64x64xf32>
    tpu.vector_store %arg12[%c2_452, %c0_453, %c0_454], %397 {strides = array<i32>} : memref<4x64x64xf32, #tpu.memory_space<vmem>>, vector<1x64x64xf32>,
    %c2_455 = arith.constant 2 : index
    %c0_456 = arith.constant 0 : index
    %c0_457 = arith.constant 0 : index
    %398 = vector.load %arg12[%c2_455, %c0_456, %c0_457] : memref<4x64x64xf32, #tpu.memory_space<vmem>>, vector<1x64x64xf32>
    %399 = vector.shape_cast %398 : vector<1x64x64xf32> to vector<64x64xf32>
    %400 = vector.broadcast %1 : vector<1x64xf32> to vector<64x64xf32>
    %401 = arith.addf %399, %400 : vector<64x64xf32>
    %cst_458 = arith.constant 0.000000e+00 : f32
    %402 = vector.broadcast %cst_458 : f32 to vector<64x64xf32>
    %403 = arith.maximumf %401, %402 : vector<64x64xf32>
    %404 = arith.truncf %403 : vector<64x64xf32> to vector<64x64xbf16>
    %c2_459 = arith.constant 2 : index
    %c0_460 = arith.constant 0 : index
    %c0_461 = arith.constant 0 : index
    %405 = vector.load %arg13[%c2_459, %c0_460, %c0_461] : memref<4x64x64xbf16, #tpu.memory_space<vmem>>, vector<1x64x64xbf16>
    %406 = vector.shape_cast %405 : vector<1x64x64xbf16> to vector<64x64xbf16>
    %407 = vector.shape_cast %404 : vector<64x64xbf16> to vector<1x64x64xbf16>
    tpu.vector_store %arg13[%c2_459, %c0_460, %c0_461], %407 {strides = array<i32>} : memref<4x64x64xbf16, #tpu.memory_space<vmem>>, vector<1x64x64xbf16>,
    %c3_462 = arith.constant 3 : index
    %c0_463 = arith.constant 0 : index
    %c0_464 = arith.constant 0 : index
    %c0_465 = arith.constant 0 : index
    %408 = vector.load %arg11[%c3_462, %c0_463, %c0_464, %c0_465] : memref<5x2x80x64xbf16, #tpu.memory_space<vmem>>, vector<1x1x64x64xbf16>
    %409 = vector.shape_cast %408 : vector<1x1x64x64xbf16> to vector<64x64xbf16>
    %c0_466 = arith.constant 0 : index
    %c0_467 = arith.constant 0 : index
    %c0_468 = arith.constant 0 : index
    %410 = vector.load %arg4[%c0_466, %c0_467, %c0_468] : memref<8x64x64xbf16, #tpu.memory_space<vmem>>, vector<1x64x64xbf16>
    %411 = vector.shape_cast %410 : vector<1x64x64xbf16> to vector<64x64xbf16>
    %cst_469 = arith.constant dense<0.000000e+00> : vector<64x64xf32>
    %412 = tpu.matmul %409, %411, %cst_469 {dimension_numbers = #tpu.dot_dimension_numbers<[1], [0], [0], [1], [0, 0, 1, 1], [], []>} : vector<64x64xbf16>, vector<64x64xbf16>, vector<64x64xf32> -> vector<64x64xf32>
    %c3_470 = arith.constant 3 : index
    %c0_471 = arith.constant 0 : index
    %c0_472 = arith.constant 0 : index
    %413 = vector.load %arg12[%c3_470, %c0_471, %c0_472] : memref<4x64x64xf32, #tpu.memory_space<vmem>>, vector<1x64x64xf32>
    %414 = vector.shape_cast %413 : vector<1x64x64xf32> to vector<64x64xf32>
    %415 = vector.shape_cast %412 : vector<64x64xf32> to vector<1x64x64xf32>
    tpu.vector_store %arg12[%c3_470, %c0_471, %c0_472], %415 {strides = array<i32>} : memref<4x64x64xf32, #tpu.memory_space<vmem>>, vector<1x64x64xf32>,
    %c3_473 = arith.constant 3 : index
    %c0_474 = arith.constant 0 : index
    %c16_475 = arith.constant 16 : index
    %c0_476 = arith.constant 0 : index
    %416 = vector.load %arg11[%c3_473, %c0_474, %c16_475, %c0_476] : memref<5x2x80x64xbf16, #tpu.memory_space<vmem>>, vector<1x1x64x64xbf16>
    %417 = vector.shape_cast %416 : vector<1x1x64x64xbf16> to vector<64x64xbf16>
    %c1_477 = arith.constant 1 : index
    %c0_478 = arith.constant 0 : index
    %c0_479 = arith.constant 0 : index
    %418 = vector.load %arg4[%c1_477, %c0_478, %c0_479] : memref<8x64x64xbf16, #tpu.memory_space<vmem>>, vector<1x64x64xbf16>
    %419 = vector.shape_cast %418 : vector<1x64x64xbf16> to vector<64x64xbf16>
    %cst_480 = arith.constant dense<0.000000e+00> : vector<64x64xf32>
    %420 = tpu.matmul %417, %419, %cst_480 {dimension_numbers = #tpu.dot_dimension_numbers<[1], [0], [0], [1], [0, 0, 1, 1], [], []>} : vector<64x64xbf16>, vector<64x64xbf16>, vector<64x64xf32> -> vector<64x64xf32>
    %c3_481 = arith.constant 3 : index
    %c0_482 = arith.constant 0 : index
    %c0_483 = arith.constant 0 : index
    %421 = vector.load %arg12[%c3_481, %c0_482, %c0_483] : memref<4x64x64xf32, #tpu.memory_space<vmem>>, vector<1x64x64xf32>
    %422 = vector.shape_cast %421 : vector<1x64x64xf32> to vector<64x64xf32>
    %423 = arith.addf %422, %420 : vector<64x64xf32>
    %c3_484 = arith.constant 3 : index
    %c0_485 = arith.constant 0 : index
    %c0_486 = arith.constant 0 : index
    %424 = vector.load %arg12[%c3_484, %c0_485, %c0_486] : memref<4x64x64xf32, #tpu.memory_space<vmem>>, vector<1x64x64xf32>
    %425 = vector.shape_cast %424 : vector<1x64x64xf32> to vector<64x64xf32>
    %426 = vector.shape_cast %423 : vector<64x64xf32> to vector<1x64x64xf32>
    tpu.vector_store %arg12[%c3_484, %c0_485, %c0_486], %426 {strides = array<i32>} : memref<4x64x64xf32, #tpu.memory_space<vmem>>, vector<1x64x64xf32>,
    %c3_487 = arith.constant 3 : index
    %c1_488 = arith.constant 1 : index
    %c0_489 = arith.constant 0 : index
    %c0_490 = arith.constant 0 : index
    %427 = vector.load %arg11[%c3_487, %c1_488, %c0_489, %c0_490] : memref<5x2x80x64xbf16, #tpu.memory_space<vmem>>, vector<1x1x64x64xbf16>
    %428 = vector.shape_cast %427 : vector<1x1x64x64xbf16> to vector<64x64xbf16>
    %c2_491 = arith.constant 2 : index
    %c0_492 = arith.constant 0 : index
    %c0_493 = arith.constant 0 : index
    %429 = vector.load %arg4[%c2_491, %c0_492, %c0_493] : memref<8x64x64xbf16, #tpu.memory_space<vmem>>, vector<1x64x64xbf16>
    %430 = vector.shape_cast %429 : vector<1x64x64xbf16> to vector<64x64xbf16>
    %cst_494 = arith.constant dense<0.000000e+00> : vector<64x64xf32>
    %431 = tpu.matmul %428, %430, %cst_494 {dimension_numbers = #tpu.dot_dimension_numbers<[1], [0], [0], [1], [0, 0, 1, 1], [], []>} : vector<64x64xbf16>, vector<64x64xbf16>, vector<64x64xf32> -> vector<64x64xf32>
    %c3_495 = arith.constant 3 : index
    %c0_496 = arith.constant 0 : index
    %c0_497 = arith.constant 0 : index
    %432 = vector.load %arg12[%c3_495, %c0_496, %c0_497] : memref<4x64x64xf32, #tpu.memory_space<vmem>>, vector<1x64x64xf32>
    %433 = vector.shape_cast %432 : vector<1x64x64xf32> to vector<64x64xf32>
    %434 = arith.addf %433, %431 : vector<64x64xf32>
    %c3_498 = arith.constant 3 : index
    %c0_499 = arith.constant 0 : index
    %c0_500 = arith.constant 0 : index
    %435 = vector.load %arg12[%c3_498, %c0_499, %c0_500] : memref<4x64x64xf32, #tpu.memory_space<vmem>>, vector<1x64x64xf32>
    %436 = vector.shape_cast %435 : vector<1x64x64xf32> to vector<64x64xf32>
    %437 = vector.shape_cast %434 : vector<64x64xf32> to vector<1x64x64xf32>
    tpu.vector_store %arg12[%c3_498, %c0_499, %c0_500], %437 {strides = array<i32>} : memref<4x64x64xf32, #tpu.memory_space<vmem>>, vector<1x64x64xf32>,
    %c3_501 = arith.constant 3 : index
    %c1_502 = arith.constant 1 : index
    %c16_503 = arith.constant 16 : index
    %c0_504 = arith.constant 0 : index
    %438 = vector.load %arg11[%c3_501, %c1_502, %c16_503, %c0_504] : memref<5x2x80x64xbf16, #tpu.memory_space<vmem>>, vector<1x1x64x64xbf16>
    %439 = vector.shape_cast %438 : vector<1x1x64x64xbf16> to vector<64x64xbf16>
    %c3_505 = arith.constant 3 : index
    %c0_506 = arith.constant 0 : index
    %c0_507 = arith.constant 0 : index
    %440 = vector.load %arg4[%c3_505, %c0_506, %c0_507] : memref<8x64x64xbf16, #tpu.memory_space<vmem>>, vector<1x64x64xbf16>
    %441 = vector.shape_cast %440 : vector<1x64x64xbf16> to vector<64x64xbf16>
    %cst_508 = arith.constant dense<0.000000e+00> : vector<64x64xf32>
    %442 = tpu.matmul %439, %441, %cst_508 {dimension_numbers = #tpu.dot_dimension_numbers<[1], [0], [0], [1], [0, 0, 1, 1], [], []>} : vector<64x64xbf16>, vector<64x64xbf16>, vector<64x64xf32> -> vector<64x64xf32>
    %c3_509 = arith.constant 3 : index
    %c0_510 = arith.constant 0 : index
    %c0_511 = arith.constant 0 : index
    %443 = vector.load %arg12[%c3_509, %c0_510, %c0_511] : memref<4x64x64xf32, #tpu.memory_space<vmem>>, vector<1x64x64xf32>
    %444 = vector.shape_cast %443 : vector<1x64x64xf32> to vector<64x64xf32>
    %445 = arith.addf %444, %442 : vector<64x64xf32>
    %c3_512 = arith.constant 3 : index
    %c0_513 = arith.constant 0 : index
    %c0_514 = arith.constant 0 : index
    %446 = vector.load %arg12[%c3_512, %c0_513, %c0_514] : memref<4x64x64xf32, #tpu.memory_space<vmem>>, vector<1x64x64xf32>
    %447 = vector.shape_cast %446 : vector<1x64x64xf32> to vector<64x64xf32>
    %448 = vector.shape_cast %445 : vector<64x64xf32> to vector<1x64x64xf32>
    tpu.vector_store %arg12[%c3_512, %c0_513, %c0_514], %448 {strides = array<i32>} : memref<4x64x64xf32, #tpu.memory_space<vmem>>, vector<1x64x64xf32>,
    %c4_515 = arith.constant 4 : index
    %c0_516 = arith.constant 0 : index
    %c0_517 = arith.constant 0 : index
    %c0_518 = arith.constant 0 : index
    %449 = vector.load %arg11[%c4_515, %c0_516, %c0_517, %c0_518] : memref<5x2x80x64xbf16, #tpu.memory_space<vmem>>, vector<1x1x64x64xbf16>
    %450 = vector.shape_cast %449 : vector<1x1x64x64xbf16> to vector<64x64xbf16>
    %c4_519 = arith.constant 4 : index
    %c0_520 = arith.constant 0 : index
    %c0_521 = arith.constant 0 : index
    %451 = vector.load %arg4[%c4_519, %c0_520, %c0_521] : memref<8x64x64xbf16, #tpu.memory_space<vmem>>, vector<1x64x64xbf16>
    %452 = vector.shape_cast %451 : vector<1x64x64xbf16> to vector<64x64xbf16>
    %cst_522 = arith.constant dense<0.000000e+00> : vector<64x64xf32>
    %453 = tpu.matmul %450, %452, %cst_522 {dimension_numbers = #tpu.dot_dimension_numbers<[1], [0], [0], [1], [0, 0, 1, 1], [], []>} : vector<64x64xbf16>, vector<64x64xbf16>, vector<64x64xf32> -> vector<64x64xf32>
    %c3_523 = arith.constant 3 : index
    %c0_524 = arith.constant 0 : index
    %c0_525 = arith.constant 0 : index
    %454 = vector.load %arg12[%c3_523, %c0_524, %c0_525] : memref<4x64x64xf32, #tpu.memory_space<vmem>>, vector<1x64x64xf32>
    %455 = vector.shape_cast %454 : vector<1x64x64xf32> to vector<64x64xf32>
    %456 = arith.addf %455, %453 : vector<64x64xf32>
    %c3_526 = arith.constant 3 : index
    %c0_527 = arith.constant 0 : index
    %c0_528 = arith.constant 0 : index
    %457 = vector.load %arg12[%c3_526, %c0_527, %c0_528] : memref<4x64x64xf32, #tpu.memory_space<vmem>>, vector<1x64x64xf32>
    %458 = vector.shape_cast %457 : vector<1x64x64xf32> to vector<64x64xf32>
    %459 = vector.shape_cast %456 : vector<64x64xf32> to vector<1x64x64xf32>
    tpu.vector_store %arg12[%c3_526, %c0_527, %c0_528], %459 {strides = array<i32>} : memref<4x64x64xf32, #tpu.memory_space<vmem>>, vector<1x64x64xf32>,
    %c4_529 = arith.constant 4 : index
    %c0_530 = arith.constant 0 : index
    %c16_531 = arith.constant 16 : index
    %c0_532 = arith.constant 0 : index
    %460 = vector.load %arg11[%c4_529, %c0_530, %c16_531, %c0_532] : memref<5x2x80x64xbf16, #tpu.memory_space<vmem>>, vector<1x1x64x64xbf16>
    %461 = vector.shape_cast %460 : vector<1x1x64x64xbf16> to vector<64x64xbf16>
    %c5_533 = arith.constant 5 : index
    %c0_534 = arith.constant 0 : index
    %c0_535 = arith.constant 0 : index
    %462 = vector.load %arg4[%c5_533, %c0_534, %c0_535] : memref<8x64x64xbf16, #tpu.memory_space<vmem>>, vector<1x64x64xbf16>
    %463 = vector.shape_cast %462 : vector<1x64x64xbf16> to vector<64x64xbf16>
    %cst_536 = arith.constant dense<0.000000e+00> : vector<64x64xf32>
    %464 = tpu.matmul %461, %463, %cst_536 {dimension_numbers = #tpu.dot_dimension_numbers<[1], [0], [0], [1], [0, 0, 1, 1], [], []>} : vector<64x64xbf16>, vector<64x64xbf16>, vector<64x64xf32> -> vector<64x64xf32>
    %c3_537 = arith.constant 3 : index
    %c0_538 = arith.constant 0 : index
    %c0_539 = arith.constant 0 : index
    %465 = vector.load %arg12[%c3_537, %c0_538, %c0_539] : memref<4x64x64xf32, #tpu.memory_space<vmem>>, vector<1x64x64xf32>
    %466 = vector.shape_cast %465 : vector<1x64x64xf32> to vector<64x64xf32>
    %467 = arith.addf %466, %464 : vector<64x64xf32>
    %c3_540 = arith.constant 3 : index
    %c0_541 = arith.constant 0 : index
    %c0_542 = arith.constant 0 : index
    %468 = vector.load %arg12[%c3_540, %c0_541, %c0_542] : memref<4x64x64xf32, #tpu.memory_space<vmem>>, vector<1x64x64xf32>
    %469 = vector.shape_cast %468 : vector<1x64x64xf32> to vector<64x64xf32>
    %470 = vector.shape_cast %467 : vector<64x64xf32> to vector<1x64x64xf32>
    tpu.vector_store %arg12[%c3_540, %c0_541, %c0_542], %470 {strides = array<i32>} : memref<4x64x64xf32, #tpu.memory_space<vmem>>, vector<1x64x64xf32>,
    %c4_543 = arith.constant 4 : index
    %c1_544 = arith.constant 1 : index
    %c0_545 = arith.constant 0 : index
    %c0_546 = arith.constant 0 : index
    %471 = vector.load %arg11[%c4_543, %c1_544, %c0_545, %c0_546] : memref<5x2x80x64xbf16, #tpu.memory_space<vmem>>, vector<1x1x64x64xbf16>
    %472 = vector.shape_cast %471 : vector<1x1x64x64xbf16> to vector<64x64xbf16>
    %c6_547 = arith.constant 6 : index
    %c0_548 = arith.constant 0 : index
    %c0_549 = arith.constant 0 : index
    %473 = vector.load %arg4[%c6_547, %c0_548, %c0_549] : memref<8x64x64xbf16, #tpu.memory_space<vmem>>, vector<1x64x64xbf16>
    %474 = vector.shape_cast %473 : vector<1x64x64xbf16> to vector<64x64xbf16>
    %cst_550 = arith.constant dense<0.000000e+00> : vector<64x64xf32>
    %475 = tpu.matmul %472, %474, %cst_550 {dimension_numbers = #tpu.dot_dimension_numbers<[1], [0], [0], [1], [0, 0, 1, 1], [], []>} : vector<64x64xbf16>, vector<64x64xbf16>, vector<64x64xf32> -> vector<64x64xf32>
    %c3_551 = arith.constant 3 : index
    %c0_552 = arith.constant 0 : index
    %c0_553 = arith.constant 0 : index
    %476 = vector.load %arg12[%c3_551, %c0_552, %c0_553] : memref<4x64x64xf32, #tpu.memory_space<vmem>>, vector<1x64x64xf32>
    %477 = vector.shape_cast %476 : vector<1x64x64xf32> to vector<64x64xf32>
    %478 = arith.addf %477, %475 : vector<64x64xf32>
    %c3_554 = arith.constant 3 : index
    %c0_555 = arith.constant 0 : index
    %c0_556 = arith.constant 0 : index
    %479 = vector.load %arg12[%c3_554, %c0_555, %c0_556] : memref<4x64x64xf32, #tpu.memory_space<vmem>>, vector<1x64x64xf32>
    %480 = vector.shape_cast %479 : vector<1x64x64xf32> to vector<64x64xf32>
    %481 = vector.shape_cast %478 : vector<64x64xf32> to vector<1x64x64xf32>
    tpu.vector_store %arg12[%c3_554, %c0_555, %c0_556], %481 {strides = array<i32>} : memref<4x64x64xf32, #tpu.memory_space<vmem>>, vector<1x64x64xf32>,
    %c4_557 = arith.constant 4 : index
    %c1_558 = arith.constant 1 : index
    %c16_559 = arith.constant 16 : index
    %c0_560 = arith.constant 0 : index
    %482 = vector.load %arg11[%c4_557, %c1_558, %c16_559, %c0_560] : memref<5x2x80x64xbf16, #tpu.memory_space<vmem>>, vector<1x1x64x64xbf16>
    %483 = vector.shape_cast %482 : vector<1x1x64x64xbf16> to vector<64x64xbf16>
    %c7_561 = arith.constant 7 : index
    %c0_562 = arith.constant 0 : index
    %c0_563 = arith.constant 0 : index
    %484 = vector.load %arg4[%c7_561, %c0_562, %c0_563] : memref<8x64x64xbf16, #tpu.memory_space<vmem>>, vector<1x64x64xbf16>
    %485 = vector.shape_cast %484 : vector<1x64x64xbf16> to vector<64x64xbf16>
    %cst_564 = arith.constant dense<0.000000e+00> : vector<64x64xf32>
    %486 = tpu.matmul %483, %485, %cst_564 {dimension_numbers = #tpu.dot_dimension_numbers<[1], [0], [0], [1], [0, 0, 1, 1], [], []>} : vector<64x64xbf16>, vector<64x64xbf16>, vector<64x64xf32> -> vector<64x64xf32>
    %c3_565 = arith.constant 3 : index
    %c0_566 = arith.constant 0 : index
    %c0_567 = arith.constant 0 : index
    %487 = vector.load %arg12[%c3_565, %c0_566, %c0_567] : memref<4x64x64xf32, #tpu.memory_space<vmem>>, vector<1x64x64xf32>
    %488 = vector.shape_cast %487 : vector<1x64x64xf32> to vector<64x64xf32>
    %489 = arith.addf %488, %486 : vector<64x64xf32>
    %c3_568 = arith.constant 3 : index
    %c0_569 = arith.constant 0 : index
    %c0_570 = arith.constant 0 : index
    %490 = vector.load %arg12[%c3_568, %c0_569, %c0_570] : memref<4x64x64xf32, #tpu.memory_space<vmem>>, vector<1x64x64xf32>
    %491 = vector.shape_cast %490 : vector<1x64x64xf32> to vector<64x64xf32>
    %492 = vector.shape_cast %489 : vector<64x64xf32> to vector<1x64x64xf32>
    tpu.vector_store %arg12[%c3_568, %c0_569, %c0_570], %492 {strides = array<i32>} : memref<4x64x64xf32, #tpu.memory_space<vmem>>, vector<1x64x64xf32>,
    %c3_571 = arith.constant 3 : index
    %c0_572 = arith.constant 0 : index
    %c0_573 = arith.constant 0 : index
    %493 = vector.load %arg12[%c3_571, %c0_572, %c0_573] : memref<4x64x64xf32, #tpu.memory_space<vmem>>, vector<1x64x64xf32>
    %494 = vector.shape_cast %493 : vector<1x64x64xf32> to vector<64x64xf32>
    %495 = vector.broadcast %1 : vector<1x64xf32> to vector<64x64xf32>
    %496 = arith.addf %494, %495 : vector<64x64xf32>
    %cst_574 = arith.constant 0.000000e+00 : f32
    %497 = vector.broadcast %cst_574 : f32 to vector<64x64xf32>
    %498 = arith.maximumf %496, %497 : vector<64x64xf32>
    %499 = arith.truncf %498 : vector<64x64xf32> to vector<64x64xbf16>
    %c3_575 = arith.constant 3 : index
    %c0_576 = arith.constant 0 : index
    %c0_577 = arith.constant 0 : index
    %500 = vector.load %arg13[%c3_575, %c0_576, %c0_577] : memref<4x64x64xbf16, #tpu.memory_space<vmem>>, vector<1x64x64xbf16>
    %501 = vector.shape_cast %500 : vector<1x64x64xbf16> to vector<64x64xbf16>
    %502 = vector.shape_cast %499 : vector<64x64xbf16> to vector<1x64x64xbf16>
    tpu.vector_store %arg13[%c3_575, %c0_576, %c0_577], %502 {strides = array<i32>} : memref<4x64x64xbf16, #tpu.memory_space<vmem>>, vector<1x64x64xbf16>,
    %c0_578 = arith.constant 0 : index
    %c0_579 = arith.constant 0 : index
    %c0_580 = arith.constant 0 : index
    %c0_581 = arith.constant 0 : index
    %503 = vector.load %arg8[%c0_578, %c0_579, %c0_580, %c0_581] : memref<2x2x1x64xf32, #tpu.memory_space<vmem>>, vector<2x2x1x64xf32>
    %cst_582 = arith.constant 0.000000e+00 : f32
    %504 = vector.broadcast %cst_582 : f32 to vector<16x1xf32>
    %cst_583 = arith.constant 0.000000e+00 : f32
    %505 = vector.broadcast %cst_583 : f32 to vector<32x64xf32>
    %c0_584 = arith.constant 0 : index
    %c0_585 = arith.constant 0 : index
    %c0_586 = arith.constant 0 : index
    %506 = vector.load %arg13[%c0_584, %c0_585, %c0_586] : memref<4x64x64xbf16, #tpu.memory_space<vmem>>, vector<1x32x64xbf16>
    %507 = vector.shape_cast %506 : vector<1x32x64xbf16> to vector<32x64xbf16>
    %c0_587 = arith.constant 0 : index
    %c0_588 = arith.constant 0 : index
    %c0_589 = arith.constant 0 : index
    %508 = vector.load %arg6[%c0_587, %c0_588, %c0_589] : memref<9x64x64xbf16, #tpu.memory_space<vmem>>, vector<1x64x64xbf16>
    %509 = vector.shape_cast %508 : vector<1x64x64xbf16> to vector<64x64xbf16>
    %cst_590 = arith.constant dense<0.000000e+00> : vector<32x64xf32>
    %510 = tpu.matmul %507, %509, %cst_590 {dimension_numbers = #tpu.dot_dimension_numbers<[1], [0], [0], [1], [0, 0, 1, 1], [], []>} : vector<32x64xbf16>, vector<64x64xbf16>, vector<32x64xf32> -> vector<32x64xf32>
    %511 = arith.addf %505, %510 : vector<32x64xf32>
    %c0_591 = arith.constant 0 : index
    %c16_592 = arith.constant 16 : index
    %c0_593 = arith.constant 0 : index
    %512 = vector.load %arg13[%c0_591, %c16_592, %c0_593] : memref<4x64x64xbf16, #tpu.memory_space<vmem>>, vector<1x32x64xbf16>
    %513 = vector.shape_cast %512 : vector<1x32x64xbf16> to vector<32x64xbf16>
    %c1_594 = arith.constant 1 : index
    %c0_595 = arith.constant 0 : index
    %c0_596 = arith.constant 0 : index
    %514 = vector.load %arg6[%c1_594, %c0_595, %c0_596] : memref<9x64x64xbf16, #tpu.memory_space<vmem>>, vector<1x64x64xbf16>
    %515 = vector.shape_cast %514 : vector<1x64x64xbf16> to vector<64x64xbf16>
    %cst_597 = arith.constant dense<0.000000e+00> : vector<32x64xf32>
    %516 = tpu.matmul %513, %515, %cst_597 {dimension_numbers = #tpu.dot_dimension_numbers<[1], [0], [0], [1], [0, 0, 1, 1], [], []>} : vector<32x64xbf16>, vector<64x64xbf16>, vector<32x64xf32> -> vector<32x64xf32>
    %517 = arith.addf %511, %516 : vector<32x64xf32>
    %c0_598 = arith.constant 0 : index
    %c32 = arith.constant 32 : index
    %c0_599 = arith.constant 0 : index
    %518 = vector.load %arg13[%c0_598, %c32, %c0_599] : memref<4x64x64xbf16, #tpu.memory_space<vmem>>, vector<1x32x64xbf16>
    %519 = vector.shape_cast %518 : vector<1x32x64xbf16> to vector<32x64xbf16>
    %c2_600 = arith.constant 2 : index
    %c0_601 = arith.constant 0 : index
    %c0_602 = arith.constant 0 : index
    %520 = vector.load %arg6[%c2_600, %c0_601, %c0_602] : memref<9x64x64xbf16, #tpu.memory_space<vmem>>, vector<1x64x64xbf16>
    %521 = vector.shape_cast %520 : vector<1x64x64xbf16> to vector<64x64xbf16>
    %cst_603 = arith.constant dense<0.000000e+00> : vector<32x64xf32>
    %522 = tpu.matmul %519, %521, %cst_603 {dimension_numbers = #tpu.dot_dimension_numbers<[1], [0], [0], [1], [0, 0, 1, 1], [], []>} : vector<32x64xbf16>, vector<64x64xbf16>, vector<32x64xf32> -> vector<32x64xf32>
    %523 = arith.addf %517, %522 : vector<32x64xf32>
    %c1_604 = arith.constant 1 : index
    %c0_605 = arith.constant 0 : index
    %c0_606 = arith.constant 0 : index
    %524 = vector.load %arg13[%c1_604, %c0_605, %c0_606] : memref<4x64x64xbf16, #tpu.memory_space<vmem>>, vector<1x32x64xbf16>
    %525 = vector.shape_cast %524 : vector<1x32x64xbf16> to vector<32x64xbf16>
    %c3_607 = arith.constant 3 : index
    %c0_608 = arith.constant 0 : index
    %c0_609 = arith.constant 0 : index
    %526 = vector.load %arg6[%c3_607, %c0_608, %c0_609] : memref<9x64x64xbf16, #tpu.memory_space<vmem>>, vector<1x64x64xbf16>
    %527 = vector.shape_cast %526 : vector<1x64x64xbf16> to vector<64x64xbf16>
    %cst_610 = arith.constant dense<0.000000e+00> : vector<32x64xf32>
    %528 = tpu.matmul %525, %527, %cst_610 {dimension_numbers = #tpu.dot_dimension_numbers<[1], [0], [0], [1], [0, 0, 1, 1], [], []>} : vector<32x64xbf16>, vector<64x64xbf16>, vector<32x64xf32> -> vector<32x64xf32>
    %529 = arith.addf %523, %528 : vector<32x64xf32>
    %c1_611 = arith.constant 1 : index
    %c16_612 = arith.constant 16 : index
    %c0_613 = arith.constant 0 : index
    %530 = vector.load %arg13[%c1_611, %c16_612, %c0_613] : memref<4x64x64xbf16, #tpu.memory_space<vmem>>, vector<1x32x64xbf16>
    %531 = vector.shape_cast %530 : vector<1x32x64xbf16> to vector<32x64xbf16>
    %c4_614 = arith.constant 4 : index
    %c0_615 = arith.constant 0 : index
    %c0_616 = arith.constant 0 : index
    %532 = vector.load %arg6[%c4_614, %c0_615, %c0_616] : memref<9x64x64xbf16, #tpu.memory_space<vmem>>, vector<1x64x64xbf16>
    %533 = vector.shape_cast %532 : vector<1x64x64xbf16> to vector<64x64xbf16>
    %cst_617 = arith.constant dense<0.000000e+00> : vector<32x64xf32>
    %534 = tpu.matmul %531, %533, %cst_617 {dimension_numbers = #tpu.dot_dimension_numbers<[1], [0], [0], [1], [0, 0, 1, 1], [], []>} : vector<32x64xbf16>, vector<64x64xbf16>, vector<32x64xf32> -> vector<32x64xf32>
    %535 = arith.addf %529, %534 : vector<32x64xf32>
    %c1_618 = arith.constant 1 : index
    %c32_619 = arith.constant 32 : index
    %c0_620 = arith.constant 0 : index
    %536 = vector.load %arg13[%c1_618, %c32_619, %c0_620] : memref<4x64x64xbf16, #tpu.memory_space<vmem>>, vector<1x32x64xbf16>
    %537 = vector.shape_cast %536 : vector<1x32x64xbf16> to vector<32x64xbf16>
    %c5_621 = arith.constant 5 : index
    %c0_622 = arith.constant 0 : index
    %c0_623 = arith.constant 0 : index
    %538 = vector.load %arg6[%c5_621, %c0_622, %c0_623] : memref<9x64x64xbf16, #tpu.memory_space<vmem>>, vector<1x64x64xbf16>
    %539 = vector.shape_cast %538 : vector<1x64x64xbf16> to vector<64x64xbf16>
    %cst_624 = arith.constant dense<0.000000e+00> : vector<32x64xf32>
    %540 = tpu.matmul %537, %539, %cst_624 {dimension_numbers = #tpu.dot_dimension_numbers<[1], [0], [0], [1], [0, 0, 1, 1], [], []>} : vector<32x64xbf16>, vector<64x64xbf16>, vector<32x64xf32> -> vector<32x64xf32>
    %541 = arith.addf %535, %540 : vector<32x64xf32>
    %c2_625 = arith.constant 2 : index
    %c0_626 = arith.constant 0 : index
    %c0_627 = arith.constant 0 : index
    %542 = vector.load %arg13[%c2_625, %c0_626, %c0_627] : memref<4x64x64xbf16, #tpu.memory_space<vmem>>, vector<1x32x64xbf16>
    %543 = vector.shape_cast %542 : vector<1x32x64xbf16> to vector<32x64xbf16>
    %c6_628 = arith.constant 6 : index
    %c0_629 = arith.constant 0 : index
    %c0_630 = arith.constant 0 : index
    %544 = vector.load %arg6[%c6_628, %c0_629, %c0_630] : memref<9x64x64xbf16, #tpu.memory_space<vmem>>, vector<1x64x64xbf16>
    %545 = vector.shape_cast %544 : vector<1x64x64xbf16> to vector<64x64xbf16>
    %cst_631 = arith.constant dense<0.000000e+00> : vector<32x64xf32>
    %546 = tpu.matmul %543, %545, %cst_631 {dimension_numbers = #tpu.dot_dimension_numbers<[1], [0], [0], [1], [0, 0, 1, 1], [], []>} : vector<32x64xbf16>, vector<64x64xbf16>, vector<32x64xf32> -> vector<32x64xf32>
    %547 = arith.addf %541, %546 : vector<32x64xf32>
    %c2_632 = arith.constant 2 : index
    %c16_633 = arith.constant 16 : index
    %c0_634 = arith.constant 0 : index
    %548 = vector.load %arg13[%c2_632, %c16_633, %c0_634] : memref<4x64x64xbf16, #tpu.memory_space<vmem>>, vector<1x32x64xbf16>
    %549 = vector.shape_cast %548 : vector<1x32x64xbf16> to vector<32x64xbf16>
    %c7_635 = arith.constant 7 : index
    %c0_636 = arith.constant 0 : index
    %c0_637 = arith.constant 0 : index
    %550 = vector.load %arg6[%c7_635, %c0_636, %c0_637] : memref<9x64x64xbf16, #tpu.memory_space<vmem>>, vector<1x64x64xbf16>
    %551 = vector.shape_cast %550 : vector<1x64x64xbf16> to vector<64x64xbf16>
    %cst_638 = arith.constant dense<0.000000e+00> : vector<32x64xf32>
    %552 = tpu.matmul %549, %551, %cst_638 {dimension_numbers = #tpu.dot_dimension_numbers<[1], [0], [0], [1], [0, 0, 1, 1], [], []>} : vector<32x64xbf16>, vector<64x64xbf16>, vector<32x64xf32> -> vector<32x64xf32>
    %553 = arith.addf %547, %552 : vector<32x64xf32>
    %c2_639 = arith.constant 2 : index
    %c32_640 = arith.constant 32 : index
    %c0_641 = arith.constant 0 : index
    %554 = vector.load %arg13[%c2_639, %c32_640, %c0_641] : memref<4x64x64xbf16, #tpu.memory_space<vmem>>, vector<1x32x64xbf16>
    %555 = vector.shape_cast %554 : vector<1x32x64xbf16> to vector<32x64xbf16>
    %c8_642 = arith.constant 8 : index
    %c0_643 = arith.constant 0 : index
    %c0_644 = arith.constant 0 : index
    %556 = vector.load %arg6[%c8_642, %c0_643, %c0_644] : memref<9x64x64xbf16, #tpu.memory_space<vmem>>, vector<1x64x64xbf16>
    %557 = vector.shape_cast %556 : vector<1x64x64xbf16> to vector<64x64xbf16>
    %cst_645 = arith.constant dense<0.000000e+00> : vector<32x64xf32>
    %558 = tpu.matmul %555, %557, %cst_645 {dimension_numbers = #tpu.dot_dimension_numbers<[1], [0], [0], [1], [0, 0, 1, 1], [], []>} : vector<32x64xbf16>, vector<64x64xbf16>, vector<32x64xf32> -> vector<32x64xf32>
    %559 = arith.addf %553, %558 : vector<32x64xf32>
    %560 = vector.broadcast %2 : vector<1x64xf32> to vector<32x64xf32>
    %561 = arith.addf %559, %560 : vector<32x64xf32>
    %cst_646 = arith.constant 0.000000e+00 : f32
    %562 = vector.broadcast %cst_646 : f32 to vector<32x64xf32>
    %563 = arith.maximumf %561, %562 : vector<32x64xf32>
    %564 = vector.shape_cast %563 : vector<32x64xf32> to vector<2x16x64xf32>
    %565 = vector.extract_strided_slice %503 {offsets = [0, 0, 0, 0], sizes = [1, 2, 1, 64], strides = [1, 1, 1, 1]} : vector<2x2x1x64xf32> to vector<1x2x1x64xf32>
    %566 = vector.shape_cast %565 : vector<1x2x1x64xf32> to vector<2x1x64xf32>
    %567 = vector.broadcast %566 : vector<2x1x64xf32> to vector<2x16x64xf32>
    %568 = arith.mulf %564, %567 : vector<2x16x64xf32>
    %cst_647 = arith.constant dense<0.000000e+00> : vector<2x16xf32>
    %569 = vector.multi_reduction <add>, %568, %cst_647 [2] : vector<2x16x64xf32> to vector<2x16xf32>
    %570 = vector.shape_cast %569 : vector<2x16xf32> to vector<2x16x1xf32>
    %cst_648 = arith.constant dense<0.000000e+00> : vector<16x1xf32>
    %571 = vector.multi_reduction <add>, %570, %cst_648 [0] : vector<2x16x1xf32> to vector<16x1xf32>
    %572 = arith.addf %504, %571 : vector<16x1xf32>
    %cst_649 = arith.constant 0.000000e+00 : f32
    %573 = vector.broadcast %cst_649 : f32 to vector<32x64xf32>
    %c1_650 = arith.constant 1 : index
    %c0_651 = arith.constant 0 : index
    %c0_652 = arith.constant 0 : index
    %574 = vector.load %arg13[%c1_650, %c0_651, %c0_652] : memref<4x64x64xbf16, #tpu.memory_space<vmem>>, vector<1x32x64xbf16>
    %575 = vector.shape_cast %574 : vector<1x32x64xbf16> to vector<32x64xbf16>
    %c0_653 = arith.constant 0 : index
    %c0_654 = arith.constant 0 : index
    %c0_655 = arith.constant 0 : index
    %576 = vector.load %arg6[%c0_653, %c0_654, %c0_655] : memref<9x64x64xbf16, #tpu.memory_space<vmem>>, vector<1x64x64xbf16>
    %577 = vector.shape_cast %576 : vector<1x64x64xbf16> to vector<64x64xbf16>
    %cst_656 = arith.constant dense<0.000000e+00> : vector<32x64xf32>
    %578 = tpu.matmul %575, %577, %cst_656 {dimension_numbers = #tpu.dot_dimension_numbers<[1], [0], [0], [1], [0, 0, 1, 1], [], []>} : vector<32x64xbf16>, vector<64x64xbf16>, vector<32x64xf32> -> vector<32x64xf32>
    %579 = arith.addf %573, %578 : vector<32x64xf32>
    %c1_657 = arith.constant 1 : index
    %c16_658 = arith.constant 16 : index
    %c0_659 = arith.constant 0 : index
    %580 = vector.load %arg13[%c1_657, %c16_658, %c0_659] : memref<4x64x64xbf16, #tpu.memory_space<vmem>>, vector<1x32x64xbf16>
    %581 = vector.shape_cast %580 : vector<1x32x64xbf16> to vector<32x64xbf16>
    %c1_660 = arith.constant 1 : index
    %c0_661 = arith.constant 0 : index
    %c0_662 = arith.constant 0 : index
    %582 = vector.load %arg6[%c1_660, %c0_661, %c0_662] : memref<9x64x64xbf16, #tpu.memory_space<vmem>>, vector<1x64x64xbf16>
    %583 = vector.shape_cast %582 : vector<1x64x64xbf16> to vector<64x64xbf16>
    %cst_663 = arith.constant dense<0.000000e+00> : vector<32x64xf32>
    %584 = tpu.matmul %581, %583, %cst_663 {dimension_numbers = #tpu.dot_dimension_numbers<[1], [0], [0], [1], [0, 0, 1, 1], [], []>} : vector<32x64xbf16>, vector<64x64xbf16>, vector<32x64xf32> -> vector<32x64xf32>
    %585 = arith.addf %579, %584 : vector<32x64xf32>
    %c1_664 = arith.constant 1 : index
    %c32_665 = arith.constant 32 : index
    %c0_666 = arith.constant 0 : index
    %586 = vector.load %arg13[%c1_664, %c32_665, %c0_666] : memref<4x64x64xbf16, #tpu.memory_space<vmem>>, vector<1x32x64xbf16>
    %587 = vector.shape_cast %586 : vector<1x32x64xbf16> to vector<32x64xbf16>
    %c2_667 = arith.constant 2 : index
    %c0_668 = arith.constant 0 : index
    %c0_669 = arith.constant 0 : index
    %588 = vector.load %arg6[%c2_667, %c0_668, %c0_669] : memref<9x64x64xbf16, #tpu.memory_space<vmem>>, vector<1x64x64xbf16>
    %589 = vector.shape_cast %588 : vector<1x64x64xbf16> to vector<64x64xbf16>
    %cst_670 = arith.constant dense<0.000000e+00> : vector<32x64xf32>
    %590 = tpu.matmul %587, %589, %cst_670 {dimension_numbers = #tpu.dot_dimension_numbers<[1], [0], [0], [1], [0, 0, 1, 1], [], []>} : vector<32x64xbf16>, vector<64x64xbf16>, vector<32x64xf32> -> vector<32x64xf32>
    %591 = arith.addf %585, %590 : vector<32x64xf32>
    %c2_671 = arith.constant 2 : index
    %c0_672 = arith.constant 0 : index
    %c0_673 = arith.constant 0 : index
    %592 = vector.load %arg13[%c2_671, %c0_672, %c0_673] : memref<4x64x64xbf16, #tpu.memory_space<vmem>>, vector<1x32x64xbf16>
    %593 = vector.shape_cast %592 : vector<1x32x64xbf16> to vector<32x64xbf16>
    %c3_674 = arith.constant 3 : index
    %c0_675 = arith.constant 0 : index
    %c0_676 = arith.constant 0 : index
    %594 = vector.load %arg6[%c3_674, %c0_675, %c0_676] : memref<9x64x64xbf16, #tpu.memory_space<vmem>>, vector<1x64x64xbf16>
    %595 = vector.shape_cast %594 : vector<1x64x64xbf16> to vector<64x64xbf16>
    %cst_677 = arith.constant dense<0.000000e+00> : vector<32x64xf32>
    %596 = tpu.matmul %593, %595, %cst_677 {dimension_numbers = #tpu.dot_dimension_numbers<[1], [0], [0], [1], [0, 0, 1, 1], [], []>} : vector<32x64xbf16>, vector<64x64xbf16>, vector<32x64xf32> -> vector<32x64xf32>
    %597 = arith.addf %591, %596 : vector<32x64xf32>
    %c2_678 = arith.constant 2 : index
    %c16_679 = arith.constant 16 : index
    %c0_680 = arith.constant 0 : index
    %598 = vector.load %arg13[%c2_678, %c16_679, %c0_680] : memref<4x64x64xbf16, #tpu.memory_space<vmem>>, vector<1x32x64xbf16>
    %599 = vector.shape_cast %598 : vector<1x32x64xbf16> to vector<32x64xbf16>
    %c4_681 = arith.constant 4 : index
    %c0_682 = arith.constant 0 : index
    %c0_683 = arith.constant 0 : index
    %600 = vector.load %arg6[%c4_681, %c0_682, %c0_683] : memref<9x64x64xbf16, #tpu.memory_space<vmem>>, vector<1x64x64xbf16>
    %601 = vector.shape_cast %600 : vector<1x64x64xbf16> to vector<64x64xbf16>
    %cst_684 = arith.constant dense<0.000000e+00> : vector<32x64xf32>
    %602 = tpu.matmul %599, %601, %cst_684 {dimension_numbers = #tpu.dot_dimension_numbers<[1], [0], [0], [1], [0, 0, 1, 1], [], []>} : vector<32x64xbf16>, vector<64x64xbf16>, vector<32x64xf32> -> vector<32x64xf32>
    %603 = arith.addf %597, %602 : vector<32x64xf32>
    %c2_685 = arith.constant 2 : index
    %c32_686 = arith.constant 32 : index
    %c0_687 = arith.constant 0 : index
    %604 = vector.load %arg13[%c2_685, %c32_686, %c0_687] : memref<4x64x64xbf16, #tpu.memory_space<vmem>>, vector<1x32x64xbf16>
    %605 = vector.shape_cast %604 : vector<1x32x64xbf16> to vector<32x64xbf16>
    %c5_688 = arith.constant 5 : index
    %c0_689 = arith.constant 0 : index
    %c0_690 = arith.constant 0 : index
    %606 = vector.load %arg6[%c5_688, %c0_689, %c0_690] : memref<9x64x64xbf16, #tpu.memory_space<vmem>>, vector<1x64x64xbf16>
    %607 = vector.shape_cast %606 : vector<1x64x64xbf16> to vector<64x64xbf16>
    %cst_691 = arith.constant dense<0.000000e+00> : vector<32x64xf32>
    %608 = tpu.matmul %605, %607, %cst_691 {dimension_numbers = #tpu.dot_dimension_numbers<[1], [0], [0], [1], [0, 0, 1, 1], [], []>} : vector<32x64xbf16>, vector<64x64xbf16>, vector<32x64xf32> -> vector<32x64xf32>
    %609 = arith.addf %603, %608 : vector<32x64xf32>
    %c3_692 = arith.constant 3 : index
    %c0_693 = arith.constant 0 : index
    %c0_694 = arith.constant 0 : index
    %610 = vector.load %arg13[%c3_692, %c0_693, %c0_694] : memref<4x64x64xbf16, #tpu.memory_space<vmem>>, vector<1x32x64xbf16>
    %611 = vector.shape_cast %610 : vector<1x32x64xbf16> to vector<32x64xbf16>
    %c6_695 = arith.constant 6 : index
    %c0_696 = arith.constant 0 : index
    %c0_697 = arith.constant 0 : index
    %612 = vector.load %arg6[%c6_695, %c0_696, %c0_697] : memref<9x64x64xbf16, #tpu.memory_space<vmem>>, vector<1x64x64xbf16>
    %613 = vector.shape_cast %612 : vector<1x64x64xbf16> to vector<64x64xbf16>
    %cst_698 = arith.constant dense<0.000000e+00> : vector<32x64xf32>
    %614 = tpu.matmul %611, %613, %cst_698 {dimension_numbers = #tpu.dot_dimension_numbers<[1], [0], [0], [1], [0, 0, 1, 1], [], []>} : vector<32x64xbf16>, vector<64x64xbf16>, vector<32x64xf32> -> vector<32x64xf32>
    %615 = arith.addf %609, %614 : vector<32x64xf32>
    %c3_699 = arith.constant 3 : index
    %c16_700 = arith.constant 16 : index
    %c0_701 = arith.constant 0 : index
    %616 = vector.load %arg13[%c3_699, %c16_700, %c0_701] : memref<4x64x64xbf16, #tpu.memory_space<vmem>>, vector<1x32x64xbf16>
    %617 = vector.shape_cast %616 : vector<1x32x64xbf16> to vector<32x64xbf16>
    %c7_702 = arith.constant 7 : index
    %c0_703 = arith.constant 0 : index
    %c0_704 = arith.constant 0 : index
    %618 = vector.load %arg6[%c7_702, %c0_703, %c0_704] : memref<9x64x64xbf16, #tpu.memory_space<vmem>>, vector<1x64x64xbf16>
    %619 = vector.shape_cast %618 : vector<1x64x64xbf16> to vector<64x64xbf16>
    %cst_705 = arith.constant dense<0.000000e+00> : vector<32x64xf32>
    %620 = tpu.matmul %617, %619, %cst_705 {dimension_numbers = #tpu.dot_dimension_numbers<[1], [0], [0], [1], [0, 0, 1, 1], [], []>} : vector<32x64xbf16>, vector<64x64xbf16>, vector<32x64xf32> -> vector<32x64xf32>
    %621 = arith.addf %615, %620 : vector<32x64xf32>
    %c3_706 = arith.constant 3 : index
    %c32_707 = arith.constant 32 : index
    %c0_708 = arith.constant 0 : index
    %622 = vector.load %arg13[%c3_706, %c32_707, %c0_708] : memref<4x64x64xbf16, #tpu.memory_space<vmem>>, vector<1x32x64xbf16>
    %623 = vector.shape_cast %622 : vector<1x32x64xbf16> to vector<32x64xbf16>
    %c8_709 = arith.constant 8 : index
    %c0_710 = arith.constant 0 : index
    %c0_711 = arith.constant 0 : index
    %624 = vector.load %arg6[%c8_709, %c0_710, %c0_711] : memref<9x64x64xbf16, #tpu.memory_space<vmem>>, vector<1x64x64xbf16>
    %625 = vector.shape_cast %624 : vector<1x64x64xbf16> to vector<64x64xbf16>
    %cst_712 = arith.constant dense<0.000000e+00> : vector<32x64xf32>
    %626 = tpu.matmul %623, %625, %cst_712 {dimension_numbers = #tpu.dot_dimension_numbers<[1], [0], [0], [1], [0, 0, 1, 1], [], []>} : vector<32x64xbf16>, vector<64x64xbf16>, vector<32x64xf32> -> vector<32x64xf32>
    %627 = arith.addf %621, %626 : vector<32x64xf32>
    %628 = vector.broadcast %2 : vector<1x64xf32> to vector<32x64xf32>
    %629 = arith.addf %627, %628 : vector<32x64xf32>
    %cst_713 = arith.constant 0.000000e+00 : f32
    %630 = vector.broadcast %cst_713 : f32 to vector<32x64xf32>
    %631 = arith.maximumf %629, %630 : vector<32x64xf32>
    %632 = vector.shape_cast %631 : vector<32x64xf32> to vector<2x16x64xf32>
    %633 = vector.extract_strided_slice %503 {offsets = [1, 0, 0, 0], sizes = [1, 2, 1, 64], strides = [1, 1, 1, 1]} : vector<2x2x1x64xf32> to vector<1x2x1x64xf32>
    %634 = vector.shape_cast %633 : vector<1x2x1x64xf32> to vector<2x1x64xf32>
    %635 = vector.broadcast %634 : vector<2x1x64xf32> to vector<2x16x64xf32>
    %636 = arith.mulf %632, %635 : vector<2x16x64xf32>
    %cst_714 = arith.constant dense<0.000000e+00> : vector<2x16xf32>
    %637 = vector.multi_reduction <add>, %636, %cst_714 [2] : vector<2x16x64xf32> to vector<2x16xf32>
    %638 = vector.shape_cast %637 : vector<2x16xf32> to vector<2x16x1xf32>
    %cst_715 = arith.constant dense<0.000000e+00> : vector<16x1xf32>
    %639 = vector.multi_reduction <add>, %638, %cst_715 [0] : vector<2x16x1xf32> to vector<16x1xf32>
    %640 = arith.addf %572, %639 : vector<16x1xf32>
    %c0_716 = arith.constant 0 : index
    %c0_717 = arith.constant 0 : index
    %641 = vector.load %arg9[%c0_716, %c0_717] : memref<1x1xf32, #tpu.memory_space<vmem>>, vector<1x1xf32>
    %642 = vector.broadcast %641 : vector<1x1xf32> to vector<16x1xf32>
    %643 = arith.addf %640, %642 : vector<16x1xf32>
    %644 = math.tanh %643 : vector<16x1xf32>
    %c0_718 = arith.constant 0 : index
    %c0_719 = arith.constant 0 : index
    %645 = vector.load %arg10[%c0_718, %c0_719] : memref<16x1xf32, #tpu.memory_space<vmem>>, vector<16x1xf32>
    tpu.vector_store %arg10[%c0_718, %c0_719], %644 {strides = array<i32>} : memref<16x1xf32, #tpu.memory_space<vmem>>, vector<16x1xf32>,
    return
  }
  func.func @transform_0(%arg0: i32) -> (i32, i32, i32, i32) {
    %c0_i32 = arith.constant 0 : i32
    %c0_i32_0 = arith.constant 0 : i32
    %c0_i32_1 = arith.constant 0 : i32
    %c0_i32_2 = arith.constant 0 : i32
    return %arg0, %c0_i32, %c0_i32_0, %c0_i32_1 : i32, i32, i32, i32
  }
  func.func @transform_1(%arg0: i32) -> (i32, i32) {
    %c0_i32 = arith.constant 0 : i32
    %c0_i32_0 = arith.constant 0 : i32
    %c0_i32_1 = arith.constant 0 : i32
    return %c0_i32, %c0_i32_0 : i32, i32
  }
  func.func @transform_2(%arg0: i32) -> (i32, i32) {
    %c0_i32 = arith.constant 0 : i32
    %c0_i32_0 = arith.constant 0 : i32
    %c0_i32_1 = arith.constant 0 : i32
    return %c0_i32, %c0_i32_0 : i32, i32
  }
  func.func @transform_3(%arg0: i32) -> (i32, i32, i32) {
    %c0_i32 = arith.constant 0 : i32
    %c0_i32_0 = arith.constant 0 : i32
    %c0_i32_1 = arith.constant 0 : i32
    %c0_i32_2 = arith.constant 0 : i32
    return %c0_i32, %c0_i32_0, %c0_i32_1 : i32, i32, i32
  }
  func.func @transform_4(%arg0: i32) -> (i32, i32) {
    %c0_i32 = arith.constant 0 : i32
    %c0_i32_0 = arith.constant 0 : i32
    %c0_i32_1 = arith.constant 0 : i32
    return %c0_i32, %c0_i32_0 : i32, i32
  }
  func.func @transform_5(%arg0: i32) -> (i32, i32, i32) {
    %c0_i32 = arith.constant 0 : i32
    %c0_i32_0 = arith.constant 0 : i32
    %c0_i32_1 = arith.constant 0 : i32
    %c0_i32_2 = arith.constant 0 : i32
    return %c0_i32, %c0_i32_0, %c0_i32_1 : i32, i32, i32
  }
  func.func @transform_6(%arg0: i32) -> (i32, i32) {
    %c0_i32 = arith.constant 0 : i32
    %c0_i32_0 = arith.constant 0 : i32
    %c0_i32_1 = arith.constant 0 : i32
    return %c0_i32, %c0_i32_0 : i32, i32
  }
  func.func @transform_7(%arg0: i32) -> (i32, i32, i32, i32) {
    %c0_i32 = arith.constant 0 : i32
    %c0_i32_0 = arith.constant 0 : i32
    %c0_i32_1 = arith.constant 0 : i32
    %c0_i32_2 = arith.constant 0 : i32
    %c0_i32_3 = arith.constant 0 : i32
    return %c0_i32, %c0_i32_0, %c0_i32_1, %c0_i32_2 : i32, i32, i32, i32
  }
  func.func @transform_8(%arg0: i32) -> (i32, i32) {
    %c0_i32 = arith.constant 0 : i32
    %c0_i32_0 = arith.constant 0 : i32
    %c0_i32_1 = arith.constant 0 : i32
    return %c0_i32, %c0_i32_0 : i32, i32
  }
  func.func @transform_9(%arg0: i32) -> (i32, i32) {
    %c0_i32 = arith.constant 0 : i32
    %c0_i32_0 = arith.constant 0 : i32
    return %arg0, %c0_i32 : i32, i32
  }
}

</mosaic_0001>

<llo_original>
// kernel: mlp_central_critic_v2_forward.1
$region0: #{mlp_central_critic_v2_forward.1}
  #allocation0 [shape = 'u32[]', space=smem, size = 0x4, offset = 0x4, fixed_abs, tag = 'smem constant byte address 0x4 - core index']
  #allocation1 [shape = 'u32[72,128]{1,0:T(1,128)}', space=vmem, size = 0x9000, scoped, tag = 'internal scratch']
  #allocation2 [shape = 'bf16[5,2,80,64]{3,2,1,0:T(8,128)(2,1)}', space=vmem, size = 0x32000, scoped, tag = 'scratch operand']
  #allocation3 [shape = 'f32[4,64,64]{2,1,0:T(8,128)}', space=vmem, size = 0x20000, scoped, tag = 'scratch operand']
  #allocation4 [shape = 'bf16[4,64,64]{2,1,0:T(8,128)(2,1)}', space=vmem, size = 0x10000, scoped, tag = 'scratch operand']
  #allocation5 [shape = 'f32[1,1]{1,0:T(1,128)S(1)}', space=vmem, size = 0x200, scoped, tag = 'scoped memory for mlp_central_critic_v2_forward.1']
  %s0 = inlined_call_operand.vmem [shape: bf16[1,10,80,384], index: 0, kind: input, shape index: {}]
  %s1 = inlined_call_operand.vmem [shape: bf16[384,64], index: 1, kind: input, shape index: {}]
  %s2 = inlined_call_operand.vmem [shape: f32[1,64], index: 2, kind: input, shape index: {}]
  %s3 = inlined_call_operand.vmem [shape: bf16[8,64,64], index: 3, kind: input, shape index: {}]
  %s4 = inlined_call_operand.vmem [shape: f32[1,64], index: 4, kind: input, shape index: {}]
  %s5 = inlined_call_operand.vmem [shape: bf16[9,64,64], index: 5, kind: input, shape index: {}]
  %s6 = inlined_call_operand.vmem [shape: f32[1,64], index: 6, kind: input, shape index: {}]
  %s7 = inlined_call_operand.vmem [shape: f32[2,2,1,64], index: 7, kind: input, shape index: {}]
  %s8 = inlined_call_operand.<no memory space> [shape: f32[1,1], index: 8, kind: input, shape index: {}]
  %s9 = inlined_call_operand.vmem [shape: f32[16,1], index: 9, kind: output, shape index: {}]
  %s10 = sld [smem:[#allocation0]]
  $region46: #{mlp_central_critic_v2_forward.1} parent=0
    _
  %s12 = ssub.s32 1, %s10
  %s13 = scalar_select 0, %s12, %s10
  %v14 = vstv %s8
  %15 = vst [vmem:[#allocation5] sm:$0x1] %v14
  // Predicated region
  $region2: #{mlp_central_critic_v2_forward.1} parent=0 // pred_check
    _
  $region3: #{mlp_central_critic_v2_forward.1} parent=0 // pred_check_branch
    %17 = sbr.rel (0) target = $region5
  $region4: #{mlp_central_critic_v2_forward.1} parent=0 // pred_region
    _
  $region5: #{mlp_central_critic_v2_forward.1} parent=0 // pred_fallthru
    _
  // Predicated region
  $region6: #{mlp_central_critic_v2_forward.1} parent=0 // pred_check
    _
  $region7: #{mlp_central_critic_v2_forward.1} parent=0 // pred_check_branch
    %19 = sbr.rel (0) target = $region9
  $region8: #{mlp_central_critic_v2_forward.1} parent=0 // pred_region
    _
  $region9: #{mlp_central_critic_v2_forward.1} parent=0 // pred_fallthru
    _
  // Predicated region
  $region10: #{mlp_central_critic_v2_forward.1} parent=0 // pred_check
    _
  $region11: #{mlp_central_critic_v2_forward.1} parent=0 // pred_check_branch
    %21 = sbr.rel (0) target = $region13
  $region12: #{mlp_central_critic_v2_forward.1} parent=0 // pred_region
    _
  $region13: #{mlp_central_critic_v2_forward.1} parent=0 // pred_fallthru
    _
  // Predicated region
  $region14: #{mlp_central_critic_v2_forward.1} parent=0 // pred_check
    _
  $region15: #{mlp_central_critic_v2_forward.1} parent=0 // pred_check_branch
    %23 = sbr.rel (0) target = $region17
  $region16: #{mlp_central_critic_v2_forward.1} parent=0 // pred_region
    _
  $region17: #{mlp_central_critic_v2_forward.1} parent=0 // pred_fallthru
    _
  // Predicated region
  $region18: #{mlp_central_critic_v2_forward.1} parent=0 // pred_check
    _
  $region19: #{mlp_central_critic_v2_forward.1} parent=0 // pred_check_branch
    %25 = sbr.rel (0) target = $region21
  $region20: #{mlp_central_critic_v2_forward.1} parent=0 // pred_region
    _
  $region21: #{mlp_central_critic_v2_forward.1} parent=0 // pred_fallthru
    _
  // Predicated region
  $region22: #{mlp_central_critic_v2_forward.1} parent=0 // pred_check
    _
  $region23: #{mlp_central_critic_v2_forward.1} parent=0 // pred_check_branch
    %27 = sbr.rel (0) target = $region25
  $region24: #{mlp_central_critic_v2_forward.1} parent=0 // pred_region
    _
  $region25: #{mlp_central_critic_v2_forward.1} parent=0 // pred_fallthru
    _
  // Predicated region
  $region26: #{mlp_central_critic_v2_forward.1} parent=0 // pred_check
    _
  $region27: #{mlp_central_critic_v2_forward.1} parent=0 // pred_check_branch
    %29 = sbr.rel (0) target = $region29
  $region28: #{mlp_central_critic_v2_forward.1} parent=0 // pred_region
    _
  $region29: #{mlp_central_critic_v2_forward.1} parent=0 // pred_fallthru
    _
  // Predicated region
  $region30: #{mlp_central_critic_v2_forward.1} parent=0 // pred_check
    _
  $region31: #{mlp_central_critic_v2_forward.1} parent=0 // pred_check_branch
    %31 = sbr.rel (0) target = $region33
  $region32: #{mlp_central_critic_v2_forward.1} parent=0 // pred_region
    _
  $region33: #{mlp_central_critic_v2_forward.1} parent=0 // pred_fallthru
    _
  // Predicated region
  $region34: #{mlp_central_critic_v2_forward.1} parent=0 // pred_check
    _
  $region35: #{mlp_central_critic_v2_forward.1} parent=0 // pred_check_branch
    %33 = sbr.rel (0) target = $region37
  $region36: #{mlp_central_critic_v2_forward.1} parent=0 // pred_region
    _
  $region37: #{mlp_central_critic_v2_forward.1} parent=0 // pred_fallthru
    _
  %v35 = vld [vmem:[%s2] sm:$0x1]
  %v36 = vld [vmem:[%s4] sm:$0x1]
  %v37 = vld [vmem:[%s6] sm:$0x1]
  %v38 = vld [vmem:[%s0] sm:$0xff]
  %v39 = vld [vmem:[%s0 + $0x8] sm:$0xf]
  %v40 = vld [vmem:[%s0 + $0xc] sm:$0xff]
  %v41 = vld [vmem:[%s0 + $0x14] sm:$0xf]
  %v42 = vld [vmem:[%s0 + $0x18] sm:$0xff]
  %v43 = vld [vmem:[%s0 + $0x20] sm:$0xf]
  %v44 = vld [vmem:[%s0 + $0x24] sm:$0xff]
  %v45 = vld [vmem:[%s0 + $0x2c] sm:$0xf]
  %v46 = vld [vmem:[%s0 + $0x30] sm:$0xff]
  %v47 = vld [vmem:[%s0 + $0x38] sm:$0xf]
  %v48 = vld [vmem:[%s0 + $0x3c] sm:$0xff]
  %v49 = vld [vmem:[%s0 + $0x44] sm:$0xf]
  %v50 = vld [vmem:[%s0 + $0x48] sm:$0xff]
  %v51 = vld [vmem:[%s0 + $0x50] sm:$0xf]
  %v52 = vld [vmem:[%s0 + $0x54] sm:$0xff]
  %v53 = vld [vmem:[%s0 + $0x5c] sm:$0xf]
  %v54 = vld [vmem:[%s0 + $0x60] sm:$0xff]
  %v55 = vld [vmem:[%s0 + $0x68] sm:$0xf]
  %v56 = vld [vmem:[%s0 + $0x6c] sm:$0xff]
  %v57 = vld [vmem:[%s0 + $0x74] sm:$0xf]
  %v58 = vld [vmem:[%s1] sm:$0xf]
  %v59 = vld [vmem:[%s1 + $0x4] sm:$0xf]
  %v60 = vld [vmem:[%s1 + $0x8] sm:$0xf]
  %v61 = vld [vmem:[%s1 + $0xc] sm:$0xf]
  %v62 = vld [vmem:[%s1 + $0x10] sm:$0xf]
  %v63 = vld [vmem:[%s1 + $0x14] sm:$0xf]
  %v64 = vld [vmem:[%s1 + $0x18] sm:$0xf]
  %v65 = vld [vmem:[%s1 + $0x1c] sm:$0xf]
  %v66 = vld [vmem:[%s1 + $0x20] sm:$0xf]
  %v67 = vld [vmem:[%s1 + $0x24] sm:$0xf]
  %v68 = vld [vmem:[%s1 + $0x28] sm:$0xf]
  %v69 = vld [vmem:[%s1 + $0x2c] sm:$0xf]
  %v70 = vld [vmem:[%s1 + $0x30] sm:$0xf]
  %v71 = vld [vmem:[%s1 + $0x34] sm:$0xf]
  %v72 = vld [vmem:[%s1 + $0x38] sm:$0xf]
  %v73 = vld [vmem:[%s1 + $0x3c] sm:$0xf]
  %v74 = vld [vmem:[%s1 + $0x40] sm:$0xf]
  %v75 = vld [vmem:[%s1 + $0x44] sm:$0xf]
  %v76 = vld [vmem:[%s1 + $0x48] sm:$0xf]
  %v77 = vld [vmem:[%s1 + $0x4c] sm:$0xf]
  %v78 = vld [vmem:[%s1 + $0x50] sm:$0xf]
  %v79 = vld [vmem:[%s1 + $0x54] sm:$0xf]
  %v80 = vld [vmem:[%s1 + $0x58] sm:$0xf]
  %v81 = vld [vmem:[%s1 + $0x5c] sm:$0xf]
  %v82 = vld [vmem:[%s1 + $0x60] sm:$0xf]
  %v83 = vld [vmem:[%s1 + $0x64] sm:$0xf]
  %v84 = vld [vmem:[%s1 + $0x68] sm:$0xf]
  %v85 = vld [vmem:[%s1 + $0x6c] sm:$0xf]
  %v86 = vld [vmem:[%s1 + $0x70] sm:$0xf]
  %v87 = vld [vmem:[%s1 + $0x74] sm:$0xf]
  %v88 = vld [vmem:[%s1 + $0x78] sm:$0xf]
  %v89 = vld [vmem:[%s1 + $0x7c] sm:$0xf]
  %v90 = vld [vmem:[%s1 + $0x80] sm:$0xf]
  %v91 = vld [vmem:[%s1 + $0x84] sm:$0xf]
  %v92 = vld [vmem:[%s1 + $0x88] sm:$0xf]
  %v93 = vld [vmem:[%s1 + $0x8c] sm:$0xf]
  %v94 = vld [vmem:[%s1 + $0x90] sm:$0xf]
  %v95 = vld [vmem:[%s1 + $0x94] sm:$0xf]
  %v96 = vld [vmem:[%s1 + $0x98] sm:$0xf]
  %v97 = vld [vmem:[%s1 + $0x9c] sm:$0xf]
  %v98 = vld [vmem:[%s1 + $0xa0] sm:$0xf]
  %v99 = vld [vmem:[%s1 + $0xa4] sm:$0xf]
  %v100 = vld [vmem:[%s1 + $0xa8] sm:$0xf]
  %v101 = vld [vmem:[%s1 + $0xac] sm:$0xf]
  %v102 = vld [vmem:[%s1 + $0xb0] sm:$0xf]
  %v103 = vld [vmem:[%s1 + $0xb4] sm:$0xf]
  %v104 = vld [vmem:[%s1 + $0xb8] sm:$0xf]
  %v105 = vld [vmem:[%s1 + $0xbc] sm:$0xf]
  %v107 = vperm.slane %v35, 0
  %v129 = vunpack.c.l.b16 %v38
  %v130 = vunpack.c.h.b16 %v38
  %v131 = vunpack.c.l.b16 %v39
  %v132 = vunpack.c.l.b16 %v40
  %v133 = vunpack.c.h.b16 %v40
  %v134 = vunpack.c.l.b16 %v41
  %v135 = vunpack.c.l.b16 %v42
  %v136 = vunpack.c.h.b16 %v42
  %v137 = vunpack.c.l.b16 %v43
  %v138 = vunpack.c.l.b16 %v44
  %v139 = vunpack.c.h.b16 %v44
  %v140 = vunpack.c.l.b16 %v45
  %v141 = vunpack.c.l.b16 %v46
  %v142 = vunpack.c.h.b16 %v46
  %v143 = vunpack.c.l.b16 %v47
  %v144 = vunpack.c.l.b16 %v48
  %v145 = vunpack.c.h.b16 %v48
  %v146 = vunpack.c.l.b16 %v49
  %v147 = vunpack.c.l.b16 %v50
  %v148 = vunpack.c.h.b16 %v50
  %v149 = vunpack.c.l.b16 %v51
  %v150 = vunpack.c.l.b16 %v52
  %v151 = vunpack.c.h.b16 %v52
  %v152 = vunpack.c.l.b16 %v53
  %v153 = vunpack.c.l.b16 %v54
  %v154 = vunpack.c.h.b16 %v54
  %v155 = vunpack.c.l.b16 %v55
  %v156 = vunpack.c.l.b16 %v56
  %v157 = vunpack.c.h.b16 %v56
  %v158 = vunpack.c.l.b16 %v57
  %v159 = vpack.c.b16 %v132, %v129
  %v160 = vpack.c.b16 %v133, %v130
  %v161 = vpack.c.b16 %v134, %v131
  %v162 = vpack.c.b16 %v138, %v135
  %v163 = vpack.c.b16 %v139, %v136
  %v164 = vpack.c.b16 %v140, %v137
  %v165 = vpack.c.b16 %v144, %v141
  %v166 = vpack.c.b16 %v145, %v142
  %v167 = vpack.c.b16 %v146, %v143
  %v168 = vpack.c.b16 %v150, %v147
  %v169 = vpack.c.b16 %v151, %v148
  %v170 = vpack.c.b16 %v152, %v149
  %v171 = vpack.c.b16 %v156, %v153
  %v172 = vpack.c.b16 %v157, %v154
  %v173 = vpack.c.b16 %v158, %v155
  %v237 = vunpack.c.l.b16 %v58
  %v238 = vunpack.c.l.b16 %v59
  %v239 = vunpack.c.l.b16 %v60
  %v240 = vunpack.c.l.b16 %v61
  %v241 = vunpack.c.l.b16 %v62
  %v242 = vunpack.c.l.b16 %v63
  %v243 = vunpack.c.l.b16 %v64
  %v244 = vunpack.c.l.b16 %v65
  %v245 = vunpack.c.l.b16 %v66
  %v246 = vunpack.c.l.b16 %v67
  %v247 = vunpack.c.l.b16 %v68
  %v248 = vunpack.c.l.b16 %v69
  %v249 = vunpack.c.l.b16 %v70
  %v250 = vunpack.c.l.b16 %v71
  %v251 = vunpack.c.l.b16 %v72
  %v252 = vunpack.c.l.b16 %v73
  %v253 = vunpack.c.l.b16 %v74
  %v254 = vunpack.c.l.b16 %v75
  %v255 = vunpack.c.l.b16 %v76
  %v256 = vunpack.c.l.b16 %v77
  %v257 = vunpack.c.l.b16 %v78
  %v258 = vunpack.c.l.b16 %v79
  %v259 = vunpack.c.l.b16 %v80
  %v260 = vunpack.c.l.b16 %v81
  %v261 = vunpack.c.l.b16 %v82
  %v262 = vunpack.c.l.b16 %v83
  %v263 = vunpack.c.l.b16 %v84
  %v264 = vunpack.c.l.b16 %v85
  %v265 = vunpack.c.l.b16 %v86
  %v266 = vunpack.c.l.b16 %v87
  %v267 = vunpack.c.l.b16 %v88
  %v268 = vunpack.c.l.b16 %v89
  %v269 = vunpack.c.l.b16 %v90
  %v270 = vunpack.c.l.b16 %v91
  %v271 = vunpack.c.l.b16 %v92
  %v272 = vunpack.c.l.b16 %v93
  %v273 = vunpack.c.l.b16 %v94
  %v274 = vunpack.c.l.b16 %v95
  %v275 = vunpack.c.l.b16 %v96
  %v276 = vunpack.c.l.b16 %v97
  %v277 = vunpack.c.l.b16 %v98
  %v278 = vunpack.c.l.b16 %v99
  %v279 = vunpack.c.l.b16 %v100
  %v280 = vunpack.c.l.b16 %v101
  %v281 = vunpack.c.l.b16 %v102
  %v282 = vunpack.c.l.b16 %v103
  %v283 = vunpack.c.l.b16 %v104
  %v284 = vunpack.c.l.b16 %v105
  %v285 = vpack.c.b16 %v238, %v237
  %v286 = vpack.c.b16 %v240, %v239
  %v287 = vpack.c.b16 %v242, %v241
  %v288 = vpack.c.b16 %v244, %v243
  %v289 = vpack.c.b16 %v246, %v245
  %v290 = vpack.c.b16 %v248, %v247
  %v291 = vpack.c.b16 %v250, %v249
  %v292 = vpack.c.b16 %v252, %v251
  %v293 = vpack.c.b16 %v254, %v253
  %v294 = vpack.c.b16 %v256, %v255
  %v295 = vpack.c.b16 %v258, %v257
  %v296 = vpack.c.b16 %v260, %v259
  %v297 = vpack.c.b16 %v262, %v261
  %v298 = vpack.c.b16 %v264, %v263
  %v299 = vpack.c.b16 %v266, %v265
  %v300 = vpack.c.b16 %v268, %v267
  %v301 = vpack.c.b16 %v270, %v269
  %v302 = vpack.c.b16 %v272, %v271
  %v303 = vpack.c.b16 %v274, %v273
  %v304 = vpack.c.b16 %v276, %v275
  %v305 = vpack.c.b16 %v278, %v277
  %v306 = vpack.c.b16 %v280, %v279
  %v307 = vpack.c.b16 %v282, %v281
  %v308 = vpack.c.b16 %v284, %v283
  %333 = vmatpush.bf16.msra.mxu0 %v292
  %334 = vmatpush.bf16.msra.mxu0 %v291
  %335 = vmatpush.bf16.msra.mxu0 %v290
  %336 = vmatpush.bf16.msra.mxu0 %v289
  %337 = vmatpush.bf16.msra.mxu0 %v288
  %338 = vmatpush.bf16.msra.mxu0 %v287
  %339 = vmatpush.bf16.msra.mxu0 %v286
  %340 = vmatpush.bf16.msra.mxu0 %v285
  %341 = vmatmul.bf16.gmra.mxu0 %v159
  %v342 = vpop.f32.mrf.mxu0
  %v343 = vadd.f32 %v107, %v342
  %v344 = vpop.f32.mrf.mxu0
  %v345 = vadd.f32 %v107, %v344
  %346 = vmatmul.bf16.gmra.mxu0 %v162
  %v347 = vpop.f32.mrf.mxu0
  %v348 = vadd.f32 %v107, %v347
  %v349 = vpop.f32.mrf.mxu0
  %v350 = vadd.f32 %v107, %v349
  %351 = vmatmul.bf16.gmra.mxu0 %v165
  %v352 = vpop.f32.mrf.mxu0
  %v353 = vadd.f32 %v107, %v352
  %v354 = vpop.f32.mrf.mxu0
  %v355 = vadd.f32 %v107, %v354
  %356 = vmatmul.bf16.gmra.mxu0 %v168
  %v357 = vpop.f32.mrf.mxu0
  %v358 = vadd.f32 %v107, %v357
  %v359 = vpop.f32.mrf.mxu0
  %v360 = vadd.f32 %v107, %v359
  %361 = vmatmul.bf16.gmra.mxu0 %v171
  %v362 = vpop.f32.mrf.mxu0
  %v363 = vadd.f32 %v107, %v362
  %v364 = vpop.f32.mrf.mxu0
  %v365 = vadd.f32 %v107, %v364
  %366 = vdwg.mxu0
  %367 = vmatpush.bf16.msra.mxu0 %v300
  %368 = vmatpush.bf16.msra.mxu0 %v299
  %369 = vmatpush.bf16.msra.mxu0 %v298
  %370 = vmatpush.bf16.msra.mxu0 %v297
  %371 = vmatpush.bf16.msra.mxu0 %v296
  %372 = vmatpush.bf16.msra.mxu0 %v295
  %373 = vmatpush.bf16.msra.mxu0 %v294
  %374 = vmatpush.bf16.msra.mxu0 %v293
  %375 = vmatmul.bf16.gmra.mxu0 %v160
  %v376 = vpop.f32.mrf.mxu0
  %v377 = vadd.f32 %v343, %v376
  %v378 = vpop.f32.mrf.mxu0
  %v379 = vadd.f32 %v345, %v378
  %380 = vmatmul.bf16.gmra.mxu0 %v163
  %v381 = vpop.f32.mrf.mxu0
  %v382 = vadd.f32 %v348, %v381
  %v383 = vpop.f32.mrf.mxu0
  %v384 = vadd.f32 %v350, %v383
  %385 = vmatmul.bf16.gmra.mxu0 %v166
  %v386 = vpop.f32.mrf.mxu0
  %v387 = vadd.f32 %v353, %v386
  %v388 = vpop.f32.mrf.mxu0
  %v389 = vadd.f32 %v355, %v388
  %390 = vmatmul.bf16.gmra.mxu0 %v169
  %v391 = vpop.f32.mrf.mxu0
  %v392 = vadd.f32 %v358, %v391
  %v393 = vpop.f32.mrf.mxu0
  %v394 = vadd.f32 %v360, %v393
  %395 = vmatmul.bf16.gmra.mxu0 %v172
  %v396 = vpop.f32.mrf.mxu0
  %v397 = vadd.f32 %v363, %v396
  %v398 = vpop.f32.mrf.mxu0
  %v399 = vadd.f32 %v365, %v398
  %400 = vdwg.mxu0
  %401 = vmatpush.bf16.msra.mxu0 %v308
  %402 = vmatpush.bf16.msra.mxu0 %v307
  %403 = vmatpush.bf16.msra.mxu0 %v306
  %404 = vmatpush.bf16.msra.mxu0 %v305
  %405 = vmatpush.bf16.msra.mxu0 %v304
  %406 = vmatpush.bf16.msra.mxu0 %v303
  %407 = vmatpush.bf16.msra.mxu0 %v302
  %408 = vmatpush.bf16.msra.mxu0 %v301
  %409 = vmatmul.bf16.gmra.mxu0 %v161
  %v410 = vpop.f32.mrf.mxu0
  %v411 = vadd.f32 %v377, %v410
  %v412 = vpop.f32.mrf.mxu0
  %v413 = vadd.f32 %v379, %v412
  %414 = vmatmul.bf16.gmra.mxu0 %v164
  %v415 = vpop.f32.mrf.mxu0
  %v416 = vadd.f32 %v382, %v415
  %v417 = vpop.f32.mrf.mxu0
  %v418 = vadd.f32 %v384, %v417
  %419 = vmatmul.bf16.gmra.mxu0 %v167
  %v420 = vpop.f32.mrf.mxu0
  %v421 = vadd.f32 %v387, %v420
  %v422 = vpop.f32.mrf.mxu0
  %v423 = vadd.f32 %v389, %v422
  %424 = vmatmul.bf16.gmra.mxu0 %v170
  %v425 = vpop.f32.mrf.mxu0
  %v426 = vadd.f32 %v392, %v425
  %v427 = vpop.f32.mrf.mxu0
  %v428 = vadd.f32 %v394, %v427
  %429 = vmatmul.bf16.gmra.mxu0 %v173
  %v430 = vpop.f32.mrf.mxu0
  %v431 = vadd.f32 %v397, %v430
  %v432 = vpop.f32.mrf.mxu0
  %v433 = vadd.f32 %v399, %v432
  %434 = vdwg.mxu0
  %v435 = vmax.f32 %v411, 0.0
  %v436 = vmax.f32 %v413, 0.0
  %v437 = vmax.f32 %v416, 0.0
  %v438 = vmax.f32 %v418, 0.0
  %v439 = vmax.f32 %v421, 0.0
  %v440 = vmax.f32 %v423, 0.0
  %v441 = vmax.f32 %v426, 0.0
  %v442 = vmax.f32 %v428, 0.0
  %v443 = vmax.f32 %v431, 0.0
  %v444 = vmax.f32 %v433, 0.0
  %v445 = vpack.c.bf16 %v435, %v435
  %v446 = vpack.c.bf16 %v436, %v436
  %v447 = vpack.c.bf16 %v437, %v437
  %v448 = vpack.c.bf16 %v438, %v438
  %v449 = vpack.c.bf16 %v439, %v439
  %v450 = vpack.c.bf16 %v440, %v440
  %v451 = vpack.c.bf16 %v441, %v441
  %v452 = vpack.c.bf16 %v442, %v442
  %v453 = vpack.c.bf16 %v443, %v443
  %v454 = vpack.c.bf16 %v444, %v444
  %vm455 = vcmask 519168
  %456 = vst.msk [vmem:[#allocation2] sm:$0xf] %vm455, %v445
  %457 = vst.msk [vmem:[#allocation2 + $0x4] sm:$0xf] %vm455, %v446
  %458 = vst.msk [vmem:[#allocation2 + $0x8] sm:$0xf] %vm455, %v447
  %459 = vst.msk [vmem:[#allocation2 + $0xc] sm:$0xf] %vm455, %v448
  %460 = vst.msk [vmem:[#allocation2 + $0x10] sm:$0xf] %vm455, %v449
  %461 = vst.msk [vmem:[#allocation2 + $0x14] sm:$0xf] %vm455, %v450
  %462 = vst.msk [vmem:[#allocation2 + $0x18] sm:$0xf] %vm455, %v451
  %463 = vst.msk [vmem:[#allocation2 + $0x1c] sm:$0xf] %vm455, %v452
  %464 = vst.msk [vmem:[#allocation2 + $0x20] sm:$0xf] %vm455, %v453
  %465 = vst.msk [vmem:[#allocation2 + $0x24] sm:$0xf] %vm455, %v454
  %s466 = scalar_lea.vmem %s0, 120
  %v467 = vld [vmem:[%s466] sm:$0xff]
  %v468 = vld [vmem:[%s466 + $0x8] sm:$0xf]
  %v469 = vld [vmem:[%s466 + $0xc] sm:$0xff]
  %v470 = vld [vmem:[%s466 + $0x14] sm:$0xf]
  %v471 = vld [vmem:[%s466 + $0x18] sm:$0xff]
  %v472 = vld [vmem:[%s466 + $0x20] sm:$0xf]
  %v473 = vld [vmem:[%s466 + $0x24] sm:$0xff]
  %v474 = vld [vmem:[%s466 + $0x2c] sm:$0xf]
  %v475 = vld [vmem:[%s466 + $0x30] sm:$0xff]
  %v476 = vld [vmem:[%s466 + $0x38] sm:$0xf]
  %v477 = vld [vmem:[%s466 + $0x3c] sm:$0xff]
  %v478 = vld [vmem:[%s466 + $0x44] sm:$0xf]
  %v479 = vld [vmem:[%s466 + $0x48] sm:$0xff]
  %v480 = vld [vmem:[%s466 + $0x50] sm:$0xf]
  %v481 = vld [vmem:[%s466 + $0x54] sm:$0xff]
  %v482 = vld [vmem:[%s466 + $0x5c] sm:$0xf]
  %v483 = vld [vmem:[%s466 + $0x60] sm:$0xff]
  %v484 = vld [vmem:[%s466 + $0x68] sm:$0xf]
  %v485 = vld [vmem:[%s466 + $0x6c] sm:$0xff]
  %v486 = vld [vmem:[%s466 + $0x74] sm:$0xf]
  %v487 = vld [vmem:[%s1] sm:$0xf]
  %v488 = vld [vmem:[%s1 + $0x4] sm:$0xf]
  %v489 = vld [vmem:[%s1 + $0x8] sm:$0xf]
  %v490 = vld [vmem:[%s1 + $0xc] sm:$0xf]
  %v491 = vld [vmem:[%s1 + $0x10] sm:$0xf]
  %v492 = vld [vmem:[%s1 + $0x14] sm:$0xf]
  %v493 = vld [vmem:[%s1 + $0x18] sm:$0xf]
  %v494 = vld [vmem:[%s1 + $0x1c] sm:$0xf]
  %v495 = vld [vmem:[%s1 + $0x20] sm:$0xf]
  %v496 = vld [vmem:[%s1 + $0x24] sm:$0xf]
  %v497 = vld [vmem:[%s1 + $0x28] sm:$0xf]
  %v498 = vld [vmem:[%s1 + $0x2c] sm:$0xf]
  %v499 = vld [vmem:[%s1 + $0x30] sm:$0xf]
  %v500 = vld [vmem:[%s1 + $0x34] sm:$0xf]
  %v501 = vld [vmem:[%s1 + $0x38] sm:$0xf]
  %v502 = vld [vmem:[%s1 + $0x3c] sm:$0xf]
  %v503 = vld [vmem:[%s1 + $0x40] sm:$0xf]
  %v504 = vld [vmem:[%s1 + $0x44] sm:$0xf]
  %v505 = vld [vmem:[%s1 + $0x48] sm:$0xf]
  %v506 = vld [vmem:[%s1 + $0x4c] sm:$0xf]
  %v507 = vld [vmem:[%s1 + $0x50] sm:$0xf]
  %v508 = vld [vmem:[%s1 + $0x54] sm:$0xf]
  %v509 = vld [vmem:[%s1 + $0x58] sm:$0xf]
  %v510 = vld [vmem:[%s1 + $0x5c] sm:$0xf]
  %v511 = vld [vmem:[%s1 + $0x60] sm:$0xf]
  %v512 = vld [vmem:[%s1 + $0x64] sm:$0xf]
  %v513 = vld [vmem:[%s1 + $0x68] sm:$0xf]
  %v514 = vld [vmem:[%s1 + $0x6c] sm:$0xf]
  %v515 = vld [vmem:[%s1 + $0x70] sm:$0xf]
  %v516 = vld [vmem:[%s1 + $0x74] sm:$0xf]
  %v517 = vld [vmem:[%s1 + $0x78] sm:$0xf]
  %v518 = vld [vmem:[%s1 + $0x7c] sm:$0xf]
  %v519 = vld [vmem:[%s1 + $0x80] sm:$0xf]
  %v520 = vld [vmem:[%s1 + $0x84] sm:$0xf]
  %v521 = vld [vmem:[%s1 + $0x88] sm:$0xf]
  %v522 = vld [vmem:[%s1 + $0x8c] sm:$0xf]
  %v523 = vld [vmem:[%s1 + $0x90] sm:$0xf]
  %v524 = vld [vmem:[%s1 + $0x94] sm:$0xf]
  %v525 = vld [vmem:[%s1 + $0x98] sm:$0xf]
  %v526 = vld [vmem:[%s1 + $0x9c] sm:$0xf]
  %v527 = vld [vmem:[%s1 + $0xa0] sm:$0xf]
  %v528 = vld [vmem:[%s1 + $0xa4] sm:$0xf]
  %v529 = vld [vmem:[%s1 + $0xa8] sm:$0xf]
  %v530 = vld [vmem:[%s1 + $0xac] sm:$0xf]
  %v531 = vld [vmem:[%s1 + $0xb0] sm:$0xf]
  %v532 = vld [vmem:[%s1 + $0xb4] sm:$0xf]
  %v533 = vld [vmem:[%s1 + $0xb8] sm:$0xf]
  %v534 = vld [vmem:[%s1 + $0xbc] sm:$0xf]
  %v555 = vunpack.c.l.b16 %v467
  %v556 = vunpack.c.h.b16 %v467
  %v557 = vunpack.c.l.b16 %v468
  %v558 = vunpack.c.l.b16 %v469
  %v559 = vunpack.c.h.b16 %v469
  %v560 = vunpack.c.l.b16 %v470
  %v561 = vunpack.c.l.b16 %v471
  %v562 = vunpack.c.h.b16 %v471
  %v563 = vunpack.c.l.b16 %v472
  %v564 = vunpack.c.l.b16 %v473
  %v565 = vunpack.c.h.b16 %v473
  %v566 = vunpack.c.l.b16 %v474
  %v567 = vunpack.c.l.b16 %v475
  %v568 = vunpack.c.h.b16 %v475
  %v569 = vunpack.c.l.b16 %v476
  %v570 = vunpack.c.l.b16 %v477
  %v571 = vunpack.c.h.b16 %v477
  %v572 = vunpack.c.l.b16 %v478
  %v573 = vunpack.c.l.b16 %v479
  %v574 = vunpack.c.h.b16 %v479
  %v575 = vunpack.c.l.b16 %v480
  %v576 = vunpack.c.l.b16 %v481
  %v577 = vunpack.c.h.b16 %v481
  %v578 = vunpack.c.l.b16 %v482
  %v579 = vunpack.c.l.b16 %v483
  %v580 = vunpack.c.h.b16 %v483
  %v581 = vunpack.c.l.b16 %v484
  %v582 = vunpack.c.l.b16 %v485
  %v583 = vunpack.c.h.b16 %v485
  %v584 = vunpack.c.l.b16 %v486
  %v585 = vpack.c.b16 %v558, %v555
  %v586 = vpack.c.b16 %v559, %v556
  %v587 = vpack.c.b16 %v560, %v557
  %v588 = vpack.c.b16 %v564, %v561
  %v589 = vpack.c.b16 %v565, %v562
  %v590 = vpack.c.b16 %v566, %v563
  %v591 = vpack.c.b16 %v570, %v567
  %v592 = vpack.c.b16 %v571, %v568
  %v593 = vpack.c.b16 %v572, %v569
  %v594 = vpack.c.b16 %v576, %v573
  %v595 = vpack.c.b16 %v577, %v574
  %v596 = vpack.c.b16 %v578, %v575
  %v597 = vpack.c.b16 %v582, %v579
  %v598 = vpack.c.b16 %v583, %v580
  %v599 = vpack.c.b16 %v584, %v581
  %v663 = vunpack.c.l.b16 %v487
  %v664 = vunpack.c.l.b16 %v488
  %v665 = vunpack.c.l.b16 %v489
  %v666 = vunpack.c.l.b16 %v490
  %v667 = vunpack.c.l.b16 %v491
  %v668 = vunpack.c.l.b16 %v492
  %v669 = vunpack.c.l.b16 %v493
  %v670 = vunpack.c.l.b16 %v494
  %v671 = vunpack.c.l.b16 %v495
  %v672 = vunpack.c.l.b16 %v496
  %v673 = vunpack.c.l.b16 %v497
  %v674 = vunpack.c.l.b16 %v498
  %v675 = vunpack.c.l.b16 %v499
  %v676 = vunpack.c.l.b16 %v500
  %v677 = vunpack.c.l.b16 %v501
  %v678 = vunpack.c.l.b16 %v502
  %v679 = vunpack.c.l.b16 %v503
  %v680 = vunpack.c.l.b16 %v504
  %v681 = vunpack.c.l.b16 %v505
  %v682 = vunpack.c.l.b16 %v506
  %v683 = vunpack.c.l.b16 %v507
  %v684 = vunpack.c.l.b16 %v508
  %v685 = vunpack.c.l.b16 %v509
  %v686 = vunpack.c.l.b16 %v510
  %v687 = vunpack.c.l.b16 %v511
  %v688 = vunpack.c.l.b16 %v512
  %v689 = vunpack.c.l.b16 %v513
  %v690 = vunpack.c.l.b16 %v514
  %v691 = vunpack.c.l.b16 %v515
  %v692 = vunpack.c.l.b16 %v516
  %v693 = vunpack.c.l.b16 %v517
  %v694 = vunpack.c.l.b16 %v518
  %v695 = vunpack.c.l.b16 %v519
  %v696 = vunpack.c.l.b16 %v520
  %v697 = vunpack.c.l.b16 %v521
  %v698 = vunpack.c.l.b16 %v522
  %v699 = vunpack.c.l.b16 %v523
  %v700 = vunpack.c.l.b16 %v524
  %v701 = vunpack.c.l.b16 %v525
  %v702 = vunpack.c.l.b16 %v526
  %v703 = vunpack.c.l.b16 %v527
  %v704 = vunpack.c.l.b16 %v528
  %v705 = vunpack.c.l.b16 %v529
  %v706 = vunpack.c.l.b16 %v530
  %v707 = vunpack.c.l.b16 %v531
  %v708 = vunpack.c.l.b16 %v532
  %v709 = vunpack.c.l.b16 %v533
  %v710 = vunpack.c.l.b16 %v534
  %v711 = vpack.c.b16 %v664, %v663
  %v712 = vpack.c.b16 %v666, %v665
  %v713 = vpack.c.b16 %v668, %v667
  %v714 = vpack.c.b16 %v670, %v669
  %v715 = vpack.c.b16 %v672, %v671
  %v716 = vpack.c.b16 %v674, %v673
  %v717 = vpack.c.b16 %v676, %v675
  %v718 = vpack.c.b16 %v678, %v677
  %v719 = vpack.c.b16 %v680, %v679
  %v720 = vpack.c.b16 %v682, %v681
  %v721 = vpack.c.b16 %v684, %v683
  %v722 = vpack.c.b16 %v686, %v685
  %v723 = vpack.c.b16 %v688, %v687
  %v724 = vpack.c.b16 %v690, %v689
  %v725 = vpack.c.b16 %v692, %v691
  %v726 = vpack.c.b16 %v694, %v693
  %v727 = vpack.c.b16 %v696, %v695
  %v728 = vpack.c.b16 %v698, %v697
  %v729 = vpack.c.b16 %v700, %v699
  %v730 = vpack.c.b16 %v702, %v701
  %v731 = vpack.c.b16 %v704, %v703
  %v732 = vpack.c.b16 %v706, %v705
  %v733 = vpack.c.b16 %v708, %v707
  %v734 = vpack.c.b16 %v710, %v709
  %759 = vmatpush.bf16.msra.mxu0 %v718
  %760 = vmatpush.bf16.msra.mxu0 %v717
  %761 = vmatpush.bf16.msra.mxu0 %v716
  %762 = vmatpush.bf16.msra.mxu0 %v715
  %763 = vmatpush.bf16.msra.mxu0 %v714
  %764 = vmatpush.bf16.msra.mxu0 %v713
  %765 = vmatpush.bf16.msra.mxu0 %v712
  %766 = vmatpush.bf16.msra.mxu0 %v711
  %767 = vmatmul.bf16.gmra.mxu0 %v585
  %v768 = vpop.f32.mrf.mxu0
  %v769 = vadd.f32 %v107, %v768
  %v770 = vpop.f32.mrf.mxu0
  %v771 = vadd.f32 %v107, %v770
  %772 = vmatmul.bf16.gmra.mxu0 %v588
  %v773 = vpop.f32.mrf.mxu0
  %v774 = vadd.f32 %v107, %v773
  %v775 = vpop.f32.mrf.mxu0
  %v776 = vadd.f32 %v107, %v775
  %777 = vmatmul.bf16.gmra.mxu0 %v591
  %v778 = vpop.f32.mrf.mxu0
  %v779 = vadd.f32 %v107, %v778
  %v780 = vpop.f32.mrf.mxu0
  %v781 = vadd.f32 %v107, %v780
  %782 = vmatmul.bf16.gmra.mxu0 %v594
  %v783 = vpop.f32.mrf.mxu0
  %v784 = vadd.f32 %v107, %v783
  %v785 = vpop.f32.mrf.mxu0
  %v786 = vadd.f32 %v107, %v785
  %787 = vmatmul.bf16.gmra.mxu0 %v597
  %v788 = vpop.f32.mrf.mxu0
  %v789 = vadd.f32 %v107, %v788
  %v790 = vpop.f32.mrf.mxu0
  %v791 = vadd.f32 %v107, %v790
  %792 = vdwg.mxu0
  %793 = vmatpush.bf16.msra.mxu0 %v726
  %794 = vmatpush.bf16.msra.mxu0 %v725
  %795 = vmatpush.bf16.msra.mxu0 %v724
  %796 = vmatpush.bf16.msra.mxu0 %v723
  %797 = vmatpush.bf16.msra.mxu0 %v722
  %798 = vmatpush.bf16.msra.mxu0 %v721
  %799 = vmatpush.bf16.msra.mxu0 %v720
  %800 = vmatpush.bf16.msra.mxu0 %v719
  %801 = vmatmul.bf16.gmra.mxu0 %v586
  %v802 = vpop.f32.mrf.mxu0
  %v803 = vadd.f32 %v769, %v802
  %v804 = vpop.f32.mrf.mxu0
  %v805 = vadd.f32 %v771, %v804
  %806 = vmatmul.bf16.gmra.mxu0 %v589
  %v807 = vpop.f32.mrf.mxu0
  %v808 = vadd.f32 %v774, %v807
  %v809 = vpop.f32.mrf.mxu0
  %v810 = vadd.f32 %v776, %v809
  %811 = vmatmul.bf16.gmra.mxu0 %v592
  %v812 = vpop.f32.mrf.mxu0
  %v813 = vadd.f32 %v779, %v812
  %v814 = vpop.f32.mrf.mxu0
  %v815 = vadd.f32 %v781, %v814
  %816 = vmatmul.bf16.gmra.mxu0 %v595
  %v817 = vpop.f32.mrf.mxu0
  %v818 = vadd.f32 %v784, %v817
  %v819 = vpop.f32.mrf.mxu0
  %v820 = vadd.f32 %v786, %v819
  %821 = vmatmul.bf16.gmra.mxu0 %v598
  %v822 = vpop.f32.mrf.mxu0
  %v823 = vadd.f32 %v789, %v822
  %v824 = vpop.f32.mrf.mxu0
  %v825 = vadd.f32 %v791, %v824
  %826 = vdwg.mxu0
  %827 = vmatpush.bf16.msra.mxu0 %v734
  %828 = vmatpush.bf16.msra.mxu0 %v733
  %829 = vmatpush.bf16.msra.mxu0 %v732
  %830 = vmatpush.bf16.msra.mxu0 %v731
  %831 = vmatpush.bf16.msra.mxu0 %v730
  %832 = vmatpush.bf16.msra.mxu0 %v729
  %833 = vmatpush.bf16.msra.mxu0 %v728
  %834 = vmatpush.bf16.msra.mxu0 %v727
  %835 = vmatmul.bf16.gmra.mxu0 %v587
  %v836 = vpop.f32.mrf.mxu0
  %v837 = vadd.f32 %v803, %v836
  %v838 = vpop.f32.mrf.mxu0
  %v839 = vadd.f32 %v805, %v838
  %840 = vmatmul.bf16.gmra.mxu0 %v590
  %v841 = vpop.f32.mrf.mxu0
  %v842 = vadd.f32 %v808, %v841
  %v843 = vpop.f32.mrf.mxu0
  %v844 = vadd.f32 %v810, %v843
  %845 = vmatmul.bf16.gmra.mxu0 %v593
  %v846 = vpop.f32.mrf.mxu0
  %v847 = vadd.f32 %v813, %v846
  %v848 = vpop.f32.mrf.mxu0
  %v849 = vadd.f32 %v815, %v848
  %850 = vmatmul.bf16.gmra.mxu0 %v596
  %v851 = vpop.f32.mrf.mxu0
  %v852 = vadd.f32 %v818, %v851
  %v853 = vpop.f32.mrf.mxu0
  %v854 = vadd.f32 %v820, %v853
  %855 = vmatmul.bf16.gmra.mxu0 %v599
  %v856 = vpop.f32.mrf.mxu0
  %v857 = vadd.f32 %v823, %v856
  %v858 = vpop.f32.mrf.mxu0
  %v859 = vadd.f32 %v825, %v858
  %860 = vdwg.mxu0
  %v861 = vmax.f32 %v837, 0.0
  %v862 = vmax.f32 %v839, 0.0
  %v863 = vmax.f32 %v842, 0.0
  %v864 = vmax.f32 %v844, 0.0
  %v865 = vmax.f32 %v847, 0.0
  %v866 = vmax.f32 %v849, 0.0
  %v867 = vmax.f32 %v852, 0.0
  %v868 = vmax.f32 %v854, 0.0
  %v869 = vmax.f32 %v857, 0.0
  %v870 = vmax.f32 %v859, 0.0
  %v871 = vpack.c.bf16 %v861, %v861
  %v872 = vpack.c.bf16 %v862, %v862
  %v873 = vpack.c.bf16 %v863, %v863
  %v874 = vpack.c.bf16 %v864, %v864
  %v875 = vpack.c.bf16 %v865, %v865
  %v876 = vpack.c.bf16 %v866, %v866
  %v877 = vpack.c.bf16 %v867, %v867
  %v878 = vpack.c.bf16 %v868, %v868
  %v879 = vpack.c.bf16 %v869, %v869
  %v880 = vpack.c.bf16 %v870, %v870
  %s881 = scalar_lea.vmem [#allocation2], 40
  %882 = vst.msk [vmem:[%s881] sm:$0xf] %vm455, %v871
  %883 = vst.msk [vmem:[%s881 + $0x4] sm:$0xf] %vm455, %v872
  %884 = vst.msk [vmem:[%s881 + $0x8] sm:$0xf] %vm455, %v873
  %885 = vst.msk [vmem:[%s881 + $0xc] sm:$0xf] %vm455, %v874
  %886 = vst.msk [vmem:[%s881 + $0x10] sm:$0xf] %vm455, %v875
  %887 = vst.msk [vmem:[%s881 + $0x14] sm:$0xf] %vm455, %v876
  %888 = vst.msk [vmem:[%s881 + $0x18] sm:$0xf] %vm455, %v877
  %889 = vst.msk [vmem:[%s881 + $0x1c] sm:$0xf] %vm455, %v878
  %890 = vst.msk [vmem:[%s881 + $0x20] sm:$0xf] %vm455, %v879
  %891 = vst.msk [vmem:[%s881 + $0x24] sm:$0xf] %vm455, %v880
  %s892 = scalar_lea.vmem %s0, 240
  %v893 = vld [vmem:[%s892] sm:$0xff]
  %v894 = vld [vmem:[%s892 + $0x8] sm:$0xf]
  %v895 = vld [vmem:[%s892 + $0xc] sm:$0xff]
  %v896 = vld [vmem:[%s892 + $0x14] sm:$0xf]
  %v897 = vld [vmem:[%s892 + $0x18] sm:$0xff]
  %v898 = vld [vmem:[%s892 + $0x20] sm:$0xf]
  %v899 = vld [vmem:[%s892 + $0x24] sm:$0xff]
  %v900 = vld [vmem:[%s892 + $0x2c] sm:$0xf]
  %v901 = vld [vmem:[%s892 + $0x30] sm:$0xff]
  %v902 = vld [vmem:[%s892 + $0x38] sm:$0xf]
  %v903 = vld [vmem:[%s892 + $0x3c] sm:$0xff]
  %v904 = vld [vmem:[%s892 + $0x44] sm:$0xf]
  %v905 = vld [vmem:[%s892 + $0x48] sm:$0xff]
  %v906 = vld [vmem:[%s892 + $0x50] sm:$0xf]
  %v907 = vld [vmem:[%s892 + $0x54] sm:$0xff]
  %v908 = vld [vmem:[%s892 + $0x5c] sm:$0xf]
  %v909 = vld [vmem:[%s892 + $0x60] sm:$0xff]
  %v910 = vld [vmem:[%s892 + $0x68] sm:$0xf]
  %v911 = vld [vmem:[%s892 + $0x6c] sm:$0xff]
  %v912 = vld [vmem:[%s892 + $0x74] sm:$0xf]
  %v913 = vld [vmem:[%s1] sm:$0xf]
  %v914 = vld [vmem:[%s1 + $0x4] sm:$0xf]
  %v915 = vld [vmem:[%s1 + $0x8] sm:$0xf]
  %v916 = vld [vmem:[%s1 + $0xc] sm:$0xf]
  %v917 = vld [vmem:[%s1 + $0x10] sm:$0xf]
  %v918 = vld [vmem:[%s1 + $0x14] sm:$0xf]
  %v919 = vld [vmem:[%s1 + $0x18] sm:$0xf]
  %v920 = vld [vmem:[%s1 + $0x1c] sm:$0xf]
  %v921 = vld [vmem:[%s1 + $0x20] sm:$0xf]
  %v922 = vld [vmem:[%s1 + $0x24] sm:$0xf]
  %v923 = vld [vmem:[%s1 + $0x28] sm:$0xf]
  %v924 = vld [vmem:[%s1 + $0x2c] sm:$0xf]
  %v925 = vld [vmem:[%s1 + $0x30] sm:$0xf]
  %v926 = vld [vmem:[%s1 + $0x34] sm:$0xf]
  %v927 = vld [vmem:[%s1 + $0x38] sm:$0xf]
  %v928 = vld [vmem:[%s1 + $0x3c] sm:$0xf]
  %v929 = vld [vmem:[%s1 + $0x40] sm:$0xf]
  %v930 = vld [vmem:[%s1 + $0x44] sm:$0xf]
  %v931 = vld [vmem:[%s1 + $0x48] sm:$0xf]
  %v932 = vld [vmem:[%s1 + $0x4c] sm:$0xf]
  %v933 = vld [vmem:[%s1 + $0x50] sm:$0xf]
  %v934 = vld [vmem:[%s1 + $0x54] sm:$0xf]
  %v935 = vld [vmem:[%s1 + $0x58] sm:$0xf]
  %v936 = vld [vmem:[%s1 + $0x5c] sm:$0xf]
  %v937 = vld [vmem:[%s1 + $0x60] sm:$0xf]
  %v938 = vld [vmem:[%s1 + $0x64] sm:$0xf]
  %v939 = vld [vmem:[%s1 + $0x68] sm:$0xf]
  %v940 = vld [vmem:[%s1 + $0x6c] sm:$0xf]
  %v941 = vld [vmem:[%s1 + $0x70] sm:$0xf]
  %v942 = vld [vmem:[%s1 + $0x74] sm:$0xf]
  %v943 = vld [vmem:[%s1 + $0x78] sm:$0xf]
  %v944 = vld [vmem:[%s1 + $0x7c] sm:$0xf]
  %v945 = vld [vmem:[%s1 + $0x80] sm:$0xf]
  %v946 = vld [vmem:[%s1 + $0x84] sm:$0xf]
  %v947 = vld [vmem:[%s1 + $0x88] sm:$0xf]
  %v948 = vld [vmem:[%s1 + $0x8c] sm:$0xf]
  %v949 = vld [vmem:[%s1 + $0x90] sm:$0xf]
  %v950 = vld [vmem:[%s1 + $0x94] sm:$0xf]
  %v951 = vld [vmem:[%s1 + $0x98] sm:$0xf]
  %v952 = vld [vmem:[%s1 + $0x9c] sm:$0xf]
  %v953 = vld [vmem:[%s1 + $0xa0] sm:$0xf]
  %v954 = vld [vmem:[%s1 + $0xa4] sm:$0xf]
  %v955 = vld [vmem:[%s1 + $0xa8] sm:$0xf]
  %v956 = vld [vmem:[%s1 + $0xac] sm:$0xf]
  %v957 = vld [vmem:[%s1 + $0xb0] sm:$0xf]
  %v958 = vld [vmem:[%s1 + $0xb4] sm:$0xf]
  %v959 = vld [vmem:[%s1 + $0xb8] sm:$0xf]
  %v960 = vld [vmem:[%s1 + $0xbc] sm:$0xf]
  %v981 = vunpack.c.l.b16 %v893
  %v982 = vunpack.c.h.b16 %v893
  %v983 = vunpack.c.l.b16 %v894
  %v984 = vunpack.c.l.b16 %v895
  %v985 = vunpack.c.h.b16 %v895
  %v986 = vunpack.c.l.b16 %v896
  %v987 = vunpack.c.l.b16 %v897
  %v988 = vunpack.c.h.b16 %v897
  %v989 = vunpack.c.l.b16 %v898
  %v990 = vunpack.c.l.b16 %v899
  %v991 = vunpack.c.h.b16 %v899
  %v992 = vunpack.c.l.b16 %v900
  %v993 = vunpack.c.l.b16 %v901
  %v994 = vunpack.c.h.b16 %v901
  %v995 = vunpack.c.l.b16 %v902
  %v996 = vunpack.c.l.b16 %v903
  %v997 = vunpack.c.h.b16 %v903
  %v998 = vunpack.c.l.b16 %v904
  %v999 = vunpack.c.l.b16 %v905
  %v1000 = vunpack.c.h.b16 %v905
  %v1001 = vunpack.c.l.b16 %v906
  %v1002 = vunpack.c.l.b16 %v907
  %v1003 = vunpack.c.h.b16 %v907
  %v1004 = vunpack.c.l.b16 %v908
  %v1005 = vunpack.c.l.b16 %v909
  %v1006 = vunpack.c.h.b16 %v909
  %v1007 = vunpack.c.l.b16 %v910
  %v1008 = vunpack.c.l.b16 %v911
  %v1009 = vunpack.c.h.b16 %v911
  %v1010 = vunpack.c.l.b16 %v912
  %v1011 = vpack.c.b16 %v984, %v981
  %v1012 = vpack.c.b16 %v985, %v982
  %v1013 = vpack.c.b16 %v986, %v983
  %v1014 = vpack.c.b16 %v990, %v987
  %v1015 = vpack.c.b16 %v991, %v988
  %v1016 = vpack.c.b16 %v992, %v989
  %v1017 = vpack.c.b16 %v996, %v993
  %v1018 = vpack.c.b16 %v997, %v994
  %v1019 = vpack.c.b16 %v998, %v995
  %v1020 = vpack.c.b16 %v1002, %v999
  %v1021 = vpack.c.b16 %v1003, %v1000
  %v1022 = vpack.c.b16 %v1004, %v1001
  %v1023 = vpack.c.b16 %v1008, %v1005
  %v1024 = vpack.c.b16 %v1009, %v1006
  %v1025 = vpack.c.b16 %v1010, %v1007
  %v1089 = vunpack.c.l.b16 %v913
  %v1090 = vunpack.c.l.b16 %v914
  %v1091 = vunpack.c.l.b16 %v915
  %v1092 = vunpack.c.l.b16 %v916
  %v1093 = vunpack.c.l.b16 %v917
  %v1094 = vunpack.c.l.b16 %v918
  %v1095 = vunpack.c.l.b16 %v919
  %v1096 = vunpack.c.l.b16 %v920
  %v1097 = vunpack.c.l.b16 %v921
  %v1098 = vunpack.c.l.b16 %v922
  %v1099 = vunpack.c.l.b16 %v923
  %v1100 = vunpack.c.l.b16 %v924
  %v1101 = vunpack.c.l.b16 %v925
  %v1102 = vunpack.c.l.b16 %v926
  %v1103 = vunpack.c.l.b16 %v927
  %v1104 = vunpack.c.l.b16 %v928
  %v1105 = vunpack.c.l.b16 %v929
  %v1106 = vunpack.c.l.b16 %v930
  %v1107 = vunpack.c.l.b16 %v931
  %v1108 = vunpack.c.l.b16 %v932
  %v1109 = vunpack.c.l.b16 %v933
  %v1110 = vunpack.c.l.b16 %v934
  %v1111 = vunpack.c.l.b16 %v935
  %v1112 = vunpack.c.l.b16 %v936
  %v1113 = vunpack.c.l.b16 %v937
  %v1114 = vunpack.c.l.b16 %v938
  %v1115 = vunpack.c.l.b16 %v939
  %v1116 = vunpack.c.l.b16 %v940
  %v1117 = vunpack.c.l.b16 %v941
  %v1118 = vunpack.c.l.b16 %v942
  %v1119 = vunpack.c.l.b16 %v943
  %v1120 = vunpack.c.l.b16 %v944
  %v1121 = vunpack.c.l.b16 %v945
  %v1122 = vunpack.c.l.b16 %v946
  %v1123 = vunpack.c.l.b16 %v947
  %v1124 = vunpack.c.l.b16 %v948
  %v1125 = vunpack.c.l.b16 %v949
  %v1126 = vunpack.c.l.b16 %v950
  %v1127 = vunpack.c.l.b16 %v951
  %v1128 = vunpack.c.l.b16 %v952
  %v1129 = vunpack.c.l.b16 %v953
  %v1130 = vunpack.c.l.b16 %v954
  %v1131 = vunpack.c.l.b16 %v955
  %v1132 = vunpack.c.l.b16 %v956
  %v1133 = vunpack.c.l.b16 %v957
  %v1134 = vunpack.c.l.b16 %v958
  %v1135 = vunpack.c.l.b16 %v959
  %v1136 = vunpack.c.l.b16 %v960
  %v1137 = vpack.c.b16 %v1090, %v1089
  %v1138 = vpack.c.b16 %v1092, %v1091
  %v1139 = vpack.c.b16 %v1094, %v1093
  %v1140 = vpack.c.b16 %v1096, %v1095
  %v1141 = vpack.c.b16 %v1098, %v1097
  %v1142 = vpack.c.b16 %v1100, %v1099
  %v1143 = vpack.c.b16 %v1102, %v1101
  %v1144 = vpack.c.b16 %v1104, %v1103
  %v1145 = vpack.c.b16 %v1106, %v1105
  %v1146 = vpack.c.b16 %v1108, %v1107
  %v1147 = vpack.c.b16 %v1110, %v1109
  %v1148 = vpack.c.b16 %v1112, %v1111
  %v1149 = vpack.c.b16 %v1114, %v1113
  %v1150 = vpack.c.b16 %v1116, %v1115
  %v1151 = vpack.c.b16 %v1118, %v1117
  %v1152 = vpack.c.b16 %v1120, %v1119
  %v1153 = vpack.c.b16 %v1122, %v1121
  %v1154 = vpack.c.b16 %v1124, %v1123
  %v1155 = vpack.c.b16 %v1126, %v1125
  %v1156 = vpack.c.b16 %v1128, %v1127
  %v1157 = vpack.c.b16 %v1130, %v1129
  %v1158 = vpack.c.b16 %v1132, %v1131
  %v1159 = vpack.c.b16 %v1134, %v1133
  %v1160 = vpack.c.b16 %v1136, %v1135
  %1185 = vmatpush.bf16.msra.mxu0 %v1144
  %1186 = vmatpush.bf16.msra.mxu0 %v1143
  %1187 = vmatpush.bf16.msra.mxu0 %v1142
  %1188 = vmatpush.bf16.msra.mxu0 %v1141
  %1189 = vmatpush.bf16.msra.mxu0 %v1140
  %1190 = vmatpush.bf16.msra.mxu0 %v1139
  %1191 = vmatpush.bf16.msra.mxu0 %v1138
  %1192 = vmatpush.bf16.msra.mxu0 %v1137
  %1193 = vmatmul.bf16.gmra.mxu0 %v1011
  %v1194 = vpop.f32.mrf.mxu0
  %v1195 = vadd.f32 %v107, %v1194
  %v1196 = vpop.f32.mrf.mxu0
  %v1197 = vadd.f32 %v107, %v1196
  %1198 = vmatmul.bf16.gmra.mxu0 %v1014
  %v1199 = vpop.f32.mrf.mxu0
  %v1200 = vadd.f32 %v107, %v1199
  %v1201 = vpop.f32.mrf.mxu0
  %v1202 = vadd.f32 %v107, %v1201
  %1203 = vmatmul.bf16.gmra.mxu0 %v1017
  %v1204 = vpop.f32.mrf.mxu0
  %v1205 = vadd.f32 %v107, %v1204
  %v1206 = vpop.f32.mrf.mxu0
  %v1207 = vadd.f32 %v107, %v1206
  %1208 = vmatmul.bf16.gmra.mxu0 %v1020
  %v1209 = vpop.f32.mrf.mxu0
  %v1210 = vadd.f32 %v107, %v1209
  %v1211 = vpop.f32.mrf.mxu0
  %v1212 = vadd.f32 %v107, %v1211
  %1213 = vmatmul.bf16.gmra.mxu0 %v1023
  %v1214 = vpop.f32.mrf.mxu0
  %v1215 = vadd.f32 %v107, %v1214
  %v1216 = vpop.f32.mrf.mxu0
  %v1217 = vadd.f32 %v107, %v1216
  %1218 = vdwg.mxu0
  %1219 = vmatpush.bf16.msra.mxu0 %v1152
  %1220 = vmatpush.bf16.msra.mxu0 %v1151
  %1221 = vmatpush.bf16.msra.mxu0 %v1150
  %1222 = vmatpush.bf16.msra.mxu0 %v1149
  %1223 = vmatpush.bf16.msra.mxu0 %v1148
  %1224 = vmatpush.bf16.msra.mxu0 %v1147
  %1225 = vmatpush.bf16.msra.mxu0 %v1146
  %1226 = vmatpush.bf16.msra.mxu0 %v1145
  %1227 = vmatmul.bf16.gmra.mxu0 %v1012
  %v1228 = vpop.f32.mrf.mxu0
  %v1229 = vadd.f32 %v1195, %v1228
  %v1230 = vpop.f32.mrf.mxu0
  %v1231 = vadd.f32 %v1197, %v1230
  %1232 = vmatmul.bf16.gmra.mxu0 %v1015
  %v1233 = vpop.f32.mrf.mxu0
  %v1234 = vadd.f32 %v1200, %v1233
  %v1235 = vpop.f32.mrf.mxu0
  %v1236 = vadd.f32 %v1202, %v1235
  %1237 = vmatmul.bf16.gmra.mxu0 %v1018
  %v1238 = vpop.f32.mrf.mxu0
  %v1239 = vadd.f32 %v1205, %v1238
  %v1240 = vpop.f32.mrf.mxu0
  %v1241 = vadd.f32 %v1207, %v1240
  %1242 = vmatmul.bf16.gmra.mxu0 %v1021
  %v1243 = vpop.f32.mrf.mxu0
  %v1244 = vadd.f32 %v1210, %v1243
  %v1245 = vpop.f32.mrf.mxu0
  %v1246 = vadd.f32 %v1212, %v1245
  %1247 = vmatmul.bf16.gmra.mxu0 %v1024
  %v1248 = vpop.f32.mrf.mxu0
  %v1249 = vadd.f32 %v1215, %v1248
  %v1250 = vpop.f32.mrf.mxu0
  %v1251 = vadd.f32 %v1217, %v1250
  %1252 = vdwg.mxu0
  %1253 = vmatpush.bf16.msra.mxu0 %v1160
  %1254 = vmatpush.bf16.msra.mxu0 %v1159
  %1255 = vmatpush.bf16.msra.mxu0 %v1158
  %1256 = vmatpush.bf16.msra.mxu0 %v1157
  %1257 = vmatpush.bf16.msra.mxu0 %v1156
  %1258 = vmatpush.bf16.msra.mxu0 %v1155
  %1259 = vmatpush.bf16.msra.mxu0 %v1154
  %1260 = vmatpush.bf16.msra.mxu0 %v1153
  %1261 = vmatmul.bf16.gmra.mxu0 %v1013
  %v1262 = vpop.f32.mrf.mxu0
  %v1263 = vadd.f32 %v1229, %v1262
  %v1264 = vpop.f32.mrf.mxu0
  %v1265 = vadd.f32 %v1231, %v1264
  %1266 = vmatmul.bf16.gmra.mxu0 %v1016
  %v1267 = vpop.f32.mrf.mxu0
  %v1268 = vadd.f32 %v1234, %v1267
  %v1269 = vpop.f32.mrf.mxu0
  %v1270 = vadd.f32 %v1236, %v1269
  %1271 = vmatmul.bf16.gmra.mxu0 %v1019
  %v1272 = vpop.f32.mrf.mxu0
  %v1273 = vadd.f32 %v1239, %v1272
  %v1274 = vpop.f32.mrf.mxu0
  %v1275 = vadd.f32 %v1241, %v1274
  %1276 = vmatmul.bf16.gmra.mxu0 %v1022
  %v1277 = vpop.f32.mrf.mxu0
  %v1278 = vadd.f32 %v1244, %v1277
  %v1279 = vpop.f32.mrf.mxu0
  %v1280 = vadd.f32 %v1246, %v1279
  %1281 = vmatmul.bf16.gmra.mxu0 %v1025
  %v1282 = vpop.f32.mrf.mxu0
  %v1283 = vadd.f32 %v1249, %v1282
  %v1284 = vpop.f32.mrf.mxu0
  %v1285 = vadd.f32 %v1251, %v1284
  %1286 = vdwg.mxu0
  %v1287 = vmax.f32 %v1263, 0.0
  %v1288 = vmax.f32 %v1265, 0.0
  %v1289 = vmax.f32 %v1268, 0.0
  %v1290 = vmax.f32 %v1270, 0.0
  %v1291 = vmax.f32 %v1273, 0.0
  %v1292 = vmax.f32 %v1275, 0.0
  %v1293 = vmax.f32 %v1278, 0.0
  %v1294 = vmax.f32 %v1280, 0.0
  %v1295 = vmax.f32 %v1283, 0.0
  %v1296 = vmax.f32 %v1285, 0.0
  %v1297 = vpack.c.bf16 %v1287, %v1287
  %v1298 = vpack.c.bf16 %v1288, %v1288
  %v1299 = vpack.c.bf16 %v1289, %v1289
  %v1300 = vpack.c.bf16 %v1290, %v1290
  %v1301 = vpack.c.bf16 %v1291, %v1291
  %v1302 = vpack.c.bf16 %v1292, %v1292
  %v1303 = vpack.c.bf16 %v1293, %v1293
  %v1304 = vpack.c.bf16 %v1294, %v1294
  %v1305 = vpack.c.bf16 %v1295, %v1295
  %v1306 = vpack.c.bf16 %v1296, %v1296
  %s1307 = scalar_lea.vmem [#allocation2], 80
  %1308 = vst.msk [vmem:[%s1307] sm:$0xf] %vm455, %v1297
  %1309 = vst.msk [vmem:[%s1307 + $0x4] sm:$0xf] %vm455, %v1298
  %1310 = vst.msk [vmem:[%s1307 + $0x8] sm:$0xf] %vm455, %v1299
  %1311 = vst.msk [vmem:[%s1307 + $0xc] sm:$0xf] %vm455, %v1300
  %1312 = vst.msk [vmem:[%s1307 + $0x10] sm:$0xf] %vm455, %v1301
  %1313 = vst.msk [vmem:[%s1307 + $0x14] sm:$0xf] %vm455, %v1302
  %1314 = vst.msk [vmem:[%s1307 + $0x18] sm:$0xf] %vm455, %v1303
  %1315 = vst.msk [vmem:[%s1307 + $0x1c] sm:$0xf] %vm455, %v1304
  %1316 = vst.msk [vmem:[%s1307 + $0x20] sm:$0xf] %vm455, %v1305
  %1317 = vst.msk [vmem:[%s1307 + $0x24] sm:$0xf] %vm455, %v1306
  %s1318 = scalar_lea.vmem %s0, 360
  %v1319 = vld [vmem:[%s1318] sm:$0xff]
  %v1320 = vld [vmem:[%s1318 + $0x8] sm:$0xf]
  %v1321 = vld [vmem:[%s1318 + $0xc] sm:$0xff]
  %v1322 = vld [vmem:[%s1318 + $0x14] sm:$0xf]
  %v1323 = vld [vmem:[%s1318 + $0x18] sm:$0xff]
  %v1324 = vld [vmem:[%s1318 + $0x20] sm:$0xf]
  %v1325 = vld [vmem:[%s1318 + $0x24] sm:$0xff]
  %v1326 = vld [vmem:[%s1318 + $0x2c] sm:$0xf]
  %v1327 = vld [vmem:[%s1318 + $0x30] sm:$0xff]
  %v1328 = vld [vmem:[%s1318 + $0x38] sm:$0xf]
  %v1329 = vld [vmem:[%s1318 + $0x3c] sm:$0xff]
  %v1330 = vld [vmem:[%s1318 + $0x44] sm:$0xf]
  %v1331 = vld [vmem:[%s1318 + $0x48] sm:$0xff]
  %v1332 = vld [vmem:[%s1318 + $0x50] sm:$0xf]
  %v1333 = vld [vmem:[%s1318 + $0x54] sm:$0xff]
  %v1334 = vld [vmem:[%s1318 + $0x5c] sm:$0xf]
  %v1335 = vld [vmem:[%s1318 + $0x60] sm:$0xff]
  %v1336 = vld [vmem:[%s1318 + $0x68] sm:$0xf]
  %v1337 = vld [vmem:[%s1318 + $0x6c] sm:$0xff]
  %v1338 = vld [vmem:[%s1318 + $0x74] sm:$0xf]
  %v1339 = vld [vmem:[%s1] sm:$0xf]
  %v1340 = vld [vmem:[%s1 + $0x4] sm:$0xf]
  %v1341 = vld [vmem:[%s1 + $0x8] sm:$0xf]
  %v1342 = vld [vmem:[%s1 + $0xc] sm:$0xf]
  %v1343 = vld [vmem:[%s1 + $0x10] sm:$0xf]
  %v1344 = vld [vmem:[%s1 + $0x14] sm:$0xf]
  %v1345 = vld [vmem:[%s1 + $0x18] sm:$0xf]
  %v1346 = vld [vmem:[%s1 + $0x1c] sm:$0xf]
  %v1347 = vld [vmem:[%s1 + $0x20] sm:$0xf]
  %v1348 = vld [vmem:[%s1 + $0x24] sm:$0xf]
  %v1349 = vld [vmem:[%s1 + $0x28] sm:$0xf]
  %v1350 = vld [vmem:[%s1 + $0x2c] sm:$0xf]
  %v1351 = vld [vmem:[%s1 + $0x30] sm:$0xf]
  %v1352 = vld [vmem:[%s1 + $0x34] sm:$0xf]
  %v1353 = vld [vmem:[%s1 + $0x38] sm:$0xf]
  %v1354 = vld [vmem:[%s1 + $0x3c] sm:$0xf]
  %v1355 = vld [vmem:[%s1 + $0x40] sm:$0xf]
  %v1356 = vld [vmem:[%s1 + $0x44] sm:$0xf]
  %v1357 = vld [vmem:[%s1 + $0x48] sm:$0xf]
  %v1358 = vld [vmem:[%s1 + $0x4c] sm:$0xf]
  %v1359 = vld [vmem:[%s1 + $0x50] sm:$0xf]
  %v1360 = vld [vmem:[%s1 + $0x54] sm:$0xf]
  %v1361 = vld [vmem:[%s1 + $0x58] sm:$0xf]
  %v1362 = vld [vmem:[%s1 + $0x5c] sm:$0xf]
  %v1363 = vld [vmem:[%s1 + $0x60] sm:$0xf]
  %v1364 = vld [vmem:[%s1 + $0x64] sm:$0xf]
  %v1365 = vld [vmem:[%s1 + $0x68] sm:$0xf]
  %v1366 = vld [vmem:[%s1 + $0x6c] sm:$0xf]
  %v1367 = vld [vmem:[%s1 + $0x70] sm:$0xf]
  %v1368 = vld [vmem:[%s1 + $0x74] sm:$0xf]
  %v1369 = vld [vmem:[%s1 + $0x78] sm:$0xf]
  %v1370 = vld [vmem:[%s1 + $0x7c] sm:$0xf]
  %v1371 = vld [vmem:[%s1 + $0x80] sm:$0xf]
  %v1372 = vld [vmem:[%s1 + $0x84] sm:$0xf]
  %v1373 = vld [vmem:[%s1 + $0x88] sm:$0xf]
  %v1374 = vld [vmem:[%s1 + $0x8c] sm:$0xf]
  %v1375 = vld [vmem:[%s1 + $0x90] sm:$0xf]
  %v1376 = vld [vmem:[%s1 + $0x94] sm:$0xf]
  %v1377 = vld [vmem:[%s1 + $0x98] sm:$0xf]
  %v1378 = vld [vmem:[%s1 + $0x9c] sm:$0xf]
  %v1379 = vld [vmem:[%s1 + $0xa0] sm:$0xf]
  %v1380 = vld [vmem:[%s1 + $0xa4] sm:$0xf]
  %v1381 = vld [vmem:[%s1 + $0xa8] sm:$0xf]
  %v1382 = vld [vmem:[%s1 + $0xac] sm:$0xf]
  %v1383 = vld [vmem:[%s1 + $0xb0] sm:$0xf]
  %v1384 = vld [vmem:[%s1 + $0xb4] sm:$0xf]
  %v1385 = vld [vmem:[%s1 + $0xb8] sm:$0xf]
  %v1386 = vld [vmem:[%s1 + $0xbc] sm:$0xf]
  %v1407 = vunpack.c.l.b16 %v1319
  %v1408 = vunpack.c.h.b16 %v1319
  %v1409 = vunpack.c.l.b16 %v1320
  %v1410 = vunpack.c.l.b16 %v1321
  %v1411 = vunpack.c.h.b16 %v1321
  %v1412 = vunpack.c.l.b16 %v1322
  %v1413 = vunpack.c.l.b16 %v1323
  %v1414 = vunpack.c.h.b16 %v1323
  %v1415 = vunpack.c.l.b16 %v1324
  %v1416 = vunpack.c.l.b16 %v1325
  %v1417 = vunpack.c.h.b16 %v1325
  %v1418 = vunpack.c.l.b16 %v1326
  %v1419 = vunpack.c.l.b16 %v1327
  %v1420 = vunpack.c.h.b16 %v1327
  %v1421 = vunpack.c.l.b16 %v1328
  %v1422 = vunpack.c.l.b16 %v1329
  %v1423 = vunpack.c.h.b16 %v1329
  %v1424 = vunpack.c.l.b16 %v1330
  %v1425 = vunpack.c.l.b16 %v1331
  %v1426 = vunpack.c.h.b16 %v1331
  %v1427 = vunpack.c.l.b16 %v1332
  %v1428 = vunpack.c.l.b16 %v1333
  %v1429 = vunpack.c.h.b16 %v1333
  %v1430 = vunpack.c.l.b16 %v1334
  %v1431 = vunpack.c.l.b16 %v1335
  %v1432 = vunpack.c.h.b16 %v1335
  %v1433 = vunpack.c.l.b16 %v1336
  %v1434 = vunpack.c.l.b16 %v1337
  %v1435 = vunpack.c.h.b16 %v1337
  %v1436 = vunpack.c.l.b16 %v1338
  %v1437 = vpack.c.b16 %v1410, %v1407
  %v1438 = vpack.c.b16 %v1411, %v1408
  %v1439 = vpack.c.b16 %v1412, %v1409
  %v1440 = vpack.c.b16 %v1416, %v1413
  %v1441 = vpack.c.b16 %v1417, %v1414
  %v1442 = vpack.c.b16 %v1418, %v1415
  %v1443 = vpack.c.b16 %v1422, %v1419
  %v1444 = vpack.c.b16 %v1423, %v1420
  %v1445 = vpack.c.b16 %v1424, %v1421
  %v1446 = vpack.c.b16 %v1428, %v1425
  %v1447 = vpack.c.b16 %v1429, %v1426
  %v1448 = vpack.c.b16 %v1430, %v1427
  %v1449 = vpack.c.b16 %v1434, %v1431
  %v1450 = vpack.c.b16 %v1435, %v1432
  %v1451 = vpack.c.b16 %v1436, %v1433
  %v1515 = vunpack.c.l.b16 %v1339
  %v1516 = vunpack.c.l.b16 %v1340
  %v1517 = vunpack.c.l.b16 %v1341
  %v1518 = vunpack.c.l.b16 %v1342
  %v1519 = vunpack.c.l.b16 %v1343
  %v1520 = vunpack.c.l.b16 %v1344
  %v1521 = vunpack.c.l.b16 %v1345
  %v1522 = vunpack.c.l.b16 %v1346
  %v1523 = vunpack.c.l.b16 %v1347
  %v1524 = vunpack.c.l.b16 %v1348
  %v1525 = vunpack.c.l.b16 %v1349
  %v1526 = vunpack.c.l.b16 %v1350
  %v1527 = vunpack.c.l.b16 %v1351
  %v1528 = vunpack.c.l.b16 %v1352
  %v1529 = vunpack.c.l.b16 %v1353
  %v1530 = vunpack.c.l.b16 %v1354
  %v1531 = vunpack.c.l.b16 %v1355
  %v1532 = vunpack.c.l.b16 %v1356
  %v1533 = vunpack.c.l.b16 %v1357
  %v1534 = vunpack.c.l.b16 %v1358
  %v1535 = vunpack.c.l.b16 %v1359
  %v1536 = vunpack.c.l.b16 %v1360
  %v1537 = vunpack.c.l.b16 %v1361
  %v1538 = vunpack.c.l.b16 %v1362
  %v1539 = vunpack.c.l.b16 %v1363
  %v1540 = vunpack.c.l.b16 %v1364
  %v1541 = vunpack.c.l.b16 %v1365
  %v1542 = vunpack.c.l.b16 %v1366
  %v1543 = vunpack.c.l.b16 %v1367
  %v1544 = vunpack.c.l.b16 %v1368
  %v1545 = vunpack.c.l.b16 %v1369
  %v1546 = vunpack.c.l.b16 %v1370
  %v1547 = vunpack.c.l.b16 %v1371
  %v1548 = vunpack.c.l.b16 %v1372
  %v1549 = vunpack.c.l.b16 %v1373
  %v1550 = vunpack.c.l.b16 %v1374
  %v1551 = vunpack.c.l.b16 %v1375
  %v1552 = vunpack.c.l.b16 %v1376
  %v1553 = vunpack.c.l.b16 %v1377
  %v1554 = vunpack.c.l.b16 %v1378
  %v1555 = vunpack.c.l.b16 %v1379
  %v1556 = vunpack.c.l.b16 %v1380
  %v1557 = vunpack.c.l.b16 %v1381
  %v1558 = vunpack.c.l.b16 %v1382
  %v1559 = vunpack.c.l.b16 %v1383
  %v1560 = vunpack.c.l.b16 %v1384
  %v1561 = vunpack.c.l.b16 %v1385
  %v1562 = vunpack.c.l.b16 %v1386
  %v1563 = vpack.c.b16 %v1516, %v1515
  %v1564 = vpack.c.b16 %v1518, %v1517
  %v1565 = vpack.c.b16 %v1520, %v1519
  %v1566 = vpack.c.b16 %v1522, %v1521
  %v1567 = vpack.c.b16 %v1524, %v1523
  %v1568 = vpack.c.b16 %v1526, %v1525
  %v1569 = vpack.c.b16 %v1528, %v1527
  %v1570 = vpack.c.b16 %v1530, %v1529
  %v1571 = vpack.c.b16 %v1532, %v1531
  %v1572 = vpack.c.b16 %v1534, %v1533
  %v1573 = vpack.c.b16 %v1536, %v1535
  %v1574 = vpack.c.b16 %v1538, %v1537
  %v1575 = vpack.c.b16 %v1540, %v1539
  %v1576 = vpack.c.b16 %v1542, %v1541
  %v1577 = vpack.c.b16 %v1544, %v1543
  %v1578 = vpack.c.b16 %v1546, %v1545
  %v1579 = vpack.c.b16 %v1548, %v1547
  %v1580 = vpack.c.b16 %v1550, %v1549
  %v1581 = vpack.c.b16 %v1552, %v1551
  %v1582 = vpack.c.b16 %v1554, %v1553
  %v1583 = vpack.c.b16 %v1556, %v1555
  %v1584 = vpack.c.b16 %v1558, %v1557
  %v1585 = vpack.c.b16 %v1560, %v1559
  %v1586 = vpack.c.b16 %v1562, %v1561
  %1611 = vmatpush.bf16.msra.mxu0 %v1570
  %1612 = vmatpush.bf16.msra.mxu0 %v1569
  %1613 = vmatpush.bf16.msra.mxu0 %v1568
  %1614 = vmatpush.bf16.msra.mxu0 %v1567
  %1615 = vmatpush.bf16.msra.mxu0 %v1566
  %1616 = vmatpush.bf16.msra.mxu0 %v1565
  %1617 = vmatpush.bf16.msra.mxu0 %v1564
  %1618 = vmatpush.bf16.msra.mxu0 %v1563
  %1619 = vmatmul.bf16.gmra.mxu0 %v1437
  %v1620 = vpop.f32.mrf.mxu0
  %v1621 = vadd.f32 %v107, %v1620
  %v1622 = vpop.f32.mrf.mxu0
  %v1623 = vadd.f32 %v107, %v1622
  %1624 = vmatmul.bf16.gmra.mxu0 %v1440
  %v1625 = vpop.f32.mrf.mxu0
  %v1626 = vadd.f32 %v107, %v1625
  %v1627 = vpop.f32.mrf.mxu0
  %v1628 = vadd.f32 %v107, %v1627
  %1629 = vmatmul.bf16.gmra.mxu0 %v1443
  %v1630 = vpop.f32.mrf.mxu0
  %v1631 = vadd.f32 %v107, %v1630
  %v1632 = vpop.f32.mrf.mxu0
  %v1633 = vadd.f32 %v107, %v1632
  %1634 = vmatmul.bf16.gmra.mxu0 %v1446
  %v1635 = vpop.f32.mrf.mxu0
  %v1636 = vadd.f32 %v107, %v1635
  %v1637 = vpop.f32.mrf.mxu0
  %v1638 = vadd.f32 %v107, %v1637
  %1639 = vmatmul.bf16.gmra.mxu0 %v1449
  %v1640 = vpop.f32.mrf.mxu0
  %v1641 = vadd.f32 %v107, %v1640
  %v1642 = vpop.f32.mrf.mxu0
  %v1643 = vadd.f32 %v107, %v1642
  %1644 = vdwg.mxu0
  %1645 = vmatpush.bf16.msra.mxu0 %v1578
  %1646 = vmatpush.bf16.msra.mxu0 %v1577
  %1647 = vmatpush.bf16.msra.mxu0 %v1576
  %1648 = vmatpush.bf16.msra.mxu0 %v1575
  %1649 = vmatpush.bf16.msra.mxu0 %v1574
  %1650 = vmatpush.bf16.msra.mxu0 %v1573
  %1651 = vmatpush.bf16.msra.mxu0 %v1572
  %1652 = vmatpush.bf16.msra.mxu0 %v1571
  %1653 = vmatmul.bf16.gmra.mxu0 %v1438
  %v1654 = vpop.f32.mrf.mxu0
  %v1655 = vadd.f32 %v1621, %v1654
  %v1656 = vpop.f32.mrf.mxu0
  %v1657 = vadd.f32 %v1623, %v1656
  %1658 = vmatmul.bf16.gmra.mxu0 %v1441
  %v1659 = vpop.f32.mrf.mxu0
  %v1660 = vadd.f32 %v1626, %v1659
  %v1661 = vpop.f32.mrf.mxu0
  %v1662 = vadd.f32 %v1628, %v1661
  %1663 = vmatmul.bf16.gmra.mxu0 %v1444
  %v1664 = vpop.f32.mrf.mxu0
  %v1665 = vadd.f32 %v1631, %v1664
  %v1666 = vpop.f32.mrf.mxu0
  %v1667 = vadd.f32 %v1633, %v1666
  %1668 = vmatmul.bf16.gmra.mxu0 %v1447
  %v1669 = vpop.f32.mrf.mxu0
  %v1670 = vadd.f32 %v1636, %v1669
  %v1671 = vpop.f32.mrf.mxu0
  %v1672 = vadd.f32 %v1638, %v1671
  %1673 = vmatmul.bf16.gmra.mxu0 %v1450
  %v1674 = vpop.f32.mrf.mxu0
  %v1675 = vadd.f32 %v1641, %v1674
  %v1676 = vpop.f32.mrf.mxu0
  %v1677 = vadd.f32 %v1643, %v1676
  %1678 = vdwg.mxu0
  %1679 = vmatpush.bf16.msra.mxu0 %v1586
  %1680 = vmatpush.bf16.msra.mxu0 %v1585
  %1681 = vmatpush.bf16.msra.mxu0 %v1584
  %1682 = vmatpush.bf16.msra.mxu0 %v1583
  %1683 = vmatpush.bf16.msra.mxu0 %v1582
  %1684 = vmatpush.bf16.msra.mxu0 %v1581
  %1685 = vmatpush.bf16.msra.mxu0 %v1580
  %1686 = vmatpush.bf16.msra.mxu0 %v1579
  %1687 = vmatmul.bf16.gmra.mxu0 %v1439
  %v1688 = vpop.f32.mrf.mxu0
  %v1689 = vadd.f32 %v1655, %v1688
  %v1690 = vpop.f32.mrf.mxu0
  %v1691 = vadd.f32 %v1657, %v1690
  %1692 = vmatmul.bf16.gmra.mxu0 %v1442
  %v1693 = vpop.f32.mrf.mxu0
  %v1694 = vadd.f32 %v1660, %v1693
  %v1695 = vpop.f32.mrf.mxu0
  %v1696 = vadd.f32 %v1662, %v1695
  %1697 = vmatmul.bf16.gmra.mxu0 %v1445
  %v1698 = vpop.f32.mrf.mxu0
  %v1699 = vadd.f32 %v1665, %v1698
  %v1700 = vpop.f32.mrf.mxu0
  %v1701 = vadd.f32 %v1667, %v1700
  %1702 = vmatmul.bf16.gmra.mxu0 %v1448
  %v1703 = vpop.f32.mrf.mxu0
  %v1704 = vadd.f32 %v1670, %v1703
  %v1705 = vpop.f32.mrf.mxu0
  %v1706 = vadd.f32 %v1672, %v1705
  %1707 = vmatmul.bf16.gmra.mxu0 %v1451
  %v1708 = vpop.f32.mrf.mxu0
  %v1709 = vadd.f32 %v1675, %v1708
  %v1710 = vpop.f32.mrf.mxu0
  %v1711 = vadd.f32 %v1677, %v1710
  %1712 = vdwg.mxu0
  %v1713 = vmax.f32 %v1689, 0.0
  %v1714 = vmax.f32 %v1691, 0.0
  %v1715 = vmax.f32 %v1694, 0.0
  %v1716 = vmax.f32 %v1696, 0.0
  %v1717 = vmax.f32 %v1699, 0.0
  %v1718 = vmax.f32 %v1701, 0.0
  %v1719 = vmax.f32 %v1704, 0.0
  %v1720 = vmax.f32 %v1706, 0.0
  %v1721 = vmax.f32 %v1709, 0.0
  %v1722 = vmax.f32 %v1711, 0.0
  %v1723 = vpack.c.bf16 %v1713, %v1713
  %v1724 = vpack.c.bf16 %v1714, %v1714
  %v1725 = vpack.c.bf16 %v1715, %v1715
  %v1726 = vpack.c.bf16 %v1716, %v1716
  %v1727 = vpack.c.bf16 %v1717, %v1717
  %v1728 = vpack.c.bf16 %v1718, %v1718
  %v1729 = vpack.c.bf16 %v1719, %v1719
  %v1730 = vpack.c.bf16 %v1720, %v1720
  %v1731 = vpack.c.bf16 %v1721, %v1721
  %v1732 = vpack.c.bf16 %v1722, %v1722
  %s1733 = scalar_lea.vmem [#allocation2], 120
  %1734 = vst.msk [vmem:[%s1733] sm:$0xf] %vm455, %v1723
  %1735 = vst.msk [vmem:[%s1733 + $0x4] sm:$0xf] %vm455, %v1724
  %1736 = vst.msk [vmem:[%s1733 + $0x8] sm:$0xf] %vm455, %v1725
  %1737 = vst.msk [vmem:[%s1733 + $0xc] sm:$0xf] %vm455, %v1726
  %1738 = vst.msk [vmem:[%s1733 + $0x10] sm:$0xf] %vm455, %v1727
  %1739 = vst.msk [vmem:[%s1733 + $0x14] sm:$0xf] %vm455, %v1728
  %1740 = vst.msk [vmem:[%s1733 + $0x18] sm:$0xf] %vm455, %v1729
  %1741 = vst.msk [vmem:[%s1733 + $0x1c] sm:$0xf] %vm455, %v1730
  %1742 = vst.msk [vmem:[%s1733 + $0x20] sm:$0xf] %vm455, %v1731
  %1743 = vst.msk [vmem:[%s1733 + $0x24] sm:$0xf] %vm455, %v1732
  %s1744 = scalar_lea.vmem %s0, 480
  %v1745 = vld [vmem:[%s1744] sm:$0xff]
  %v1746 = vld [vmem:[%s1744 + $0x8] sm:$0xf]
  %v1747 = vld [vmem:[%s1744 + $0xc] sm:$0xff]
  %v1748 = vld [vmem:[%s1744 + $0x14] sm:$0xf]
  %v1749 = vld [vmem:[%s1744 + $0x18] sm:$0xff]
  %v1750 = vld [vmem:[%s1744 + $0x20] sm:$0xf]
  %v1751 = vld [vmem:[%s1744 + $0x24] sm:$0xff]
  %v1752 = vld [vmem:[%s1744 + $0x2c] sm:$0xf]
  %v1753 = vld [vmem:[%s1744 + $0x30] sm:$0xff]
  %v1754 = vld [vmem:[%s1744 + $0x38] sm:$0xf]
  %v1755 = vld [vmem:[%s1744 + $0x3c] sm:$0xff]
  %v1756 = vld [vmem:[%s1744 + $0x44] sm:$0xf]
  %v1757 = vld [vmem:[%s1744 + $0x48] sm:$0xff]
  %v1758 = vld [vmem:[%s1744 + $0x50] sm:$0xf]
  %v1759 = vld [vmem:[%s1744 + $0x54] sm:$0xff]
  %v1760 = vld [vmem:[%s1744 + $0x5c] sm:$0xf]
  %v1761 = vld [vmem:[%s1744 + $0x60] sm:$0xff]
  %v1762 = vld [vmem:[%s1744 + $0x68] sm:$0xf]
  %v1763 = vld [vmem:[%s1744 + $0x6c] sm:$0xff]
  %v1764 = vld [vmem:[%s1744 + $0x74] sm:$0xf]
  %v1765 = vld [vmem:[%s1] sm:$0xf]
  %v1766 = vld [vmem:[%s1 + $0x4] sm:$0xf]
  %v1767 = vld [vmem:[%s1 + $0x8] sm:$0xf]
  %v1768 = vld [vmem:[%s1 + $0xc] sm:$0xf]
  %v1769 = vld [vmem:[%s1 + $0x10] sm:$0xf]
  %v1770 = vld [vmem:[%s1 + $0x14] sm:$0xf]
  %v1771 = vld [vmem:[%s1 + $0x18] sm:$0xf]
  %v1772 = vld [vmem:[%s1 + $0x1c] sm:$0xf]
  %v1773 = vld [vmem:[%s1 + $0x20] sm:$0xf]
  %v1774 = vld [vmem:[%s1 + $0x24] sm:$0xf]
  %v1775 = vld [vmem:[%s1 + $0x28] sm:$0xf]
  %v1776 = vld [vmem:[%s1 + $0x2c] sm:$0xf]
  %v1777 = vld [vmem:[%s1 + $0x30] sm:$0xf]
  %v1778 = vld [vmem:[%s1 + $0x34] sm:$0xf]
  %v1779 = vld [vmem:[%s1 + $0x38] sm:$0xf]
  %v1780 = vld [vmem:[%s1 + $0x3c] sm:$0xf]
  %v1781 = vld [vmem:[%s1 + $0x40] sm:$0xf]
  %v1782 = vld [vmem:[%s1 + $0x44] sm:$0xf]
  %v1783 = vld [vmem:[%s1 + $0x48] sm:$0xf]
  %v1784 = vld [vmem:[%s1 + $0x4c] sm:$0xf]
  %v1785 = vld [vmem:[%s1 + $0x50] sm:$0xf]
  %v1786 = vld [vmem:[%s1 + $0x54] sm:$0xf]
  %v1787 = vld [vmem:[%s1 + $0x58] sm:$0xf]
  %v1788 = vld [vmem:[%s1 + $0x5c] sm:$0xf]
  %v1789 = vld [vmem:[%s1 + $0x60] sm:$0xf]
  %v1790 = vld [vmem:[%s1 + $0x64] sm:$0xf]
  %v1791 = vld [vmem:[%s1 + $0x68] sm:$0xf]
  %v1792 = vld [vmem:[%s1 + $0x6c] sm:$0xf]
  %v1793 = vld [vmem:[%s1 + $0x70] sm:$0xf]
  %v1794 = vld [vmem:[%s1 + $0x74] sm:$0xf]
  %v1795 = vld [vmem:[%s1 + $0x78] sm:$0xf]
  %v1796 = vld [vmem:[%s1 + $0x7c] sm:$0xf]
  %v1797 = vld [vmem:[%s1 + $0x80] sm:$0xf]
  %v1798 = vld [vmem:[%s1 + $0x84] sm:$0xf]
  %v1799 = vld [vmem:[%s1 + $0x88] sm:$0xf]
  %v1800 = vld [vmem:[%s1 + $0x8c] sm:$0xf]
  %v1801 = vld [vmem:[%s1 + $0x90] sm:$0xf]
  %v1802 = vld [vmem:[%s1 + $0x94] sm:$0xf]
  %v1803 = vld [vmem:[%s1 + $0x98] sm:$0xf]
  %v1804 = vld [vmem:[%s1 + $0x9c] sm:$0xf]
  %v1805 = vld [vmem:[%s1 + $0xa0] sm:$0xf]
  %v1806 = vld [vmem:[%s1 + $0xa4] sm:$0xf]
  %v1807 = vld [vmem:[%s1 + $0xa8] sm:$0xf]
  %v1808 = vld [vmem:[%s1 + $0xac] sm:$0xf]
  %v1809 = vld [vmem:[%s1 + $0xb0] sm:$0xf]
  %v1810 = vld [vmem:[%s1 + $0xb4] sm:$0xf]
  %v1811 = vld [vmem:[%s1 + $0xb8] sm:$0xf]
  %v1812 = vld [vmem:[%s1 + $0xbc] sm:$0xf]
  %v1833 = vunpack.c.l.b16 %v1745
  %v1834 = vunpack.c.h.b16 %v1745
  %v1835 = vunpack.c.l.b16 %v1746
  %v1836 = vunpack.c.l.b16 %v1747
  %v1837 = vunpack.c.h.b16 %v1747
  %v1838 = vunpack.c.l.b16 %v1748
  %v1839 = vunpack.c.l.b16 %v1749
  %v1840 = vunpack.c.h.b16 %v1749
  %v1841 = vunpack.c.l.b16 %v1750
  %v1842 = vunpack.c.l.b16 %v1751
  %v1843 = vunpack.c.h.b16 %v1751
  %v1844 = vunpack.c.l.b16 %v1752
  %v1845 = vunpack.c.l.b16 %v1753
  %v1846 = vunpack.c.h.b16 %v1753
  %v1847 = vunpack.c.l.b16 %v1754
  %v1848 = vunpack.c.l.b16 %v1755
  %v1849 = vunpack.c.h.b16 %v1755
  %v1850 = vunpack.c.l.b16 %v1756
  %v1851 = vunpack.c.l.b16 %v1757
  %v1852 = vunpack.c.h.b16 %v1757
  %v1853 = vunpack.c.l.b16 %v1758
  %v1854 = vunpack.c.l.b16 %v1759
  %v1855 = vunpack.c.h.b16 %v1759
  %v1856 = vunpack.c.l.b16 %v1760
  %v1857 = vunpack.c.l.b16 %v1761
  %v1858 = vunpack.c.h.b16 %v1761
  %v1859 = vunpack.c.l.b16 %v1762
  %v1860 = vunpack.c.l.b16 %v1763
  %v1861 = vunpack.c.h.b16 %v1763
  %v1862 = vunpack.c.l.b16 %v1764
  %v1863 = vpack.c.b16 %v1836, %v1833
  %v1864 = vpack.c.b16 %v1837, %v1834
  %v1865 = vpack.c.b16 %v1838, %v1835
  %v1866 = vpack.c.b16 %v1842, %v1839
  %v1867 = vpack.c.b16 %v1843, %v1840
  %v1868 = vpack.c.b16 %v1844, %v1841
  %v1869 = vpack.c.b16 %v1848, %v1845
  %v1870 = vpack.c.b16 %v1849, %v1846
  %v1871 = vpack.c.b16 %v1850, %v1847
  %v1872 = vpack.c.b16 %v1854, %v1851
  %v1873 = vpack.c.b16 %v1855, %v1852
  %v1874 = vpack.c.b16 %v1856, %v1853
  %v1875 = vpack.c.b16 %v1860, %v1857
  %v1876 = vpack.c.b16 %v1861, %v1858
  %v1877 = vpack.c.b16 %v1862, %v1859
  %v1941 = vunpack.c.l.b16 %v1765
  %v1942 = vunpack.c.l.b16 %v1766
  %v1943 = vunpack.c.l.b16 %v1767
  %v1944 = vunpack.c.l.b16 %v1768
  %v1945 = vunpack.c.l.b16 %v1769
  %v1946 = vunpack.c.l.b16 %v1770
  %v1947 = vunpack.c.l.b16 %v1771
  %v1948 = vunpack.c.l.b16 %v1772
  %v1949 = vunpack.c.l.b16 %v1773
  %v1950 = vunpack.c.l.b16 %v1774
  %v1951 = vunpack.c.l.b16 %v1775
  %v1952 = vunpack.c.l.b16 %v1776
  %v1953 = vunpack.c.l.b16 %v1777
  %v1954 = vunpack.c.l.b16 %v1778
  %v1955 = vunpack.c.l.b16 %v1779
  %v1956 = vunpack.c.l.b16 %v1780
  %v1957 = vunpack.c.l.b16 %v1781
  %v1958 = vunpack.c.l.b16 %v1782
  %v1959 = vunpack.c.l.b16 %v1783
  %v1960 = vunpack.c.l.b16 %v1784
  %v1961 = vunpack.c.l.b16 %v1785
  %v1962 = vunpack.c.l.b16 %v1786
  %v1963 = vunpack.c.l.b16 %v1787
  %v1964 = vunpack.c.l.b16 %v1788
  %v1965 = vunpack.c.l.b16 %v1789
  %v1966 = vunpack.c.l.b16 %v1790
  %v1967 = vunpack.c.l.b16 %v1791
  %v1968 = vunpack.c.l.b16 %v1792
  %v1969 = vunpack.c.l.b16 %v1793
  %v1970 = vunpack.c.l.b16 %v1794
  %v1971 = vunpack.c.l.b16 %v1795
  %v1972 = vunpack.c.l.b16 %v1796
  %v1973 = vunpack.c.l.b16 %v1797
  %v1974 = vunpack.c.l.b16 %v1798
  %v1975 = vunpack.c.l.b16 %v1799
  %v1976 = vunpack.c.l.b16 %v1800
  %v1977 = vunpack.c.l.b16 %v1801
  %v1978 = vunpack.c.l.b16 %v1802
  %v1979 = vunpack.c.l.b16 %v1803
  %v1980 = vunpack.c.l.b16 %v1804
  %v1981 = vunpack.c.l.b16 %v1805
  %v1982 = vunpack.c.l.b16 %v1806
  %v1983 = vunpack.c.l.b16 %v1807
  %v1984 = vunpack.c.l.b16 %v1808
  %v1985 = vunpack.c.l.b16 %v1809
  %v1986 = vunpack.c.l.b16 %v1810
  %v1987 = vunpack.c.l.b16 %v1811
  %v1988 = vunpack.c.l.b16 %v1812
  %v1989 = vpack.c.b16 %v1942, %v1941
  %v1990 = vpack.c.b16 %v1944, %v1943
  %v1991 = vpack.c.b16 %v1946, %v1945
  %v1992 = vpack.c.b16 %v1948, %v1947
  %v1993 = vpack.c.b16 %v1950, %v1949
  %v1994 = vpack.c.b16 %v1952, %v1951
  %v1995 = vpack.c.b16 %v1954, %v1953
  %v1996 = vpack.c.b16 %v1956, %v1955
  %v1997 = vpack.c.b16 %v1958, %v1957
  %v1998 = vpack.c.b16 %v1960, %v1959
  %v1999 = vpack.c.b16 %v1962, %v1961
  %v2000 = vpack.c.b16 %v1964, %v1963
  %v2001 = vpack.c.b16 %v1966, %v1965
  %v2002 = vpack.c.b16 %v1968, %v1967
  %v2003 = vpack.c.b16 %v1970, %v1969
  %v2004 = vpack.c.b16 %v1972, %v1971
  %v2005 = vpack.c.b16 %v1974, %v1973
  %v2006 = vpack.c.b16 %v1976, %v1975
  %v2007 = vpack.c.b16 %v1978, %v1977
  %v2008 = vpack.c.b16 %v1980, %v1979
  %v2009 = vpack.c.b16 %v1982, %v1981
  %v2010 = vpack.c.b16 %v1984, %v1983
  %v2011 = vpack.c.b16 %v1986, %v1985
  %v2012 = vpack.c.b16 %v1988, %v1987
  %2037 = vmatpush.bf16.msra.mxu0 %v1996
  %2038 = vmatpush.bf16.msra.mxu0 %v1995
  %2039 = vmatpush.bf16.msra.mxu0 %v1994
  %2040 = vmatpush.bf16.msra.mxu0 %v1993
  %2041 = vmatpush.bf16.msra.mxu0 %v1992
  %2042 = vmatpush.bf16.msra.mxu0 %v1991
  %2043 = vmatpush.bf16.msra.mxu0 %v1990
  %2044 = vmatpush.bf16.msra.mxu0 %v1989
  %2045 = vmatmul.bf16.gmra.mxu0 %v1863
  %v2046 = vpop.f32.mrf.mxu0
  %v2047 = vadd.f32 %v107, %v2046
  %v2048 = vpop.f32.mrf.mxu0
  %v2049 = vadd.f32 %v107, %v2048
  %2050 = vmatmul.bf16.gmra.mxu0 %v1866
  %v2051 = vpop.f32.mrf.mxu0
  %v2052 = vadd.f32 %v107, %v2051
  %v2053 = vpop.f32.mrf.mxu0
  %v2054 = vadd.f32 %v107, %v2053
  %2055 = vmatmul.bf16.gmra.mxu0 %v1869
  %v2056 = vpop.f32.mrf.mxu0
  %v2057 = vadd.f32 %v107, %v2056
  %v2058 = vpop.f32.mrf.mxu0
  %v2059 = vadd.f32 %v107, %v2058
  %2060 = vmatmul.bf16.gmra.mxu0 %v1872
  %v2061 = vpop.f32.mrf.mxu0
  %v2062 = vadd.f32 %v107, %v2061
  %v2063 = vpop.f32.mrf.mxu0
  %v2064 = vadd.f32 %v107, %v2063
  %2065 = vmatmul.bf16.gmra.mxu0 %v1875
  %v2066 = vpop.f32.mrf.mxu0
  %v2067 = vadd.f32 %v107, %v2066
  %v2068 = vpop.f32.mrf.mxu0
  %v2069 = vadd.f32 %v107, %v2068
  %2070 = vdwg.mxu0
  %2071 = vmatpush.bf16.msra.mxu0 %v2004
  %2072 = vmatpush.bf16.msra.mxu0 %v2003
  %2073 = vmatpush.bf16.msra.mxu0 %v2002
  %2074 = vmatpush.bf16.msra.mxu0 %v2001
  %2075 = vmatpush.bf16.msra.mxu0 %v2000
  %2076 = vmatpush.bf16.msra.mxu0 %v1999
  %2077 = vmatpush.bf16.msra.mxu0 %v1998
  %2078 = vmatpush.bf16.msra.mxu0 %v1997
  %2079 = vmatmul.bf16.gmra.mxu0 %v1864
  %v2080 = vpop.f32.mrf.mxu0
  %v2081 = vadd.f32 %v2047, %v2080
  %v2082 = vpop.f32.mrf.mxu0
  %v2083 = vadd.f32 %v2049, %v2082
  %2084 = vmatmul.bf16.gmra.mxu0 %v1867
  %v2085 = vpop.f32.mrf.mxu0
  %v2086 = vadd.f32 %v2052, %v2085
  %v2087 = vpop.f32.mrf.mxu0
  %v2088 = vadd.f32 %v2054, %v2087
  %2089 = vmatmul.bf16.gmra.mxu0 %v1870
  %v2090 = vpop.f32.mrf.mxu0
  %v2091 = vadd.f32 %v2057, %v2090
  %v2092 = vpop.f32.mrf.mxu0
  %v2093 = vadd.f32 %v2059, %v2092
  %2094 = vmatmul.bf16.gmra.mxu0 %v1873
  %v2095 = vpop.f32.mrf.mxu0
  %v2096 = vadd.f32 %v2062, %v2095
  %v2097 = vpop.f32.mrf.mxu0
  %v2098 = vadd.f32 %v2064, %v2097
  %2099 = vmatmul.bf16.gmra.mxu0 %v1876
  %v2100 = vpop.f32.mrf.mxu0
  %v2101 = vadd.f32 %v2067, %v2100
  %v2102 = vpop.f32.mrf.mxu0
  %v2103 = vadd.f32 %v2069, %v2102
  %2104 = vdwg.mxu0
  %2105 = vmatpush.bf16.msra.mxu0 %v2012
  %2106 = vmatpush.bf16.msra.mxu0 %v2011
  %2107 = vmatpush.bf16.msra.mxu0 %v2010
  %2108 = vmatpush.bf16.msra.mxu0 %v2009
  %2109 = vmatpush.bf16.msra.mxu0 %v2008
  %2110 = vmatpush.bf16.msra.mxu0 %v2007
  %2111 = vmatpush.bf16.msra.mxu0 %v2006
  %2112 = vmatpush.bf16.msra.mxu0 %v2005
  %2113 = vmatmul.bf16.gmra.mxu0 %v1865
  %v2114 = vpop.f32.mrf.mxu0
  %v2115 = vadd.f32 %v2081, %v2114
  %v2116 = vpop.f32.mrf.mxu0
  %v2117 = vadd.f32 %v2083, %v2116
  %2118 = vmatmul.bf16.gmra.mxu0 %v1868
  %v2119 = vpop.f32.mrf.mxu0
  %v2120 = vadd.f32 %v2086, %v2119
  %v2121 = vpop.f32.mrf.mxu0
  %v2122 = vadd.f32 %v2088, %v2121
  %2123 = vmatmul.bf16.gmra.mxu0 %v1871
  %v2124 = vpop.f32.mrf.mxu0
  %v2125 = vadd.f32 %v2091, %v2124
  %v2126 = vpop.f32.mrf.mxu0
  %v2127 = vadd.f32 %v2093, %v2126
  %2128 = vmatmul.bf16.gmra.mxu0 %v1874
  %v2129 = vpop.f32.mrf.mxu0
  %v2130 = vadd.f32 %v2096, %v2129
  %v2131 = vpop.f32.mrf.mxu0
  %v2132 = vadd.f32 %v2098, %v2131
  %2133 = vmatmul.bf16.gmra.mxu0 %v1877
  %v2134 = vpop.f32.mrf.mxu0
  %v2135 = vadd.f32 %v2101, %v2134
  %v2136 = vpop.f32.mrf.mxu0
  %v2137 = vadd.f32 %v2103, %v2136
  %2138 = vdwg.mxu0
  %v2139 = vmax.f32 %v2115, 0.0
  %v2140 = vmax.f32 %v2117, 0.0
  %v2141 = vmax.f32 %v2120, 0.0
  %v2142 = vmax.f32 %v2122, 0.0
  %v2143 = vmax.f32 %v2125, 0.0
  %v2144 = vmax.f32 %v2127, 0.0
  %v2145 = vmax.f32 %v2130, 0.0
  %v2146 = vmax.f32 %v2132, 0.0
  %v2147 = vmax.f32 %v2135, 0.0
  %v2148 = vmax.f32 %v2137, 0.0
  %v2149 = vpack.c.bf16 %v2139, %v2139
  %v2150 = vpack.c.bf16 %v2140, %v2140
  %v2151 = vpack.c.bf16 %v2141, %v2141
  %v2152 = vpack.c.bf16 %v2142, %v2142
  %v2153 = vpack.c.bf16 %v2143, %v2143
  %v2154 = vpack.c.bf16 %v2144, %v2144
  %v2155 = vpack.c.bf16 %v2145, %v2145
  %v2156 = vpack.c.bf16 %v2146, %v2146
  %v2157 = vpack.c.bf16 %v2147, %v2147
  %v2158 = vpack.c.bf16 %v2148, %v2148
  %s2159 = scalar_lea.vmem [#allocation2], 160
  %2160 = vst.msk [vmem:[%s2159] sm:$0xf] %vm455, %v2149
  %2161 = vst.msk [vmem:[%s2159 + $0x4] sm:$0xf] %vm455, %v2150
  %2162 = vst.msk [vmem:[%s2159 + $0x8] sm:$0xf] %vm455, %v2151
  %2163 = vst.msk [vmem:[%s2159 + $0xc] sm:$0xf] %vm455, %v2152
  %2164 = vst.msk [vmem:[%s2159 + $0x10] sm:$0xf] %vm455, %v2153
  %2165 = vst.msk [vmem:[%s2159 + $0x14] sm:$0xf] %vm455, %v2154
  %2166 = vst.msk [vmem:[%s2159 + $0x18] sm:$0xf] %vm455, %v2155
  %2167 = vst.msk [vmem:[%s2159 + $0x1c] sm:$0xf] %vm455, %v2156
  %2168 = vst.msk [vmem:[%s2159 + $0x20] sm:$0xf] %vm455, %v2157
  %2169 = vst.msk [vmem:[%s2159 + $0x24] sm:$0xf] %vm455, %v2158
  %s2170 = scalar_lea.vmem %s0, 600
  %v2171 = vld [vmem:[%s2170] sm:$0xff]
  %v2172 = vld [vmem:[%s2170 + $0x8] sm:$0xf]
  %v2173 = vld [vmem:[%s2170 + $0xc] sm:$0xff]
  %v2174 = vld [vmem:[%s2170 + $0x14] sm:$0xf]
  %v2175 = vld [vmem:[%s2170 + $0x18] sm:$0xff]
  %v2176 = vld [vmem:[%s2170 + $0x20] sm:$0xf]
  %v2177 = vld [vmem:[%s2170 + $0x24] sm:$0xff]
  %v2178 = vld [vmem:[%s2170 + $0x2c] sm:$0xf]
  %v2179 = vld [vmem:[%s2170 + $0x30] sm:$0xff]
  %v2180 = vld [vmem:[%s2170 + $0x38] sm:$0xf]
  %v2181 = vld [vmem:[%s2170 + $0x3c] sm:$0xff]
  %v2182 = vld [vmem:[%s2170 + $0x44] sm:$0xf]
  %v2183 = vld [vmem:[%s2170 + $0x48] sm:$0xff]
  %v2184 = vld [vmem:[%s2170 + $0x50] sm:$0xf]
  %v2185 = vld [vmem:[%s2170 + $0x54] sm:$0xff]
  %v2186 = vld [vmem:[%s2170 + $0x5c] sm:$0xf]
  %v2187 = vld [vmem:[%s2170 + $0x60] sm:$0xff]
  %v2188 = vld [vmem:[%s2170 + $0x68] sm:$0xf]
  %v2189 = vld [vmem:[%s2170 + $0x6c] sm:$0xff]
  %v2190 = vld [vmem:[%s2170 + $0x74] sm:$0xf]
  %v2191 = vld [vmem:[%s1] sm:$0xf]
  %v2192 = vld [vmem:[%s1 + $0x4] sm:$0xf]
  %v2193 = vld [vmem:[%s1 + $0x8] sm:$0xf]
  %v2194 = vld [vmem:[%s1 + $0xc] sm:$0xf]
  %v2195 = vld [vmem:[%s1 + $0x10] sm:$0xf]
  %v2196 = vld [vmem:[%s1 + $0x14] sm:$0xf]
  %v2197 = vld [vmem:[%s1 + $0x18] sm:$0xf]
  %v2198 = vld [vmem:[%s1 + $0x1c] sm:$0xf]
  %v2199 = vld [vmem:[%s1 + $0x20] sm:$0xf]
  %v2200 = vld [vmem:[%s1 + $0x24] sm:$0xf]
  %v2201 = vld [vmem:[%s1 + $0x28] sm:$0xf]
  %v2202 = vld [vmem:[%s1 + $0x2c] sm:$0xf]
  %v2203 = vld [vmem:[%s1 + $0x30] sm:$0xf]
  %v2204 = vld [vmem:[%s1 + $0x34] sm:$0xf]
  %v2205 = vld [vmem:[%s1 + $0x38] sm:$0xf]
  %v2206 = vld [vmem:[%s1 + $0x3c] sm:$0xf]
  %v2207 = vld [vmem:[%s1 + $0x40] sm:$0xf]
  %v2208 = vld [vmem:[%s1 + $0x44] sm:$0xf]
  %v2209 = vld [vmem:[%s1 + $0x48] sm:$0xf]
  %v2210 = vld [vmem:[%s1 + $0x4c] sm:$0xf]
  %v2211 = vld [vmem:[%s1 + $0x50] sm:$0xf]
  %v2212 = vld [vmem:[%s1 + $0x54] sm:$0xf]
  %v2213 = vld [vmem:[%s1 + $0x58] sm:$0xf]
  %v2214 = vld [vmem:[%s1 + $0x5c] sm:$0xf]
  %v2215 = vld [vmem:[%s1 + $0x60] sm:$0xf]
  %v2216 = vld [vmem:[%s1 + $0x64] sm:$0xf]
  %v2217 = vld [vmem:[%s1 + $0x68] sm:$0xf]
  %v2218 = vld [vmem:[%s1 + $0x6c] sm:$0xf]
  %v2219 = vld [vmem:[%s1 + $0x70] sm:$0xf]
  %v2220 = vld [vmem:[%s1 + $0x74] sm:$0xf]
  %v2221 = vld [vmem:[%s1 + $0x78] sm:$0xf]
  %v2222 = vld [vmem:[%s1 + $0x7c] sm:$0xf]
  %v2223 = vld [vmem:[%s1 + $0x80] sm:$0xf]
  %v2224 = vld [vmem:[%s1 + $0x84] sm:$0xf]
  %v2225 = vld [vmem:[%s1 + $0x88] sm:$0xf]
  %v2226 = vld [vmem:[%s1 + $0x8c] sm:$0xf]
  %v2227 = vld [vmem:[%s1 + $0x90] sm:$0xf]
  %v2228 = vld [vmem:[%s1 + $0x94] sm:$0xf]
  %v2229 = vld [vmem:[%s1 + $0x98] sm:$0xf]
  %v2230 = vld [vmem:[%s1 + $0x9c] sm:$0xf]
  %v2231 = vld [vmem:[%s1 + $0xa0] sm:$0xf]
  %v2232 = vld [vmem:[%s1 + $0xa4] sm:$0xf]
  %v2233 = vld [vmem:[%s1 + $0xa8] sm:$0xf]
  %v2234 = vld [vmem:[%s1 + $0xac] sm:$0xf]
  %v2235 = vld [vmem:[%s1 + $0xb0] sm:$0xf]
  %v2236 = vld [vmem:[%s1 + $0xb4] sm:$0xf]
  %v2237 = vld [vmem:[%s1 + $0xb8] sm:$0xf]
  %v2238 = vld [vmem:[%s1 + $0xbc] sm:$0xf]
  %v2259 = vunpack.c.l.b16 %v2171
  %v2260 = vunpack.c.h.b16 %v2171
  %v2261 = vunpack.c.l.b16 %v2172
  %v2262 = vunpack.c.l.b16 %v2173
  %v2263 = vunpack.c.h.b16 %v2173
  %v2264 = vunpack.c.l.b16 %v2174
  %v2265 = vunpack.c.l.b16 %v2175
  %v2266 = vunpack.c.h.b16 %v2175
  %v2267 = vunpack.c.l.b16 %v2176
  %v2268 = vunpack.c.l.b16 %v2177
  %v2269 = vunpack.c.h.b16 %v2177
  %v2270 = vunpack.c.l.b16 %v2178
  %v2271 = vunpack.c.l.b16 %v2179
  %v2272 = vunpack.c.h.b16 %v2179
  %v2273 = vunpack.c.l.b16 %v2180
  %v2274 = vunpack.c.l.b16 %v2181
  %v2275 = vunpack.c.h.b16 %v2181
  %v2276 = vunpack.c.l.b16 %v2182
  %v2277 = vunpack.c.l.b16 %v2183
  %v2278 = vunpack.c.h.b16 %v2183
  %v2279 = vunpack.c.l.b16 %v2184
  %v2280 = vunpack.c.l.b16 %v2185
  %v2281 = vunpack.c.h.b16 %v2185
  %v2282 = vunpack.c.l.b16 %v2186
  %v2283 = vunpack.c.l.b16 %v2187
  %v2284 = vunpack.c.h.b16 %v2187
  %v2285 = vunpack.c.l.b16 %v2188
  %v2286 = vunpack.c.l.b16 %v2189
  %v2287 = vunpack.c.h.b16 %v2189
  %v2288 = vunpack.c.l.b16 %v2190
  %v2289 = vpack.c.b16 %v2262, %v2259
  %v2290 = vpack.c.b16 %v2263, %v2260
  %v2291 = vpack.c.b16 %v2264, %v2261
  %v2292 = vpack.c.b16 %v2268, %v2265
  %v2293 = vpack.c.b16 %v2269, %v2266
  %v2294 = vpack.c.b16 %v2270, %v2267
  %v2295 = vpack.c.b16 %v2274, %v2271
  %v2296 = vpack.c.b16 %v2275, %v2272
  %v2297 = vpack.c.b16 %v2276, %v2273
  %v2298 = vpack.c.b16 %v2280, %v2277
  %v2299 = vpack.c.b16 %v2281, %v2278
  %v2300 = vpack.c.b16 %v2282, %v2279
  %v2301 = vpack.c.b16 %v2286, %v2283
  %v2302 = vpack.c.b16 %v2287, %v2284
  %v2303 = vpack.c.b16 %v2288, %v2285
  %v2367 = vunpack.c.l.b16 %v2191
  %v2368 = vunpack.c.l.b16 %v2192
  %v2369 = vunpack.c.l.b16 %v2193
  %v2370 = vunpack.c.l.b16 %v2194
  %v2371 = vunpack.c.l.b16 %v2195
  %v2372 = vunpack.c.l.b16 %v2196
  %v2373 = vunpack.c.l.b16 %v2197
  %v2374 = vunpack.c.l.b16 %v2198
  %v2375 = vunpack.c.l.b16 %v2199
  %v2376 = vunpack.c.l.b16 %v2200
  %v2377 = vunpack.c.l.b16 %v2201
  %v2378 = vunpack.c.l.b16 %v2202
  %v2379 = vunpack.c.l.b16 %v2203
  %v2380 = vunpack.c.l.b16 %v2204
  %v2381 = vunpack.c.l.b16 %v2205
  %v2382 = vunpack.c.l.b16 %v2206
  %v2383 = vunpack.c.l.b16 %v2207
  %v2384 = vunpack.c.l.b16 %v2208
  %v2385 = vunpack.c.l.b16 %v2209
  %v2386 = vunpack.c.l.b16 %v2210
  %v2387 = vunpack.c.l.b16 %v2211
  %v2388 = vunpack.c.l.b16 %v2212
  %v2389 = vunpack.c.l.b16 %v2213
  %v2390 = vunpack.c.l.b16 %v2214
  %v2391 = vunpack.c.l.b16 %v2215
  %v2392 = vunpack.c.l.b16 %v2216
  %v2393 = vunpack.c.l.b16 %v2217
  %v2394 = vunpack.c.l.b16 %v2218
  %v2395 = vunpack.c.l.b16 %v2219
  %v2396 = vunpack.c.l.b16 %v2220
  %v2397 = vunpack.c.l.b16 %v2221
  %v2398 = vunpack.c.l.b16 %v2222
  %v2399 = vunpack.c.l.b16 %v2223
  %v2400 = vunpack.c.l.b16 %v2224
  %v2401 = vunpack.c.l.b16 %v2225
  %v2402 = vunpack.c.l.b16 %v2226
  %v2403 = vunpack.c.l.b16 %v2227
  %v2404 = vunpack.c.l.b16 %v2228
  %v2405 = vunpack.c.l.b16 %v2229
  %v2406 = vunpack.c.l.b16 %v2230
  %v2407 = vunpack.c.l.b16 %v2231
  %v2408 = vunpack.c.l.b16 %v2232
  %v2409 = vunpack.c.l.b16 %v2233
  %v2410 = vunpack.c.l.b16 %v2234
  %v2411 = vunpack.c.l.b16 %v2235
  %v2412 = vunpack.c.l.b16 %v2236
  %v2413 = vunpack.c.l.b16 %v2237
  %v2414 = vunpack.c.l.b16 %v2238
  %v2415 = vpack.c.b16 %v2368, %v2367
  %v2416 = vpack.c.b16 %v2370, %v2369
  %v2417 = vpack.c.b16 %v2372, %v2371
  %v2418 = vpack.c.b16 %v2374, %v2373
  %v2419 = vpack.c.b16 %v2376, %v2375
  %v2420 = vpack.c.b16 %v2378, %v2377
  %v2421 = vpack.c.b16 %v2380, %v2379
  %v2422 = vpack.c.b16 %v2382, %v2381
  %v2423 = vpack.c.b16 %v2384, %v2383
  %v2424 = vpack.c.b16 %v2386, %v2385
  %v2425 = vpack.c.b16 %v2388, %v2387
  %v2426 = vpack.c.b16 %v2390, %v2389
  %v2427 = vpack.c.b16 %v2392, %v2391
  %v2428 = vpack.c.b16 %v2394, %v2393
  %v2429 = vpack.c.b16 %v2396, %v2395
  %v2430 = vpack.c.b16 %v2398, %v2397
  %v2431 = vpack.c.b16 %v2400, %v2399
  %v2432 = vpack.c.b16 %v2402, %v2401
  %v2433 = vpack.c.b16 %v2404, %v2403
  %v2434 = vpack.c.b16 %v2406, %v2405
  %v2435 = vpack.c.b16 %v2408, %v2407
  %v2436 = vpack.c.b16 %v2410, %v2409
  %v2437 = vpack.c.b16 %v2412, %v2411
  %v2438 = vpack.c.b16 %v2414, %v2413
  %2463 = vmatpush.bf16.msra.mxu0 %v2422
  %2464 = vmatpush.bf16.msra.mxu0 %v2421
  %2465 = vmatpush.bf16.msra.mxu0 %v2420
  %2466 = vmatpush.bf16.msra.mxu0 %v2419
  %2467 = vmatpush.bf16.msra.mxu0 %v2418
  %2468 = vmatpush.bf16.msra.mxu0 %v2417
  %2469 = vmatpush.bf16.msra.mxu0 %v2416
  %2470 = vmatpush.bf16.msra.mxu0 %v2415
  %2471 = vmatmul.bf16.gmra.mxu0 %v2289
  %v2472 = vpop.f32.mrf.mxu0
  %v2473 = vadd.f32 %v107, %v2472
  %v2474 = vpop.f32.mrf.mxu0
  %v2475 = vadd.f32 %v107, %v2474
  %2476 = vmatmul.bf16.gmra.mxu0 %v2292
  %v2477 = vpop.f32.mrf.mxu0
  %v2478 = vadd.f32 %v107, %v2477
  %v2479 = vpop.f32.mrf.mxu0
  %v2480 = vadd.f32 %v107, %v2479
  %2481 = vmatmul.bf16.gmra.mxu0 %v2295
  %v2482 = vpop.f32.mrf.mxu0
  %v2483 = vadd.f32 %v107, %v2482
  %v2484 = vpop.f32.mrf.mxu0
  %v2485 = vadd.f32 %v107, %v2484
  %2486 = vmatmul.bf16.gmra.mxu0 %v2298
  %v2487 = vpop.f32.mrf.mxu0
  %v2488 = vadd.f32 %v107, %v2487
  %v2489 = vpop.f32.mrf.mxu0
  %v2490 = vadd.f32 %v107, %v2489
  %2491 = vmatmul.bf16.gmra.mxu0 %v2301
  %v2492 = vpop.f32.mrf.mxu0
  %v2493 = vadd.f32 %v107, %v2492
  %v2494 = vpop.f32.mrf.mxu0
  %v2495 = vadd.f32 %v107, %v2494
  %2496 = vdwg.mxu0
  %2497 = vmatpush.bf16.msra.mxu0 %v2430
  %2498 = vmatpush.bf16.msra.mxu0 %v2429
  %2499 = vmatpush.bf16.msra.mxu0 %v2428
  %2500 = vmatpush.bf16.msra.mxu0 %v2427
  %2501 = vmatpush.bf16.msra.mxu0 %v2426
  %2502 = vmatpush.bf16.msra.mxu0 %v2425
  %2503 = vmatpush.bf16.msra.mxu0 %v2424
  %2504 = vmatpush.bf16.msra.mxu0 %v2423
  %2505 = vmatmul.bf16.gmra.mxu0 %v2290
  %v2506 = vpop.f32.mrf.mxu0
  %v2507 = vadd.f32 %v2473, %v2506
  %v2508 = vpop.f32.mrf.mxu0
  %v2509 = vadd.f32 %v2475, %v2508
  %2510 = vmatmul.bf16.gmra.mxu0 %v2293
  %v2511 = vpop.f32.mrf.mxu0
  %v2512 = vadd.f32 %v2478, %v2511
  %v2513 = vpop.f32.mrf.mxu0
  %v2514 = vadd.f32 %v2480, %v2513
  %2515 = vmatmul.bf16.gmra.mxu0 %v2296
  %v2516 = vpop.f32.mrf.mxu0
  %v2517 = vadd.f32 %v2483, %v2516
  %v2518 = vpop.f32.mrf.mxu0
  %v2519 = vadd.f32 %v2485, %v2518
  %2520 = vmatmul.bf16.gmra.mxu0 %v2299
  %v2521 = vpop.f32.mrf.mxu0
  %v2522 = vadd.f32 %v2488, %v2521
  %v2523 = vpop.f32.mrf.mxu0
  %v2524 = vadd.f32 %v2490, %v2523
  %2525 = vmatmul.bf16.gmra.mxu0 %v2302
  %v2526 = vpop.f32.mrf.mxu0
  %v2527 = vadd.f32 %v2493, %v2526
  %v2528 = vpop.f32.mrf.mxu0
  %v2529 = vadd.f32 %v2495, %v2528
  %2530 = vdwg.mxu0
  %2531 = vmatpush.bf16.msra.mxu0 %v2438
  %2532 = vmatpush.bf16.msra.mxu0 %v2437
  %2533 = vmatpush.bf16.msra.mxu0 %v2436
  %2534 = vmatpush.bf16.msra.mxu0 %v2435
  %2535 = vmatpush.bf16.msra.mxu0 %v2434
  %2536 = vmatpush.bf16.msra.mxu0 %v2433
  %2537 = vmatpush.bf16.msra.mxu0 %v2432
  %2538 = vmatpush.bf16.msra.mxu0 %v2431
  %2539 = vmatmul.bf16.gmra.mxu0 %v2291
  %v2540 = vpop.f32.mrf.mxu0
  %v2541 = vadd.f32 %v2507, %v2540
  %v2542 = vpop.f32.mrf.mxu0
  %v2543 = vadd.f32 %v2509, %v2542
  %2544 = vmatmul.bf16.gmra.mxu0 %v2294
  %v2545 = vpop.f32.mrf.mxu0
  %v2546 = vadd.f32 %v2512, %v2545
  %v2547 = vpop.f32.mrf.mxu0
  %v2548 = vadd.f32 %v2514, %v2547
  %2549 = vmatmul.bf16.gmra.mxu0 %v2297
  %v2550 = vpop.f32.mrf.mxu0
  %v2551 = vadd.f32 %v2517, %v2550
  %v2552 = vpop.f32.mrf.mxu0
  %v2553 = vadd.f32 %v2519, %v2552
  %2554 = vmatmul.bf16.gmra.mxu0 %v2300
  %v2555 = vpop.f32.mrf.mxu0
  %v2556 = vadd.f32 %v2522, %v2555
  %v2557 = vpop.f32.mrf.mxu0
  %v2558 = vadd.f32 %v2524, %v2557
  %2559 = vmatmul.bf16.gmra.mxu0 %v2303
  %v2560 = vpop.f32.mrf.mxu0
  %v2561 = vadd.f32 %v2527, %v2560
  %v2562 = vpop.f32.mrf.mxu0
  %v2563 = vadd.f32 %v2529, %v2562
  %2564 = vdwg.mxu0
  %v2565 = vmax.f32 %v2541, 0.0
  %v2566 = vmax.f32 %v2543, 0.0
  %v2567 = vmax.f32 %v2546, 0.0
  %v2568 = vmax.f32 %v2548, 0.0
  %v2569 = vmax.f32 %v2551, 0.0
  %v2570 = vmax.f32 %v2553, 0.0
  %v2571 = vmax.f32 %v2556, 0.0
  %v2572 = vmax.f32 %v2558, 0.0
  %v2573 = vmax.f32 %v2561, 0.0
  %v2574 = vmax.f32 %v2563, 0.0
  %v2575 = vpack.c.bf16 %v2565, %v2565
  %v2576 = vpack.c.bf16 %v2566, %v2566
  %v2577 = vpack.c.bf16 %v2567, %v2567
  %v2578 = vpack.c.bf16 %v2568, %v2568
  %v2579 = vpack.c.bf16 %v2569, %v2569
  %v2580 = vpack.c.bf16 %v2570, %v2570
  %v2581 = vpack.c.bf16 %v2571, %v2571
  %v2582 = vpack.c.bf16 %v2572, %v2572
  %v2583 = vpack.c.bf16 %v2573, %v2573
  %v2584 = vpack.c.bf16 %v2574, %v2574
  %s2585 = scalar_lea.vmem [#allocation2], 200
  %2586 = vst.msk [vmem:[%s2585] sm:$0xf] %vm455, %v2575
  %2587 = vst.msk [vmem:[%s2585 + $0x4] sm:$0xf] %vm455, %v2576
  %2588 = vst.msk [vmem:[%s2585 + $0x8] sm:$0xf] %vm455, %v2577
  %2589 = vst.msk [vmem:[%s2585 + $0xc] sm:$0xf] %vm455, %v2578
  %2590 = vst.msk [vmem:[%s2585 + $0x10] sm:$0xf] %vm455, %v2579
  %2591 = vst.msk [vmem:[%s2585 + $0x14] sm:$0xf] %vm455, %v2580
  %2592 = vst.msk [vmem:[%s2585 + $0x18] sm:$0xf] %vm455, %v2581
  %2593 = vst.msk [vmem:[%s2585 + $0x1c] sm:$0xf] %vm455, %v2582
  %2594 = vst.msk [vmem:[%s2585 + $0x20] sm:$0xf] %vm455, %v2583
  %2595 = vst.msk [vmem:[%s2585 + $0x24] sm:$0xf] %vm455, %v2584
  %s2596 = scalar_lea.vmem %s0, 720
  %v2597 = vld [vmem:[%s2596] sm:$0xff]
  %v2598 = vld [vmem:[%s2596 + $0x8] sm:$0xf]
  %v2599 = vld [vmem:[%s2596 + $0xc] sm:$0xff]
  %v2600 = vld [vmem:[%s2596 + $0x14] sm:$0xf]
  %v2601 = vld [vmem:[%s2596 + $0x18] sm:$0xff]
  %v2602 = vld [vmem:[%s2596 + $0x20] sm:$0xf]
  %v2603 = vld [vmem:[%s2596 + $0x24] sm:$0xff]
  %v2604 = vld [vmem:[%s2596 + $0x2c] sm:$0xf]
  %v2605 = vld [vmem:[%s2596 + $0x30] sm:$0xff]
  %v2606 = vld [vmem:[%s2596 + $0x38] sm:$0xf]
  %v2607 = vld [vmem:[%s2596 + $0x3c] sm:$0xff]
  %v2608 = vld [vmem:[%s2596 + $0x44] sm:$0xf]
  %v2609 = vld [vmem:[%s2596 + $0x48] sm:$0xff]
  %v2610 = vld [vmem:[%s2596 + $0x50] sm:$0xf]
  %v2611 = vld [vmem:[%s2596 + $0x54] sm:$0xff]
  %v2612 = vld [vmem:[%s2596 + $0x5c] sm:$0xf]
  %v2613 = vld [vmem:[%s2596 + $0x60] sm:$0xff]
  %v2614 = vld [vmem:[%s2596 + $0x68] sm:$0xf]
  %v2615 = vld [vmem:[%s2596 + $0x6c] sm:$0xff]
  %v2616 = vld [vmem:[%s2596 + $0x74] sm:$0xf]
  %v2617 = vld [vmem:[%s1] sm:$0xf]
  %v2618 = vld [vmem:[%s1 + $0x4] sm:$0xf]
  %v2619 = vld [vmem:[%s1 + $0x8] sm:$0xf]
  %v2620 = vld [vmem:[%s1 + $0xc] sm:$0xf]
  %v2621 = vld [vmem:[%s1 + $0x10] sm:$0xf]
  %v2622 = vld [vmem:[%s1 + $0x14] sm:$0xf]
  %v2623 = vld [vmem:[%s1 + $0x18] sm:$0xf]
  %v2624 = vld [vmem:[%s1 + $0x1c] sm:$0xf]
  %v2625 = vld [vmem:[%s1 + $0x20] sm:$0xf]
  %v2626 = vld [vmem:[%s1 + $0x24] sm:$0xf]
  %v2627 = vld [vmem:[%s1 + $0x28] sm:$0xf]
  %v2628 = vld [vmem:[%s1 + $0x2c] sm:$0xf]
  %v2629 = vld [vmem:[%s1 + $0x30] sm:$0xf]
  %v2630 = vld [vmem:[%s1 + $0x34] sm:$0xf]
  %v2631 = vld [vmem:[%s1 + $0x38] sm:$0xf]
  %v2632 = vld [vmem:[%s1 + $0x3c] sm:$0xf]
  %v2633 = vld [vmem:[%s1 + $0x40] sm:$0xf]
  %v2634 = vld [vmem:[%s1 + $0x44] sm:$0xf]
  %v2635 = vld [vmem:[%s1 + $0x48] sm:$0xf]
  %v2636 = vld [vmem:[%s1 + $0x4c] sm:$0xf]
  %v2637 = vld [vmem:[%s1 + $0x50] sm:$0xf]
  %v2638 = vld [vmem:[%s1 + $0x54] sm:$0xf]
  %v2639 = vld [vmem:[%s1 + $0x58] sm:$0xf]
  %v2640 = vld [vmem:[%s1 + $0x5c] sm:$0xf]
  %v2641 = vld [vmem:[%s1 + $0x60] sm:$0xf]
  %v2642 = vld [vmem:[%s1 + $0x64] sm:$0xf]
  %v2643 = vld [vmem:[%s1 + $0x68] sm:$0xf]
  %v2644 = vld [vmem:[%s1 + $0x6c] sm:$0xf]
  %v2645 = vld [vmem:[%s1 + $0x70] sm:$0xf]
  %v2646 = vld [vmem:[%s1 + $0x74] sm:$0xf]
  %v2647 = vld [vmem:[%s1 + $0x78] sm:$0xf]
  %v2648 = vld [vmem:[%s1 + $0x7c] sm:$0xf]
  %v2649 = vld [vmem:[%s1 + $0x80] sm:$0xf]
  %v2650 = vld [vmem:[%s1 + $0x84] sm:$0xf]
  %v2651 = vld [vmem:[%s1 + $0x88] sm:$0xf]
  %v2652 = vld [vmem:[%s1 + $0x8c] sm:$0xf]
  %v2653 = vld [vmem:[%s1 + $0x90] sm:$0xf]
  %v2654 = vld [vmem:[%s1 + $0x94] sm:$0xf]
  %v2655 = vld [vmem:[%s1 + $0x98] sm:$0xf]
  %v2656 = vld [vmem:[%s1 + $0x9c] sm:$0xf]
  %v2657 = vld [vmem:[%s1 + $0xa0] sm:$0xf]
  %v2658 = vld [vmem:[%s1 + $0xa4] sm:$0xf]
  %v2659 = vld [vmem:[%s1 + $0xa8] sm:$0xf]
  %v2660 = vld [vmem:[%s1 + $0xac] sm:$0xf]
  %v2661 = vld [vmem:[%s1 + $0xb0] sm:$0xf]
  %v2662 = vld [vmem:[%s1 + $0xb4] sm:$0xf]
  %v2663 = vld [vmem:[%s1 + $0xb8] sm:$0xf]
  %v2664 = vld [vmem:[%s1 + $0xbc] sm:$0xf]
  %v2685 = vunpack.c.l.b16 %v2597
  %v2686 = vunpack.c.h.b16 %v2597
  %v2687 = vunpack.c.l.b16 %v2598
  %v2688 = vunpack.c.l.b16 %v2599
  %v2689 = vunpack.c.h.b16 %v2599
  %v2690 = vunpack.c.l.b16 %v2600
  %v2691 = vunpack.c.l.b16 %v2601
  %v2692 = vunpack.c.h.b16 %v2601
  %v2693 = vunpack.c.l.b16 %v2602
  %v2694 = vunpack.c.l.b16 %v2603
  %v2695 = vunpack.c.h.b16 %v2603
  %v2696 = vunpack.c.l.b16 %v2604
  %v2697 = vunpack.c.l.b16 %v2605
  %v2698 = vunpack.c.h.b16 %v2605
  %v2699 = vunpack.c.l.b16 %v2606
  %v2700 = vunpack.c.l.b16 %v2607
  %v2701 = vunpack.c.h.b16 %v2607
  %v2702 = vunpack.c.l.b16 %v2608
  %v2703 = vunpack.c.l.b16 %v2609
  %v2704 = vunpack.c.h.b16 %v2609
  %v2705 = vunpack.c.l.b16 %v2610
  %v2706 = vunpack.c.l.b16 %v2611
  %v2707 = vunpack.c.h.b16 %v2611
  %v2708 = vunpack.c.l.b16 %v2612
  %v2709 = vunpack.c.l.b16 %v2613
  %v2710 = vunpack.c.h.b16 %v2613
  %v2711 = vunpack.c.l.b16 %v2614
  %v2712 = vunpack.c.l.b16 %v2615
  %v2713 = vunpack.c.h.b16 %v2615
  %v2714 = vunpack.c.l.b16 %v2616
  %v2715 = vpack.c.b16 %v2688, %v2685
  %v2716 = vpack.c.b16 %v2689, %v2686
  %v2717 = vpack.c.b16 %v2690, %v2687
  %v2718 = vpack.c.b16 %v2694, %v2691
  %v2719 = vpack.c.b16 %v2695, %v2692
  %v2720 = vpack.c.b16 %v2696, %v2693
  %v2721 = vpack.c.b16 %v2700, %v2697
  %v2722 = vpack.c.b16 %v2701, %v2698
  %v2723 = vpack.c.b16 %v2702, %v2699
  %v2724 = vpack.c.b16 %v2706, %v2703
  %v2725 = vpack.c.b16 %v2707, %v2704
  %v2726 = vpack.c.b16 %v2708, %v2705
  %v2727 = vpack.c.b16 %v2712, %v2709
  %v2728 = vpack.c.b16 %v2713, %v2710
  %v2729 = vpack.c.b16 %v2714, %v2711
  %v2793 = vunpack.c.l.b16 %v2617
  %v2794 = vunpack.c.l.b16 %v2618
  %v2795 = vunpack.c.l.b16 %v2619
  %v2796 = vunpack.c.l.b16 %v2620
  %v2797 = vunpack.c.l.b16 %v2621
  %v2798 = vunpack.c.l.b16 %v2622
  %v2799 = vunpack.c.l.b16 %v2623
  %v2800 = vunpack.c.l.b16 %v2624
  %v2801 = vunpack.c.l.b16 %v2625
  %v2802 = vunpack.c.l.b16 %v2626
  %v2803 = vunpack.c.l.b16 %v2627
  %v2804 = vunpack.c.l.b16 %v2628
  %v2805 = vunpack.c.l.b16 %v2629
  %v2806 = vunpack.c.l.b16 %v2630
  %v2807 = vunpack.c.l.b16 %v2631
  %v2808 = vunpack.c.l.b16 %v2632
  %v2809 = vunpack.c.l.b16 %v2633
  %v2810 = vunpack.c.l.b16 %v2634
  %v2811 = vunpack.c.l.b16 %v2635
  %v2812 = vunpack.c.l.b16 %v2636
  %v2813 = vunpack.c.l.b16 %v2637
  %v2814 = vunpack.c.l.b16 %v2638
  %v2815 = vunpack.c.l.b16 %v2639
  %v2816 = vunpack.c.l.b16 %v2640
  %v2817 = vunpack.c.l.b16 %v2641
  %v2818 = vunpack.c.l.b16 %v2642
  %v2819 = vunpack.c.l.b16 %v2643
  %v2820 = vunpack.c.l.b16 %v2644
  %v2821 = vunpack.c.l.b16 %v2645
  %v2822 = vunpack.c.l.b16 %v2646
  %v2823 = vunpack.c.l.b16 %v2647
  %v2824 = vunpack.c.l.b16 %v2648
  %v2825 = vunpack.c.l.b16 %v2649
  %v2826 = vunpack.c.l.b16 %v2650
  %v2827 = vunpack.c.l.b16 %v2651
  %v2828 = vunpack.c.l.b16 %v2652
  %v2829 = vunpack.c.l.b16 %v2653
  %v2830 = vunpack.c.l.b16 %v2654
  %v2831 = vunpack.c.l.b16 %v2655
  %v2832 = vunpack.c.l.b16 %v2656
  %v2833 = vunpack.c.l.b16 %v2657
  %v2834 = vunpack.c.l.b16 %v2658
  %v2835 = vunpack.c.l.b16 %v2659
  %v2836 = vunpack.c.l.b16 %v2660
  %v2837 = vunpack.c.l.b16 %v2661
  %v2838 = vunpack.c.l.b16 %v2662
  %v2839 = vunpack.c.l.b16 %v2663
  %v2840 = vunpack.c.l.b16 %v2664
  %v2841 = vpack.c.b16 %v2794, %v2793
  %v2842 = vpack.c.b16 %v2796, %v2795
  %v2843 = vpack.c.b16 %v2798, %v2797
  %v2844 = vpack.c.b16 %v2800, %v2799
  %v2845 = vpack.c.b16 %v2802, %v2801
  %v2846 = vpack.c.b16 %v2804, %v2803
  %v2847 = vpack.c.b16 %v2806, %v2805
  %v2848 = vpack.c.b16 %v2808, %v2807
  %v2849 = vpack.c.b16 %v2810, %v2809
  %v2850 = vpack.c.b16 %v2812, %v2811
  %v2851 = vpack.c.b16 %v2814, %v2813
  %v2852 = vpack.c.b16 %v2816, %v2815
  %v2853 = vpack.c.b16 %v2818, %v2817
  %v2854 = vpack.c.b16 %v2820, %v2819
  %v2855 = vpack.c.b16 %v2822, %v2821
  %v2856 = vpack.c.b16 %v2824, %v2823
  %v2857 = vpack.c.b16 %v2826, %v2825
  %v2858 = vpack.c.b16 %v2828, %v2827
  %v2859 = vpack.c.b16 %v2830, %v2829
  %v2860 = vpack.c.b16 %v2832, %v2831
  %v2861 = vpack.c.b16 %v2834, %v2833
  %v2862 = vpack.c.b16 %v2836, %v2835
  %v2863 = vpack.c.b16 %v2838, %v2837
  %v2864 = vpack.c.b16 %v2840, %v2839
  %2889 = vmatpush.bf16.msra.mxu0 %v2848
  %2890 = vmatpush.bf16.msra.mxu0 %v2847
  %2891 = vmatpush.bf16.msra.mxu0 %v2846
  %2892 = vmatpush.bf16.msra.mxu0 %v2845
  %2893 = vmatpush.bf16.msra.mxu0 %v2844
  %2894 = vmatpush.bf16.msra.mxu0 %v2843
  %2895 = vmatpush.bf16.msra.mxu0 %v2842
  %2896 = vmatpush.bf16.msra.mxu0 %v2841
  %2897 = vmatmul.bf16.gmra.mxu0 %v2715
  %v2898 = vpop.f32.mrf.mxu0
  %v2899 = vadd.f32 %v107, %v2898
  %v2900 = vpop.f32.mrf.mxu0
  %v2901 = vadd.f32 %v107, %v2900
  %2902 = vmatmul.bf16.gmra.mxu0 %v2718
  %v2903 = vpop.f32.mrf.mxu0
  %v2904 = vadd.f32 %v107, %v2903
  %v2905 = vpop.f32.mrf.mxu0
  %v2906 = vadd.f32 %v107, %v2905
  %2907 = vmatmul.bf16.gmra.mxu0 %v2721
  %v2908 = vpop.f32.mrf.mxu0
  %v2909 = vadd.f32 %v107, %v2908
  %v2910 = vpop.f32.mrf.mxu0
  %v2911 = vadd.f32 %v107, %v2910
  %2912 = vmatmul.bf16.gmra.mxu0 %v2724
  %v2913 = vpop.f32.mrf.mxu0
  %v2914 = vadd.f32 %v107, %v2913
  %v2915 = vpop.f32.mrf.mxu0
  %v2916 = vadd.f32 %v107, %v2915
  %2917 = vmatmul.bf16.gmra.mxu0 %v2727
  %v2918 = vpop.f32.mrf.mxu0
  %v2919 = vadd.f32 %v107, %v2918
  %v2920 = vpop.f32.mrf.mxu0
  %v2921 = vadd.f32 %v107, %v2920
  %2922 = vdwg.mxu0
  %2923 = vmatpush.bf16.msra.mxu0 %v2856
  %2924 = vmatpush.bf16.msra.mxu0 %v2855
  %2925 = vmatpush.bf16.msra.mxu0 %v2854
  %2926 = vmatpush.bf16.msra.mxu0 %v2853
  %2927 = vmatpush.bf16.msra.mxu0 %v2852
  %2928 = vmatpush.bf16.msra.mxu0 %v2851
  %2929 = vmatpush.bf16.msra.mxu0 %v2850
  %2930 = vmatpush.bf16.msra.mxu0 %v2849
  %2931 = vmatmul.bf16.gmra.mxu0 %v2716
  %v2932 = vpop.f32.mrf.mxu0
  %v2933 = vadd.f32 %v2899, %v2932
  %v2934 = vpop.f32.mrf.mxu0
  %v2935 = vadd.f32 %v2901, %v2934
  %2936 = vmatmul.bf16.gmra.mxu0 %v2719
  %v2937 = vpop.f32.mrf.mxu0
  %v2938 = vadd.f32 %v2904, %v2937
  %v2939 = vpop.f32.mrf.mxu0
  %v2940 = vadd.f32 %v2906, %v2939
  %2941 = vmatmul.bf16.gmra.mxu0 %v2722
  %v2942 = vpop.f32.mrf.mxu0
  %v2943 = vadd.f32 %v2909, %v2942
  %v2944 = vpop.f32.mrf.mxu0
  %v2945 = vadd.f32 %v2911, %v2944
  %2946 = vmatmul.bf16.gmra.mxu0 %v2725
  %v2947 = vpop.f32.mrf.mxu0
  %v2948 = vadd.f32 %v2914, %v2947
  %v2949 = vpop.f32.mrf.mxu0
  %v2950 = vadd.f32 %v2916, %v2949
  %2951 = vmatmul.bf16.gmra.mxu0 %v2728
  %v2952 = vpop.f32.mrf.mxu0
  %v2953 = vadd.f32 %v2919, %v2952
  %v2954 = vpop.f32.mrf.mxu0
  %v2955 = vadd.f32 %v2921, %v2954
  %2956 = vdwg.mxu0
  %2957 = vmatpush.bf16.msra.mxu0 %v2864
  %2958 = vmatpush.bf16.msra.mxu0 %v2863
  %2959 = vmatpush.bf16.msra.mxu0 %v2862
  %2960 = vmatpush.bf16.msra.mxu0 %v2861
  %2961 = vmatpush.bf16.msra.mxu0 %v2860
  %2962 = vmatpush.bf16.msra.mxu0 %v2859
  %2963 = vmatpush.bf16.msra.mxu0 %v2858
  %2964 = vmatpush.bf16.msra.mxu0 %v2857
  %2965 = vmatmul.bf16.gmra.mxu0 %v2717
  %v2966 = vpop.f32.mrf.mxu0
  %v2967 = vadd.f32 %v2933, %v2966
  %v2968 = vpop.f32.mrf.mxu0
  %v2969 = vadd.f32 %v2935, %v2968
  %2970 = vmatmul.bf16.gmra.mxu0 %v2720
  %v2971 = vpop.f32.mrf.mxu0
  %v2972 = vadd.f32 %v2938, %v2971
  %v2973 = vpop.f32.mrf.mxu0
  %v2974 = vadd.f32 %v2940, %v2973
  %2975 = vmatmul.bf16.gmra.mxu0 %v2723
  %v2976 = vpop.f32.mrf.mxu0
  %v2977 = vadd.f32 %v2943, %v2976
  %v2978 = vpop.f32.mrf.mxu0
  %v2979 = vadd.f32 %v2945, %v2978
  %2980 = vmatmul.bf16.gmra.mxu0 %v2726
  %v2981 = vpop.f32.mrf.mxu0
  %v2982 = vadd.f32 %v2948, %v2981
  %v2983 = vpop.f32.mrf.mxu0
  %v2984 = vadd.f32 %v2950, %v2983
  %2985 = vmatmul.bf16.gmra.mxu0 %v2729
  %v2986 = vpop.f32.mrf.mxu0
  %v2987 = vadd.f32 %v2953, %v2986
  %v2988 = vpop.f32.mrf.mxu0
  %v2989 = vadd.f32 %v2955, %v2988
  %2990 = vdwg.mxu0
  %v2991 = vmax.f32 %v2967, 0.0
  %v2992 = vmax.f32 %v2969, 0.0
  %v2993 = vmax.f32 %v2972, 0.0
  %v2994 = vmax.f32 %v2974, 0.0
  %v2995 = vmax.f32 %v2977, 0.0
  %v2996 = vmax.f32 %v2979, 0.0
  %v2997 = vmax.f32 %v2982, 0.0
  %v2998 = vmax.f32 %v2984, 0.0
  %v2999 = vmax.f32 %v2987, 0.0
  %v3000 = vmax.f32 %v2989, 0.0
  %v3001 = vpack.c.bf16 %v2991, %v2991
  %v3002 = vpack.c.bf16 %v2992, %v2992
  %v3003 = vpack.c.bf16 %v2993, %v2993
  %v3004 = vpack.c.bf16 %v2994, %v2994
  %v3005 = vpack.c.bf16 %v2995, %v2995
  %v3006 = vpack.c.bf16 %v2996, %v2996
  %v3007 = vpack.c.bf16 %v2997, %v2997
  %v3008 = vpack.c.bf16 %v2998, %v2998
  %v3009 = vpack.c.bf16 %v2999, %v2999
  %v3010 = vpack.c.bf16 %v3000, %v3000
  %s3011 = scalar_lea.vmem [#allocation2], 240
  %3012 = vst.msk [vmem:[%s3011] sm:$0xf] %vm455, %v3001
  %3013 = vst.msk [vmem:[%s3011 + $0x4] sm:$0xf] %vm455, %v3002
  %3014 = vst.msk [vmem:[%s3011 + $0x8] sm:$0xf] %vm455, %v3003
  %3015 = vst.msk [vmem:[%s3011 + $0xc] sm:$0xf] %vm455, %v3004
  %3016 = vst.msk [vmem:[%s3011 + $0x10] sm:$0xf] %vm455, %v3005
  %3017 = vst.msk [vmem:[%s3011 + $0x14] sm:$0xf] %vm455, %v3006
  %3018 = vst.msk [vmem:[%s3011 + $0x18] sm:$0xf] %vm455, %v3007
  %3019 = vst.msk [vmem:[%s3011 + $0x1c] sm:$0xf] %vm455, %v3008
  %3020 = vst.msk [vmem:[%s3011 + $0x20] sm:$0xf] %vm455, %v3009
  %3021 = vst.msk [vmem:[%s3011 + $0x24] sm:$0xf] %vm455, %v3010
  %s3022 = scalar_lea.vmem %s0, 840
  %v3023 = vld [vmem:[%s3022] sm:$0xff]
  %v3024 = vld [vmem:[%s3022 + $0x8] sm:$0xf]
  %v3025 = vld [vmem:[%s3022 + $0xc] sm:$0xff]
  %v3026 = vld [vmem:[%s3022 + $0x14] sm:$0xf]
  %v3027 = vld [vmem:[%s3022 + $0x18] sm:$0xff]
  %v3028 = vld [vmem:[%s3022 + $0x20] sm:$0xf]
  %v3029 = vld [vmem:[%s3022 + $0x24] sm:$0xff]
  %v3030 = vld [vmem:[%s3022 + $0x2c] sm:$0xf]
  %v3031 = vld [vmem:[%s3022 + $0x30] sm:$0xff]
  %v3032 = vld [vmem:[%s3022 + $0x38] sm:$0xf]
  %v3033 = vld [vmem:[%s3022 + $0x3c] sm:$0xff]
  %v3034 = vld [vmem:[%s3022 + $0x44] sm:$0xf]
  %v3035 = vld [vmem:[%s3022 + $0x48] sm:$0xff]
  %v3036 = vld [vmem:[%s3022 + $0x50] sm:$0xf]
  %v3037 = vld [vmem:[%s3022 + $0x54] sm:$0xff]
  %v3038 = vld [vmem:[%s3022 + $0x5c] sm:$0xf]
  %v3039 = vld [vmem:[%s3022 + $0x60] sm:$0xff]
  %v3040 = vld [vmem:[%s3022 + $0x68] sm:$0xf]
  %v3041 = vld [vmem:[%s3022 + $0x6c] sm:$0xff]
  %v3042 = vld [vmem:[%s3022 + $0x74] sm:$0xf]
  %v3043 = vld [vmem:[%s1] sm:$0xf]
  %v3044 = vld [vmem:[%s1 + $0x4] sm:$0xf]
  %v3045 = vld [vmem:[%s1 + $0x8] sm:$0xf]
  %v3046 = vld [vmem:[%s1 + $0xc] sm:$0xf]
  %v3047 = vld [vmem:[%s1 + $0x10] sm:$0xf]
  %v3048 = vld [vmem:[%s1 + $0x14] sm:$0xf]
  %v3049 = vld [vmem:[%s1 + $0x18] sm:$0xf]
  %v3050 = vld [vmem:[%s1 + $0x1c] sm:$0xf]
  %v3051 = vld [vmem:[%s1 + $0x20] sm:$0xf]
  %v3052 = vld [vmem:[%s1 + $0x24] sm:$0xf]
  %v3053 = vld [vmem:[%s1 + $0x28] sm:$0xf]
  %v3054 = vld [vmem:[%s1 + $0x2c] sm:$0xf]
  %v3055 = vld [vmem:[%s1 + $0x30] sm:$0xf]
  %v3056 = vld [vmem:[%s1 + $0x34] sm:$0xf]
  %v3057 = vld [vmem:[%s1 + $0x38] sm:$0xf]
  %v3058 = vld [vmem:[%s1 + $0x3c] sm:$0xf]
  %v3059 = vld [vmem:[%s1 + $0x40] sm:$0xf]
  %v3060 = vld [vmem:[%s1 + $0x44] sm:$0xf]
  %v3061 = vld [vmem:[%s1 + $0x48] sm:$0xf]
  %v3062 = vld [vmem:[%s1 + $0x4c] sm:$0xf]
  %v3063 = vld [vmem:[%s1 + $0x50] sm:$0xf]
  %v3064 = vld [vmem:[%s1 + $0x54] sm:$0xf]
  %v3065 = vld [vmem:[%s1 + $0x58] sm:$0xf]
  %v3066 = vld [vmem:[%s1 + $0x5c] sm:$0xf]
  %v3067 = vld [vmem:[%s1 + $0x60] sm:$0xf]
  %v3068 = vld [vmem:[%s1 + $0x64] sm:$0xf]
  %v3069 = vld [vmem:[%s1 + $0x68] sm:$0xf]
  %v3070 = vld [vmem:[%s1 + $0x6c] sm:$0xf]
  %v3071 = vld [vmem:[%s1 + $0x70] sm:$0xf]
  %v3072 = vld [vmem:[%s1 + $0x74] sm:$0xf]
  %v3073 = vld [vmem:[%s1 + $0x78] sm:$0xf]
  %v3074 = vld [vmem:[%s1 + $0x7c] sm:$0xf]
  %v3075 = vld [vmem:[%s1 + $0x80] sm:$0xf]
  %v3076 = vld [vmem:[%s1 + $0x84] sm:$0xf]
  %v3077 = vld [vmem:[%s1 + $0x88] sm:$0xf]
  %v3078 = vld [vmem:[%s1 + $0x8c] sm:$0xf]
  %v3079 = vld [vmem:[%s1 + $0x90] sm:$0xf]
  %v3080 = vld [vmem:[%s1 + $0x94] sm:$0xf]
  %v3081 = vld [vmem:[%s1 + $0x98] sm:$0xf]
  %v3082 = vld [vmem:[%s1 + $0x9c] sm:$0xf]
  %v3083 = vld [vmem:[%s1 + $0xa0] sm:$0xf]
  %v3084 = vld [vmem:[%s1 + $0xa4] sm:$0xf]
  %v3085 = vld [vmem:[%s1 + $0xa8] sm:$0xf]
  %v3086 = vld [vmem:[%s1 + $0xac] sm:$0xf]
  %v3087 = vld [vmem:[%s1 + $0xb0] sm:$0xf]
  %v3088 = vld [vmem:[%s1 + $0xb4] sm:$0xf]
  %v3089 = vld [vmem:[%s1 + $0xb8] sm:$0xf]
  %v3090 = vld [vmem:[%s1 + $0xbc] sm:$0xf]
  %v3111 = vunpack.c.l.b16 %v3023
  %v3112 = vunpack.c.h.b16 %v3023
  %v3113 = vunpack.c.l.b16 %v3024
  %v3114 = vunpack.c.l.b16 %v3025
  %v3115 = vunpack.c.h.b16 %v3025
  %v3116 = vunpack.c.l.b16 %v3026
  %v3117 = vunpack.c.l.b16 %v3027
  %v3118 = vunpack.c.h.b16 %v3027
  %v3119 = vunpack.c.l.b16 %v3028
  %v3120 = vunpack.c.l.b16 %v3029
  %v3121 = vunpack.c.h.b16 %v3029
  %v3122 = vunpack.c.l.b16 %v3030
  %v3123 = vunpack.c.l.b16 %v3031
  %v3124 = vunpack.c.h.b16 %v3031
  %v3125 = vunpack.c.l.b16 %v3032
  %v3126 = vunpack.c.l.b16 %v3033
  %v3127 = vunpack.c.h.b16 %v3033
  %v3128 = vunpack.c.l.b16 %v3034
  %v3129 = vunpack.c.l.b16 %v3035
  %v3130 = vunpack.c.h.b16 %v3035
  %v3131 = vunpack.c.l.b16 %v3036
  %v3132 = vunpack.c.l.b16 %v3037
  %v3133 = vunpack.c.h.b16 %v3037
  %v3134 = vunpack.c.l.b16 %v3038
  %v3135 = vunpack.c.l.b16 %v3039
  %v3136 = vunpack.c.h.b16 %v3039
  %v3137 = vunpack.c.l.b16 %v3040
  %v3138 = vunpack.c.l.b16 %v3041
  %v3139 = vunpack.c.h.b16 %v3041
  %v3140 = vunpack.c.l.b16 %v3042
  %v3141 = vpack.c.b16 %v3114, %v3111
  %v3142 = vpack.c.b16 %v3115, %v3112
  %v3143 = vpack.c.b16 %v3116, %v3113
  %v3144 = vpack.c.b16 %v3120, %v3117
  %v3145 = vpack.c.b16 %v3121, %v3118
  %v3146 = vpack.c.b16 %v3122, %v3119
  %v3147 = vpack.c.b16 %v3126, %v3123
  %v3148 = vpack.c.b16 %v3127, %v3124
  %v3149 = vpack.c.b16 %v3128, %v3125
  %v3150 = vpack.c.b16 %v3132, %v3129
  %v3151 = vpack.c.b16 %v3133, %v3130
  %v3152 = vpack.c.b16 %v3134, %v3131
  %v3153 = vpack.c.b16 %v3138, %v3135
  %v3154 = vpack.c.b16 %v3139, %v3136
  %v3155 = vpack.c.b16 %v3140, %v3137
  %v3219 = vunpack.c.l.b16 %v3043
  %v3220 = vunpack.c.l.b16 %v3044
  %v3221 = vunpack.c.l.b16 %v3045
  %v3222 = vunpack.c.l.b16 %v3046
  %v3223 = vunpack.c.l.b16 %v3047
  %v3224 = vunpack.c.l.b16 %v3048
  %v3225 = vunpack.c.l.b16 %v3049
  %v3226 = vunpack.c.l.b16 %v3050
  %v3227 = vunpack.c.l.b16 %v3051
  %v3228 = vunpack.c.l.b16 %v3052
  %v3229 = vunpack.c.l.b16 %v3053
  %v3230 = vunpack.c.l.b16 %v3054
  %v3231 = vunpack.c.l.b16 %v3055
  %v3232 = vunpack.c.l.b16 %v3056
  %v3233 = vunpack.c.l.b16 %v3057
  %v3234 = vunpack.c.l.b16 %v3058
  %v3235 = vunpack.c.l.b16 %v3059
  %v3236 = vunpack.c.l.b16 %v3060
  %v3237 = vunpack.c.l.b16 %v3061
  %v3238 = vunpack.c.l.b16 %v3062
  %v3239 = vunpack.c.l.b16 %v3063
  %v3240 = vunpack.c.l.b16 %v3064
  %v3241 = vunpack.c.l.b16 %v3065
  %v3242 = vunpack.c.l.b16 %v3066
  %v3243 = vunpack.c.l.b16 %v3067
  %v3244 = vunpack.c.l.b16 %v3068
  %v3245 = vunpack.c.l.b16 %v3069
  %v3246 = vunpack.c.l.b16 %v3070
  %v3247 = vunpack.c.l.b16 %v3071
  %v3248 = vunpack.c.l.b16 %v3072
  %v3249 = vunpack.c.l.b16 %v3073
  %v3250 = vunpack.c.l.b16 %v3074
  %v3251 = vunpack.c.l.b16 %v3075
  %v3252 = vunpack.c.l.b16 %v3076
  %v3253 = vunpack.c.l.b16 %v3077
  %v3254 = vunpack.c.l.b16 %v3078
  %v3255 = vunpack.c.l.b16 %v3079
  %v3256 = vunpack.c.l.b16 %v3080
  %v3257 = vunpack.c.l.b16 %v3081
  %v3258 = vunpack.c.l.b16 %v3082
  %v3259 = vunpack.c.l.b16 %v3083
  %v3260 = vunpack.c.l.b16 %v3084
  %v3261 = vunpack.c.l.b16 %v3085
  %v3262 = vunpack.c.l.b16 %v3086
  %v3263 = vunpack.c.l.b16 %v3087
  %v3264 = vunpack.c.l.b16 %v3088
  %v3265 = vunpack.c.l.b16 %v3089
  %v3266 = vunpack.c.l.b16 %v3090
  %v3267 = vpack.c.b16 %v3220, %v3219
  %v3268 = vpack.c.b16 %v3222, %v3221
  %v3269 = vpack.c.b16 %v3224, %v3223
  %v3270 = vpack.c.b16 %v3226, %v3225
  %v3271 = vpack.c.b16 %v3228, %v3227
  %v3272 = vpack.c.b16 %v3230, %v3229
  %v3273 = vpack.c.b16 %v3232, %v3231
  %v3274 = vpack.c.b16 %v3234, %v3233
  %v3275 = vpack.c.b16 %v3236, %v3235
  %v3276 = vpack.c.b16 %v3238, %v3237
  %v3277 = vpack.c.b16 %v3240, %v3239
  %v3278 = vpack.c.b16 %v3242, %v3241
  %v3279 = vpack.c.b16 %v3244, %v3243
  %v3280 = vpack.c.b16 %v3246, %v3245
  %v3281 = vpack.c.b16 %v3248, %v3247
  %v3282 = vpack.c.b16 %v3250, %v3249
  %v3283 = vpack.c.b16 %v3252, %v3251
  %v3284 = vpack.c.b16 %v3254, %v3253
  %v3285 = vpack.c.b16 %v3256, %v3255
  %v3286 = vpack.c.b16 %v3258, %v3257
  %v3287 = vpack.c.b16 %v3260, %v3259
  %v3288 = vpack.c.b16 %v3262, %v3261
  %v3289 = vpack.c.b16 %v3264, %v3263
  %v3290 = vpack.c.b16 %v3266, %v3265
  %3315 = vmatpush.bf16.msra.mxu0 %v3274
  %3316 = vmatpush.bf16.msra.mxu0 %v3273
  %3317 = vmatpush.bf16.msra.mxu0 %v3272
  %3318 = vmatpush.bf16.msra.mxu0 %v3271
  %3319 = vmatpush.bf16.msra.mxu0 %v3270
  %3320 = vmatpush.bf16.msra.mxu0 %v3269
  %3321 = vmatpush.bf16.msra.mxu0 %v3268
  %3322 = vmatpush.bf16.msra.mxu0 %v3267
  %3323 = vmatmul.bf16.gmra.mxu0 %v3141
  %v3324 = vpop.f32.mrf.mxu0
  %v3325 = vadd.f32 %v107, %v3324
  %v3326 = vpop.f32.mrf.mxu0
  %v3327 = vadd.f32 %v107, %v3326
  %3328 = vmatmul.bf16.gmra.mxu0 %v3144
  %v3329 = vpop.f32.mrf.mxu0
  %v3330 = vadd.f32 %v107, %v3329
  %v3331 = vpop.f32.mrf.mxu0
  %v3332 = vadd.f32 %v107, %v3331
  %3333 = vmatmul.bf16.gmra.mxu0 %v3147
  %v3334 = vpop.f32.mrf.mxu0
  %v3335 = vadd.f32 %v107, %v3334
  %v3336 = vpop.f32.mrf.mxu0
  %v3337 = vadd.f32 %v107, %v3336
  %3338 = vmatmul.bf16.gmra.mxu0 %v3150
  %v3339 = vpop.f32.mrf.mxu0
  %v3340 = vadd.f32 %v107, %v3339
  %v3341 = vpop.f32.mrf.mxu0
  %v3342 = vadd.f32 %v107, %v3341
  %3343 = vmatmul.bf16.gmra.mxu0 %v3153
  %v3344 = vpop.f32.mrf.mxu0
  %v3345 = vadd.f32 %v107, %v3344
  %v3346 = vpop.f32.mrf.mxu0
  %v3347 = vadd.f32 %v107, %v3346
  %3348 = vdwg.mxu0
  %3349 = vmatpush.bf16.msra.mxu0 %v3282
  %3350 = vmatpush.bf16.msra.mxu0 %v3281
  %3351 = vmatpush.bf16.msra.mxu0 %v3280
  %3352 = vmatpush.bf16.msra.mxu0 %v3279
  %3353 = vmatpush.bf16.msra.mxu0 %v3278
  %3354 = vmatpush.bf16.msra.mxu0 %v3277
  %3355 = vmatpush.bf16.msra.mxu0 %v3276
  %3356 = vmatpush.bf16.msra.mxu0 %v3275
  %3357 = vmatmul.bf16.gmra.mxu0 %v3142
  %v3358 = vpop.f32.mrf.mxu0
  %v3359 = vadd.f32 %v3325, %v3358
  %v3360 = vpop.f32.mrf.mxu0
  %v3361 = vadd.f32 %v3327, %v3360
  %3362 = vmatmul.bf16.gmra.mxu0 %v3145
  %v3363 = vpop.f32.mrf.mxu0
  %v3364 = vadd.f32 %v3330, %v3363
  %v3365 = vpop.f32.mrf.mxu0
  %v3366 = vadd.f32 %v3332, %v3365
  %3367 = vmatmul.bf16.gmra.mxu0 %v3148
  %v3368 = vpop.f32.mrf.mxu0
  %v3369 = vadd.f32 %v3335, %v3368
  %v3370 = vpop.f32.mrf.mxu0
  %v3371 = vadd.f32 %v3337, %v3370
  %3372 = vmatmul.bf16.gmra.mxu0 %v3151
  %v3373 = vpop.f32.mrf.mxu0
  %v3374 = vadd.f32 %v3340, %v3373
  %v3375 = vpop.f32.mrf.mxu0
  %v3376 = vadd.f32 %v3342, %v3375
  %3377 = vmatmul.bf16.gmra.mxu0 %v3154
  %v3378 = vpop.f32.mrf.mxu0
  %v3379 = vadd.f32 %v3345, %v3378
  %v3380 = vpop.f32.mrf.mxu0
  %v3381 = vadd.f32 %v3347, %v3380
  %3382 = vdwg.mxu0
  %3383 = vmatpush.bf16.msra.mxu0 %v3290
  %3384 = vmatpush.bf16.msra.mxu0 %v3289
  %3385 = vmatpush.bf16.msra.mxu0 %v3288
  %3386 = vmatpush.bf16.msra.mxu0 %v3287
  %3387 = vmatpush.bf16.msra.mxu0 %v3286
  %3388 = vmatpush.bf16.msra.mxu0 %v3285
  %3389 = vmatpush.bf16.msra.mxu0 %v3284
  %3390 = vmatpush.bf16.msra.mxu0 %v3283
  %3391 = vmatmul.bf16.gmra.mxu0 %v3143
  %v3392 = vpop.f32.mrf.mxu0
  %v3393 = vadd.f32 %v3359, %v3392
  %v3394 = vpop.f32.mrf.mxu0
  %v3395 = vadd.f32 %v3361, %v3394
  %3396 = vmatmul.bf16.gmra.mxu0 %v3146
  %v3397 = vpop.f32.mrf.mxu0
  %v3398 = vadd.f32 %v3364, %v3397
  %v3399 = vpop.f32.mrf.mxu0
  %v3400 = vadd.f32 %v3366, %v3399
  %3401 = vmatmul.bf16.gmra.mxu0 %v3149
  %v3402 = vpop.f32.mrf.mxu0
  %v3403 = vadd.f32 %v3369, %v3402
  %v3404 = vpop.f32.mrf.mxu0
  %v3405 = vadd.f32 %v3371, %v3404
  %3406 = vmatmul.bf16.gmra.mxu0 %v3152
  %v3407 = vpop.f32.mrf.mxu0
  %v3408 = vadd.f32 %v3374, %v3407
  %v3409 = vpop.f32.mrf.mxu0
  %v3410 = vadd.f32 %v3376, %v3409
  %3411 = vmatmul.bf16.gmra.mxu0 %v3155
  %v3412 = vpop.f32.mrf.mxu0
  %v3413 = vadd.f32 %v3379, %v3412
  %v3414 = vpop.f32.mrf.mxu0
  %v3415 = vadd.f32 %v3381, %v3414
  %3416 = vdwg.mxu0
  %v3417 = vmax.f32 %v3393, 0.0
  %v3418 = vmax.f32 %v3395, 0.0
  %v3419 = vmax.f32 %v3398, 0.0
  %v3420 = vmax.f32 %v3400, 0.0
  %v3421 = vmax.f32 %v3403, 0.0
  %v3422 = vmax.f32 %v3405, 0.0
  %v3423 = vmax.f32 %v3408, 0.0
  %v3424 = vmax.f32 %v3410, 0.0
  %v3425 = vmax.f32 %v3413, 0.0
  %v3426 = vmax.f32 %v3415, 0.0
  %v3427 = vpack.c.bf16 %v3417, %v3417
  %v3428 = vpack.c.bf16 %v3418, %v3418
  %v3429 = vpack.c.bf16 %v3419, %v3419
  %v3430 = vpack.c.bf16 %v3420, %v3420
  %v3431 = vpack.c.bf16 %v3421, %v3421
  %v3432 = vpack.c.bf16 %v3422, %v3422
  %v3433 = vpack.c.bf16 %v3423, %v3423
  %v3434 = vpack.c.bf16 %v3424, %v3424
  %v3435 = vpack.c.bf16 %v3425, %v3425
  %v3436 = vpack.c.bf16 %v3426, %v3426
  %s3437 = scalar_lea.vmem [#allocation2], 280
  %3438 = vst.msk [vmem:[%s3437] sm:$0xf] %vm455, %v3427
  %3439 = vst.msk [vmem:[%s3437 + $0x4] sm:$0xf] %vm455, %v3428
  %3440 = vst.msk [vmem:[%s3437 + $0x8] sm:$0xf] %vm455, %v3429
  %3441 = vst.msk [vmem:[%s3437 + $0xc] sm:$0xf] %vm455, %v3430
  %3442 = vst.msk [vmem:[%s3437 + $0x10] sm:$0xf] %vm455, %v3431
  %3443 = vst.msk [vmem:[%s3437 + $0x14] sm:$0xf] %vm455, %v3432
  %3444 = vst.msk [vmem:[%s3437 + $0x18] sm:$0xf] %vm455, %v3433
  %3445 = vst.msk [vmem:[%s3437 + $0x1c] sm:$0xf] %vm455, %v3434
  %3446 = vst.msk [vmem:[%s3437 + $0x20] sm:$0xf] %vm455, %v3435
  %3447 = vst.msk [vmem:[%s3437 + $0x24] sm:$0xf] %vm455, %v3436
  %s3448 = scalar_lea.vmem %s0, 960
  %v3449 = vld [vmem:[%s3448] sm:$0xff]
  %v3450 = vld [vmem:[%s3448 + $0x8] sm:$0xf]
  %v3451 = vld [vmem:[%s3448 + $0xc] sm:$0xff]
  %v3452 = vld [vmem:[%s3448 + $0x14] sm:$0xf]
  %v3453 = vld [vmem:[%s3448 + $0x18] sm:$0xff]
  %v3454 = vld [vmem:[%s3448 + $0x20] sm:$0xf]
  %v3455 = vld [vmem:[%s3448 + $0x24] sm:$0xff]
  %v3456 = vld [vmem:[%s3448 + $0x2c] sm:$0xf]
  %v3457 = vld [vmem:[%s3448 + $0x30] sm:$0xff]
  %v3458 = vld [vmem:[%s3448 + $0x38] sm:$0xf]
  %v3459 = vld [vmem:[%s3448 + $0x3c] sm:$0xff]
  %v3460 = vld [vmem:[%s3448 + $0x44] sm:$0xf]
  %v3461 = vld [vmem:[%s3448 + $0x48] sm:$0xff]
  %v3462 = vld [vmem:[%s3448 + $0x50] sm:$0xf]
  %v3463 = vld [vmem:[%s3448 + $0x54] sm:$0xff]
  %v3464 = vld [vmem:[%s3448 + $0x5c] sm:$0xf]
  %v3465 = vld [vmem:[%s3448 + $0x60] sm:$0xff]
  %v3466 = vld [vmem:[%s3448 + $0x68] sm:$0xf]
  %v3467 = vld [vmem:[%s3448 + $0x6c] sm:$0xff]
  %v3468 = vld [vmem:[%s3448 + $0x74] sm:$0xf]
  %v3469 = vld [vmem:[%s1] sm:$0xf]
  %v3470 = vld [vmem:[%s1 + $0x4] sm:$0xf]
  %v3471 = vld [vmem:[%s1 + $0x8] sm:$0xf]
  %v3472 = vld [vmem:[%s1 + $0xc] sm:$0xf]
  %v3473 = vld [vmem:[%s1 + $0x10] sm:$0xf]
  %v3474 = vld [vmem:[%s1 + $0x14] sm:$0xf]
  %v3475 = vld [vmem:[%s1 + $0x18] sm:$0xf]
  %v3476 = vld [vmem:[%s1 + $0x1c] sm:$0xf]
  %v3477 = vld [vmem:[%s1 + $0x20] sm:$0xf]
  %v3478 = vld [vmem:[%s1 + $0x24] sm:$0xf]
  %v3479 = vld [vmem:[%s1 + $0x28] sm:$0xf]
  %v3480 = vld [vmem:[%s1 + $0x2c] sm:$0xf]
  %v3481 = vld [vmem:[%s1 + $0x30] sm:$0xf]
  %v3482 = vld [vmem:[%s1 + $0x34] sm:$0xf]
  %v3483 = vld [vmem:[%s1 + $0x38] sm:$0xf]
  %v3484 = vld [vmem:[%s1 + $0x3c] sm:$0xf]
  %v3485 = vld [vmem:[%s1 + $0x40] sm:$0xf]
  %v3486 = vld [vmem:[%s1 + $0x44] sm:$0xf]
  %v3487 = vld [vmem:[%s1 + $0x48] sm:$0xf]
  %v3488 = vld [vmem:[%s1 + $0x4c] sm:$0xf]
  %v3489 = vld [vmem:[%s1 + $0x50] sm:$0xf]
  %v3490 = vld [vmem:[%s1 + $0x54] sm:$0xf]
  %v3491 = vld [vmem:[%s1 + $0x58] sm:$0xf]
  %v3492 = vld [vmem:[%s1 + $0x5c] sm:$0xf]
  %v3493 = vld [vmem:[%s1 + $0x60] sm:$0xf]
  %v3494 = vld [vmem:[%s1 + $0x64] sm:$0xf]
  %v3495 = vld [vmem:[%s1 + $0x68] sm:$0xf]
  %v3496 = vld [vmem:[%s1 + $0x6c] sm:$0xf]
  %v3497 = vld [vmem:[%s1 + $0x70] sm:$0xf]
  %v3498 = vld [vmem:[%s1 + $0x74] sm:$0xf]
  %v3499 = vld [vmem:[%s1 + $0x78] sm:$0xf]
  %v3500 = vld [vmem:[%s1 + $0x7c] sm:$0xf]
  %v3501 = vld [vmem:[%s1 + $0x80] sm:$0xf]
  %v3502 = vld [vmem:[%s1 + $0x84] sm:$0xf]
  %v3503 = vld [vmem:[%s1 + $0x88] sm:$0xf]
  %v3504 = vld [vmem:[%s1 + $0x8c] sm:$0xf]
  %v3505 = vld [vmem:[%s1 + $0x90] sm:$0xf]
  %v3506 = vld [vmem:[%s1 + $0x94] sm:$0xf]
  %v3507 = vld [vmem:[%s1 + $0x98] sm:$0xf]
  %v3508 = vld [vmem:[%s1 + $0x9c] sm:$0xf]
  %v3509 = vld [vmem:[%s1 + $0xa0] sm:$0xf]
  %v3510 = vld [vmem:[%s1 + $0xa4] sm:$0xf]
  %v3511 = vld [vmem:[%s1 + $0xa8] sm:$0xf]
  %v3512 = vld [vmem:[%s1 + $0xac] sm:$0xf]
  %v3513 = vld [vmem:[%s1 + $0xb0] sm:$0xf]
  %v3514 = vld [vmem:[%s1 + $0xb4] sm:$0xf]
  %v3515 = vld [vmem:[%s1 + $0xb8] sm:$0xf]
  %v3516 = vld [vmem:[%s1 + $0xbc] sm:$0xf]
  %v3537 = vunpack.c.l.b16 %v3449
  %v3538 = vunpack.c.h.b16 %v3449
  %v3539 = vunpack.c.l.b16 %v3450
  %v3540 = vunpack.c.l.b16 %v3451
  %v3541 = vunpack.c.h.b16 %v3451
  %v3542 = vunpack.c.l.b16 %v3452
  %v3543 = vunpack.c.l.b16 %v3453
  %v3544 = vunpack.c.h.b16 %v3453
  %v3545 = vunpack.c.l.b16 %v3454
  %v3546 = vunpack.c.l.b16 %v3455
  %v3547 = vunpack.c.h.b16 %v3455
  %v3548 = vunpack.c.l.b16 %v3456
  %v3549 = vunpack.c.l.b16 %v3457
  %v3550 = vunpack.c.h.b16 %v3457
  %v3551 = vunpack.c.l.b16 %v3458
  %v3552 = vunpack.c.l.b16 %v3459
  %v3553 = vunpack.c.h.b16 %v3459
  %v3554 = vunpack.c.l.b16 %v3460
  %v3555 = vunpack.c.l.b16 %v3461
  %v3556 = vunpack.c.h.b16 %v3461
  %v3557 = vunpack.c.l.b16 %v3462
  %v3558 = vunpack.c.l.b16 %v3463
  %v3559 = vunpack.c.h.b16 %v3463
  %v3560 = vunpack.c.l.b16 %v3464
  %v3561 = vunpack.c.l.b16 %v3465
  %v3562 = vunpack.c.h.b16 %v3465
  %v3563 = vunpack.c.l.b16 %v3466
  %v3564 = vunpack.c.l.b16 %v3467
  %v3565 = vunpack.c.h.b16 %v3467
  %v3566 = vunpack.c.l.b16 %v3468
  %v3567 = vpack.c.b16 %v3540, %v3537
  %v3568 = vpack.c.b16 %v3541, %v3538
  %v3569 = vpack.c.b16 %v3542, %v3539
  %v3570 = vpack.c.b16 %v3546, %v3543
  %v3571 = vpack.c.b16 %v3547, %v3544
  %v3572 = vpack.c.b16 %v3548, %v3545
  %v3573 = vpack.c.b16 %v3552, %v3549
  %v3574 = vpack.c.b16 %v3553, %v3550
  %v3575 = vpack.c.b16 %v3554, %v3551
  %v3576 = vpack.c.b16 %v3558, %v3555
  %v3577 = vpack.c.b16 %v3559, %v3556
  %v3578 = vpack.c.b16 %v3560, %v3557
  %v3579 = vpack.c.b16 %v3564, %v3561
  %v3580 = vpack.c.b16 %v3565, %v3562
  %v3581 = vpack.c.b16 %v3566, %v3563
  %v3645 = vunpack.c.l.b16 %v3469
  %v3646 = vunpack.c.l.b16 %v3470
  %v3647 = vunpack.c.l.b16 %v3471
  %v3648 = vunpack.c.l.b16 %v3472
  %v3649 = vunpack.c.l.b16 %v3473
  %v3650 = vunpack.c.l.b16 %v3474
  %v3651 = vunpack.c.l.b16 %v3475
  %v3652 = vunpack.c.l.b16 %v3476
  %v3653 = vunpack.c.l.b16 %v3477
  %v3654 = vunpack.c.l.b16 %v3478
  %v3655 = vunpack.c.l.b16 %v3479
  %v3656 = vunpack.c.l.b16 %v3480
  %v3657 = vunpack.c.l.b16 %v3481
  %v3658 = vunpack.c.l.b16 %v3482
  %v3659 = vunpack.c.l.b16 %v3483
  %v3660 = vunpack.c.l.b16 %v3484
  %v3661 = vunpack.c.l.b16 %v3485
  %v3662 = vunpack.c.l.b16 %v3486
  %v3663 = vunpack.c.l.b16 %v3487
  %v3664 = vunpack.c.l.b16 %v3488
  %v3665 = vunpack.c.l.b16 %v3489
  %v3666 = vunpack.c.l.b16 %v3490
  %v3667 = vunpack.c.l.b16 %v3491
  %v3668 = vunpack.c.l.b16 %v3492
  %v3669 = vunpack.c.l.b16 %v3493
  %v3670 = vunpack.c.l.b16 %v3494
  %v3671 = vunpack.c.l.b16 %v3495
  %v3672 = vunpack.c.l.b16 %v3496
  %v3673 = vunpack.c.l.b16 %v3497
  %v3674 = vunpack.c.l.b16 %v3498
  %v3675 = vunpack.c.l.b16 %v3499
  %v3676 = vunpack.c.l.b16 %v3500
  %v3677 = vunpack.c.l.b16 %v3501
  %v3678 = vunpack.c.l.b16 %v3502
  %v3679 = vunpack.c.l.b16 %v3503
  %v3680 = vunpack.c.l.b16 %v3504
  %v3681 = vunpack.c.l.b16 %v3505
  %v3682 = vunpack.c.l.b16 %v3506
  %v3683 = vunpack.c.l.b16 %v3507
  %v3684 = vunpack.c.l.b16 %v3508
  %v3685 = vunpack.c.l.b16 %v3509
  %v3686 = vunpack.c.l.b16 %v3510
  %v3687 = vunpack.c.l.b16 %v3511
  %v3688 = vunpack.c.l.b16 %v3512
  %v3689 = vunpack.c.l.b16 %v3513
  %v3690 = vunpack.c.l.b16 %v3514
  %v3691 = vunpack.c.l.b16 %v3515
  %v3692 = vunpack.c.l.b16 %v3516
  %v3693 = vpack.c.b16 %v3646, %v3645
  %v3694 = vpack.c.b16 %v3648, %v3647
  %v3695 = vpack.c.b16 %v3650, %v3649
  %v3696 = vpack.c.b16 %v3652, %v3651
  %v3697 = vpack.c.b16 %v3654, %v3653
  %v3698 = vpack.c.b16 %v3656, %v3655
  %v3699 = vpack.c.b16 %v3658, %v3657
  %v3700 = vpack.c.b16 %v3660, %v3659
  %v3701 = vpack.c.b16 %v3662, %v3661
  %v3702 = vpack.c.b16 %v3664, %v3663
  %v3703 = vpack.c.b16 %v3666, %v3665
  %v3704 = vpack.c.b16 %v3668, %v3667
  %v3705 = vpack.c.b16 %v3670, %v3669
  %v3706 = vpack.c.b16 %v3672, %v3671
  %v3707 = vpack.c.b16 %v3674, %v3673
  %v3708 = vpack.c.b16 %v3676, %v3675
  %v3709 = vpack.c.b16 %v3678, %v3677
  %v3710 = vpack.c.b16 %v3680, %v3679
  %v3711 = vpack.c.b16 %v3682, %v3681
  %v3712 = vpack.c.b16 %v3684, %v3683
  %v3713 = vpack.c.b16 %v3686, %v3685
  %v3714 = vpack.c.b16 %v3688, %v3687
  %v3715 = vpack.c.b16 %v3690, %v3689
  %v3716 = vpack.c.b16 %v3692, %v3691
  %3741 = vmatpush.bf16.msra.mxu0 %v3700
  %3742 = vmatpush.bf16.msra.mxu0 %v3699
  %3743 = vmatpush.bf16.msra.mxu0 %v3698
  %3744 = vmatpush.bf16.msra.mxu0 %v3697
  %3745 = vmatpush.bf16.msra.mxu0 %v3696
  %3746 = vmatpush.bf16.msra.mxu0 %v3695
  %3747 = vmatpush.bf16.msra.mxu0 %v3694
  %3748 = vmatpush.bf16.msra.mxu0 %v3693
  %3749 = vmatmul.bf16.gmra.mxu0 %v3567
  %v3750 = vpop.f32.mrf.mxu0
  %v3751 = vadd.f32 %v107, %v3750
  %v3752 = vpop.f32.mrf.mxu0
  %v3753 = vadd.f32 %v107, %v3752
  %3754 = vmatmul.bf16.gmra.mxu0 %v3570
  %v3755 = vpop.f32.mrf.mxu0
  %v3756 = vadd.f32 %v107, %v3755
  %v3757 = vpop.f32.mrf.mxu0
  %v3758 = vadd.f32 %v107, %v3757
  %3759 = vmatmul.bf16.gmra.mxu0 %v3573
  %v3760 = vpop.f32.mrf.mxu0
  %v3761 = vadd.f32 %v107, %v3760
  %v3762 = vpop.f32.mrf.mxu0
  %v3763 = vadd.f32 %v107, %v3762
  %3764 = vmatmul.bf16.gmra.mxu0 %v3576
  %v3765 = vpop.f32.mrf.mxu0
  %v3766 = vadd.f32 %v107, %v3765
  %v3767 = vpop.f32.mrf.mxu0
  %v3768 = vadd.f32 %v107, %v3767
  %3769 = vmatmul.bf16.gmra.mxu0 %v3579
  %v3770 = vpop.f32.mrf.mxu0
  %v3771 = vadd.f32 %v107, %v3770
  %v3772 = vpop.f32.mrf.mxu0
  %v3773 = vadd.f32 %v107, %v3772
  %3774 = vdwg.mxu0
  %3775 = vmatpush.bf16.msra.mxu0 %v3708
  %3776 = vmatpush.bf16.msra.mxu0 %v3707
  %3777 = vmatpush.bf16.msra.mxu0 %v3706
  %3778 = vmatpush.bf16.msra.mxu0 %v3705
  %3779 = vmatpush.bf16.msra.mxu0 %v3704
  %3780 = vmatpush.bf16.msra.mxu0 %v3703
  %3781 = vmatpush.bf16.msra.mxu0 %v3702
  %3782 = vmatpush.bf16.msra.mxu0 %v3701
  %3783 = vmatmul.bf16.gmra.mxu0 %v3568
  %v3784 = vpop.f32.mrf.mxu0
  %v3785 = vadd.f32 %v3751, %v3784
  %v3786 = vpop.f32.mrf.mxu0
  %v3787 = vadd.f32 %v3753, %v3786
  %3788 = vmatmul.bf16.gmra.mxu0 %v3571
  %v3789 = vpop.f32.mrf.mxu0
  %v3790 = vadd.f32 %v3756, %v3789
  %v3791 = vpop.f32.mrf.mxu0
  %v3792 = vadd.f32 %v3758, %v3791
  %3793 = vmatmul.bf16.gmra.mxu0 %v3574
  %v3794 = vpop.f32.mrf.mxu0
  %v3795 = vadd.f32 %v3761, %v3794
  %v3796 = vpop.f32.mrf.mxu0
  %v3797 = vadd.f32 %v3763, %v3796
  %3798 = vmatmul.bf16.gmra.mxu0 %v3577
  %v3799 = vpop.f32.mrf.mxu0
  %v3800 = vadd.f32 %v3766, %v3799
  %v3801 = vpop.f32.mrf.mxu0
  %v3802 = vadd.f32 %v3768, %v3801
  %3803 = vmatmul.bf16.gmra.mxu0 %v3580
  %v3804 = vpop.f32.mrf.mxu0
  %v3805 = vadd.f32 %v3771, %v3804
  %v3806 = vpop.f32.mrf.mxu0
  %v3807 = vadd.f32 %v3773, %v3806
  %3808 = vdwg.mxu0
  %3809 = vmatpush.bf16.msra.mxu0 %v3716
  %3810 = vmatpush.bf16.msra.mxu0 %v3715
  %3811 = vmatpush.bf16.msra.mxu0 %v3714
  %3812 = vmatpush.bf16.msra.mxu0 %v3713
  %3813 = vmatpush.bf16.msra.mxu0 %v3712
  %3814 = vmatpush.bf16.msra.mxu0 %v3711
  %3815 = vmatpush.bf16.msra.mxu0 %v3710
  %3816 = vmatpush.bf16.msra.mxu0 %v3709
  %3817 = vmatmul.bf16.gmra.mxu0 %v3569
  %v3818 = vpop.f32.mrf.mxu0
  %v3819 = vadd.f32 %v3785, %v3818
  %v3820 = vpop.f32.mrf.mxu0
  %v3821 = vadd.f32 %v3787, %v3820
  %3822 = vmatmul.bf16.gmra.mxu0 %v3572
  %v3823 = vpop.f32.mrf.mxu0
  %v3824 = vadd.f32 %v3790, %v3823
  %v3825 = vpop.f32.mrf.mxu0
  %v3826 = vadd.f32 %v3792, %v3825
  %3827 = vmatmul.bf16.gmra.mxu0 %v3575
  %v3828 = vpop.f32.mrf.mxu0
  %v3829 = vadd.f32 %v3795, %v3828
  %v3830 = vpop.f32.mrf.mxu0
  %v3831 = vadd.f32 %v3797, %v3830
  %3832 = vmatmul.bf16.gmra.mxu0 %v3578
  %v3833 = vpop.f32.mrf.mxu0
  %v3834 = vadd.f32 %v3800, %v3833
  %v3835 = vpop.f32.mrf.mxu0
  %v3836 = vadd.f32 %v3802, %v3835
  %3837 = vmatmul.bf16.gmra.mxu0 %v3581
  %v3838 = vpop.f32.mrf.mxu0
  %v3839 = vadd.f32 %v3805, %v3838
  %v3840 = vpop.f32.mrf.mxu0
  %v3841 = vadd.f32 %v3807, %v3840
  %3842 = vdwg.mxu0
  %v3843 = vmax.f32 %v3819, 0.0
  %v3844 = vmax.f32 %v3821, 0.0
  %v3845 = vmax.f32 %v3824, 0.0
  %v3846 = vmax.f32 %v3826, 0.0
  %v3847 = vmax.f32 %v3829, 0.0
  %v3848 = vmax.f32 %v3831, 0.0
  %v3849 = vmax.f32 %v3834, 0.0
  %v3850 = vmax.f32 %v3836, 0.0
  %v3851 = vmax.f32 %v3839, 0.0
  %v3852 = vmax.f32 %v3841, 0.0
  %v3853 = vpack.c.bf16 %v3843, %v3843
  %v3854 = vpack.c.bf16 %v3844, %v3844
  %v3855 = vpack.c.bf16 %v3845, %v3845
  %v3856 = vpack.c.bf16 %v3846, %v3846
  %v3857 = vpack.c.bf16 %v3847, %v3847
  %v3858 = vpack.c.bf16 %v3848, %v3848
  %v3859 = vpack.c.bf16 %v3849, %v3849
  %v3860 = vpack.c.bf16 %v3850, %v3850
  %v3861 = vpack.c.bf16 %v3851, %v3851
  %v3862 = vpack.c.bf16 %v3852, %v3852
  %s3863 = scalar_lea.vmem [#allocation2], 320
  %3864 = vst.msk [vmem:[%s3863] sm:$0xf] %vm455, %v3853
  %3865 = vst.msk [vmem:[%s3863 + $0x4] sm:$0xf] %vm455, %v3854
  %3866 = vst.msk [vmem:[%s3863 + $0x8] sm:$0xf] %vm455, %v3855
  %3867 = vst.msk [vmem:[%s3863 + $0xc] sm:$0xf] %vm455, %v3856
  %3868 = vst.msk [vmem:[%s3863 + $0x10] sm:$0xf] %vm455, %v3857
  %3869 = vst.msk [vmem:[%s3863 + $0x14] sm:$0xf] %vm455, %v3858
  %3870 = vst.msk [vmem:[%s3863 + $0x18] sm:$0xf] %vm455, %v3859
  %3871 = vst.msk [vmem:[%s3863 + $0x1c] sm:$0xf] %vm455, %v3860
  %3872 = vst.msk [vmem:[%s3863 + $0x20] sm:$0xf] %vm455, %v3861
  %3873 = vst.msk [vmem:[%s3863 + $0x24] sm:$0xf] %vm455, %v3862
  %s3874 = scalar_lea.vmem %s0, 1080
  %v3875 = vld [vmem:[%s3874] sm:$0xff]
  %v3876 = vld [vmem:[%s3874 + $0x8] sm:$0xf]
  %v3877 = vld [vmem:[%s3874 + $0xc] sm:$0xff]
  %v3878 = vld [vmem:[%s3874 + $0x14] sm:$0xf]
  %v3879 = vld [vmem:[%s3874 + $0x18] sm:$0xff]
  %v3880 = vld [vmem:[%s3874 + $0x20] sm:$0xf]
  %v3881 = vld [vmem:[%s3874 + $0x24] sm:$0xff]
  %v3882 = vld [vmem:[%s3874 + $0x2c] sm:$0xf]
  %v3883 = vld [vmem:[%s3874 + $0x30] sm:$0xff]
  %v3884 = vld [vmem:[%s3874 + $0x38] sm:$0xf]
  %v3885 = vld [vmem:[%s3874 + $0x3c] sm:$0xff]
  %v3886 = vld [vmem:[%s3874 + $0x44] sm:$0xf]
  %v3887 = vld [vmem:[%s3874 + $0x48] sm:$0xff]
  %v3888 = vld [vmem:[%s3874 + $0x50] sm:$0xf]
  %v3889 = vld [vmem:[%s3874 + $0x54] sm:$0xff]
  %v3890 = vld [vmem:[%s3874 + $0x5c] sm:$0xf]
  %v3891 = vld [vmem:[%s3874 + $0x60] sm:$0xff]
  %v3892 = vld [vmem:[%s3874 + $0x68] sm:$0xf]
  %v3893 = vld [vmem:[%s3874 + $0x6c] sm:$0xff]
  %v3894 = vld [vmem:[%s3874 + $0x74] sm:$0xf]
  %v3895 = vld [vmem:[%s1] sm:$0xf]
  %v3896 = vld [vmem:[%s1 + $0x4] sm:$0xf]
  %v3897 = vld [vmem:[%s1 + $0x8] sm:$0xf]
  %v3898 = vld [vmem:[%s1 + $0xc] sm:$0xf]
  %v3899 = vld [vmem:[%s1 + $0x10] sm:$0xf]
  %v3900 = vld [vmem:[%s1 + $0x14] sm:$0xf]
  %v3901 = vld [vmem:[%s1 + $0x18] sm:$0xf]
  %v3902 = vld [vmem:[%s1 + $0x1c] sm:$0xf]
  %v3903 = vld [vmem:[%s1 + $0x20] sm:$0xf]
  %v3904 = vld [vmem:[%s1 + $0x24] sm:$0xf]
  %v3905 = vld [vmem:[%s1 + $0x28] sm:$0xf]
  %v3906 = vld [vmem:[%s1 + $0x2c] sm:$0xf]
  %v3907 = vld [vmem:[%s1 + $0x30] sm:$0xf]
  %v3908 = vld [vmem:[%s1 + $0x34] sm:$0xf]
  %v3909 = vld [vmem:[%s1 + $0x38] sm:$0xf]
  %v3910 = vld [vmem:[%s1 + $0x3c] sm:$0xf]
  %v3911 = vld [vmem:[%s1 + $0x40] sm:$0xf]
  %v3912 = vld [vmem:[%s1 + $0x44] sm:$0xf]
  %v3913 = vld [vmem:[%s1 + $0x48] sm:$0xf]
  %v3914 = vld [vmem:[%s1 + $0x4c] sm:$0xf]
  %v3915 = vld [vmem:[%s1 + $0x50] sm:$0xf]
  %v3916 = vld [vmem:[%s1 + $0x54] sm:$0xf]
  %v3917 = vld [vmem:[%s1 + $0x58] sm:$0xf]
  %v3918 = vld [vmem:[%s1 + $0x5c] sm:$0xf]
  %v3919 = vld [vmem:[%s1 + $0x60] sm:$0xf]
  %v3920 = vld [vmem:[%s1 + $0x64] sm:$0xf]
  %v3921 = vld [vmem:[%s1 + $0x68] sm:$0xf]
  %v3922 = vld [vmem:[%s1 + $0x6c] sm:$0xf]
  %v3923 = vld [vmem:[%s1 + $0x70] sm:$0xf]
  %v3924 = vld [vmem:[%s1 + $0x74] sm:$0xf]
  %v3925 = vld [vmem:[%s1 + $0x78] sm:$0xf]
  %v3926 = vld [vmem:[%s1 + $0x7c] sm:$0xf]
  %v3927 = vld [vmem:[%s1 + $0x80] sm:$0xf]
  %v3928 = vld [vmem:[%s1 + $0x84] sm:$0xf]
  %v3929 = vld [vmem:[%s1 + $0x88] sm:$0xf]
  %v3930 = vld [vmem:[%s1 + $0x8c] sm:$0xf]
  %v3931 = vld [vmem:[%s1 + $0x90] sm:$0xf]
  %v3932 = vld [vmem:[%s1 + $0x94] sm:$0xf]
  %v3933 = vld [vmem:[%s1 + $0x98] sm:$0xf]
  %v3934 = vld [vmem:[%s1 + $0x9c] sm:$0xf]
  %v3935 = vld [vmem:[%s1 + $0xa0] sm:$0xf]
  %v3936 = vld [vmem:[%s1 + $0xa4] sm:$0xf]
  %v3937 = vld [vmem:[%s1 + $0xa8] sm:$0xf]
  %v3938 = vld [vmem:[%s1 + $0xac] sm:$0xf]
  %v3939 = vld [vmem:[%s1 + $0xb0] sm:$0xf]
  %v3940 = vld [vmem:[%s1 + $0xb4] sm:$0xf]
  %v3941 = vld [vmem:[%s1 + $0xb8] sm:$0xf]
  %v3942 = vld [vmem:[%s1 + $0xbc] sm:$0xf]
  %v3963 = vunpack.c.l.b16 %v3875
  %v3964 = vunpack.c.h.b16 %v3875
  %v3965 = vunpack.c.l.b16 %v3876
  %v3966 = vunpack.c.l.b16 %v3877
  %v3967 = vunpack.c.h.b16 %v3877
  %v3968 = vunpack.c.l.b16 %v3878
  %v3969 = vunpack.c.l.b16 %v3879
  %v3970 = vunpack.c.h.b16 %v3879
  %v3971 = vunpack.c.l.b16 %v3880
  %v3972 = vunpack.c.l.b16 %v3881
  %v3973 = vunpack.c.h.b16 %v3881
  %v3974 = vunpack.c.l.b16 %v3882
  %v3975 = vunpack.c.l.b16 %v3883
  %v3976 = vunpack.c.h.b16 %v3883
  %v3977 = vunpack.c.l.b16 %v3884
  %v3978 = vunpack.c.l.b16 %v3885
  %v3979 = vunpack.c.h.b16 %v3885
  %v3980 = vunpack.c.l.b16 %v3886
  %v3981 = vunpack.c.l.b16 %v3887
  %v3982 = vunpack.c.h.b16 %v3887
  %v3983 = vunpack.c.l.b16 %v3888
  %v3984 = vunpack.c.l.b16 %v3889
  %v3985 = vunpack.c.h.b16 %v3889
  %v3986 = vunpack.c.l.b16 %v3890
  %v3987 = vunpack.c.l.b16 %v3891
  %v3988 = vunpack.c.h.b16 %v3891
  %v3989 = vunpack.c.l.b16 %v3892
  %v3990 = vunpack.c.l.b16 %v3893
  %v3991 = vunpack.c.h.b16 %v3893
  %v3992 = vunpack.c.l.b16 %v3894
  %v3993 = vpack.c.b16 %v3966, %v3963
  %v3994 = vpack.c.b16 %v3967, %v3964
  %v3995 = vpack.c.b16 %v3968, %v3965
  %v3996 = vpack.c.b16 %v3972, %v3969
  %v3997 = vpack.c.b16 %v3973, %v3970
  %v3998 = vpack.c.b16 %v3974, %v3971
  %v3999 = vpack.c.b16 %v3978, %v3975
  %v4000 = vpack.c.b16 %v3979, %v3976
  %v4001 = vpack.c.b16 %v3980, %v3977
  %v4002 = vpack.c.b16 %v3984, %v3981
  %v4003 = vpack.c.b16 %v3985, %v3982
  %v4004 = vpack.c.b16 %v3986, %v3983
  %v4005 = vpack.c.b16 %v3990, %v3987
  %v4006 = vpack.c.b16 %v3991, %v3988
  %v4007 = vpack.c.b16 %v3992, %v3989
  %v4071 = vunpack.c.l.b16 %v3895
  %v4072 = vunpack.c.l.b16 %v3896
  %v4073 = vunpack.c.l.b16 %v3897
  %v4074 = vunpack.c.l.b16 %v3898
  %v4075 = vunpack.c.l.b16 %v3899
  %v4076 = vunpack.c.l.b16 %v3900
  %v4077 = vunpack.c.l.b16 %v3901
  %v4078 = vunpack.c.l.b16 %v3902
  %v4079 = vunpack.c.l.b16 %v3903
  %v4080 = vunpack.c.l.b16 %v3904
  %v4081 = vunpack.c.l.b16 %v3905
  %v4082 = vunpack.c.l.b16 %v3906
  %v4083 = vunpack.c.l.b16 %v3907
  %v4084 = vunpack.c.l.b16 %v3908
  %v4085 = vunpack.c.l.b16 %v3909
  %v4086 = vunpack.c.l.b16 %v3910
  %v4087 = vunpack.c.l.b16 %v3911
  %v4088 = vunpack.c.l.b16 %v3912
  %v4089 = vunpack.c.l.b16 %v3913
  %v4090 = vunpack.c.l.b16 %v3914
  %v4091 = vunpack.c.l.b16 %v3915
  %v4092 = vunpack.c.l.b16 %v3916
  %v4093 = vunpack.c.l.b16 %v3917
  %v4094 = vunpack.c.l.b16 %v3918
  %v4095 = vunpack.c.l.b16 %v3919
  %v4096 = vunpack.c.l.b16 %v3920
  %v4097 = vunpack.c.l.b16 %v3921
  %v4098 = vunpack.c.l.b16 %v3922
  %v4099 = vunpack.c.l.b16 %v3923
  %v4100 = vunpack.c.l.b16 %v3924
  %v4101 = vunpack.c.l.b16 %v3925
  %v4102 = vunpack.c.l.b16 %v3926
  %v4103 = vunpack.c.l.b16 %v3927
  %v4104 = vunpack.c.l.b16 %v3928
  %v4105 = vunpack.c.l.b16 %v3929
  %v4106 = vunpack.c.l.b16 %v3930
  %v4107 = vunpack.c.l.b16 %v3931
  %v4108 = vunpack.c.l.b16 %v3932
  %v4109 = vunpack.c.l.b16 %v3933
  %v4110 = vunpack.c.l.b16 %v3934
  %v4111 = vunpack.c.l.b16 %v3935
  %v4112 = vunpack.c.l.b16 %v3936
  %v4113 = vunpack.c.l.b16 %v3937
  %v4114 = vunpack.c.l.b16 %v3938
  %v4115 = vunpack.c.l.b16 %v3939
  %v4116 = vunpack.c.l.b16 %v3940
  %v4117 = vunpack.c.l.b16 %v3941
  %v4118 = vunpack.c.l.b16 %v3942
  %v4119 = vpack.c.b16 %v4072, %v4071
  %v4120 = vpack.c.b16 %v4074, %v4073
  %v4121 = vpack.c.b16 %v4076, %v4075
  %v4122 = vpack.c.b16 %v4078, %v4077
  %v4123 = vpack.c.b16 %v4080, %v4079
  %v4124 = vpack.c.b16 %v4082, %v4081
  %v4125 = vpack.c.b16 %v4084, %v4083
  %v4126 = vpack.c.b16 %v4086, %v4085
  %v4127 = vpack.c.b16 %v4088, %v4087
  %v4128 = vpack.c.b16 %v4090, %v4089
  %v4129 = vpack.c.b16 %v4092, %v4091
  %v4130 = vpack.c.b16 %v4094, %v4093
  %v4131 = vpack.c.b16 %v4096, %v4095
  %v4132 = vpack.c.b16 %v4098, %v4097
  %v4133 = vpack.c.b16 %v4100, %v4099
  %v4134 = vpack.c.b16 %v4102, %v4101
  %v4135 = vpack.c.b16 %v4104, %v4103
  %v4136 = vpack.c.b16 %v4106, %v4105
  %v4137 = vpack.c.b16 %v4108, %v4107
  %v4138 = vpack.c.b16 %v4110, %v4109
  %v4139 = vpack.c.b16 %v4112, %v4111
  %v4140 = vpack.c.b16 %v4114, %v4113
  %v4141 = vpack.c.b16 %v4116, %v4115
  %v4142 = vpack.c.b16 %v4118, %v4117
  %4167 = vmatpush.bf16.msra.mxu0 %v4126
  %4168 = vmatpush.bf16.msra.mxu0 %v4125
  %4169 = vmatpush.bf16.msra.mxu0 %v4124
  %4170 = vmatpush.bf16.msra.mxu0 %v4123
  %4171 = vmatpush.bf16.msra.mxu0 %v4122
  %4172 = vmatpush.bf16.msra.mxu0 %v4121
  %4173 = vmatpush.bf16.msra.mxu0 %v4120
  %4174 = vmatpush.bf16.msra.mxu0 %v4119
  %4175 = vmatmul.bf16.gmra.mxu0 %v3993
  %v4176 = vpop.f32.mrf.mxu0
  %v4177 = vadd.f32 %v107, %v4176
  %v4178 = vpop.f32.mrf.mxu0
  %v4179 = vadd.f32 %v107, %v4178
  %4180 = vmatmul.bf16.gmra.mxu0 %v3996
  %v4181 = vpop.f32.mrf.mxu0
  %v4182 = vadd.f32 %v107, %v4181
  %v4183 = vpop.f32.mrf.mxu0
  %v4184 = vadd.f32 %v107, %v4183
  %4185 = vmatmul.bf16.gmra.mxu0 %v3999
  %v4186 = vpop.f32.mrf.mxu0
  %v4187 = vadd.f32 %v107, %v4186
  %v4188 = vpop.f32.mrf.mxu0
  %v4189 = vadd.f32 %v107, %v4188
  %4190 = vmatmul.bf16.gmra.mxu0 %v4002
  %v4191 = vpop.f32.mrf.mxu0
  %v4192 = vadd.f32 %v107, %v4191
  %v4193 = vpop.f32.mrf.mxu0
  %v4194 = vadd.f32 %v107, %v4193
  %4195 = vmatmul.bf16.gmra.mxu0 %v4005
  %v4196 = vpop.f32.mrf.mxu0
  %v4197 = vadd.f32 %v107, %v4196
  %v4198 = vpop.f32.mrf.mxu0
  %v4199 = vadd.f32 %v107, %v4198
  %4200 = vdwg.mxu0
  %4201 = vmatpush.bf16.msra.mxu0 %v4134
  %4202 = vmatpush.bf16.msra.mxu0 %v4133
  %4203 = vmatpush.bf16.msra.mxu0 %v4132
  %4204 = vmatpush.bf16.msra.mxu0 %v4131
  %4205 = vmatpush.bf16.msra.mxu0 %v4130
  %4206 = vmatpush.bf16.msra.mxu0 %v4129
  %4207 = vmatpush.bf16.msra.mxu0 %v4128
  %4208 = vmatpush.bf16.msra.mxu0 %v4127
  %4209 = vmatmul.bf16.gmra.mxu0 %v3994
  %v4210 = vpop.f32.mrf.mxu0
  %v4211 = vadd.f32 %v4177, %v4210
  %v4212 = vpop.f32.mrf.mxu0
  %v4213 = vadd.f32 %v4179, %v4212
  %4214 = vmatmul.bf16.gmra.mxu0 %v3997
  %v4215 = vpop.f32.mrf.mxu0
  %v4216 = vadd.f32 %v4182, %v4215
  %v4217 = vpop.f32.mrf.mxu0
  %v4218 = vadd.f32 %v4184, %v4217
  %4219 = vmatmul.bf16.gmra.mxu0 %v4000
  %v4220 = vpop.f32.mrf.mxu0
  %v4221 = vadd.f32 %v4187, %v4220
  %v4222 = vpop.f32.mrf.mxu0
  %v4223 = vadd.f32 %v4189, %v4222
  %4224 = vmatmul.bf16.gmra.mxu0 %v4003
  %v4225 = vpop.f32.mrf.mxu0
  %v4226 = vadd.f32 %v4192, %v4225
  %v4227 = vpop.f32.mrf.mxu0
  %v4228 = vadd.f32 %v4194, %v4227
  %4229 = vmatmul.bf16.gmra.mxu0 %v4006
  %v4230 = vpop.f32.mrf.mxu0
  %v4231 = vadd.f32 %v4197, %v4230
  %v4232 = vpop.f32.mrf.mxu0
  %v4233 = vadd.f32 %v4199, %v4232
  %4234 = vdwg.mxu0
  %4235 = vmatpush.bf16.msra.mxu0 %v4142
  %4236 = vmatpush.bf16.msra.mxu0 %v4141
  %4237 = vmatpush.bf16.msra.mxu0 %v4140
  %4238 = vmatpush.bf16.msra.mxu0 %v4139
  %4239 = vmatpush.bf16.msra.mxu0 %v4138
  %4240 = vmatpush.bf16.msra.mxu0 %v4137
  %4241 = vmatpush.bf16.msra.mxu0 %v4136
  %4242 = vmatpush.bf16.msra.mxu0 %v4135
  %4243 = vmatmul.bf16.gmra.mxu0 %v3995
  %v4244 = vpop.f32.mrf.mxu0
  %v4245 = vadd.f32 %v4211, %v4244
  %v4246 = vpop.f32.mrf.mxu0
  %v4247 = vadd.f32 %v4213, %v4246
  %4248 = vmatmul.bf16.gmra.mxu0 %v3998
  %v4249 = vpop.f32.mrf.mxu0
  %v4250 = vadd.f32 %v4216, %v4249
  %v4251 = vpop.f32.mrf.mxu0
  %v4252 = vadd.f32 %v4218, %v4251
  %4253 = vmatmul.bf16.gmra.mxu0 %v4001
  %v4254 = vpop.f32.mrf.mxu0
  %v4255 = vadd.f32 %v4221, %v4254
  %v4256 = vpop.f32.mrf.mxu0
  %v4257 = vadd.f32 %v4223, %v4256
  %4258 = vmatmul.bf16.gmra.mxu0 %v4004
  %v4259 = vpop.f32.mrf.mxu0
  %v4260 = vadd.f32 %v4226, %v4259
  %v4261 = vpop.f32.mrf.mxu0
  %v4262 = vadd.f32 %v4228, %v4261
  %4263 = vmatmul.bf16.gmra.mxu0 %v4007
  %v4264 = vpop.f32.mrf.mxu0
  %v4265 = vadd.f32 %v4231, %v4264
  %v4266 = vpop.f32.mrf.mxu0
  %v4267 = vadd.f32 %v4233, %v4266
  %4268 = vdwg.mxu0
  %v4269 = vmax.f32 %v4245, 0.0
  %v4270 = vmax.f32 %v4247, 0.0
  %v4271 = vmax.f32 %v4250, 0.0
  %v4272 = vmax.f32 %v4252, 0.0
  %v4273 = vmax.f32 %v4255, 0.0
  %v4274 = vmax.f32 %v4257, 0.0
  %v4275 = vmax.f32 %v4260, 0.0
  %v4276 = vmax.f32 %v4262, 0.0
  %v4277 = vmax.f32 %v4265, 0.0
  %v4278 = vmax.f32 %v4267, 0.0
  %v4279 = vpack.c.bf16 %v4269, %v4269
  %v4280 = vpack.c.bf16 %v4270, %v4270
  %v4281 = vpack.c.bf16 %v4271, %v4271
  %v4282 = vpack.c.bf16 %v4272, %v4272
  %v4283 = vpack.c.bf16 %v4273, %v4273
  %v4284 = vpack.c.bf16 %v4274, %v4274
  %v4285 = vpack.c.bf16 %v4275, %v4275
  %v4286 = vpack.c.bf16 %v4276, %v4276
  %v4287 = vpack.c.bf16 %v4277, %v4277
  %v4288 = vpack.c.bf16 %v4278, %v4278
  %s4289 = scalar_lea.vmem [#allocation2], 360
  %4290 = vst.msk [vmem:[%s4289] sm:$0xf] %vm455, %v4279
  %4291 = vst.msk [vmem:[%s4289 + $0x4] sm:$0xf] %vm455, %v4280
  %4292 = vst.msk [vmem:[%s4289 + $0x8] sm:$0xf] %vm455, %v4281
  %4293 = vst.msk [vmem:[%s4289 + $0xc] sm:$0xf] %vm455, %v4282
  %4294 = vst.msk [vmem:[%s4289 + $0x10] sm:$0xf] %vm455, %v4283
  %4295 = vst.msk [vmem:[%s4289 + $0x14] sm:$0xf] %vm455, %v4284
  %4296 = vst.msk [vmem:[%s4289 + $0x18] sm:$0xf] %vm455, %v4285
  %4297 = vst.msk [vmem:[%s4289 + $0x1c] sm:$0xf] %vm455, %v4286
  %4298 = vst.msk [vmem:[%s4289 + $0x20] sm:$0xf] %vm455, %v4287
  %4299 = vst.msk [vmem:[%s4289 + $0x24] sm:$0xf] %vm455, %v4288
  %v4300 = vld [vmem:[#allocation2] sm:$0xf]
  %v4301 = vld [vmem:[#allocation2 + $0x4] sm:$0xf]
  %v4302 = vld [vmem:[#allocation2 + $0x8] sm:$0xf]
  %v4303 = vld [vmem:[#allocation2 + $0xc] sm:$0xf]
  %v4304 = vld [vmem:[#allocation2 + $0x10] sm:$0xf]
  %v4305 = vld [vmem:[#allocation2 + $0x14] sm:$0xf]
  %v4306 = vld [vmem:[#allocation2 + $0x18] sm:$0xf]
  %v4307 = vld [vmem:[#allocation2 + $0x1c] sm:$0xf]
  %v4308 = vld [vmem:[%s3] sm:$0xf]
  %v4309 = vld [vmem:[%s3 + $0x4] sm:$0xf]
  %v4310 = vld [vmem:[%s3 + $0x8] sm:$0xf]
  %v4311 = vld [vmem:[%s3 + $0xc] sm:$0xf]
  %v4312 = vld [vmem:[%s3 + $0x10] sm:$0xf]
  %v4313 = vld [vmem:[%s3 + $0x14] sm:$0xf]
  %v4314 = vld [vmem:[%s3 + $0x18] sm:$0xf]
  %v4315 = vld [vmem:[%s3 + $0x1c] sm:$0xf]
  %v4324 = vunpack.c.l.b16 %v4300
  %v4325 = vunpack.c.l.b16 %v4301
  %v4326 = vunpack.c.l.b16 %v4302
  %v4327 = vunpack.c.l.b16 %v4303
  %v4328 = vunpack.c.l.b16 %v4304
  %v4329 = vunpack.c.l.b16 %v4305
  %v4330 = vunpack.c.l.b16 %v4306
  %v4331 = vunpack.c.l.b16 %v4307
  %v4332 = vpack.c.b16 %v4325, %v4324
  %v4333 = vpack.c.b16 %v4327, %v4326
  %v4334 = vpack.c.b16 %v4329, %v4328
  %v4335 = vpack.c.b16 %v4331, %v4330
  %v4344 = vunpack.c.l.b16 %v4308
  %v4345 = vunpack.c.l.b16 %v4309
  %v4346 = vunpack.c.l.b16 %v4310
  %v4347 = vunpack.c.l.b16 %v4311
  %v4348 = vunpack.c.l.b16 %v4312
  %v4349 = vunpack.c.l.b16 %v4313
  %v4350 = vunpack.c.l.b16 %v4314
  %v4351 = vunpack.c.l.b16 %v4315
  %v4352 = vpack.c.b16 %v4345, %v4344
  %v4353 = vpack.c.b16 %v4347, %v4346
  %v4354 = vpack.c.b16 %v4349, %v4348
  %v4355 = vpack.c.b16 %v4351, %v4350
  %vm4360 = vcmask 523264
  %v4362 = vsel %vm4360, %v4332, 0
  %v4365 = vsel %vm4360, %v4333, 0
  %v4368 = vsel %vm4360, %v4334, 0
  %v4371 = vsel %vm4360, %v4335, 0
  %4373 = vmatpush.bf16.msra.mxu0 0
  %4374 = vmatpush.bf16.msra.mxu0 0
  %4375 = vmatpush.bf16.msra.mxu0 0
  %4376 = vmatpush.bf16.msra.mxu0 0
  %4377 = vmatpush.bf16.msra.mxu0 %v4355
  %4378 = vmatpush.bf16.msra.mxu0 %v4354
  %4379 = vmatpush.bf16.msra.mxu0 %v4353
  %4380 = vmatpush.bf16.msra.mxu0 %v4352
  %4381 = vmatmul.bf16.gmra.mxu0 %v4362
  %v4382 = vpop.f32.mrf.mxu0
  %v4383 = vadd.f32 0.0, %v4382
  %v4384 = vpop.f32.mrf.mxu0
  %v4385 = vadd.f32 0.0, %v4384
  %4386 = vmatmul.bf16.gmra.mxu0 %v4365
  %v4387 = vpop.f32.mrf.mxu0
  %v4388 = vadd.f32 0.0, %v4387
  %v4389 = vpop.f32.mrf.mxu0
  %v4390 = vadd.f32 0.0, %v4389
  %4391 = vmatmul.bf16.gmra.mxu0 %v4368
  %v4392 = vpop.f32.mrf.mxu0
  %v4393 = vadd.f32 0.0, %v4392
  %v4394 = vpop.f32.mrf.mxu0
  %v4395 = vadd.f32 0.0, %v4394
  %4396 = vmatmul.bf16.gmra.mxu0 %v4371
  %v4397 = vpop.f32.mrf.mxu0
  %v4398 = vadd.f32 0.0, %v4397
  %v4399 = vpop.f32.mrf.mxu0
  %v4400 = vadd.f32 0.0, %v4399
  %4401 = vdwg.mxu0
  %4402 = vst.msk [vmem:[#allocation3] sm:$0xff] %vm4360, %v4383
  %4403 = vst.msk [vmem:[#allocation3 + $0x8] sm:$0xff] %vm4360, %v4385
  %4404 = vst.msk [vmem:[#allocation3 + $0x10] sm:$0xff] %vm4360, %v4388
  %4405 = vst.msk [vmem:[#allocation3 + $0x18] sm:$0xff] %vm4360, %v4390
  %4406 = vst.msk [vmem:[#allocation3 + $0x20] sm:$0xff] %vm4360, %v4393
  %4407 = vst.msk [vmem:[#allocation3 + $0x28] sm:$0xff] %vm4360, %v4395
  %4408 = vst.msk [vmem:[#allocation3 + $0x30] sm:$0xff] %vm4360, %v4398
  %4409 = vst.msk [vmem:[#allocation3 + $0x38] sm:$0xff] %vm4360, %v4400
  %v4410 = vld [vmem:[#allocation2 + $0x8] sm:$0xf]
  %v4411 = vld [vmem:[#allocation2 + $0xc] sm:$0xf]
  %v4412 = vld [vmem:[#allocation2 + $0x10] sm:$0xf]
  %v4413 = vld [vmem:[#allocation2 + $0x14] sm:$0xf]
  %v4414 = vld [vmem:[#allocation2 + $0x18] sm:$0xf]
  %v4415 = vld [vmem:[#allocation2 + $0x1c] sm:$0xf]
  %v4416 = vld [vmem:[#allocation2 + $0x20] sm:$0xf]
  %v4417 = vld [vmem:[#allocation2 + $0x24] sm:$0xf]
  %s4418 = scalar_lea.vmem %s3, 32
  %v4419 = vld [vmem:[%s4418] sm:$0xf]
  %v4420 = vld [vmem:[%s4418 + $0x4] sm:$0xf]
  %v4421 = vld [vmem:[%s4418 + $0x8] sm:$0xf]
  %v4422 = vld [vmem:[%s4418 + $0xc] sm:$0xf]
  %v4423 = vld [vmem:[%s4418 + $0x10] sm:$0xf]
  %v4424 = vld [vmem:[%s4418 + $0x14] sm:$0xf]
  %v4425 = vld [vmem:[%s4418 + $0x18] sm:$0xf]
  %v4426 = vld [vmem:[%s4418 + $0x1c] sm:$0xf]
  %v4435 = vunpack.c.l.b16 %v4410
  %v4436 = vunpack.c.l.b16 %v4411
  %v4437 = vunpack.c.l.b16 %v4412
  %v4438 = vunpack.c.l.b16 %v4413
  %v4439 = vunpack.c.l.b16 %v4414
  %v4440 = vunpack.c.l.b16 %v4415
  %v4441 = vunpack.c.l.b16 %v4416
  %v4442 = vunpack.c.l.b16 %v4417
  %v4443 = vpack.c.b16 %v4436, %v4435
  %v4444 = vpack.c.b16 %v4438, %v4437
  %v4445 = vpack.c.b16 %v4440, %v4439
  %v4446 = vpack.c.b16 %v4442, %v4441
  %v4455 = vunpack.c.l.b16 %v4419
  %v4456 = vunpack.c.l.b16 %v4420
  %v4457 = vunpack.c.l.b16 %v4421
  %v4458 = vunpack.c.l.b16 %v4422
  %v4459 = vunpack.c.l.b16 %v4423
  %v4460 = vunpack.c.l.b16 %v4424
  %v4461 = vunpack.c.l.b16 %v4425
  %v4462 = vunpack.c.l.b16 %v4426
  %v4463 = vpack.c.b16 %v4456, %v4455
  %v4464 = vpack.c.b16 %v4458, %v4457
  %v4465 = vpack.c.b16 %v4460, %v4459
  %v4466 = vpack.c.b16 %v4462, %v4461
  %v4472 = vsel %vm4360, %v4443, 0
  %v4475 = vsel %vm4360, %v4444, 0
  %v4478 = vsel %vm4360, %v4445, 0
  %v4481 = vsel %vm4360, %v4446, 0
  %4483 = vmatpush.bf16.msra.mxu0 0
  %4484 = vmatpush.bf16.msra.mxu0 0
  %4485 = vmatpush.bf16.msra.mxu0 0
  %4486 = vmatpush.bf16.msra.mxu0 0
  %4487 = vmatpush.bf16.msra.mxu0 %v4466
  %4488 = vmatpush.bf16.msra.mxu0 %v4465
  %4489 = vmatpush.bf16.msra.mxu0 %v4464
  %4490 = vmatpush.bf16.msra.mxu0 %v4463
  %4491 = vmatmul.bf16.gmra.mxu0 %v4472
  %v4492 = vpop.f32.mrf.mxu0
  %v4493 = vadd.f32 0.0, %v4492
  %v4494 = vpop.f32.mrf.mxu0
  %v4495 = vadd.f32 0.0, %v4494
  %4496 = vmatmul.bf16.gmra.mxu0 %v4475
  %v4497 = vpop.f32.mrf.mxu0
  %v4498 = vadd.f32 0.0, %v4497
  %v4499 = vpop.f32.mrf.mxu0
  %v4500 = vadd.f32 0.0, %v4499
  %4501 = vmatmul.bf16.gmra.mxu0 %v4478
  %v4502 = vpop.f32.mrf.mxu0
  %v4503 = vadd.f32 0.0, %v4502
  %v4504 = vpop.f32.mrf.mxu0
  %v4505 = vadd.f32 0.0, %v4504
  %4506 = vmatmul.bf16.gmra.mxu0 %v4481
  %v4507 = vpop.f32.mrf.mxu0
  %v4508 = vadd.f32 0.0, %v4507
  %v4509 = vpop.f32.mrf.mxu0
  %v4510 = vadd.f32 0.0, %v4509
  %4511 = vdwg.mxu0
  %v4512 = vld [vmem:[#allocation3] sm:$0xff]
  %v4513 = vld [vmem:[#allocation3 + $0x8] sm:$0xff]
  %v4514 = vld [vmem:[#allocation3 + $0x10] sm:$0xff]
  %v4515 = vld [vmem:[#allocation3 + $0x18] sm:$0xff]
  %v4516 = vld [vmem:[#allocation3 + $0x20] sm:$0xff]
  %v4517 = vld [vmem:[#allocation3 + $0x28] sm:$0xff]
  %v4518 = vld [vmem:[#allocation3 + $0x30] sm:$0xff]
  %v4519 = vld [vmem:[#allocation3 + $0x38] sm:$0xff]
  %v4520 = vadd.f32 %v4512, %v4493
  %v4521 = vadd.f32 %v4513, %v4495
  %v4522 = vadd.f32 %v4514, %v4498
  %v4523 = vadd.f32 %v4515, %v4500
  %v4524 = vadd.f32 %v4516, %v4503
  %v4525 = vadd.f32 %v4517, %v4505
  %v4526 = vadd.f32 %v4518, %v4508
  %v4527 = vadd.f32 %v4519, %v4510
  %4528 = vst.msk [vmem:[#allocation3] sm:$0xff] %vm4360, %v4520
  %4529 = vst.msk [vmem:[#allocation3 + $0x8] sm:$0xff] %vm4360, %v4521
  %4530 = vst.msk [vmem:[#allocation3 + $0x10] sm:$0xff] %vm4360, %v4522
  %4531 = vst.msk [vmem:[#allocation3 + $0x18] sm:$0xff] %vm4360, %v4523
  %4532 = vst.msk [vmem:[#allocation3 + $0x20] sm:$0xff] %vm4360, %v4524
  %4533 = vst.msk [vmem:[#allocation3 + $0x28] sm:$0xff] %vm4360, %v4525
  %4534 = vst.msk [vmem:[#allocation3 + $0x30] sm:$0xff] %vm4360, %v4526
  %4535 = vst.msk [vmem:[#allocation3 + $0x38] sm:$0xff] %vm4360, %v4527
  %v4536 = vld [vmem:[%s881] sm:$0xf]
  %v4537 = vld [vmem:[%s881 + $0x4] sm:$0xf]
  %v4538 = vld [vmem:[%s881 + $0x8] sm:$0xf]
  %v4539 = vld [vmem:[%s881 + $0xc] sm:$0xf]
  %v4540 = vld [vmem:[%s881 + $0x10] sm:$0xf]
  %v4541 = vld [vmem:[%s881 + $0x14] sm:$0xf]
  %v4542 = vld [vmem:[%s881 + $0x18] sm:$0xf]
  %v4543 = vld [vmem:[%s881 + $0x1c] sm:$0xf]
  %s4544 = scalar_lea.vmem %s3, 64
  %v4545 = vld [vmem:[%s4544] sm:$0xf]
  %v4546 = vld [vmem:[%s4544 + $0x4] sm:$0xf]
  %v4547 = vld [vmem:[%s4544 + $0x8] sm:$0xf]
  %v4548 = vld [vmem:[%s4544 + $0xc] sm:$0xf]
  %v4549 = vld [vmem:[%s4544 + $0x10] sm:$0xf]
  %v4550 = vld [vmem:[%s4544 + $0x14] sm:$0xf]
  %v4551 = vld [vmem:[%s4544 + $0x18] sm:$0xf]
  %v4552 = vld [vmem:[%s4544 + $0x1c] sm:$0xf]
  %v4561 = vunpack.c.l.b16 %v4536
  %v4562 = vunpack.c.l.b16 %v4537
  %v4563 = vunpack.c.l.b16 %v4538
  %v4564 = vunpack.c.l.b16 %v4539
  %v4565 = vunpack.c.l.b16 %v4540
  %v4566 = vunpack.c.l.b16 %v4541
  %v4567 = vunpack.c.l.b16 %v4542
  %v4568 = vunpack.c.l.b16 %v4543
  %v4569 = vpack.c.b16 %v4562, %v4561
  %v4570 = vpack.c.b16 %v4564, %v4563
  %v4571 = vpack.c.b16 %v4566, %v4565
  %v4572 = vpack.c.b16 %v4568, %v4567
  %v4581 = vunpack.c.l.b16 %v4545
  %v4582 = vunpack.c.l.b16 %v4546
  %v4583 = vunpack.c.l.b16 %v4547
  %v4584 = vunpack.c.l.b16 %v4548
  %v4585 = vunpack.c.l.b16 %v4549
  %v4586 = vunpack.c.l.b16 %v4550
  %v4587 = vunpack.c.l.b16 %v4551
  %v4588 = vunpack.c.l.b16 %v4552
  %v4589 = vpack.c.b16 %v4582, %v4581
  %v4590 = vpack.c.b16 %v4584, %v4583
  %v4591 = vpack.c.b16 %v4586, %v4585
  %v4592 = vpack.c.b16 %v4588, %v4587
  %v4598 = vsel %vm4360, %v4569, 0
  %v4601 = vsel %vm4360, %v4570, 0
  %v4604 = vsel %vm4360, %v4571, 0
  %v4607 = vsel %vm4360, %v4572, 0
  %4609 = vmatpush.bf16.msra.mxu0 0
  %4610 = vmatpush.bf16.msra.mxu0 0
  %4611 = vmatpush.bf16.msra.mxu0 0
  %4612 = vmatpush.bf16.msra.mxu0 0
  %4613 = vmatpush.bf16.msra.mxu0 %v4592
  %4614 = vmatpush.bf16.msra.mxu0 %v4591
  %4615 = vmatpush.bf16.msra.mxu0 %v4590
  %4616 = vmatpush.bf16.msra.mxu0 %v4589
  %4617 = vmatmul.bf16.gmra.mxu0 %v4598
  %v4618 = vpop.f32.mrf.mxu0
  %v4619 = vadd.f32 0.0, %v4618
  %v4620 = vpop.f32.mrf.mxu0
  %v4621 = vadd.f32 0.0, %v4620
  %4622 = vmatmul.bf16.gmra.mxu0 %v4601
  %v4623 = vpop.f32.mrf.mxu0
  %v4624 = vadd.f32 0.0, %v4623
  %v4625 = vpop.f32.mrf.mxu0
  %v4626 = vadd.f32 0.0, %v4625
  %4627 = vmatmul.bf16.gmra.mxu0 %v4604
  %v4628 = vpop.f32.mrf.mxu0
  %v4629 = vadd.f32 0.0, %v4628
  %v4630 = vpop.f32.mrf.mxu0
  %v4631 = vadd.f32 0.0, %v4630
  %4632 = vmatmul.bf16.gmra.mxu0 %v4607
  %v4633 = vpop.f32.mrf.mxu0
  %v4634 = vadd.f32 0.0, %v4633
  %v4635 = vpop.f32.mrf.mxu0
  %v4636 = vadd.f32 0.0, %v4635
  %4637 = vdwg.mxu0
  %v4638 = vld [vmem:[#allocation3] sm:$0xff]
  %v4639 = vld [vmem:[#allocation3 + $0x8] sm:$0xff]
  %v4640 = vld [vmem:[#allocation3 + $0x10] sm:$0xff]
  %v4641 = vld [vmem:[#allocation3 + $0x18] sm:$0xff]
  %v4642 = vld [vmem:[#allocation3 + $0x20] sm:$0xff]
  %v4643 = vld [vmem:[#allocation3 + $0x28] sm:$0xff]
  %v4644 = vld [vmem:[#allocation3 + $0x30] sm:$0xff]
  %v4645 = vld [vmem:[#allocation3 + $0x38] sm:$0xff]
  %v4646 = vadd.f32 %v4638, %v4619
  %v4647 = vadd.f32 %v4639, %v4621
  %v4648 = vadd.f32 %v4640, %v4624
  %v4649 = vadd.f32 %v4641, %v4626
  %v4650 = vadd.f32 %v4642, %v4629
  %v4651 = vadd.f32 %v4643, %v4631
  %v4652 = vadd.f32 %v4644, %v4634
  %v4653 = vadd.f32 %v4645, %v4636
  %4654 = vst.msk [vmem:[#allocation3] sm:$0xff] %vm4360, %v4646
  %4655 = vst.msk [vmem:[#allocation3 + $0x8] sm:$0xff] %vm4360, %v4647
  %4656 = vst.msk [vmem:[#allocation3 + $0x10] sm:$0xff] %vm4360, %v4648
  %4657 = vst.msk [vmem:[#allocation3 + $0x18] sm:$0xff] %vm4360, %v4649
  %4658 = vst.msk [vmem:[#allocation3 + $0x20] sm:$0xff] %vm4360, %v4650
  %4659 = vst.msk [vmem:[#allocation3 + $0x28] sm:$0xff] %vm4360, %v4651
  %4660 = vst.msk [vmem:[#allocation3 + $0x30] sm:$0xff] %vm4360, %v4652
  %4661 = vst.msk [vmem:[#allocation3 + $0x38] sm:$0xff] %vm4360, %v4653
  %v4662 = vld [vmem:[%s881 + $0x8] sm:$0xf]
  %v4663 = vld [vmem:[%s881 + $0xc] sm:$0xf]
  %v4664 = vld [vmem:[%s881 + $0x10] sm:$0xf]
  %v4665 = vld [vmem:[%s881 + $0x14] sm:$0xf]
  %v4666 = vld [vmem:[%s881 + $0x18] sm:$0xf]
  %v4667 = vld [vmem:[%s881 + $0x1c] sm:$0xf]
  %v4668 = vld [vmem:[%s881 + $0x20] sm:$0xf]
  %v4669 = vld [vmem:[%s881 + $0x24] sm:$0xf]
  %s4670 = scalar_lea.vmem %s3, 96
  %v4671 = vld [vmem:[%s4670] sm:$0xf]
  %v4672 = vld [vmem:[%s4670 + $0x4] sm:$0xf]
  %v4673 = vld [vmem:[%s4670 + $0x8] sm:$0xf]
  %v4674 = vld [vmem:[%s4670 + $0xc] sm:$0xf]
  %v4675 = vld [vmem:[%s4670 + $0x10] sm:$0xf]
  %v4676 = vld [vmem:[%s4670 + $0x14] sm:$0xf]
  %v4677 = vld [vmem:[%s4670 + $0x18] sm:$0xf]
  %v4678 = vld [vmem:[%s4670 + $0x1c] sm:$0xf]
  %v4687 = vunpack.c.l.b16 %v4662
  %v4688 = vunpack.c.l.b16 %v4663
  %v4689 = vunpack.c.l.b16 %v4664
  %v4690 = vunpack.c.l.b16 %v4665
  %v4691 = vunpack.c.l.b16 %v4666
  %v4692 = vunpack.c.l.b16 %v4667
  %v4693 = vunpack.c.l.b16 %v4668
  %v4694 = vunpack.c.l.b16 %v4669
  %v4695 = vpack.c.b16 %v4688, %v4687
  %v4696 = vpack.c.b16 %v4690, %v4689
  %v4697 = vpack.c.b16 %v4692, %v4691
  %v4698 = vpack.c.b16 %v4694, %v4693
  %v4707 = vunpack.c.l.b16 %v4671
  %v4708 = vunpack.c.l.b16 %v4672
  %v4709 = vunpack.c.l.b16 %v4673
  %v4710 = vunpack.c.l.b16 %v4674
  %v4711 = vunpack.c.l.b16 %v4675
  %v4712 = vunpack.c.l.b16 %v4676
  %v4713 = vunpack.c.l.b16 %v4677
  %v4714 = vunpack.c.l.b16 %v4678
  %v4715 = vpack.c.b16 %v4708, %v4707
  %v4716 = vpack.c.b16 %v4710, %v4709
  %v4717 = vpack.c.b16 %v4712, %v4711
  %v4718 = vpack.c.b16 %v4714, %v4713
  %v4724 = vsel %vm4360, %v4695, 0
  %v4727 = vsel %vm4360, %v4696, 0
  %v4730 = vsel %vm4360, %v4697, 0
  %v4733 = vsel %vm4360, %v4698, 0
  %4735 = vmatpush.bf16.msra.mxu0 0
  %4736 = vmatpush.bf16.msra.mxu0 0
  %4737 = vmatpush.bf16.msra.mxu0 0
  %4738 = vmatpush.bf16.msra.mxu0 0
  %4739 = vmatpush.bf16.msra.mxu0 %v4718
  %4740 = vmatpush.bf16.msra.mxu0 %v4717
  %4741 = vmatpush.bf16.msra.mxu0 %v4716
  %4742 = vmatpush.bf16.msra.mxu0 %v4715
  %4743 = vmatmul.bf16.gmra.mxu0 %v4724
  %v4744 = vpop.f32.mrf.mxu0
  %v4745 = vadd.f32 0.0, %v4744
  %v4746 = vpop.f32.mrf.mxu0
  %v4747 = vadd.f32 0.0, %v4746
  %4748 = vmatmul.bf16.gmra.mxu0 %v4727
  %v4749 = vpop.f32.mrf.mxu0
  %v4750 = vadd.f32 0.0, %v4749
  %v4751 = vpop.f32.mrf.mxu0
  %v4752 = vadd.f32 0.0, %v4751
  %4753 = vmatmul.bf16.gmra.mxu0 %v4730
  %v4754 = vpop.f32.mrf.mxu0
  %v4755 = vadd.f32 0.0, %v4754
  %v4756 = vpop.f32.mrf.mxu0
  %v4757 = vadd.f32 0.0, %v4756
  %4758 = vmatmul.bf16.gmra.mxu0 %v4733
  %v4759 = vpop.f32.mrf.mxu0
  %v4760 = vadd.f32 0.0, %v4759
  %v4761 = vpop.f32.mrf.mxu0
  %v4762 = vadd.f32 0.0, %v4761
  %4763 = vdwg.mxu0
  %v4764 = vld [vmem:[#allocation3] sm:$0xff]
  %v4765 = vld [vmem:[#allocation3 + $0x8] sm:$0xff]
  %v4766 = vld [vmem:[#allocation3 + $0x10] sm:$0xff]
  %v4767 = vld [vmem:[#allocation3 + $0x18] sm:$0xff]
  %v4768 = vld [vmem:[#allocation3 + $0x20] sm:$0xff]
  %v4769 = vld [vmem:[#allocation3 + $0x28] sm:$0xff]
  %v4770 = vld [vmem:[#allocation3 + $0x30] sm:$0xff]
  %v4771 = vld [vmem:[#allocation3 + $0x38] sm:$0xff]
  %v4772 = vadd.f32 %v4764, %v4745
  %v4773 = vadd.f32 %v4765, %v4747
  %v4774 = vadd.f32 %v4766, %v4750
  %v4775 = vadd.f32 %v4767, %v4752
  %v4776 = vadd.f32 %v4768, %v4755
  %v4777 = vadd.f32 %v4769, %v4757
  %v4778 = vadd.f32 %v4770, %v4760
  %v4779 = vadd.f32 %v4771, %v4762
  %4780 = vst.msk [vmem:[#allocation3] sm:$0xff] %vm4360, %v4772
  %4781 = vst.msk [vmem:[#allocation3 + $0x8] sm:$0xff] %vm4360, %v4773
  %4782 = vst.msk [vmem:[#allocation3 + $0x10] sm:$0xff] %vm4360, %v4774
  %4783 = vst.msk [vmem:[#allocation3 + $0x18] sm:$0xff] %vm4360, %v4775
  %4784 = vst.msk [vmem:[#allocation3 + $0x20] sm:$0xff] %vm4360, %v4776
  %4785 = vst.msk [vmem:[#allocation3 + $0x28] sm:$0xff] %vm4360, %v4777
  %4786 = vst.msk [vmem:[#allocation3 + $0x30] sm:$0xff] %vm4360, %v4778
  %4787 = vst.msk [vmem:[#allocation3 + $0x38] sm:$0xff] %vm4360, %v4779
  %v4788 = vld [vmem:[%s1307] sm:$0xf]
  %v4789 = vld [vmem:[%s1307 + $0x4] sm:$0xf]
  %v4790 = vld [vmem:[%s1307 + $0x8] sm:$0xf]
  %v4791 = vld [vmem:[%s1307 + $0xc] sm:$0xf]
  %v4792 = vld [vmem:[%s1307 + $0x10] sm:$0xf]
  %v4793 = vld [vmem:[%s1307 + $0x14] sm:$0xf]
  %v4794 = vld [vmem:[%s1307 + $0x18] sm:$0xf]
  %v4795 = vld [vmem:[%s1307 + $0x1c] sm:$0xf]
  %s4796 = scalar_lea.vmem %s3, 128
  %v4797 = vld [vmem:[%s4796] sm:$0xf]
  %v4798 = vld [vmem:[%s4796 + $0x4] sm:$0xf]
  %v4799 = vld [vmem:[%s4796 + $0x8] sm:$0xf]
  %v4800 = vld [vmem:[%s4796 + $0xc] sm:$0xf]
  %v4801 = vld [vmem:[%s4796 + $0x10] sm:$0xf]
  %v4802 = vld [vmem:[%s4796 + $0x14] sm:$0xf]
  %v4803 = vld [vmem:[%s4796 + $0x18] sm:$0xf]
  %v4804 = vld [vmem:[%s4796 + $0x1c] sm:$0xf]
  %v4813 = vunpack.c.l.b16 %v4788
  %v4814 = vunpack.c.l.b16 %v4789
  %v4815 = vunpack.c.l.b16 %v4790
  %v4816 = vunpack.c.l.b16 %v4791
  %v4817 = vunpack.c.l.b16 %v4792
  %v4818 = vunpack.c.l.b16 %v4793
  %v4819 = vunpack.c.l.b16 %v4794
  %v4820 = vunpack.c.l.b16 %v4795
  %v4821 = vpack.c.b16 %v4814, %v4813
  %v4822 = vpack.c.b16 %v4816, %v4815
  %v4823 = vpack.c.b16 %v4818, %v4817
  %v4824 = vpack.c.b16 %v4820, %v4819
  %v4833 = vunpack.c.l.b16 %v4797
  %v4834 = vunpack.c.l.b16 %v4798
  %v4835 = vunpack.c.l.b16 %v4799
  %v4836 = vunpack.c.l.b16 %v4800
  %v4837 = vunpack.c.l.b16 %v4801
  %v4838 = vunpack.c.l.b16 %v4802
  %v4839 = vunpack.c.l.b16 %v4803
  %v4840 = vunpack.c.l.b16 %v4804
  %v4841 = vpack.c.b16 %v4834, %v4833
  %v4842 = vpack.c.b16 %v4836, %v4835
  %v4843 = vpack.c.b16 %v4838, %v4837
  %v4844 = vpack.c.b16 %v4840, %v4839
  %v4850 = vsel %vm4360, %v4821, 0
  %v4853 = vsel %vm4360, %v4822, 0
  %v4856 = vsel %vm4360, %v4823, 0
  %v4859 = vsel %vm4360, %v4824, 0
  %4861 = vmatpush.bf16.msra.mxu0 0
  %4862 = vmatpush.bf16.msra.mxu0 0
  %4863 = vmatpush.bf16.msra.mxu0 0
  %4864 = vmatpush.bf16.msra.mxu0 0
  %4865 = vmatpush.bf16.msra.mxu0 %v4844
  %4866 = vmatpush.bf16.msra.mxu0 %v4843
  %4867 = vmatpush.bf16.msra.mxu0 %v4842
  %4868 = vmatpush.bf16.msra.mxu0 %v4841
  %4869 = vmatmul.bf16.gmra.mxu0 %v4850
  %v4870 = vpop.f32.mrf.mxu0
  %v4871 = vadd.f32 0.0, %v4870
  %v4872 = vpop.f32.mrf.mxu0
  %v4873 = vadd.f32 0.0, %v4872
  %4874 = vmatmul.bf16.gmra.mxu0 %v4853
  %v4875 = vpop.f32.mrf.mxu0
  %v4876 = vadd.f32 0.0, %v4875
  %v4877 = vpop.f32.mrf.mxu0
  %v4878 = vadd.f32 0.0, %v4877
  %4879 = vmatmul.bf16.gmra.mxu0 %v4856
  %v4880 = vpop.f32.mrf.mxu0
  %v4881 = vadd.f32 0.0, %v4880
  %v4882 = vpop.f32.mrf.mxu0
  %v4883 = vadd.f32 0.0, %v4882
  %4884 = vmatmul.bf16.gmra.mxu0 %v4859
  %v4885 = vpop.f32.mrf.mxu0
  %v4886 = vadd.f32 0.0, %v4885
  %v4887 = vpop.f32.mrf.mxu0
  %v4888 = vadd.f32 0.0, %v4887
  %4889 = vdwg.mxu0
  %v4890 = vld [vmem:[#allocation3] sm:$0xff]
  %v4891 = vld [vmem:[#allocation3 + $0x8] sm:$0xff]
  %v4892 = vld [vmem:[#allocation3 + $0x10] sm:$0xff]
  %v4893 = vld [vmem:[#allocation3 + $0x18] sm:$0xff]
  %v4894 = vld [vmem:[#allocation3 + $0x20] sm:$0xff]
  %v4895 = vld [vmem:[#allocation3 + $0x28] sm:$0xff]
  %v4896 = vld [vmem:[#allocation3 + $0x30] sm:$0xff]
  %v4897 = vld [vmem:[#allocation3 + $0x38] sm:$0xff]
  %v4898 = vadd.f32 %v4890, %v4871
  %v4899 = vadd.f32 %v4891, %v4873
  %v4900 = vadd.f32 %v4892, %v4876
  %v4901 = vadd.f32 %v4893, %v4878
  %v4902 = vadd.f32 %v4894, %v4881
  %v4903 = vadd.f32 %v4895, %v4883
  %v4904 = vadd.f32 %v4896, %v4886
  %v4905 = vadd.f32 %v4897, %v4888
  %4906 = vst.msk [vmem:[#allocation3] sm:$0xff] %vm4360, %v4898
  %4907 = vst.msk [vmem:[#allocation3 + $0x8] sm:$0xff] %vm4360, %v4899
  %4908 = vst.msk [vmem:[#allocation3 + $0x10] sm:$0xff] %vm4360, %v4900
  %4909 = vst.msk [vmem:[#allocation3 + $0x18] sm:$0xff] %vm4360, %v4901
  %4910 = vst.msk [vmem:[#allocation3 + $0x20] sm:$0xff] %vm4360, %v4902
  %4911 = vst.msk [vmem:[#allocation3 + $0x28] sm:$0xff] %vm4360, %v4903
  %4912 = vst.msk [vmem:[#allocation3 + $0x30] sm:$0xff] %vm4360, %v4904
  %4913 = vst.msk [vmem:[#allocation3 + $0x38] sm:$0xff] %vm4360, %v4905
  %v4914 = vld [vmem:[%s1307 + $0x8] sm:$0xf]
  %v4915 = vld [vmem:[%s1307 + $0xc] sm:$0xf]
  %v4916 = vld [vmem:[%s1307 + $0x10] sm:$0xf]
  %v4917 = vld [vmem:[%s1307 + $0x14] sm:$0xf]
  %v4918 = vld [vmem:[%s1307 + $0x18] sm:$0xf]
  %v4919 = vld [vmem:[%s1307 + $0x1c] sm:$0xf]
  %v4920 = vld [vmem:[%s1307 + $0x20] sm:$0xf]
  %v4921 = vld [vmem:[%s1307 + $0x24] sm:$0xf]
  %s4922 = scalar_lea.vmem %s3, 160
  %v4923 = vld [vmem:[%s4922] sm:$0xf]
  %v4924 = vld [vmem:[%s4922 + $0x4] sm:$0xf]
  %v4925 = vld [vmem:[%s4922 + $0x8] sm:$0xf]
  %v4926 = vld [vmem:[%s4922 + $0xc] sm:$0xf]
  %v4927 = vld [vmem:[%s4922 + $0x10] sm:$0xf]
  %v4928 = vld [vmem:[%s4922 + $0x14] sm:$0xf]
  %v4929 = vld [vmem:[%s4922 + $0x18] sm:$0xf]
  %v4930 = vld [vmem:[%s4922 + $0x1c] sm:$0xf]
  %v4939 = vunpack.c.l.b16 %v4914
  %v4940 = vunpack.c.l.b16 %v4915
  %v4941 = vunpack.c.l.b16 %v4916
  %v4942 = vunpack.c.l.b16 %v4917
  %v4943 = vunpack.c.l.b16 %v4918
  %v4944 = vunpack.c.l.b16 %v4919
  %v4945 = vunpack.c.l.b16 %v4920
  %v4946 = vunpack.c.l.b16 %v4921
  %v4947 = vpack.c.b16 %v4940, %v4939
  %v4948 = vpack.c.b16 %v4942, %v4941
  %v4949 = vpack.c.b16 %v4944, %v4943
  %v4950 = vpack.c.b16 %v4946, %v4945
  %v4959 = vunpack.c.l.b16 %v4923
  %v4960 = vunpack.c.l.b16 %v4924
  %v4961 = vunpack.c.l.b16 %v4925
  %v4962 = vunpack.c.l.b16 %v4926
  %v4963 = vunpack.c.l.b16 %v4927
  %v4964 = vunpack.c.l.b16 %v4928
  %v4965 = vunpack.c.l.b16 %v4929
  %v4966 = vunpack.c.l.b16 %v4930
  %v4967 = vpack.c.b16 %v4960, %v4959
  %v4968 = vpack.c.b16 %v4962, %v4961
  %v4969 = vpack.c.b16 %v4964, %v4963
  %v4970 = vpack.c.b16 %v4966, %v4965
  %v4976 = vsel %vm4360, %v4947, 0
  %v4979 = vsel %vm4360, %v4948, 0
  %v4982 = vsel %vm4360, %v4949, 0
  %v4985 = vsel %vm4360, %v4950, 0
  %4987 = vmatpush.bf16.msra.mxu0 0
  %4988 = vmatpush.bf16.msra.mxu0 0
  %4989 = vmatpush.bf16.msra.mxu0 0
  %4990 = vmatpush.bf16.msra.mxu0 0
  %4991 = vmatpush.bf16.msra.mxu0 %v4970
  %4992 = vmatpush.bf16.msra.mxu0 %v4969
  %4993 = vmatpush.bf16.msra.mxu0 %v4968
  %4994 = vmatpush.bf16.msra.mxu0 %v4967
  %4995 = vmatmul.bf16.gmra.mxu0 %v4976
  %v4996 = vpop.f32.mrf.mxu0
  %v4997 = vadd.f32 0.0, %v4996
  %v4998 = vpop.f32.mrf.mxu0
  %v4999 = vadd.f32 0.0, %v4998
  %5000 = vmatmul.bf16.gmra.mxu0 %v4979
  %v5001 = vpop.f32.mrf.mxu0
  %v5002 = vadd.f32 0.0, %v5001
  %v5003 = vpop.f32.mrf.mxu0
  %v5004 = vadd.f32 0.0, %v5003
  %5005 = vmatmul.bf16.gmra.mxu0 %v4982
  %v5006 = vpop.f32.mrf.mxu0
  %v5007 = vadd.f32 0.0, %v5006
  %v5008 = vpop.f32.mrf.mxu0
  %v5009 = vadd.f32 0.0, %v5008
  %5010 = vmatmul.bf16.gmra.mxu0 %v4985
  %v5011 = vpop.f32.mrf.mxu0
  %v5012 = vadd.f32 0.0, %v5011
  %v5013 = vpop.f32.mrf.mxu0
  %v5014 = vadd.f32 0.0, %v5013
  %5015 = vdwg.mxu0
  %v5016 = vld [vmem:[#allocation3] sm:$0xff]
  %v5017 = vld [vmem:[#allocation3 + $0x8] sm:$0xff]
  %v5018 = vld [vmem:[#allocation3 + $0x10] sm:$0xff]
  %v5019 = vld [vmem:[#allocation3 + $0x18] sm:$0xff]
  %v5020 = vld [vmem:[#allocation3 + $0x20] sm:$0xff]
  %v5021 = vld [vmem:[#allocation3 + $0x28] sm:$0xff]
  %v5022 = vld [vmem:[#allocation3 + $0x30] sm:$0xff]
  %v5023 = vld [vmem:[#allocation3 + $0x38] sm:$0xff]
  %v5024 = vadd.f32 %v5016, %v4997
  %v5025 = vadd.f32 %v5017, %v4999
  %v5026 = vadd.f32 %v5018, %v5002
  %v5027 = vadd.f32 %v5019, %v5004
  %v5028 = vadd.f32 %v5020, %v5007
  %v5029 = vadd.f32 %v5021, %v5009
  %v5030 = vadd.f32 %v5022, %v5012
  %v5031 = vadd.f32 %v5023, %v5014
  %5032 = vst.msk [vmem:[#allocation3] sm:$0xff] %vm4360, %v5024
  %5033 = vst.msk [vmem:[#allocation3 + $0x8] sm:$0xff] %vm4360, %v5025
  %5034 = vst.msk [vmem:[#allocation3 + $0x10] sm:$0xff] %vm4360, %v5026
  %5035 = vst.msk [vmem:[#allocation3 + $0x18] sm:$0xff] %vm4360, %v5027
  %5036 = vst.msk [vmem:[#allocation3 + $0x20] sm:$0xff] %vm4360, %v5028
  %5037 = vst.msk [vmem:[#allocation3 + $0x28] sm:$0xff] %vm4360, %v5029
  %5038 = vst.msk [vmem:[#allocation3 + $0x30] sm:$0xff] %vm4360, %v5030
  %5039 = vst.msk [vmem:[#allocation3 + $0x38] sm:$0xff] %vm4360, %v5031
  %v5040 = vld [vmem:[%s1733] sm:$0xf]
  %v5041 = vld [vmem:[%s1733 + $0x4] sm:$0xf]
  %v5042 = vld [vmem:[%s1733 + $0x8] sm:$0xf]
  %v5043 = vld [vmem:[%s1733 + $0xc] sm:$0xf]
  %v5044 = vld [vmem:[%s1733 + $0x10] sm:$0xf]
  %v5045 = vld [vmem:[%s1733 + $0x14] sm:$0xf]
  %v5046 = vld [vmem:[%s1733 + $0x18] sm:$0xf]
  %v5047 = vld [vmem:[%s1733 + $0x1c] sm:$0xf]
  %s5048 = scalar_lea.vmem %s3, 192
  %v5049 = vld [vmem:[%s5048] sm:$0xf]
  %v5050 = vld [vmem:[%s5048 + $0x4] sm:$0xf]
  %v5051 = vld [vmem:[%s5048 + $0x8] sm:$0xf]
  %v5052 = vld [vmem:[%s5048 + $0xc] sm:$0xf]
  %v5053 = vld [vmem:[%s5048 + $0x10] sm:$0xf]
  %v5054 = vld [vmem:[%s5048 + $0x14] sm:$0xf]
  %v5055 = vld [vmem:[%s5048 + $0x18] sm:$0xf]
  %v5056 = vld [vmem:[%s5048 + $0x1c] sm:$0xf]
  %v5065 = vunpack.c.l.b16 %v5040
  %v5066 = vunpack.c.l.b16 %v5041
  %v5067 = vunpack.c.l.b16 %v5042
  %v5068 = vunpack.c.l.b16 %v5043
  %v5069 = vunpack.c.l.b16 %v5044
  %v5070 = vunpack.c.l.b16 %v5045
  %v5071 = vunpack.c.l.b16 %v5046
  %v5072 = vunpack.c.l.b16 %v5047
  %v5073 = vpack.c.b16 %v5066, %v5065
  %v5074 = vpack.c.b16 %v5068, %v5067
  %v5075 = vpack.c.b16 %v5070, %v5069
  %v5076 = vpack.c.b16 %v5072, %v5071
  %v5085 = vunpack.c.l.b16 %v5049
  %v5086 = vunpack.c.l.b16 %v5050
  %v5087 = vunpack.c.l.b16 %v5051
  %v5088 = vunpack.c.l.b16 %v5052
  %v5089 = vunpack.c.l.b16 %v5053
  %v5090 = vunpack.c.l.b16 %v5054
  %v5091 = vunpack.c.l.b16 %v5055
  %v5092 = vunpack.c.l.b16 %v5056
  %v5093 = vpack.c.b16 %v5086, %v5085
  %v5094 = vpack.c.b16 %v5088, %v5087
  %v5095 = vpack.c.b16 %v5090, %v5089
  %v5096 = vpack.c.b16 %v5092, %v5091
  %v5102 = vsel %vm4360, %v5073, 0
  %v5105 = vsel %vm4360, %v5074, 0
  %v5108 = vsel %vm4360, %v5075, 0
  %v5111 = vsel %vm4360, %v5076, 0
  %5113 = vmatpush.bf16.msra.mxu0 0
  %5114 = vmatpush.bf16.msra.mxu0 0
  %5115 = vmatpush.bf16.msra.mxu0 0
  %5116 = vmatpush.bf16.msra.mxu0 0
  %5117 = vmatpush.bf16.msra.mxu0 %v5096
  %5118 = vmatpush.bf16.msra.mxu0 %v5095
  %5119 = vmatpush.bf16.msra.mxu0 %v5094
  %5120 = vmatpush.bf16.msra.mxu0 %v5093
  %5121 = vmatmul.bf16.gmra.mxu0 %v5102
  %v5122 = vpop.f32.mrf.mxu0
  %v5123 = vadd.f32 0.0, %v5122
  %v5124 = vpop.f32.mrf.mxu0
  %v5125 = vadd.f32 0.0, %v5124
  %5126 = vmatmul.bf16.gmra.mxu0 %v5105
  %v5127 = vpop.f32.mrf.mxu0
  %v5128 = vadd.f32 0.0, %v5127
  %v5129 = vpop.f32.mrf.mxu0
  %v5130 = vadd.f32 0.0, %v5129
  %5131 = vmatmul.bf16.gmra.mxu0 %v5108
  %v5132 = vpop.f32.mrf.mxu0
  %v5133 = vadd.f32 0.0, %v5132
  %v5134 = vpop.f32.mrf.mxu0
  %v5135 = vadd.f32 0.0, %v5134
  %5136 = vmatmul.bf16.gmra.mxu0 %v5111
  %v5137 = vpop.f32.mrf.mxu0
  %v5138 = vadd.f32 0.0, %v5137
  %v5139 = vpop.f32.mrf.mxu0
  %v5140 = vadd.f32 0.0, %v5139
  %5141 = vdwg.mxu0
  %v5142 = vld [vmem:[#allocation3] sm:$0xff]
  %v5143 = vld [vmem:[#allocation3 + $0x8] sm:$0xff]
  %v5144 = vld [vmem:[#allocation3 + $0x10] sm:$0xff]
  %v5145 = vld [vmem:[#allocation3 + $0x18] sm:$0xff]
  %v5146 = vld [vmem:[#allocation3 + $0x20] sm:$0xff]
  %v5147 = vld [vmem:[#allocation3 + $0x28] sm:$0xff]
  %v5148 = vld [vmem:[#allocation3 + $0x30] sm:$0xff]
  %v5149 = vld [vmem:[#allocation3 + $0x38] sm:$0xff]
  %v5150 = vadd.f32 %v5142, %v5123
  %v5151 = vadd.f32 %v5143, %v5125
  %v5152 = vadd.f32 %v5144, %v5128
  %v5153 = vadd.f32 %v5145, %v5130
  %v5154 = vadd.f32 %v5146, %v5133
  %v5155 = vadd.f32 %v5147, %v5135
  %v5156 = vadd.f32 %v5148, %v5138
  %v5157 = vadd.f32 %v5149, %v5140
  %5158 = vst.msk [vmem:[#allocation3] sm:$0xff] %vm4360, %v5150
  %5159 = vst.msk [vmem:[#allocation3 + $0x8] sm:$0xff] %vm4360, %v5151
  %5160 = vst.msk [vmem:[#allocation3 + $0x10] sm:$0xff] %vm4360, %v5152
  %5161 = vst.msk [vmem:[#allocation3 + $0x18] sm:$0xff] %vm4360, %v5153
  %5162 = vst.msk [vmem:[#allocation3 + $0x20] sm:$0xff] %vm4360, %v5154
  %5163 = vst.msk [vmem:[#allocation3 + $0x28] sm:$0xff] %vm4360, %v5155
  %5164 = vst.msk [vmem:[#allocation3 + $0x30] sm:$0xff] %vm4360, %v5156
  %5165 = vst.msk [vmem:[#allocation3 + $0x38] sm:$0xff] %vm4360, %v5157
  %v5166 = vld [vmem:[%s1733 + $0x8] sm:$0xf]
  %v5167 = vld [vmem:[%s1733 + $0xc] sm:$0xf]
  %v5168 = vld [vmem:[%s1733 + $0x10] sm:$0xf]
  %v5169 = vld [vmem:[%s1733 + $0x14] sm:$0xf]
  %v5170 = vld [vmem:[%s1733 + $0x18] sm:$0xf]
  %v5171 = vld [vmem:[%s1733 + $0x1c] sm:$0xf]
  %v5172 = vld [vmem:[%s1733 + $0x20] sm:$0xf]
  %v5173 = vld [vmem:[%s1733 + $0x24] sm:$0xf]
  %s5174 = scalar_lea.vmem %s3, 224
  %v5175 = vld [vmem:[%s5174] sm:$0xf]
  %v5176 = vld [vmem:[%s5174 + $0x4] sm:$0xf]
  %v5177 = vld [vmem:[%s5174 + $0x8] sm:$0xf]
  %v5178 = vld [vmem:[%s5174 + $0xc] sm:$0xf]
  %v5179 = vld [vmem:[%s5174 + $0x10] sm:$0xf]
  %v5180 = vld [vmem:[%s5174 + $0x14] sm:$0xf]
  %v5181 = vld [vmem:[%s5174 + $0x18] sm:$0xf]
  %v5182 = vld [vmem:[%s5174 + $0x1c] sm:$0xf]
  %v5191 = vunpack.c.l.b16 %v5166
  %v5192 = vunpack.c.l.b16 %v5167
  %v5193 = vunpack.c.l.b16 %v5168
  %v5194 = vunpack.c.l.b16 %v5169
  %v5195 = vunpack.c.l.b16 %v5170
  %v5196 = vunpack.c.l.b16 %v5171
  %v5197 = vunpack.c.l.b16 %v5172
  %v5198 = vunpack.c.l.b16 %v5173
  %v5199 = vpack.c.b16 %v5192, %v5191
  %v5200 = vpack.c.b16 %v5194, %v5193
  %v5201 = vpack.c.b16 %v5196, %v5195
  %v5202 = vpack.c.b16 %v5198, %v5197
  %v5211 = vunpack.c.l.b16 %v5175
  %v5212 = vunpack.c.l.b16 %v5176
  %v5213 = vunpack.c.l.b16 %v5177
  %v5214 = vunpack.c.l.b16 %v5178
  %v5215 = vunpack.c.l.b16 %v5179
  %v5216 = vunpack.c.l.b16 %v5180
  %v5217 = vunpack.c.l.b16 %v5181
  %v5218 = vunpack.c.l.b16 %v5182
  %v5219 = vpack.c.b16 %v5212, %v5211
  %v5220 = vpack.c.b16 %v5214, %v5213
  %v5221 = vpack.c.b16 %v5216, %v5215
  %v5222 = vpack.c.b16 %v5218, %v5217
  %v5228 = vsel %vm4360, %v5199, 0
  %v5231 = vsel %vm4360, %v5200, 0
  %v5234 = vsel %vm4360, %v5201, 0
  %v5237 = vsel %vm4360, %v5202, 0
  %5239 = vmatpush.bf16.msra.mxu0 0
  %5240 = vmatpush.bf16.msra.mxu0 0
  %5241 = vmatpush.bf16.msra.mxu0 0
  %5242 = vmatpush.bf16.msra.mxu0 0
  %5243 = vmatpush.bf16.msra.mxu0 %v5222
  %5244 = vmatpush.bf16.msra.mxu0 %v5221
  %5245 = vmatpush.bf16.msra.mxu0 %v5220
  %5246 = vmatpush.bf16.msra.mxu0 %v5219
  %5247 = vmatmul.bf16.gmra.mxu0 %v5228
  %v5248 = vpop.f32.mrf.mxu0
  %v5249 = vadd.f32 0.0, %v5248
  %v5250 = vpop.f32.mrf.mxu0
  %v5251 = vadd.f32 0.0, %v5250
  %5252 = vmatmul.bf16.gmra.mxu0 %v5231
  %v5253 = vpop.f32.mrf.mxu0
  %v5254 = vadd.f32 0.0, %v5253
  %v5255 = vpop.f32.mrf.mxu0
  %v5256 = vadd.f32 0.0, %v5255
  %5257 = vmatmul.bf16.gmra.mxu0 %v5234
  %v5258 = vpop.f32.mrf.mxu0
  %v5259 = vadd.f32 0.0, %v5258
  %v5260 = vpop.f32.mrf.mxu0
  %v5261 = vadd.f32 0.0, %v5260
  %5262 = vmatmul.bf16.gmra.mxu0 %v5237
  %v5263 = vpop.f32.mrf.mxu0
  %v5264 = vadd.f32 0.0, %v5263
  %v5265 = vpop.f32.mrf.mxu0
  %v5266 = vadd.f32 0.0, %v5265
  %5267 = vdwg.mxu0
  %v5268 = vld [vmem:[#allocation3] sm:$0xff]
  %v5269 = vld [vmem:[#allocation3 + $0x8] sm:$0xff]
  %v5270 = vld [vmem:[#allocation3 + $0x10] sm:$0xff]
  %v5271 = vld [vmem:[#allocation3 + $0x18] sm:$0xff]
  %v5272 = vld [vmem:[#allocation3 + $0x20] sm:$0xff]
  %v5273 = vld [vmem:[#allocation3 + $0x28] sm:$0xff]
  %v5274 = vld [vmem:[#allocation3 + $0x30] sm:$0xff]
  %v5275 = vld [vmem:[#allocation3 + $0x38] sm:$0xff]
  %v5276 = vadd.f32 %v5268, %v5249
  %v5277 = vadd.f32 %v5269, %v5251
  %v5278 = vadd.f32 %v5270, %v5254
  %v5279 = vadd.f32 %v5271, %v5256
  %v5280 = vadd.f32 %v5272, %v5259
  %v5281 = vadd.f32 %v5273, %v5261
  %v5282 = vadd.f32 %v5274, %v5264
  %v5283 = vadd.f32 %v5275, %v5266
  %5284 = vst.msk [vmem:[#allocation3] sm:$0xff] %vm4360, %v5276
  %5285 = vst.msk [vmem:[#allocation3 + $0x8] sm:$0xff] %vm4360, %v5277
  %5286 = vst.msk [vmem:[#allocation3 + $0x10] sm:$0xff] %vm4360, %v5278
  %5287 = vst.msk [vmem:[#allocation3 + $0x18] sm:$0xff] %vm4360, %v5279
  %5288 = vst.msk [vmem:[#allocation3 + $0x20] sm:$0xff] %vm4360, %v5280
  %5289 = vst.msk [vmem:[#allocation3 + $0x28] sm:$0xff] %vm4360, %v5281
  %5290 = vst.msk [vmem:[#allocation3 + $0x30] sm:$0xff] %vm4360, %v5282
  %5291 = vst.msk [vmem:[#allocation3 + $0x38] sm:$0xff] %vm4360, %v5283
  %v5292 = vld [vmem:[#allocation3] sm:$0xff]
  %v5293 = vld [vmem:[#allocation3 + $0x8] sm:$0xff]
  %v5294 = vld [vmem:[#allocation3 + $0x10] sm:$0xff]
  %v5295 = vld [vmem:[#allocation3 + $0x18] sm:$0xff]
  %v5296 = vld [vmem:[#allocation3 + $0x20] sm:$0xff]
  %v5297 = vld [vmem:[#allocation3 + $0x28] sm:$0xff]
  %v5298 = vld [vmem:[#allocation3 + $0x30] sm:$0xff]
  %v5299 = vld [vmem:[#allocation3 + $0x38] sm:$0xff]
  %v5301 = vperm.slane %v36, 0
  %v5303 = vadd.f32 %v5292, %v5301
  %v5304 = vadd.f32 %v5293, %v5301
  %v5305 = vadd.f32 %v5294, %v5301
  %v5306 = vadd.f32 %v5295, %v5301
  %v5307 = vadd.f32 %v5296, %v5301
  %v5308 = vadd.f32 %v5297, %v5301
  %v5309 = vadd.f32 %v5298, %v5301
  %v5310 = vadd.f32 %v5299, %v5301
  %v5311 = vmax.f32 %v5303, 0.0
  %v5312 = vmax.f32 %v5304, 0.0
  %v5313 = vmax.f32 %v5305, 0.0
  %v5314 = vmax.f32 %v5306, 0.0
  %v5315 = vmax.f32 %v5307, 0.0
  %v5316 = vmax.f32 %v5308, 0.0
  %v5317 = vmax.f32 %v5309, 0.0
  %v5318 = vmax.f32 %v5310, 0.0
  %v5319 = vpack.c.bf16 %v5311, %v5311
  %v5320 = vpack.c.bf16 %v5312, %v5312
  %v5321 = vpack.c.bf16 %v5313, %v5313
  %v5322 = vpack.c.bf16 %v5314, %v5314
  %v5323 = vpack.c.bf16 %v5315, %v5315
  %v5324 = vpack.c.bf16 %v5316, %v5316
  %v5325 = vpack.c.bf16 %v5317, %v5317
  %v5326 = vpack.c.bf16 %v5318, %v5318
  %5327 = vst.msk [vmem:[#allocation4] sm:$0xf] %vm455, %v5319
  %5328 = vst.msk [vmem:[#allocation4 + $0x4] sm:$0xf] %vm455, %v5320
  %5329 = vst.msk [vmem:[#allocation4 + $0x8] sm:$0xf] %vm455, %v5321
  %5330 = vst.msk [vmem:[#allocation4 + $0xc] sm:$0xf] %vm455, %v5322
  %5331 = vst.msk [vmem:[#allocation4 + $0x10] sm:$0xf] %vm455, %v5323
  %5332 = vst.msk [vmem:[#allocation4 + $0x14] sm:$0xf] %vm455, %v5324
  %5333 = vst.msk [vmem:[#allocation4 + $0x18] sm:$0xf] %vm455, %v5325
  %5334 = vst.msk [vmem:[#allocation4 + $0x1c] sm:$0xf] %vm455, %v5326
  %v5335 = vld [vmem:[%s1307] sm:$0xf]
  %v5336 = vld [vmem:[%s1307 + $0x4] sm:$0xf]
  %v5337 = vld [vmem:[%s1307 + $0x8] sm:$0xf]
  %v5338 = vld [vmem:[%s1307 + $0xc] sm:$0xf]
  %v5339 = vld [vmem:[%s1307 + $0x10] sm:$0xf]
  %v5340 = vld [vmem:[%s1307 + $0x14] sm:$0xf]
  %v5341 = vld [vmem:[%s1307 + $0x18] sm:$0xf]
  %v5342 = vld [vmem:[%s1307 + $0x1c] sm:$0xf]
  %v5343 = vld [vmem:[%s3] sm:$0xf]
  %v5344 = vld [vmem:[%s3 + $0x4] sm:$0xf]
  %v5345 = vld [vmem:[%s3 + $0x8] sm:$0xf]
  %v5346 = vld [vmem:[%s3 + $0xc] sm:$0xf]
  %v5347 = vld [vmem:[%s3 + $0x10] sm:$0xf]
  %v5348 = vld [vmem:[%s3 + $0x14] sm:$0xf]
  %v5349 = vld [vmem:[%s3 + $0x18] sm:$0xf]
  %v5350 = vld [vmem:[%s3 + $0x1c] sm:$0xf]
  %v5359 = vunpack.c.l.b16 %v5335
  %v5360 = vunpack.c.l.b16 %v5336
  %v5361 = vunpack.c.l.b16 %v5337
  %v5362 = vunpack.c.l.b16 %v5338
  %v5363 = vunpack.c.l.b16 %v5339
  %v5364 = vunpack.c.l.b16 %v5340
  %v5365 = vunpack.c.l.b16 %v5341
  %v5366 = vunpack.c.l.b16 %v5342
  %v5367 = vpack.c.b16 %v5360, %v5359
  %v5368 = vpack.c.b16 %v5362, %v5361
  %v5369 = vpack.c.b16 %v5364, %v5363
  %v5370 = vpack.c.b16 %v5366, %v5365
  %v5379 = vunpack.c.l.b16 %v5343
  %v5380 = vunpack.c.l.b16 %v5344
  %v5381 = vunpack.c.l.b16 %v5345
  %v5382 = vunpack.c.l.b16 %v5346
  %v5383 = vunpack.c.l.b16 %v5347
  %v5384 = vunpack.c.l.b16 %v5348
  %v5385 = vunpack.c.l.b16 %v5349
  %v5386 = vunpack.c.l.b16 %v5350
  %v5387 = vpack.c.b16 %v5380, %v5379
  %v5388 = vpack.c.b16 %v5382, %v5381
  %v5389 = vpack.c.b16 %v5384, %v5383
  %v5390 = vpack.c.b16 %v5386, %v5385
  %v5396 = vsel %vm4360, %v5367, 0
  %v5399 = vsel %vm4360, %v5368, 0
  %v5402 = vsel %vm4360, %v5369, 0
  %v5405 = vsel %vm4360, %v5370, 0
  %5407 = vmatpush.bf16.msra.mxu0 0
  %5408 = vmatpush.bf16.msra.mxu0 0
  %5409 = vmatpush.bf16.msra.mxu0 0
  %5410 = vmatpush.bf16.msra.mxu0 0
  %5411 = vmatpush.bf16.msra.mxu0 %v5390
  %5412 = vmatpush.bf16.msra.mxu0 %v5389
  %5413 = vmatpush.bf16.msra.mxu0 %v5388
  %5414 = vmatpush.bf16.msra.mxu0 %v5387
  %5415 = vmatmul.bf16.gmra.mxu0 %v5396
  %v5416 = vpop.f32.mrf.mxu0
  %v5417 = vadd.f32 0.0, %v5416
  %v5418 = vpop.f32.mrf.mxu0
  %v5419 = vadd.f32 0.0, %v5418
  %5420 = vmatmul.bf16.gmra.mxu0 %v5399
  %v5421 = vpop.f32.mrf.mxu0
  %v5422 = vadd.f32 0.0, %v5421
  %v5423 = vpop.f32.mrf.mxu0
  %v5424 = vadd.f32 0.0, %v5423
  %5425 = vmatmul.bf16.gmra.mxu0 %v5402
  %v5426 = vpop.f32.mrf.mxu0
  %v5427 = vadd.f32 0.0, %v5426
  %v5428 = vpop.f32.mrf.mxu0
  %v5429 = vadd.f32 0.0, %v5428
  %5430 = vmatmul.bf16.gmra.mxu0 %v5405
  %v5431 = vpop.f32.mrf.mxu0
  %v5432 = vadd.f32 0.0, %v5431
  %v5433 = vpop.f32.mrf.mxu0
  %v5434 = vadd.f32 0.0, %v5433
  %5435 = vdwg.mxu0
  %s5436 = scalar_lea.vmem [#allocation3], 64
  %5437 = vst.msk [vmem:[%s5436] sm:$0xff] %vm4360, %v5417
  %5438 = vst.msk [vmem:[%s5436 + $0x8] sm:$0xff] %vm4360, %v5419
  %5439 = vst.msk [vmem:[%s5436 + $0x10] sm:$0xff] %vm4360, %v5422
  %5440 = vst.msk [vmem:[%s5436 + $0x18] sm:$0xff] %vm4360, %v5424
  %5441 = vst.msk [vmem:[%s5436 + $0x20] sm:$0xff] %vm4360, %v5427
  %5442 = vst.msk [vmem:[%s5436 + $0x28] sm:$0xff] %vm4360, %v5429
  %5443 = vst.msk [vmem:[%s5436 + $0x30] sm:$0xff] %vm4360, %v5432
  %5444 = vst.msk [vmem:[%s5436 + $0x38] sm:$0xff] %vm4360, %v5434
  %v5445 = vld [vmem:[%s1307 + $0x8] sm:$0xf]
  %v5446 = vld [vmem:[%s1307 + $0xc] sm:$0xf]
  %v5447 = vld [vmem:[%s1307 + $0x10] sm:$0xf]
  %v5448 = vld [vmem:[%s1307 + $0x14] sm:$0xf]
  %v5449 = vld [vmem:[%s1307 + $0x18] sm:$0xf]
  %v5450 = vld [vmem:[%s1307 + $0x1c] sm:$0xf]
  %v5451 = vld [vmem:[%s1307 + $0x20] sm:$0xf]
  %v5452 = vld [vmem:[%s1307 + $0x24] sm:$0xf]
  %v5453 = vld [vmem:[%s4418] sm:$0xf]
  %v5454 = vld [vmem:[%s4418 + $0x4] sm:$0xf]
  %v5455 = vld [vmem:[%s4418 + $0x8] sm:$0xf]
  %v5456 = vld [vmem:[%s4418 + $0xc] sm:$0xf]
  %v5457 = vld [vmem:[%s4418 + $0x10] sm:$0xf]
  %v5458 = vld [vmem:[%s4418 + $0x14] sm:$0xf]
  %v5459 = vld [vmem:[%s4418 + $0x18] sm:$0xf]
  %v5460 = vld [vmem:[%s4418 + $0x1c] sm:$0xf]
  %v5469 = vunpack.c.l.b16 %v5445
  %v5470 = vunpack.c.l.b16 %v5446
  %v5471 = vunpack.c.l.b16 %v5447
  %v5472 = vunpack.c.l.b16 %v5448
  %v5473 = vunpack.c.l.b16 %v5449
  %v5474 = vunpack.c.l.b16 %v5450
  %v5475 = vunpack.c.l.b16 %v5451
  %v5476 = vunpack.c.l.b16 %v5452
  %v5477 = vpack.c.b16 %v5470, %v5469
  %v5478 = vpack.c.b16 %v5472, %v5471
  %v5479 = vpack.c.b16 %v5474, %v5473
  %v5480 = vpack.c.b16 %v5476, %v5475
  %v5489 = vunpack.c.l.b16 %v5453
  %v5490 = vunpack.c.l.b16 %v5454
  %v5491 = vunpack.c.l.b16 %v5455
  %v5492 = vunpack.c.l.b16 %v5456
  %v5493 = vunpack.c.l.b16 %v5457
  %v5494 = vunpack.c.l.b16 %v5458
  %v5495 = vunpack.c.l.b16 %v5459
  %v5496 = vunpack.c.l.b16 %v5460
  %v5497 = vpack.c.b16 %v5490, %v5489
  %v5498 = vpack.c.b16 %v5492, %v5491
  %v5499 = vpack.c.b16 %v5494, %v5493
  %v5500 = vpack.c.b16 %v5496, %v5495
  %v5506 = vsel %vm4360, %v5477, 0
  %v5509 = vsel %vm4360, %v5478, 0
  %v5512 = vsel %vm4360, %v5479, 0
  %v5515 = vsel %vm4360, %v5480, 0
  %5517 = vmatpush.bf16.msra.mxu0 0
  %5518 = vmatpush.bf16.msra.mxu0 0
  %5519 = vmatpush.bf16.msra.mxu0 0
  %5520 = vmatpush.bf16.msra.mxu0 0
  %5521 = vmatpush.bf16.msra.mxu0 %v5500
  %5522 = vmatpush.bf16.msra.mxu0 %v5499
  %5523 = vmatpush.bf16.msra.mxu0 %v5498
  %5524 = vmatpush.bf16.msra.mxu0 %v5497
  %5525 = vmatmul.bf16.gmra.mxu0 %v5506
  %v5526 = vpop.f32.mrf.mxu0
  %v5527 = vadd.f32 0.0, %v5526
  %v5528 = vpop.f32.mrf.mxu0
  %v5529 = vadd.f32 0.0, %v5528
  %5530 = vmatmul.bf16.gmra.mxu0 %v5509
  %v5531 = vpop.f32.mrf.mxu0
  %v5532 = vadd.f32 0.0, %v5531
  %v5533 = vpop.f32.mrf.mxu0
  %v5534 = vadd.f32 0.0, %v5533
  %5535 = vmatmul.bf16.gmra.mxu0 %v5512
  %v5536 = vpop.f32.mrf.mxu0
  %v5537 = vadd.f32 0.0, %v5536
  %v5538 = vpop.f32.mrf.mxu0
  %v5539 = vadd.f32 0.0, %v5538
  %5540 = vmatmul.bf16.gmra.mxu0 %v5515
  %v5541 = vpop.f32.mrf.mxu0
  %v5542 = vadd.f32 0.0, %v5541
  %v5543 = vpop.f32.mrf.mxu0
  %v5544 = vadd.f32 0.0, %v5543
  %5545 = vdwg.mxu0
  %v5546 = vld [vmem:[%s5436] sm:$0xff]
  %v5547 = vld [vmem:[%s5436 + $0x8] sm:$0xff]
  %v5548 = vld [vmem:[%s5436 + $0x10] sm:$0xff]
  %v5549 = vld [vmem:[%s5436 + $0x18] sm:$0xff]
  %v5550 = vld [vmem:[%s5436 + $0x20] sm:$0xff]
  %v5551 = vld [vmem:[%s5436 + $0x28] sm:$0xff]
  %v5552 = vld [vmem:[%s5436 + $0x30] sm:$0xff]
  %v5553 = vld [vmem:[%s5436 + $0x38] sm:$0xff]
  %v5554 = vadd.f32 %v5546, %v5527
  %v5555 = vadd.f32 %v5547, %v5529
  %v5556 = vadd.f32 %v5548, %v5532
  %v5557 = vadd.f32 %v5549, %v5534
  %v5558 = vadd.f32 %v5550, %v5537
  %v5559 = vadd.f32 %v5551, %v5539
  %v5560 = vadd.f32 %v5552, %v5542
  %v5561 = vadd.f32 %v5553, %v5544
  %5562 = vst.msk [vmem:[%s5436] sm:$0xff] %vm4360, %v5554
  %5563 = vst.msk [vmem:[%s5436 + $0x8] sm:$0xff] %vm4360, %v5555
  %5564 = vst.msk [vmem:[%s5436 + $0x10] sm:$0xff] %vm4360, %v5556
  %5565 = vst.msk [vmem:[%s5436 + $0x18] sm:$0xff] %vm4360, %v5557
  %5566 = vst.msk [vmem:[%s5436 + $0x20] sm:$0xff] %vm4360, %v5558
  %5567 = vst.msk [vmem:[%s5436 + $0x28] sm:$0xff] %vm4360, %v5559
  %5568 = vst.msk [vmem:[%s5436 + $0x30] sm:$0xff] %vm4360, %v5560
  %5569 = vst.msk [vmem:[%s5436 + $0x38] sm:$0xff] %vm4360, %v5561
  %v5570 = vld [vmem:[%s1733] sm:$0xf]
  %v5571 = vld [vmem:[%s1733 + $0x4] sm:$0xf]
  %v5572 = vld [vmem:[%s1733 + $0x8] sm:$0xf]
  %v5573 = vld [vmem:[%s1733 + $0xc] sm:$0xf]
  %v5574 = vld [vmem:[%s1733 + $0x10] sm:$0xf]
  %v5575 = vld [vmem:[%s1733 + $0x14] sm:$0xf]
  %v5576 = vld [vmem:[%s1733 + $0x18] sm:$0xf]
  %v5577 = vld [vmem:[%s1733 + $0x1c] sm:$0xf]
  %v5578 = vld [vmem:[%s4544] sm:$0xf]
  %v5579 = vld [vmem:[%s4544 + $0x4] sm:$0xf]
  %v5580 = vld [vmem:[%s4544 + $0x8] sm:$0xf]
  %v5581 = vld [vmem:[%s4544 + $0xc] sm:$0xf]
  %v5582 = vld [vmem:[%s4544 + $0x10] sm:$0xf]
  %v5583 = vld [vmem:[%s4544 + $0x14] sm:$0xf]
  %v5584 = vld [vmem:[%s4544 + $0x18] sm:$0xf]
  %v5585 = vld [vmem:[%s4544 + $0x1c] sm:$0xf]
  %v5594 = vunpack.c.l.b16 %v5570
  %v5595 = vunpack.c.l.b16 %v5571
  %v5596 = vunpack.c.l.b16 %v5572
  %v5597 = vunpack.c.l.b16 %v5573
  %v5598 = vunpack.c.l.b16 %v5574
  %v5599 = vunpack.c.l.b16 %v5575
  %v5600 = vunpack.c.l.b16 %v5576
  %v5601 = vunpack.c.l.b16 %v5577
  %v5602 = vpack.c.b16 %v5595, %v5594
  %v5603 = vpack.c.b16 %v5597, %v5596
  %v5604 = vpack.c.b16 %v5599, %v5598
  %v5605 = vpack.c.b16 %v5601, %v5600
  %v5614 = vunpack.c.l.b16 %v5578
  %v5615 = vunpack.c.l.b16 %v5579
  %v5616 = vunpack.c.l.b16 %v5580
  %v5617 = vunpack.c.l.b16 %v5581
  %v5618 = vunpack.c.l.b16 %v5582
  %v5619 = vunpack.c.l.b16 %v5583
  %v5620 = vunpack.c.l.b16 %v5584
  %v5621 = vunpack.c.l.b16 %v5585
  %v5622 = vpack.c.b16 %v5615, %v5614
  %v5623 = vpack.c.b16 %v5617, %v5616
  %v5624 = vpack.c.b16 %v5619, %v5618
  %v5625 = vpack.c.b16 %v5621, %v5620
  %v5631 = vsel %vm4360, %v5602, 0
  %v5634 = vsel %vm4360, %v5603, 0
  %v5637 = vsel %vm4360, %v5604, 0
  %v5640 = vsel %vm4360, %v5605, 0
  %5642 = vmatpush.bf16.msra.mxu0 0
  %5643 = vmatpush.bf16.msra.mxu0 0
  %5644 = vmatpush.bf16.msra.mxu0 0
  %5645 = vmatpush.bf16.msra.mxu0 0
  %5646 = vmatpush.bf16.msra.mxu0 %v5625
  %5647 = vmatpush.bf16.msra.mxu0 %v5624
  %5648 = vmatpush.bf16.msra.mxu0 %v5623
  %5649 = vmatpush.bf16.msra.mxu0 %v5622
  %5650 = vmatmul.bf16.gmra.mxu0 %v5631
  %v5651 = vpop.f32.mrf.mxu0
  %v5652 = vadd.f32 0.0, %v5651
  %v5653 = vpop.f32.mrf.mxu0
  %v5654 = vadd.f32 0.0, %v5653
  %5655 = vmatmul.bf16.gmra.mxu0 %v5634
  %v5656 = vpop.f32.mrf.mxu0
  %v5657 = vadd.f32 0.0, %v5656
  %v5658 = vpop.f32.mrf.mxu0
  %v5659 = vadd.f32 0.0, %v5658
  %5660 = vmatmul.bf16.gmra.mxu0 %v5637
  %v5661 = vpop.f32.mrf.mxu0
  %v5662 = vadd.f32 0.0, %v5661
  %v5663 = vpop.f32.mrf.mxu0
  %v5664 = vadd.f32 0.0, %v5663
  %5665 = vmatmul.bf16.gmra.mxu0 %v5640
  %v5666 = vpop.f32.mrf.mxu0
  %v5667 = vadd.f32 0.0, %v5666
  %v5668 = vpop.f32.mrf.mxu0
  %v5669 = vadd.f32 0.0, %v5668
  %5670 = vdwg.mxu0
  %v5671 = vld [vmem:[%s5436] sm:$0xff]
  %v5672 = vld [vmem:[%s5436 + $0x8] sm:$0xff]
  %v5673 = vld [vmem:[%s5436 + $0x10] sm:$0xff]
  %v5674 = vld [vmem:[%s5436 + $0x18] sm:$0xff]
  %v5675 = vld [vmem:[%s5436 + $0x20] sm:$0xff]
  %v5676 = vld [vmem:[%s5436 + $0x28] sm:$0xff]
  %v5677 = vld [vmem:[%s5436 + $0x30] sm:$0xff]
  %v5678 = vld [vmem:[%s5436 + $0x38] sm:$0xff]
  %v5679 = vadd.f32 %v5671, %v5652
  %v5680 = vadd.f32 %v5672, %v5654
  %v5681 = vadd.f32 %v5673, %v5657
  %v5682 = vadd.f32 %v5674, %v5659
  %v5683 = vadd.f32 %v5675, %v5662
  %v5684 = vadd.f32 %v5676, %v5664
  %v5685 = vadd.f32 %v5677, %v5667
  %v5686 = vadd.f32 %v5678, %v5669
  %5687 = vst.msk [vmem:[%s5436] sm:$0xff] %vm4360, %v5679
  %5688 = vst.msk [vmem:[%s5436 + $0x8] sm:$0xff] %vm4360, %v5680
  %5689 = vst.msk [vmem:[%s5436 + $0x10] sm:$0xff] %vm4360, %v5681
  %5690 = vst.msk [vmem:[%s5436 + $0x18] sm:$0xff] %vm4360, %v5682
  %5691 = vst.msk [vmem:[%s5436 + $0x20] sm:$0xff] %vm4360, %v5683
  %5692 = vst.msk [vmem:[%s5436 + $0x28] sm:$0xff] %vm4360, %v5684
  %5693 = vst.msk [vmem:[%s5436 + $0x30] sm:$0xff] %vm4360, %v5685
  %5694 = vst.msk [vmem:[%s5436 + $0x38] sm:$0xff] %vm4360, %v5686
  %v5695 = vld [vmem:[%s1733 + $0x8] sm:$0xf]
  %v5696 = vld [vmem:[%s1733 + $0xc] sm:$0xf]
  %v5697 = vld [vmem:[%s1733 + $0x10] sm:$0xf]
  %v5698 = vld [vmem:[%s1733 + $0x14] sm:$0xf]
  %v5699 = vld [vmem:[%s1733 + $0x18] sm:$0xf]
  %v5700 = vld [vmem:[%s1733 + $0x1c] sm:$0xf]
  %v5701 = vld [vmem:[%s1733 + $0x20] sm:$0xf]
  %v5702 = vld [vmem:[%s1733 + $0x24] sm:$0xf]
  %v5703 = vld [vmem:[%s4670] sm:$0xf]
  %v5704 = vld [vmem:[%s4670 + $0x4] sm:$0xf]
  %v5705 = vld [vmem:[%s4670 + $0x8] sm:$0xf]
  %v5706 = vld [vmem:[%s4670 + $0xc] sm:$0xf]
  %v5707 = vld [vmem:[%s4670 + $0x10] sm:$0xf]
  %v5708 = vld [vmem:[%s4670 + $0x14] sm:$0xf]
  %v5709 = vld [vmem:[%s4670 + $0x18] sm:$0xf]
  %v5710 = vld [vmem:[%s4670 + $0x1c] sm:$0xf]
  %v5719 = vunpack.c.l.b16 %v5695
  %v5720 = vunpack.c.l.b16 %v5696
  %v5721 = vunpack.c.l.b16 %v5697
  %v5722 = vunpack.c.l.b16 %v5698
  %v5723 = vunpack.c.l.b16 %v5699
  %v5724 = vunpack.c.l.b16 %v5700
  %v5725 = vunpack.c.l.b16 %v5701
  %v5726 = vunpack.c.l.b16 %v5702
  %v5727 = vpack.c.b16 %v5720, %v5719
  %v5728 = vpack.c.b16 %v5722, %v5721
  %v5729 = vpack.c.b16 %v5724, %v5723
  %v5730 = vpack.c.b16 %v5726, %v5725
  %v5739 = vunpack.c.l.b16 %v5703
  %v5740 = vunpack.c.l.b16 %v5704
  %v5741 = vunpack.c.l.b16 %v5705
  %v5742 = vunpack.c.l.b16 %v5706
  %v5743 = vunpack.c.l.b16 %v5707
  %v5744 = vunpack.c.l.b16 %v5708
  %v5745 = vunpack.c.l.b16 %v5709
  %v5746 = vunpack.c.l.b16 %v5710
  %v5747 = vpack.c.b16 %v5740, %v5739
  %v5748 = vpack.c.b16 %v5742, %v5741
  %v5749 = vpack.c.b16 %v5744, %v5743
  %v5750 = vpack.c.b16 %v5746, %v5745
  %v5756 = vsel %vm4360, %v5727, 0
  %v5759 = vsel %vm4360, %v5728, 0
  %v5762 = vsel %vm4360, %v5729, 0
  %v5765 = vsel %vm4360, %v5730, 0
  %5767 = vmatpush.bf16.msra.mxu0 0
  %5768 = vmatpush.bf16.msra.mxu0 0
  %5769 = vmatpush.bf16.msra.mxu0 0
  %5770 = vmatpush.bf16.msra.mxu0 0
  %5771 = vmatpush.bf16.msra.mxu0 %v5750
  %5772 = vmatpush.bf16.msra.mxu0 %v5749
  %5773 = vmatpush.bf16.msra.mxu0 %v5748
  %5774 = vmatpush.bf16.msra.mxu0 %v5747
  %5775 = vmatmul.bf16.gmra.mxu0 %v5756
  %v5776 = vpop.f32.mrf.mxu0
  %v5777 = vadd.f32 0.0, %v5776
  %v5778 = vpop.f32.mrf.mxu0
  %v5779 = vadd.f32 0.0, %v5778
  %5780 = vmatmul.bf16.gmra.mxu0 %v5759
  %v5781 = vpop.f32.mrf.mxu0
  %v5782 = vadd.f32 0.0, %v5781
  %v5783 = vpop.f32.mrf.mxu0
  %v5784 = vadd.f32 0.0, %v5783
  %5785 = vmatmul.bf16.gmra.mxu0 %v5762
  %v5786 = vpop.f32.mrf.mxu0
  %v5787 = vadd.f32 0.0, %v5786
  %v5788 = vpop.f32.mrf.mxu0
  %v5789 = vadd.f32 0.0, %v5788
  %5790 = vmatmul.bf16.gmra.mxu0 %v5765
  %v5791 = vpop.f32.mrf.mxu0
  %v5792 = vadd.f32 0.0, %v5791
  %v5793 = vpop.f32.mrf.mxu0
  %v5794 = vadd.f32 0.0, %v5793
  %5795 = vdwg.mxu0
  %v5796 = vld [vmem:[%s5436] sm:$0xff]
  %v5797 = vld [vmem:[%s5436 + $0x8] sm:$0xff]
  %v5798 = vld [vmem:[%s5436 + $0x10] sm:$0xff]
  %v5799 = vld [vmem:[%s5436 + $0x18] sm:$0xff]
  %v5800 = vld [vmem:[%s5436 + $0x20] sm:$0xff]
  %v5801 = vld [vmem:[%s5436 + $0x28] sm:$0xff]
  %v5802 = vld [vmem:[%s5436 + $0x30] sm:$0xff]
  %v5803 = vld [vmem:[%s5436 + $0x38] sm:$0xff]
  %v5804 = vadd.f32 %v5796, %v5777
  %v5805 = vadd.f32 %v5797, %v5779
  %v5806 = vadd.f32 %v5798, %v5782
  %v5807 = vadd.f32 %v5799, %v5784
  %v5808 = vadd.f32 %v5800, %v5787
  %v5809 = vadd.f32 %v5801, %v5789
  %v5810 = vadd.f32 %v5802, %v5792
  %v5811 = vadd.f32 %v5803, %v5794
  %5812 = vst.msk [vmem:[%s5436] sm:$0xff] %vm4360, %v5804
  %5813 = vst.msk [vmem:[%s5436 + $0x8] sm:$0xff] %vm4360, %v5805
  %5814 = vst.msk [vmem:[%s5436 + $0x10] sm:$0xff] %vm4360, %v5806
  %5815 = vst.msk [vmem:[%s5436 + $0x18] sm:$0xff] %vm4360, %v5807
  %5816 = vst.msk [vmem:[%s5436 + $0x20] sm:$0xff] %vm4360, %v5808
  %5817 = vst.msk [vmem:[%s5436 + $0x28] sm:$0xff] %vm4360, %v5809
  %5818 = vst.msk [vmem:[%s5436 + $0x30] sm:$0xff] %vm4360, %v5810
  %5819 = vst.msk [vmem:[%s5436 + $0x38] sm:$0xff] %vm4360, %v5811
  %v5820 = vld [vmem:[%s2159] sm:$0xf]
  %v5821 = vld [vmem:[%s2159 + $0x4] sm:$0xf]
  %v5822 = vld [vmem:[%s2159 + $0x8] sm:$0xf]
  %v5823 = vld [vmem:[%s2159 + $0xc] sm:$0xf]
  %v5824 = vld [vmem:[%s2159 + $0x10] sm:$0xf]
  %v5825 = vld [vmem:[%s2159 + $0x14] sm:$0xf]
  %v5826 = vld [vmem:[%s2159 + $0x18] sm:$0xf]
  %v5827 = vld [vmem:[%s2159 + $0x1c] sm:$0xf]
  %v5828 = vld [vmem:[%s4796] sm:$0xf]
  %v5829 = vld [vmem:[%s4796 + $0x4] sm:$0xf]
  %v5830 = vld [vmem:[%s4796 + $0x8] sm:$0xf]
  %v5831 = vld [vmem:[%s4796 + $0xc] sm:$0xf]
  %v5832 = vld [vmem:[%s4796 + $0x10] sm:$0xf]
  %v5833 = vld [vmem:[%s4796 + $0x14] sm:$0xf]
  %v5834 = vld [vmem:[%s4796 + $0x18] sm:$0xf]
  %v5835 = vld [vmem:[%s4796 + $0x1c] sm:$0xf]
  %v5844 = vunpack.c.l.b16 %v5820
  %v5845 = vunpack.c.l.b16 %v5821
  %v5846 = vunpack.c.l.b16 %v5822
  %v5847 = vunpack.c.l.b16 %v5823
  %v5848 = vunpack.c.l.b16 %v5824
  %v5849 = vunpack.c.l.b16 %v5825
  %v5850 = vunpack.c.l.b16 %v5826
  %v5851 = vunpack.c.l.b16 %v5827
  %v5852 = vpack.c.b16 %v5845, %v5844
  %v5853 = vpack.c.b16 %v5847, %v5846
  %v5854 = vpack.c.b16 %v5849, %v5848
  %v5855 = vpack.c.b16 %v5851, %v5850
  %v5864 = vunpack.c.l.b16 %v5828
  %v5865 = vunpack.c.l.b16 %v5829
  %v5866 = vunpack.c.l.b16 %v5830
  %v5867 = vunpack.c.l.b16 %v5831
  %v5868 = vunpack.c.l.b16 %v5832
  %v5869 = vunpack.c.l.b16 %v5833
  %v5870 = vunpack.c.l.b16 %v5834
  %v5871 = vunpack.c.l.b16 %v5835
  %v5872 = vpack.c.b16 %v5865, %v5864
  %v5873 = vpack.c.b16 %v5867, %v5866
  %v5874 = vpack.c.b16 %v5869, %v5868
  %v5875 = vpack.c.b16 %v5871, %v5870
  %v5881 = vsel %vm4360, %v5852, 0
  %v5884 = vsel %vm4360, %v5853, 0
  %v5887 = vsel %vm4360, %v5854, 0
  %v5890 = vsel %vm4360, %v5855, 0
  %5892 = vmatpush.bf16.msra.mxu0 0
  %5893 = vmatpush.bf16.msra.mxu0 0
  %5894 = vmatpush.bf16.msra.mxu0 0
  %5895 = vmatpush.bf16.msra.mxu0 0
  %5896 = vmatpush.bf16.msra.mxu0 %v5875
  %5897 = vmatpush.bf16.msra.mxu0 %v5874
  %5898 = vmatpush.bf16.msra.mxu0 %v5873
  %5899 = vmatpush.bf16.msra.mxu0 %v5872
  %5900 = vmatmul.bf16.gmra.mxu0 %v5881
  %v5901 = vpop.f32.mrf.mxu0
  %v5902 = vadd.f32 0.0, %v5901
  %v5903 = vpop.f32.mrf.mxu0
  %v5904 = vadd.f32 0.0, %v5903
  %5905 = vmatmul.bf16.gmra.mxu0 %v5884
  %v5906 = vpop.f32.mrf.mxu0
  %v5907 = vadd.f32 0.0, %v5906
  %v5908 = vpop.f32.mrf.mxu0
  %v5909 = vadd.f32 0.0, %v5908
  %5910 = vmatmul.bf16.gmra.mxu0 %v5887
  %v5911 = vpop.f32.mrf.mxu0
  %v5912 = vadd.f32 0.0, %v5911
  %v5913 = vpop.f32.mrf.mxu0
  %v5914 = vadd.f32 0.0, %v5913
  %5915 = vmatmul.bf16.gmra.mxu0 %v5890
  %v5916 = vpop.f32.mrf.mxu0
  %v5917 = vadd.f32 0.0, %v5916
  %v5918 = vpop.f32.mrf.mxu0
  %v5919 = vadd.f32 0.0, %v5918
  %5920 = vdwg.mxu0
  %v5921 = vld [vmem:[%s5436] sm:$0xff]
  %v5922 = vld [vmem:[%s5436 + $0x8] sm:$0xff]
  %v5923 = vld [vmem:[%s5436 + $0x10] sm:$0xff]
  %v5924 = vld [vmem:[%s5436 + $0x18] sm:$0xff]
  %v5925 = vld [vmem:[%s5436 + $0x20] sm:$0xff]
  %v5926 = vld [vmem:[%s5436 + $0x28] sm:$0xff]
  %v5927 = vld [vmem:[%s5436 + $0x30] sm:$0xff]
  %v5928 = vld [vmem:[%s5436 + $0x38] sm:$0xff]
  %v5929 = vadd.f32 %v5921, %v5902
  %v5930 = vadd.f32 %v5922, %v5904
  %v5931 = vadd.f32 %v5923, %v5907
  %v5932 = vadd.f32 %v5924, %v5909
  %v5933 = vadd.f32 %v5925, %v5912
  %v5934 = vadd.f32 %v5926, %v5914
  %v5935 = vadd.f32 %v5927, %v5917
  %v5936 = vadd.f32 %v5928, %v5919
  %5937 = vst.msk [vmem:[%s5436] sm:$0xff] %vm4360, %v5929
  %5938 = vst.msk [vmem:[%s5436 + $0x8] sm:$0xff] %vm4360, %v5930
  %5939 = vst.msk [vmem:[%s5436 + $0x10] sm:$0xff] %vm4360, %v5931
  %5940 = vst.msk [vmem:[%s5436 + $0x18] sm:$0xff] %vm4360, %v5932
  %5941 = vst.msk [vmem:[%s5436 + $0x20] sm:$0xff] %vm4360, %v5933
  %5942 = vst.msk [vmem:[%s5436 + $0x28] sm:$0xff] %vm4360, %v5934
  %5943 = vst.msk [vmem:[%s5436 + $0x30] sm:$0xff] %vm4360, %v5935
  %5944 = vst.msk [vmem:[%s5436 + $0x38] sm:$0xff] %vm4360, %v5936
  %v5945 = vld [vmem:[%s2159 + $0x8] sm:$0xf]
  %v5946 = vld [vmem:[%s2159 + $0xc] sm:$0xf]
  %v5947 = vld [vmem:[%s2159 + $0x10] sm:$0xf]
  %v5948 = vld [vmem:[%s2159 + $0x14] sm:$0xf]
  %v5949 = vld [vmem:[%s2159 + $0x18] sm:$0xf]
  %v5950 = vld [vmem:[%s2159 + $0x1c] sm:$0xf]
  %v5951 = vld [vmem:[%s2159 + $0x20] sm:$0xf]
  %v5952 = vld [vmem:[%s2159 + $0x24] sm:$0xf]
  %v5953 = vld [vmem:[%s4922] sm:$0xf]
  %v5954 = vld [vmem:[%s4922 + $0x4] sm:$0xf]
  %v5955 = vld [vmem:[%s4922 + $0x8] sm:$0xf]
  %v5956 = vld [vmem:[%s4922 + $0xc] sm:$0xf]
  %v5957 = vld [vmem:[%s4922 + $0x10] sm:$0xf]
  %v5958 = vld [vmem:[%s4922 + $0x14] sm:$0xf]
  %v5959 = vld [vmem:[%s4922 + $0x18] sm:$0xf]
  %v5960 = vld [vmem:[%s4922 + $0x1c] sm:$0xf]
  %v5969 = vunpack.c.l.b16 %v5945
  %v5970 = vunpack.c.l.b16 %v5946
  %v5971 = vunpack.c.l.b16 %v5947
  %v5972 = vunpack.c.l.b16 %v5948
  %v5973 = vunpack.c.l.b16 %v5949
  %v5974 = vunpack.c.l.b16 %v5950
  %v5975 = vunpack.c.l.b16 %v5951
  %v5976 = vunpack.c.l.b16 %v5952
  %v5977 = vpack.c.b16 %v5970, %v5969
  %v5978 = vpack.c.b16 %v5972, %v5971
  %v5979 = vpack.c.b16 %v5974, %v5973
  %v5980 = vpack.c.b16 %v5976, %v5975
  %v5989 = vunpack.c.l.b16 %v5953
  %v5990 = vunpack.c.l.b16 %v5954
  %v5991 = vunpack.c.l.b16 %v5955
  %v5992 = vunpack.c.l.b16 %v5956
  %v5993 = vunpack.c.l.b16 %v5957
  %v5994 = vunpack.c.l.b16 %v5958
  %v5995 = vunpack.c.l.b16 %v5959
  %v5996 = vunpack.c.l.b16 %v5960
  %v5997 = vpack.c.b16 %v5990, %v5989
  %v5998 = vpack.c.b16 %v5992, %v5991
  %v5999 = vpack.c.b16 %v5994, %v5993
  %v6000 = vpack.c.b16 %v5996, %v5995
  %v6006 = vsel %vm4360, %v5977, 0
  %v6009 = vsel %vm4360, %v5978, 0
  %v6012 = vsel %vm4360, %v5979, 0
  %v6015 = vsel %vm4360, %v5980, 0
  %6017 = vmatpush.bf16.msra.mxu0 0
  %6018 = vmatpush.bf16.msra.mxu0 0
  %6019 = vmatpush.bf16.msra.mxu0 0
  %6020 = vmatpush.bf16.msra.mxu0 0
  %6021 = vmatpush.bf16.msra.mxu0 %v6000
  %6022 = vmatpush.bf16.msra.mxu0 %v5999
  %6023 = vmatpush.bf16.msra.mxu0 %v5998
  %6024 = vmatpush.bf16.msra.mxu0 %v5997
  %6025 = vmatmul.bf16.gmra.mxu0 %v6006
  %v6026 = vpop.f32.mrf.mxu0
  %v6027 = vadd.f32 0.0, %v6026
  %v6028 = vpop.f32.mrf.mxu0
  %v6029 = vadd.f32 0.0, %v6028
  %6030 = vmatmul.bf16.gmra.mxu0 %v6009
  %v6031 = vpop.f32.mrf.mxu0
  %v6032 = vadd.f32 0.0, %v6031
  %v6033 = vpop.f32.mrf.mxu0
  %v6034 = vadd.f32 0.0, %v6033
  %6035 = vmatmul.bf16.gmra.mxu0 %v6012
  %v6036 = vpop.f32.mrf.mxu0
  %v6037 = vadd.f32 0.0, %v6036
  %v6038 = vpop.f32.mrf.mxu0
  %v6039 = vadd.f32 0.0, %v6038
  %6040 = vmatmul.bf16.gmra.mxu0 %v6015
  %v6041 = vpop.f32.mrf.mxu0
  %v6042 = vadd.f32 0.0, %v6041
  %v6043 = vpop.f32.mrf.mxu0
  %v6044 = vadd.f32 0.0, %v6043
  %6045 = vdwg.mxu0
  %v6046 = vld [vmem:[%s5436] sm:$0xff]
  %v6047 = vld [vmem:[%s5436 + $0x8] sm:$0xff]
  %v6048 = vld [vmem:[%s5436 + $0x10] sm:$0xff]
  %v6049 = vld [vmem:[%s5436 + $0x18] sm:$0xff]
  %v6050 = vld [vmem:[%s5436 + $0x20] sm:$0xff]
  %v6051 = vld [vmem:[%s5436 + $0x28] sm:$0xff]
  %v6052 = vld [vmem:[%s5436 + $0x30] sm:$0xff]
  %v6053 = vld [vmem:[%s5436 + $0x38] sm:$0xff]
  %v6054 = vadd.f32 %v6046, %v6027
  %v6055 = vadd.f32 %v6047, %v6029
  %v6056 = vadd.f32 %v6048, %v6032
  %v6057 = vadd.f32 %v6049, %v6034
  %v6058 = vadd.f32 %v6050, %v6037
  %v6059 = vadd.f32 %v6051, %v6039
  %v6060 = vadd.f32 %v6052, %v6042
  %v6061 = vadd.f32 %v6053, %v6044
  %6062 = vst.msk [vmem:[%s5436] sm:$0xff] %vm4360, %v6054
  %6063 = vst.msk [vmem:[%s5436 + $0x8] sm:$0xff] %vm4360, %v6055
  %6064 = vst.msk [vmem:[%s5436 + $0x10] sm:$0xff] %vm4360, %v6056
  %6065 = vst.msk [vmem:[%s5436 + $0x18] sm:$0xff] %vm4360, %v6057
  %6066 = vst.msk [vmem:[%s5436 + $0x20] sm:$0xff] %vm4360, %v6058
  %6067 = vst.msk [vmem:[%s5436 + $0x28] sm:$0xff] %vm4360, %v6059
  %6068 = vst.msk [vmem:[%s5436 + $0x30] sm:$0xff] %vm4360, %v6060
  %6069 = vst.msk [vmem:[%s5436 + $0x38] sm:$0xff] %vm4360, %v6061
  %v6070 = vld [vmem:[%s2585] sm:$0xf]
  %v6071 = vld [vmem:[%s2585 + $0x4] sm:$0xf]
  %v6072 = vld [vmem:[%s2585 + $0x8] sm:$0xf]
  %v6073 = vld [vmem:[%s2585 + $0xc] sm:$0xf]
  %v6074 = vld [vmem:[%s2585 + $0x10] sm:$0xf]
  %v6075 = vld [vmem:[%s2585 + $0x14] sm:$0xf]
  %v6076 = vld [vmem:[%s2585 + $0x18] sm:$0xf]
  %v6077 = vld [vmem:[%s2585 + $0x1c] sm:$0xf]
  %v6078 = vld [vmem:[%s5048] sm:$0xf]
  %v6079 = vld [vmem:[%s5048 + $0x4] sm:$0xf]
  %v6080 = vld [vmem:[%s5048 + $0x8] sm:$0xf]
  %v6081 = vld [vmem:[%s5048 + $0xc] sm:$0xf]
  %v6082 = vld [vmem:[%s5048 + $0x10] sm:$0xf]
  %v6083 = vld [vmem:[%s5048 + $0x14] sm:$0xf]
  %v6084 = vld [vmem:[%s5048 + $0x18] sm:$0xf]
  %v6085 = vld [vmem:[%s5048 + $0x1c] sm:$0xf]
  %v6094 = vunpack.c.l.b16 %v6070
  %v6095 = vunpack.c.l.b16 %v6071
  %v6096 = vunpack.c.l.b16 %v6072
  %v6097 = vunpack.c.l.b16 %v6073
  %v6098 = vunpack.c.l.b16 %v6074
  %v6099 = vunpack.c.l.b16 %v6075
  %v6100 = vunpack.c.l.b16 %v6076
  %v6101 = vunpack.c.l.b16 %v6077
  %v6102 = vpack.c.b16 %v6095, %v6094
  %v6103 = vpack.c.b16 %v6097, %v6096
  %v6104 = vpack.c.b16 %v6099, %v6098
  %v6105 = vpack.c.b16 %v6101, %v6100
  %v6114 = vunpack.c.l.b16 %v6078
  %v6115 = vunpack.c.l.b16 %v6079
  %v6116 = vunpack.c.l.b16 %v6080
  %v6117 = vunpack.c.l.b16 %v6081
  %v6118 = vunpack.c.l.b16 %v6082
  %v6119 = vunpack.c.l.b16 %v6083
  %v6120 = vunpack.c.l.b16 %v6084
  %v6121 = vunpack.c.l.b16 %v6085
  %v6122 = vpack.c.b16 %v6115, %v6114
  %v6123 = vpack.c.b16 %v6117, %v6116
  %v6124 = vpack.c.b16 %v6119, %v6118
  %v6125 = vpack.c.b16 %v6121, %v6120
  %v6131 = vsel %vm4360, %v6102, 0
  %v6134 = vsel %vm4360, %v6103, 0
  %v6137 = vsel %vm4360, %v6104, 0
  %v6140 = vsel %vm4360, %v6105, 0
  %6142 = vmatpush.bf16.msra.mxu0 0
  %6143 = vmatpush.bf16.msra.mxu0 0
  %6144 = vmatpush.bf16.msra.mxu0 0
  %6145 = vmatpush.bf16.msra.mxu0 0
  %6146 = vmatpush.bf16.msra.mxu0 %v6125
  %6147 = vmatpush.bf16.msra.mxu0 %v6124
  %6148 = vmatpush.bf16.msra.mxu0 %v6123
  %6149 = vmatpush.bf16.msra.mxu0 %v6122
  %6150 = vmatmul.bf16.gmra.mxu0 %v6131
  %v6151 = vpop.f32.mrf.mxu0
  %v6152 = vadd.f32 0.0, %v6151
  %v6153 = vpop.f32.mrf.mxu0
  %v6154 = vadd.f32 0.0, %v6153
  %6155 = vmatmul.bf16.gmra.mxu0 %v6134
  %v6156 = vpop.f32.mrf.mxu0
  %v6157 = vadd.f32 0.0, %v6156
  %v6158 = vpop.f32.mrf.mxu0
  %v6159 = vadd.f32 0.0, %v6158
  %6160 = vmatmul.bf16.gmra.mxu0 %v6137
  %v6161 = vpop.f32.mrf.mxu0
  %v6162 = vadd.f32 0.0, %v6161
  %v6163 = vpop.f32.mrf.mxu0
  %v6164 = vadd.f32 0.0, %v6163
  %6165 = vmatmul.bf16.gmra.mxu0 %v6140
  %v6166 = vpop.f32.mrf.mxu0
  %v6167 = vadd.f32 0.0, %v6166
  %v6168 = vpop.f32.mrf.mxu0
  %v6169 = vadd.f32 0.0, %v6168
  %6170 = vdwg.mxu0
  %v6171 = vld [vmem:[%s5436] sm:$0xff]
  %v6172 = vld [vmem:[%s5436 + $0x8] sm:$0xff]
  %v6173 = vld [vmem:[%s5436 + $0x10] sm:$0xff]
  %v6174 = vld [vmem:[%s5436 + $0x18] sm:$0xff]
  %v6175 = vld [vmem:[%s5436 + $0x20] sm:$0xff]
  %v6176 = vld [vmem:[%s5436 + $0x28] sm:$0xff]
  %v6177 = vld [vmem:[%s5436 + $0x30] sm:$0xff]
  %v6178 = vld [vmem:[%s5436 + $0x38] sm:$0xff]
  %v6179 = vadd.f32 %v6171, %v6152
  %v6180 = vadd.f32 %v6172, %v6154
  %v6181 = vadd.f32 %v6173, %v6157
  %v6182 = vadd.f32 %v6174, %v6159
  %v6183 = vadd.f32 %v6175, %v6162
  %v6184 = vadd.f32 %v6176, %v6164
  %v6185 = vadd.f32 %v6177, %v6167
  %v6186 = vadd.f32 %v6178, %v6169
  %6187 = vst.msk [vmem:[%s5436] sm:$0xff] %vm4360, %v6179
  %6188 = vst.msk [vmem:[%s5436 + $0x8] sm:$0xff] %vm4360, %v6180
  %6189 = vst.msk [vmem:[%s5436 + $0x10] sm:$0xff] %vm4360, %v6181
  %6190 = vst.msk [vmem:[%s5436 + $0x18] sm:$0xff] %vm4360, %v6182
  %6191 = vst.msk [vmem:[%s5436 + $0x20] sm:$0xff] %vm4360, %v6183
  %6192 = vst.msk [vmem:[%s5436 + $0x28] sm:$0xff] %vm4360, %v6184
  %6193 = vst.msk [vmem:[%s5436 + $0x30] sm:$0xff] %vm4360, %v6185
  %6194 = vst.msk [vmem:[%s5436 + $0x38] sm:$0xff] %vm4360, %v6186
  %v6195 = vld [vmem:[%s2585 + $0x8] sm:$0xf]
  %v6196 = vld [vmem:[%s2585 + $0xc] sm:$0xf]
  %v6197 = vld [vmem:[%s2585 + $0x10] sm:$0xf]
  %v6198 = vld [vmem:[%s2585 + $0x14] sm:$0xf]
  %v6199 = vld [vmem:[%s2585 + $0x18] sm:$0xf]
  %v6200 = vld [vmem:[%s2585 + $0x1c] sm:$0xf]
  %v6201 = vld [vmem:[%s2585 + $0x20] sm:$0xf]
  %v6202 = vld [vmem:[%s2585 + $0x24] sm:$0xf]
  %v6203 = vld [vmem:[%s5174] sm:$0xf]
  %v6204 = vld [vmem:[%s5174 + $0x4] sm:$0xf]
  %v6205 = vld [vmem:[%s5174 + $0x8] sm:$0xf]
  %v6206 = vld [vmem:[%s5174 + $0xc] sm:$0xf]
  %v6207 = vld [vmem:[%s5174 + $0x10] sm:$0xf]
  %v6208 = vld [vmem:[%s5174 + $0x14] sm:$0xf]
  %v6209 = vld [vmem:[%s5174 + $0x18] sm:$0xf]
  %v6210 = vld [vmem:[%s5174 + $0x1c] sm:$0xf]
  %v6219 = vunpack.c.l.b16 %v6195
  %v6220 = vunpack.c.l.b16 %v6196
  %v6221 = vunpack.c.l.b16 %v6197
  %v6222 = vunpack.c.l.b16 %v6198
  %v6223 = vunpack.c.l.b16 %v6199
  %v6224 = vunpack.c.l.b16 %v6200
  %v6225 = vunpack.c.l.b16 %v6201
  %v6226 = vunpack.c.l.b16 %v6202
  %v6227 = vpack.c.b16 %v6220, %v6219
  %v6228 = vpack.c.b16 %v6222, %v6221
  %v6229 = vpack.c.b16 %v6224, %v6223
  %v6230 = vpack.c.b16 %v6226, %v6225
  %v6239 = vunpack.c.l.b16 %v6203
  %v6240 = vunpack.c.l.b16 %v6204
  %v6241 = vunpack.c.l.b16 %v6205
  %v6242 = vunpack.c.l.b16 %v6206
  %v6243 = vunpack.c.l.b16 %v6207
  %v6244 = vunpack.c.l.b16 %v6208
  %v6245 = vunpack.c.l.b16 %v6209
  %v6246 = vunpack.c.l.b16 %v6210
  %v6247 = vpack.c.b16 %v6240, %v6239
  %v6248 = vpack.c.b16 %v6242, %v6241
  %v6249 = vpack.c.b16 %v6244, %v6243
  %v6250 = vpack.c.b16 %v6246, %v6245
  %v6256 = vsel %vm4360, %v6227, 0
  %v6259 = vsel %vm4360, %v6228, 0
  %v6262 = vsel %vm4360, %v6229, 0
  %v6265 = vsel %vm4360, %v6230, 0
  %6267 = vmatpush.bf16.msra.mxu0 0
  %6268 = vmatpush.bf16.msra.mxu0 0
  %6269 = vmatpush.bf16.msra.mxu0 0
  %6270 = vmatpush.bf16.msra.mxu0 0
  %6271 = vmatpush.bf16.msra.mxu0 %v6250
  %6272 = vmatpush.bf16.msra.mxu0 %v6249
  %6273 = vmatpush.bf16.msra.mxu0 %v6248
  %6274 = vmatpush.bf16.msra.mxu0 %v6247
  %6275 = vmatmul.bf16.gmra.mxu0 %v6256
  %v6276 = vpop.f32.mrf.mxu0
  %v6277 = vadd.f32 0.0, %v6276
  %v6278 = vpop.f32.mrf.mxu0
  %v6279 = vadd.f32 0.0, %v6278
  %6280 = vmatmul.bf16.gmra.mxu0 %v6259
  %v6281 = vpop.f32.mrf.mxu0
  %v6282 = vadd.f32 0.0, %v6281
  %v6283 = vpop.f32.mrf.mxu0
  %v6284 = vadd.f32 0.0, %v6283
  %6285 = vmatmul.bf16.gmra.mxu0 %v6262
  %v6286 = vpop.f32.mrf.mxu0
  %v6287 = vadd.f32 0.0, %v6286
  %v6288 = vpop.f32.mrf.mxu0
  %v6289 = vadd.f32 0.0, %v6288
  %6290 = vmatmul.bf16.gmra.mxu0 %v6265
  %v6291 = vpop.f32.mrf.mxu0
  %v6292 = vadd.f32 0.0, %v6291
  %v6293 = vpop.f32.mrf.mxu0
  %v6294 = vadd.f32 0.0, %v6293
  %6295 = vdwg.mxu0
  %v6296 = vld [vmem:[%s5436] sm:$0xff]
  %v6297 = vld [vmem:[%s5436 + $0x8] sm:$0xff]
  %v6298 = vld [vmem:[%s5436 + $0x10] sm:$0xff]
  %v6299 = vld [vmem:[%s5436 + $0x18] sm:$0xff]
  %v6300 = vld [vmem:[%s5436 + $0x20] sm:$0xff]
  %v6301 = vld [vmem:[%s5436 + $0x28] sm:$0xff]
  %v6302 = vld [vmem:[%s5436 + $0x30] sm:$0xff]
  %v6303 = vld [vmem:[%s5436 + $0x38] sm:$0xff]
  %v6304 = vadd.f32 %v6296, %v6277
  %v6305 = vadd.f32 %v6297, %v6279
  %v6306 = vadd.f32 %v6298, %v6282
  %v6307 = vadd.f32 %v6299, %v6284
  %v6308 = vadd.f32 %v6300, %v6287
  %v6309 = vadd.f32 %v6301, %v6289
  %v6310 = vadd.f32 %v6302, %v6292
  %v6311 = vadd.f32 %v6303, %v6294
  %6312 = vst.msk [vmem:[%s5436] sm:$0xff] %vm4360, %v6304
  %6313 = vst.msk [vmem:[%s5436 + $0x8] sm:$0xff] %vm4360, %v6305
  %6314 = vst.msk [vmem:[%s5436 + $0x10] sm:$0xff] %vm4360, %v6306
  %6315 = vst.msk [vmem:[%s5436 + $0x18] sm:$0xff] %vm4360, %v6307
  %6316 = vst.msk [vmem:[%s5436 + $0x20] sm:$0xff] %vm4360, %v6308
  %6317 = vst.msk [vmem:[%s5436 + $0x28] sm:$0xff] %vm4360, %v6309
  %6318 = vst.msk [vmem:[%s5436 + $0x30] sm:$0xff] %vm4360, %v6310
  %6319 = vst.msk [vmem:[%s5436 + $0x38] sm:$0xff] %vm4360, %v6311
  %v6320 = vld [vmem:[%s5436] sm:$0xff]
  %v6321 = vld [vmem:[%s5436 + $0x8] sm:$0xff]
  %v6322 = vld [vmem:[%s5436 + $0x10] sm:$0xff]
  %v6323 = vld [vmem:[%s5436 + $0x18] sm:$0xff]
  %v6324 = vld [vmem:[%s5436 + $0x20] sm:$0xff]
  %v6325 = vld [vmem:[%s5436 + $0x28] sm:$0xff]
  %v6326 = vld [vmem:[%s5436 + $0x30] sm:$0xff]
  %v6327 = vld [vmem:[%s5436 + $0x38] sm:$0xff]
  %v6328 = vadd.f32 %v6320, %v5301
  %v6329 = vadd.f32 %v6321, %v5301
  %v6330 = vadd.f32 %v6322, %v5301
  %v6331 = vadd.f32 %v6323, %v5301
  %v6332 = vadd.f32 %v6324, %v5301
  %v6333 = vadd.f32 %v6325, %v5301
  %v6334 = vadd.f32 %v6326, %v5301
  %v6335 = vadd.f32 %v6327, %v5301
  %v6336 = vmax.f32 %v6328, 0.0
  %v6337 = vmax.f32 %v6329, 0.0
  %v6338 = vmax.f32 %v6330, 0.0
  %v6339 = vmax.f32 %v6331, 0.0
  %v6340 = vmax.f32 %v6332, 0.0
  %v6341 = vmax.f32 %v6333, 0.0
  %v6342 = vmax.f32 %v6334, 0.0
  %v6343 = vmax.f32 %v6335, 0.0
  %v6344 = vpack.c.bf16 %v6336, %v6336
  %v6345 = vpack.c.bf16 %v6337, %v6337
  %v6346 = vpack.c.bf16 %v6338, %v6338
  %v6347 = vpack.c.bf16 %v6339, %v6339
  %v6348 = vpack.c.bf16 %v6340, %v6340
  %v6349 = vpack.c.bf16 %v6341, %v6341
  %v6350 = vpack.c.bf16 %v6342, %v6342
  %v6351 = vpack.c.bf16 %v6343, %v6343
  %s6352 = scalar_lea.vmem [#allocation4], 32
  %6353 = vst.msk [vmem:[%s6352] sm:$0xf] %vm455, %v6344
  %6354 = vst.msk [vmem:[%s6352 + $0x4] sm:$0xf] %vm455, %v6345
  %6355 = vst.msk [vmem:[%s6352 + $0x8] sm:$0xf] %vm455, %v6346
  %6356 = vst.msk [vmem:[%s6352 + $0xc] sm:$0xf] %vm455, %v6347
  %6357 = vst.msk [vmem:[%s6352 + $0x10] sm:$0xf] %vm455, %v6348
  %6358 = vst.msk [vmem:[%s6352 + $0x14] sm:$0xf] %vm455, %v6349
  %6359 = vst.msk [vmem:[%s6352 + $0x18] sm:$0xf] %vm455, %v6350
  %6360 = vst.msk [vmem:[%s6352 + $0x1c] sm:$0xf] %vm455, %v6351
  %v6361 = vld [vmem:[%s2159] sm:$0xf]
  %v6362 = vld [vmem:[%s2159 + $0x4] sm:$0xf]
  %v6363 = vld [vmem:[%s2159 + $0x8] sm:$0xf]
  %v6364 = vld [vmem:[%s2159 + $0xc] sm:$0xf]
  %v6365 = vld [vmem:[%s2159 + $0x10] sm:$0xf]
  %v6366 = vld [vmem:[%s2159 + $0x14] sm:$0xf]
  %v6367 = vld [vmem:[%s2159 + $0x18] sm:$0xf]
  %v6368 = vld [vmem:[%s2159 + $0x1c] sm:$0xf]
  %v6369 = vld [vmem:[%s3] sm:$0xf]
  %v6370 = vld [vmem:[%s3 + $0x4] sm:$0xf]
  %v6371 = vld [vmem:[%s3 + $0x8] sm:$0xf]
  %v6372 = vld [vmem:[%s3 + $0xc] sm:$0xf]
  %v6373 = vld [vmem:[%s3 + $0x10] sm:$0xf]
  %v6374 = vld [vmem:[%s3 + $0x14] sm:$0xf]
  %v6375 = vld [vmem:[%s3 + $0x18] sm:$0xf]
  %v6376 = vld [vmem:[%s3 + $0x1c] sm:$0xf]
  %v6385 = vunpack.c.l.b16 %v6361
  %v6386 = vunpack.c.l.b16 %v6362
  %v6387 = vunpack.c.l.b16 %v6363
  %v6388 = vunpack.c.l.b16 %v6364
  %v6389 = vunpack.c.l.b16 %v6365
  %v6390 = vunpack.c.l.b16 %v6366
  %v6391 = vunpack.c.l.b16 %v6367
  %v6392 = vunpack.c.l.b16 %v6368
  %v6393 = vpack.c.b16 %v6386, %v6385
  %v6394 = vpack.c.b16 %v6388, %v6387
  %v6395 = vpack.c.b16 %v6390, %v6389
  %v6396 = vpack.c.b16 %v6392, %v6391
  %v6405 = vunpack.c.l.b16 %v6369
  %v6406 = vunpack.c.l.b16 %v6370
  %v6407 = vunpack.c.l.b16 %v6371
  %v6408 = vunpack.c.l.b16 %v6372
  %v6409 = vunpack.c.l.b16 %v6373
  %v6410 = vunpack.c.l.b16 %v6374
  %v6411 = vunpack.c.l.b16 %v6375
  %v6412 = vunpack.c.l.b16 %v6376
  %v6413 = vpack.c.b16 %v6406, %v6405
  %v6414 = vpack.c.b16 %v6408, %v6407
  %v6415 = vpack.c.b16 %v6410, %v6409
  %v6416 = vpack.c.b16 %v6412, %v6411
  %v6422 = vsel %vm4360, %v6393, 0
  %v6425 = vsel %vm4360, %v6394, 0
  %v6428 = vsel %vm4360, %v6395, 0
  %v6431 = vsel %vm4360, %v6396, 0
  %6433 = vmatpush.bf16.msra.mxu0 0
  %6434 = vmatpush.bf16.msra.mxu0 0
  %6435 = vmatpush.bf16.msra.mxu0 0
  %6436 = vmatpush.bf16.msra.mxu0 0
  %6437 = vmatpush.bf16.msra.mxu0 %v6416
  %6438 = vmatpush.bf16.msra.mxu0 %v6415
  %6439 = vmatpush.bf16.msra.mxu0 %v6414
  %6440 = vmatpush.bf16.msra.mxu0 %v6413
  %6441 = vmatmul.bf16.gmra.mxu0 %v6422
  %v6442 = vpop.f32.mrf.mxu0
  %v6443 = vadd.f32 0.0, %v6442
  %v6444 = vpop.f32.mrf.mxu0
  %v6445 = vadd.f32 0.0, %v6444
  %6446 = vmatmul.bf16.gmra.mxu0 %v6425
  %v6447 = vpop.f32.mrf.mxu0
  %v6448 = vadd.f32 0.0, %v6447
  %v6449 = vpop.f32.mrf.mxu0
  %v6450 = vadd.f32 0.0, %v6449
  %6451 = vmatmul.bf16.gmra.mxu0 %v6428
  %v6452 = vpop.f32.mrf.mxu0
  %v6453 = vadd.f32 0.0, %v6452
  %v6454 = vpop.f32.mrf.mxu0
  %v6455 = vadd.f32 0.0, %v6454
  %6456 = vmatmul.bf16.gmra.mxu0 %v6431
  %v6457 = vpop.f32.mrf.mxu0
  %v6458 = vadd.f32 0.0, %v6457
  %v6459 = vpop.f32.mrf.mxu0
  %v6460 = vadd.f32 0.0, %v6459
  %6461 = vdwg.mxu0
  %s6462 = scalar_lea.vmem [#allocation3], 128
  %6463 = vst.msk [vmem:[%s6462] sm:$0xff] %vm4360, %v6443
  %6464 = vst.msk [vmem:[%s6462 + $0x8] sm:$0xff] %vm4360, %v6445
  %6465 = vst.msk [vmem:[%s6462 + $0x10] sm:$0xff] %vm4360, %v6448
  %6466 = vst.msk [vmem:[%s6462 + $0x18] sm:$0xff] %vm4360, %v6450
  %6467 = vst.msk [vmem:[%s6462 + $0x20] sm:$0xff] %vm4360, %v6453
  %6468 = vst.msk [vmem:[%s6462 + $0x28] sm:$0xff] %vm4360, %v6455
  %6469 = vst.msk [vmem:[%s6462 + $0x30] sm:$0xff] %vm4360, %v6458
  %6470 = vst.msk [vmem:[%s6462 + $0x38] sm:$0xff] %vm4360, %v6460
  %v6471 = vld [vmem:[%s2159 + $0x8] sm:$0xf]
  %v6472 = vld [vmem:[%s2159 + $0xc] sm:$0xf]
  %v6473 = vld [vmem:[%s2159 + $0x10] sm:$0xf]
  %v6474 = vld [vmem:[%s2159 + $0x14] sm:$0xf]
  %v6475 = vld [vmem:[%s2159 + $0x18] sm:$0xf]
  %v6476 = vld [vmem:[%s2159 + $0x1c] sm:$0xf]
  %v6477 = vld [vmem:[%s2159 + $0x20] sm:$0xf]
  %v6478 = vld [vmem:[%s2159 + $0x24] sm:$0xf]
  %v6479 = vld [vmem:[%s4418] sm:$0xf]
  %v6480 = vld [vmem:[%s4418 + $0x4] sm:$0xf]
  %v6481 = vld [vmem:[%s4418 + $0x8] sm:$0xf]
  %v6482 = vld [vmem:[%s4418 + $0xc] sm:$0xf]
  %v6483 = vld [vmem:[%s4418 + $0x10] sm:$0xf]
  %v6484 = vld [vmem:[%s4418 + $0x14] sm:$0xf]
  %v6485 = vld [vmem:[%s4418 + $0x18] sm:$0xf]
  %v6486 = vld [vmem:[%s4418 + $0x1c] sm:$0xf]
  %v6495 = vunpack.c.l.b16 %v6471
  %v6496 = vunpack.c.l.b16 %v6472
  %v6497 = vunpack.c.l.b16 %v6473
  %v6498 = vunpack.c.l.b16 %v6474
  %v6499 = vunpack.c.l.b16 %v6475
  %v6500 = vunpack.c.l.b16 %v6476
  %v6501 = vunpack.c.l.b16 %v6477
  %v6502 = vunpack.c.l.b16 %v6478
  %v6503 = vpack.c.b16 %v6496, %v6495
  %v6504 = vpack.c.b16 %v6498, %v6497
  %v6505 = vpack.c.b16 %v6500, %v6499
  %v6506 = vpack.c.b16 %v6502, %v6501
  %v6515 = vunpack.c.l.b16 %v6479
  %v6516 = vunpack.c.l.b16 %v6480
  %v6517 = vunpack.c.l.b16 %v6481
  %v6518 = vunpack.c.l.b16 %v6482
  %v6519 = vunpack.c.l.b16 %v6483
  %v6520 = vunpack.c.l.b16 %v6484
  %v6521 = vunpack.c.l.b16 %v6485
  %v6522 = vunpack.c.l.b16 %v6486
  %v6523 = vpack.c.b16 %v6516, %v6515
  %v6524 = vpack.c.b16 %v6518, %v6517
  %v6525 = vpack.c.b16 %v6520, %v6519
  %v6526 = vpack.c.b16 %v6522, %v6521
  %v6532 = vsel %vm4360, %v6503, 0
  %v6535 = vsel %vm4360, %v6504, 0
  %v6538 = vsel %vm4360, %v6505, 0
  %v6541 = vsel %vm4360, %v6506, 0
  %6543 = vmatpush.bf16.msra.mxu0 0
  %6544 = vmatpush.bf16.msra.mxu0 0
  %6545 = vmatpush.bf16.msra.mxu0 0
  %6546 = vmatpush.bf16.msra.mxu0 0
  %6547 = vmatpush.bf16.msra.mxu0 %v6526
  %6548 = vmatpush.bf16.msra.mxu0 %v6525
  %6549 = vmatpush.bf16.msra.mxu0 %v6524
  %6550 = vmatpush.bf16.msra.mxu0 %v6523
  %6551 = vmatmul.bf16.gmra.mxu0 %v6532
  %v6552 = vpop.f32.mrf.mxu0
  %v6553 = vadd.f32 0.0, %v6552
  %v6554 = vpop.f32.mrf.mxu0
  %v6555 = vadd.f32 0.0, %v6554
  %6556 = vmatmul.bf16.gmra.mxu0 %v6535
  %v6557 = vpop.f32.mrf.mxu0
  %v6558 = vadd.f32 0.0, %v6557
  %v6559 = vpop.f32.mrf.mxu0
  %v6560 = vadd.f32 0.0, %v6559
  %6561 = vmatmul.bf16.gmra.mxu0 %v6538
  %v6562 = vpop.f32.mrf.mxu0
  %v6563 = vadd.f32 0.0, %v6562
  %v6564 = vpop.f32.mrf.mxu0
  %v6565 = vadd.f32 0.0, %v6564
  %6566 = vmatmul.bf16.gmra.mxu0 %v6541
  %v6567 = vpop.f32.mrf.mxu0
  %v6568 = vadd.f32 0.0, %v6567
  %v6569 = vpop.f32.mrf.mxu0
  %v6570 = vadd.f32 0.0, %v6569
  %6571 = vdwg.mxu0
  %v6572 = vld [vmem:[%s6462] sm:$0xff]
  %v6573 = vld [vmem:[%s6462 + $0x8] sm:$0xff]
  %v6574 = vld [vmem:[%s6462 + $0x10] sm:$0xff]
  %v6575 = vld [vmem:[%s6462 + $0x18] sm:$0xff]
  %v6576 = vld [vmem:[%s6462 + $0x20] sm:$0xff]
  %v6577 = vld [vmem:[%s6462 + $0x28] sm:$0xff]
  %v6578 = vld [vmem:[%s6462 + $0x30] sm:$0xff]
  %v6579 = vld [vmem:[%s6462 + $0x38] sm:$0xff]
  %v6580 = vadd.f32 %v6572, %v6553
  %v6581 = vadd.f32 %v6573, %v6555
  %v6582 = vadd.f32 %v6574, %v6558
  %v6583 = vadd.f32 %v6575, %v6560
  %v6584 = vadd.f32 %v6576, %v6563
  %v6585 = vadd.f32 %v6577, %v6565
  %v6586 = vadd.f32 %v6578, %v6568
  %v6587 = vadd.f32 %v6579, %v6570
  %6588 = vst.msk [vmem:[%s6462] sm:$0xff] %vm4360, %v6580
  %6589 = vst.msk [vmem:[%s6462 + $0x8] sm:$0xff] %vm4360, %v6581
  %6590 = vst.msk [vmem:[%s6462 + $0x10] sm:$0xff] %vm4360, %v6582
  %6591 = vst.msk [vmem:[%s6462 + $0x18] sm:$0xff] %vm4360, %v6583
  %6592 = vst.msk [vmem:[%s6462 + $0x20] sm:$0xff] %vm4360, %v6584
  %6593 = vst.msk [vmem:[%s6462 + $0x28] sm:$0xff] %vm4360, %v6585
  %6594 = vst.msk [vmem:[%s6462 + $0x30] sm:$0xff] %vm4360, %v6586
  %6595 = vst.msk [vmem:[%s6462 + $0x38] sm:$0xff] %vm4360, %v6587
  %v6596 = vld [vmem:[%s2585] sm:$0xf]
  %v6597 = vld [vmem:[%s2585 + $0x4] sm:$0xf]
  %v6598 = vld [vmem:[%s2585 + $0x8] sm:$0xf]
  %v6599 = vld [vmem:[%s2585 + $0xc] sm:$0xf]
  %v6600 = vld [vmem:[%s2585 + $0x10] sm:$0xf]
  %v6601 = vld [vmem:[%s2585 + $0x14] sm:$0xf]
  %v6602 = vld [vmem:[%s2585 + $0x18] sm:$0xf]
  %v6603 = vld [vmem:[%s2585 + $0x1c] sm:$0xf]
  %v6604 = vld [vmem:[%s4544] sm:$0xf]
  %v6605 = vld [vmem:[%s4544 + $0x4] sm:$0xf]
  %v6606 = vld [vmem:[%s4544 + $0x8] sm:$0xf]
  %v6607 = vld [vmem:[%s4544 + $0xc] sm:$0xf]
  %v6608 = vld [vmem:[%s4544 + $0x10] sm:$0xf]
  %v6609 = vld [vmem:[%s4544 + $0x14] sm:$0xf]
  %v6610 = vld [vmem:[%s4544 + $0x18] sm:$0xf]
  %v6611 = vld [vmem:[%s4544 + $0x1c] sm:$0xf]
  %v6620 = vunpack.c.l.b16 %v6596
  %v6621 = vunpack.c.l.b16 %v6597
  %v6622 = vunpack.c.l.b16 %v6598
  %v6623 = vunpack.c.l.b16 %v6599
  %v6624 = vunpack.c.l.b16 %v6600
  %v6625 = vunpack.c.l.b16 %v6601
  %v6626 = vunpack.c.l.b16 %v6602
  %v6627 = vunpack.c.l.b16 %v6603
  %v6628 = vpack.c.b16 %v6621, %v6620
  %v6629 = vpack.c.b16 %v6623, %v6622
  %v6630 = vpack.c.b16 %v6625, %v6624
  %v6631 = vpack.c.b16 %v6627, %v6626
  %v6640 = vunpack.c.l.b16 %v6604
  %v6641 = vunpack.c.l.b16 %v6605
  %v6642 = vunpack.c.l.b16 %v6606
  %v6643 = vunpack.c.l.b16 %v6607
  %v6644 = vunpack.c.l.b16 %v6608
  %v6645 = vunpack.c.l.b16 %v6609
  %v6646 = vunpack.c.l.b16 %v6610
  %v6647 = vunpack.c.l.b16 %v6611
  %v6648 = vpack.c.b16 %v6641, %v6640
  %v6649 = vpack.c.b16 %v6643, %v6642
  %v6650 = vpack.c.b16 %v6645, %v6644
  %v6651 = vpack.c.b16 %v6647, %v6646
  %v6657 = vsel %vm4360, %v6628, 0
  %v6660 = vsel %vm4360, %v6629, 0
  %v6663 = vsel %vm4360, %v6630, 0
  %v6666 = vsel %vm4360, %v6631, 0
  %6668 = vmatpush.bf16.msra.mxu0 0
  %6669 = vmatpush.bf16.msra.mxu0 0
  %6670 = vmatpush.bf16.msra.mxu0 0
  %6671 = vmatpush.bf16.msra.mxu0 0
  %6672 = vmatpush.bf16.msra.mxu0 %v6651
  %6673 = vmatpush.bf16.msra.mxu0 %v6650
  %6674 = vmatpush.bf16.msra.mxu0 %v6649
  %6675 = vmatpush.bf16.msra.mxu0 %v6648
  %6676 = vmatmul.bf16.gmra.mxu0 %v6657
  %v6677 = vpop.f32.mrf.mxu0
  %v6678 = vadd.f32 0.0, %v6677
  %v6679 = vpop.f32.mrf.mxu0
  %v6680 = vadd.f32 0.0, %v6679
  %6681 = vmatmul.bf16.gmra.mxu0 %v6660
  %v6682 = vpop.f32.mrf.mxu0
  %v6683 = vadd.f32 0.0, %v6682
  %v6684 = vpop.f32.mrf.mxu0
  %v6685 = vadd.f32 0.0, %v6684
  %6686 = vmatmul.bf16.gmra.mxu0 %v6663
  %v6687 = vpop.f32.mrf.mxu0
  %v6688 = vadd.f32 0.0, %v6687
  %v6689 = vpop.f32.mrf.mxu0
  %v6690 = vadd.f32 0.0, %v6689
  %6691 = vmatmul.bf16.gmra.mxu0 %v6666
  %v6692 = vpop.f32.mrf.mxu0
  %v6693 = vadd.f32 0.0, %v6692
  %v6694 = vpop.f32.mrf.mxu0
  %v6695 = vadd.f32 0.0, %v6694
  %6696 = vdwg.mxu0
  %v6697 = vld [vmem:[%s6462] sm:$0xff]
  %v6698 = vld [vmem:[%s6462 + $0x8] sm:$0xff]
  %v6699 = vld [vmem:[%s6462 + $0x10] sm:$0xff]
  %v6700 = vld [vmem:[%s6462 + $0x18] sm:$0xff]
  %v6701 = vld [vmem:[%s6462 + $0x20] sm:$0xff]
  %v6702 = vld [vmem:[%s6462 + $0x28] sm:$0xff]
  %v6703 = vld [vmem:[%s6462 + $0x30] sm:$0xff]
  %v6704 = vld [vmem:[%s6462 + $0x38] sm:$0xff]
  %v6705 = vadd.f32 %v6697, %v6678
  %v6706 = vadd.f32 %v6698, %v6680
  %v6707 = vadd.f32 %v6699, %v6683
  %v6708 = vadd.f32 %v6700, %v6685
  %v6709 = vadd.f32 %v6701, %v6688
  %v6710 = vadd.f32 %v6702, %v6690
  %v6711 = vadd.f32 %v6703, %v6693
  %v6712 = vadd.f32 %v6704, %v6695
  %6713 = vst.msk [vmem:[%s6462] sm:$0xff] %vm4360, %v6705
  %6714 = vst.msk [vmem:[%s6462 + $0x8] sm:$0xff] %vm4360, %v6706
  %6715 = vst.msk [vmem:[%s6462 + $0x10] sm:$0xff] %vm4360, %v6707
  %6716 = vst.msk [vmem:[%s6462 + $0x18] sm:$0xff] %vm4360, %v6708
  %6717 = vst.msk [vmem:[%s6462 + $0x20] sm:$0xff] %vm4360, %v6709
  %6718 = vst.msk [vmem:[%s6462 + $0x28] sm:$0xff] %vm4360, %v6710
  %6719 = vst.msk [vmem:[%s6462 + $0x30] sm:$0xff] %vm4360, %v6711
  %6720 = vst.msk [vmem:[%s6462 + $0x38] sm:$0xff] %vm4360, %v6712
  %v6721 = vld [vmem:[%s2585 + $0x8] sm:$0xf]
  %v6722 = vld [vmem:[%s2585 + $0xc] sm:$0xf]
  %v6723 = vld [vmem:[%s2585 + $0x10] sm:$0xf]
  %v6724 = vld [vmem:[%s2585 + $0x14] sm:$0xf]
  %v6725 = vld [vmem:[%s2585 + $0x18] sm:$0xf]
  %v6726 = vld [vmem:[%s2585 + $0x1c] sm:$0xf]
  %v6727 = vld [vmem:[%s2585 + $0x20] sm:$0xf]
  %v6728 = vld [vmem:[%s2585 + $0x24] sm:$0xf]
  %v6729 = vld [vmem:[%s4670] sm:$0xf]
  %v6730 = vld [vmem:[%s4670 + $0x4] sm:$0xf]
  %v6731 = vld [vmem:[%s4670 + $0x8] sm:$0xf]
  %v6732 = vld [vmem:[%s4670 + $0xc] sm:$0xf]
  %v6733 = vld [vmem:[%s4670 + $0x10] sm:$0xf]
  %v6734 = vld [vmem:[%s4670 + $0x14] sm:$0xf]
  %v6735 = vld [vmem:[%s4670 + $0x18] sm:$0xf]
  %v6736 = vld [vmem:[%s4670 + $0x1c] sm:$0xf]
  %v6745 = vunpack.c.l.b16 %v6721
  %v6746 = vunpack.c.l.b16 %v6722
  %v6747 = vunpack.c.l.b16 %v6723
  %v6748 = vunpack.c.l.b16 %v6724
  %v6749 = vunpack.c.l.b16 %v6725
  %v6750 = vunpack.c.l.b16 %v6726
  %v6751 = vunpack.c.l.b16 %v6727
  %v6752 = vunpack.c.l.b16 %v6728
  %v6753 = vpack.c.b16 %v6746, %v6745
  %v6754 = vpack.c.b16 %v6748, %v6747
  %v6755 = vpack.c.b16 %v6750, %v6749
  %v6756 = vpack.c.b16 %v6752, %v6751
  %v6765 = vunpack.c.l.b16 %v6729
  %v6766 = vunpack.c.l.b16 %v6730
  %v6767 = vunpack.c.l.b16 %v6731
  %v6768 = vunpack.c.l.b16 %v6732
  %v6769 = vunpack.c.l.b16 %v6733
  %v6770 = vunpack.c.l.b16 %v6734
  %v6771 = vunpack.c.l.b16 %v6735
  %v6772 = vunpack.c.l.b16 %v6736
  %v6773 = vpack.c.b16 %v6766, %v6765
  %v6774 = vpack.c.b16 %v6768, %v6767
  %v6775 = vpack.c.b16 %v6770, %v6769
  %v6776 = vpack.c.b16 %v6772, %v6771
  %v6782 = vsel %vm4360, %v6753, 0
  %v6785 = vsel %vm4360, %v6754, 0
  %v6788 = vsel %vm4360, %v6755, 0
  %v6791 = vsel %vm4360, %v6756, 0
  %6793 = vmatpush.bf16.msra.mxu0 0
  %6794 = vmatpush.bf16.msra.mxu0 0
  %6795 = vmatpush.bf16.msra.mxu0 0
  %6796 = vmatpush.bf16.msra.mxu0 0
  %6797 = vmatpush.bf16.msra.mxu0 %v6776
  %6798 = vmatpush.bf16.msra.mxu0 %v6775
  %6799 = vmatpush.bf16.msra.mxu0 %v6774
  %6800 = vmatpush.bf16.msra.mxu0 %v6773
  %6801 = vmatmul.bf16.gmra.mxu0 %v6782
  %v6802 = vpop.f32.mrf.mxu0
  %v6803 = vadd.f32 0.0, %v6802
  %v6804 = vpop.f32.mrf.mxu0
  %v6805 = vadd.f32 0.0, %v6804
  %6806 = vmatmul.bf16.gmra.mxu0 %v6785
  %v6807 = vpop.f32.mrf.mxu0
  %v6808 = vadd.f32 0.0, %v6807
  %v6809 = vpop.f32.mrf.mxu0
  %v6810 = vadd.f32 0.0, %v6809
  %6811 = vmatmul.bf16.gmra.mxu0 %v6788
  %v6812 = vpop.f32.mrf.mxu0
  %v6813 = vadd.f32 0.0, %v6812
  %v6814 = vpop.f32.mrf.mxu0
  %v6815 = vadd.f32 0.0, %v6814
  %6816 = vmatmul.bf16.gmra.mxu0 %v6791
  %v6817 = vpop.f32.mrf.mxu0
  %v6818 = vadd.f32 0.0, %v6817
  %v6819 = vpop.f32.mrf.mxu0
  %v6820 = vadd.f32 0.0, %v6819
  %6821 = vdwg.mxu0
  %v6822 = vld [vmem:[%s6462] sm:$0xff]
  %v6823 = vld [vmem:[%s6462 + $0x8] sm:$0xff]
  %v6824 = vld [vmem:[%s6462 + $0x10] sm:$0xff]
  %v6825 = vld [vmem:[%s6462 + $0x18] sm:$0xff]
  %v6826 = vld [vmem:[%s6462 + $0x20] sm:$0xff]
  %v6827 = vld [vmem:[%s6462 + $0x28] sm:$0xff]
  %v6828 = vld [vmem:[%s6462 + $0x30] sm:$0xff]
  %v6829 = vld [vmem:[%s6462 + $0x38] sm:$0xff]
  %v6830 = vadd.f32 %v6822, %v6803
  %v6831 = vadd.f32 %v6823, %v6805
  %v6832 = vadd.f32 %v6824, %v6808
  %v6833 = vadd.f32 %v6825, %v6810
  %v6834 = vadd.f32 %v6826, %v6813
  %v6835 = vadd.f32 %v6827, %v6815
  %v6836 = vadd.f32 %v6828, %v6818
  %v6837 = vadd.f32 %v6829, %v6820
  %6838 = vst.msk [vmem:[%s6462] sm:$0xff] %vm4360, %v6830
  %6839 = vst.msk [vmem:[%s6462 + $0x8] sm:$0xff] %vm4360, %v6831
  %6840 = vst.msk [vmem:[%s6462 + $0x10] sm:$0xff] %vm4360, %v6832
  %6841 = vst.msk [vmem:[%s6462 + $0x18] sm:$0xff] %vm4360, %v6833
  %6842 = vst.msk [vmem:[%s6462 + $0x20] sm:$0xff] %vm4360, %v6834
  %6843 = vst.msk [vmem:[%s6462 + $0x28] sm:$0xff] %vm4360, %v6835
  %6844 = vst.msk [vmem:[%s6462 + $0x30] sm:$0xff] %vm4360, %v6836
  %6845 = vst.msk [vmem:[%s6462 + $0x38] sm:$0xff] %vm4360, %v6837
  %v6846 = vld [vmem:[%s3011] sm:$0xf]
  %v6847 = vld [vmem:[%s3011 + $0x4] sm:$0xf]
  %v6848 = vld [vmem:[%s3011 + $0x8] sm:$0xf]
  %v6849 = vld [vmem:[%s3011 + $0xc] sm:$0xf]
  %v6850 = vld [vmem:[%s3011 + $0x10] sm:$0xf]
  %v6851 = vld [vmem:[%s3011 + $0x14] sm:$0xf]
  %v6852 = vld [vmem:[%s3011 + $0x18] sm:$0xf]
  %v6853 = vld [vmem:[%s3011 + $0x1c] sm:$0xf]
  %v6854 = vld [vmem:[%s4796] sm:$0xf]
  %v6855 = vld [vmem:[%s4796 + $0x4] sm:$0xf]
  %v6856 = vld [vmem:[%s4796 + $0x8] sm:$0xf]
  %v6857 = vld [vmem:[%s4796 + $0xc] sm:$0xf]
  %v6858 = vld [vmem:[%s4796 + $0x10] sm:$0xf]
  %v6859 = vld [vmem:[%s4796 + $0x14] sm:$0xf]
  %v6860 = vld [vmem:[%s4796 + $0x18] sm:$0xf]
  %v6861 = vld [vmem:[%s4796 + $0x1c] sm:$0xf]
  %v6870 = vunpack.c.l.b16 %v6846
  %v6871 = vunpack.c.l.b16 %v6847
  %v6872 = vunpack.c.l.b16 %v6848
  %v6873 = vunpack.c.l.b16 %v6849
  %v6874 = vunpack.c.l.b16 %v6850
  %v6875 = vunpack.c.l.b16 %v6851
  %v6876 = vunpack.c.l.b16 %v6852
  %v6877 = vunpack.c.l.b16 %v6853
  %v6878 = vpack.c.b16 %v6871, %v6870
  %v6879 = vpack.c.b16 %v6873, %v6872
  %v6880 = vpack.c.b16 %v6875, %v6874
  %v6881 = vpack.c.b16 %v6877, %v6876
  %v6890 = vunpack.c.l.b16 %v6854
  %v6891 = vunpack.c.l.b16 %v6855
  %v6892 = vunpack.c.l.b16 %v6856
  %v6893 = vunpack.c.l.b16 %v6857
  %v6894 = vunpack.c.l.b16 %v6858
  %v6895 = vunpack.c.l.b16 %v6859
  %v6896 = vunpack.c.l.b16 %v6860
  %v6897 = vunpack.c.l.b16 %v6861
  %v6898 = vpack.c.b16 %v6891, %v6890
  %v6899 = vpack.c.b16 %v6893, %v6892
  %v6900 = vpack.c.b16 %v6895, %v6894
  %v6901 = vpack.c.b16 %v6897, %v6896
  %v6907 = vsel %vm4360, %v6878, 0
  %v6910 = vsel %vm4360, %v6879, 0
  %v6913 = vsel %vm4360, %v6880, 0
  %v6916 = vsel %vm4360, %v6881, 0
  %6918 = vmatpush.bf16.msra.mxu0 0
  %6919 = vmatpush.bf16.msra.mxu0 0
  %6920 = vmatpush.bf16.msra.mxu0 0
  %6921 = vmatpush.bf16.msra.mxu0 0
  %6922 = vmatpush.bf16.msra.mxu0 %v6901
  %6923 = vmatpush.bf16.msra.mxu0 %v6900
  %6924 = vmatpush.bf16.msra.mxu0 %v6899
  %6925 = vmatpush.bf16.msra.mxu0 %v6898
  %6926 = vmatmul.bf16.gmra.mxu0 %v6907
  %v6927 = vpop.f32.mrf.mxu0
  %v6928 = vadd.f32 0.0, %v6927
  %v6929 = vpop.f32.mrf.mxu0
  %v6930 = vadd.f32 0.0, %v6929
  %6931 = vmatmul.bf16.gmra.mxu0 %v6910
  %v6932 = vpop.f32.mrf.mxu0
  %v6933 = vadd.f32 0.0, %v6932
  %v6934 = vpop.f32.mrf.mxu0
  %v6935 = vadd.f32 0.0, %v6934
  %6936 = vmatmul.bf16.gmra.mxu0 %v6913
  %v6937 = vpop.f32.mrf.mxu0
  %v6938 = vadd.f32 0.0, %v6937
  %v6939 = vpop.f32.mrf.mxu0
  %v6940 = vadd.f32 0.0, %v6939
  %6941 = vmatmul.bf16.gmra.mxu0 %v6916
  %v6942 = vpop.f32.mrf.mxu0
  %v6943 = vadd.f32 0.0, %v6942
  %v6944 = vpop.f32.mrf.mxu0
  %v6945 = vadd.f32 0.0, %v6944
  %6946 = vdwg.mxu0
  %v6947 = vld [vmem:[%s6462] sm:$0xff]
  %v6948 = vld [vmem:[%s6462 + $0x8] sm:$0xff]
  %v6949 = vld [vmem:[%s6462 + $0x10] sm:$0xff]
  %v6950 = vld [vmem:[%s6462 + $0x18] sm:$0xff]
  %v6951 = vld [vmem:[%s6462 + $0x20] sm:$0xff]
  %v6952 = vld [vmem:[%s6462 + $0x28] sm:$0xff]
  %v6953 = vld [vmem:[%s6462 + $0x30] sm:$0xff]
  %v6954 = vld [vmem:[%s6462 + $0x38] sm:$0xff]
  %v6955 = vadd.f32 %v6947, %v6928
  %v6956 = vadd.f32 %v6948, %v6930
  %v6957 = vadd.f32 %v6949, %v6933
  %v6958 = vadd.f32 %v6950, %v6935
  %v6959 = vadd.f32 %v6951, %v6938
  %v6960 = vadd.f32 %v6952, %v6940
  %v6961 = vadd.f32 %v6953, %v6943
  %v6962 = vadd.f32 %v6954, %v6945
  %6963 = vst.msk [vmem:[%s6462] sm:$0xff] %vm4360, %v6955
  %6964 = vst.msk [vmem:[%s6462 + $0x8] sm:$0xff] %vm4360, %v6956
  %6965 = vst.msk [vmem:[%s6462 + $0x10] sm:$0xff] %vm4360, %v6957
  %6966 = vst.msk [vmem:[%s6462 + $0x18] sm:$0xff] %vm4360, %v6958
  %6967 = vst.msk [vmem:[%s6462 + $0x20] sm:$0xff] %vm4360, %v6959
  %6968 = vst.msk [vmem:[%s6462 + $0x28] sm:$0xff] %vm4360, %v6960
  %6969 = vst.msk [vmem:[%s6462 + $0x30] sm:$0xff] %vm4360, %v6961
  %6970 = vst.msk [vmem:[%s6462 + $0x38] sm:$0xff] %vm4360, %v6962
  %v6971 = vld [vmem:[%s3011 + $0x8] sm:$0xf]
  %v6972 = vld [vmem:[%s3011 + $0xc] sm:$0xf]
  %v6973 = vld [vmem:[%s3011 + $0x10] sm:$0xf]
  %v6974 = vld [vmem:[%s3011 + $0x14] sm:$0xf]
  %v6975 = vld [vmem:[%s3011 + $0x18] sm:$0xf]
  %v6976 = vld [vmem:[%s3011 + $0x1c] sm:$0xf]
  %v6977 = vld [vmem:[%s3011 + $0x20] sm:$0xf]
  %v6978 = vld [vmem:[%s3011 + $0x24] sm:$0xf]
  %v6979 = vld [vmem:[%s4922] sm:$0xf]
  %v6980 = vld [vmem:[%s4922 + $0x4] sm:$0xf]
  %v6981 = vld [vmem:[%s4922 + $0x8] sm:$0xf]
  %v6982 = vld [vmem:[%s4922 + $0xc] sm:$0xf]
  %v6983 = vld [vmem:[%s4922 + $0x10] sm:$0xf]
  %v6984 = vld [vmem:[%s4922 + $0x14] sm:$0xf]
  %v6985 = vld [vmem:[%s4922 + $0x18] sm:$0xf]
  %v6986 = vld [vmem:[%s4922 + $0x1c] sm:$0xf]
  %v6995 = vunpack.c.l.b16 %v6971
  %v6996 = vunpack.c.l.b16 %v6972
  %v6997 = vunpack.c.l.b16 %v6973
  %v6998 = vunpack.c.l.b16 %v6974
  %v6999 = vunpack.c.l.b16 %v6975
  %v7000 = vunpack.c.l.b16 %v6976
  %v7001 = vunpack.c.l.b16 %v6977
  %v7002 = vunpack.c.l.b16 %v6978
  %v7003 = vpack.c.b16 %v6996, %v6995
  %v7004 = vpack.c.b16 %v6998, %v6997
  %v7005 = vpack.c.b16 %v7000, %v6999
  %v7006 = vpack.c.b16 %v7002, %v7001
  %v7015 = vunpack.c.l.b16 %v6979
  %v7016 = vunpack.c.l.b16 %v6980
  %v7017 = vunpack.c.l.b16 %v6981
  %v7018 = vunpack.c.l.b16 %v6982
  %v7019 = vunpack.c.l.b16 %v6983
  %v7020 = vunpack.c.l.b16 %v6984
  %v7021 = vunpack.c.l.b16 %v6985
  %v7022 = vunpack.c.l.b16 %v6986
  %v7023 = vpack.c.b16 %v7016, %v7015
  %v7024 = vpack.c.b16 %v7018, %v7017
  %v7025 = vpack.c.b16 %v7020, %v7019
  %v7026 = vpack.c.b16 %v7022, %v7021
  %v7032 = vsel %vm4360, %v7003, 0
  %v7035 = vsel %vm4360, %v7004, 0
  %v7038 = vsel %vm4360, %v7005, 0
  %v7041 = vsel %vm4360, %v7006, 0
  %7043 = vmatpush.bf16.msra.mxu0 0
  %7044 = vmatpush.bf16.msra.mxu0 0
  %7045 = vmatpush.bf16.msra.mxu0 0
  %7046 = vmatpush.bf16.msra.mxu0 0
  %7047 = vmatpush.bf16.msra.mxu0 %v7026
  %7048 = vmatpush.bf16.msra.mxu0 %v7025
  %7049 = vmatpush.bf16.msra.mxu0 %v7024
  %7050 = vmatpush.bf16.msra.mxu0 %v7023
  %7051 = vmatmul.bf16.gmra.mxu0 %v7032
  %v7052 = vpop.f32.mrf.mxu0
  %v7053 = vadd.f32 0.0, %v7052
  %v7054 = vpop.f32.mrf.mxu0
  %v7055 = vadd.f32 0.0, %v7054
  %7056 = vmatmul.bf16.gmra.mxu0 %v7035
  %v7057 = vpop.f32.mrf.mxu0
  %v7058 = vadd.f32 0.0, %v7057
  %v7059 = vpop.f32.mrf.mxu0
  %v7060 = vadd.f32 0.0, %v7059
  %7061 = vmatmul.bf16.gmra.mxu0 %v7038
  %v7062 = vpop.f32.mrf.mxu0
  %v7063 = vadd.f32 0.0, %v7062
  %v7064 = vpop.f32.mrf.mxu0
  %v7065 = vadd.f32 0.0, %v7064
  %7066 = vmatmul.bf16.gmra.mxu0 %v7041
  %v7067 = vpop.f32.mrf.mxu0
  %v7068 = vadd.f32 0.0, %v7067
  %v7069 = vpop.f32.mrf.mxu0
  %v7070 = vadd.f32 0.0, %v7069
  %7071 = vdwg.mxu0
  %v7072 = vld [vmem:[%s6462] sm:$0xff]
  %v7073 = vld [vmem:[%s6462 + $0x8] sm:$0xff]
  %v7074 = vld [vmem:[%s6462 + $0x10] sm:$0xff]
  %v7075 = vld [vmem:[%s6462 + $0x18] sm:$0xff]
  %v7076 = vld [vmem:[%s6462 + $0x20] sm:$0xff]
  %v7077 = vld [vmem:[%s6462 + $0x28] sm:$0xff]
  %v7078 = vld [vmem:[%s6462 + $0x30] sm:$0xff]
  %v7079 = vld [vmem:[%s6462 + $0x38] sm:$0xff]
  %v7080 = vadd.f32 %v7072, %v7053
  %v7081 = vadd.f32 %v7073, %v7055
  %v7082 = vadd.f32 %v7074, %v7058
  %v7083 = vadd.f32 %v7075, %v7060
  %v7084 = vadd.f32 %v7076, %v7063
  %v7085 = vadd.f32 %v7077, %v7065
  %v7086 = vadd.f32 %v7078, %v7068
  %v7087 = vadd.f32 %v7079, %v7070
  %7088 = vst.msk [vmem:[%s6462] sm:$0xff] %vm4360, %v7080
  %7089 = vst.msk [vmem:[%s6462 + $0x8] sm:$0xff] %vm4360, %v7081
  %7090 = vst.msk [vmem:[%s6462 + $0x10] sm:$0xff] %vm4360, %v7082
  %7091 = vst.msk [vmem:[%s6462 + $0x18] sm:$0xff] %vm4360, %v7083
  %7092 = vst.msk [vmem:[%s6462 + $0x20] sm:$0xff] %vm4360, %v7084
  %7093 = vst.msk [vmem:[%s6462 + $0x28] sm:$0xff] %vm4360, %v7085
  %7094 = vst.msk [vmem:[%s6462 + $0x30] sm:$0xff] %vm4360, %v7086
  %7095 = vst.msk [vmem:[%s6462 + $0x38] sm:$0xff] %vm4360, %v7087
  %v7096 = vld [vmem:[%s3437] sm:$0xf]
  %v7097 = vld [vmem:[%s3437 + $0x4] sm:$0xf]
  %v7098 = vld [vmem:[%s3437 + $0x8] sm:$0xf]
  %v7099 = vld [vmem:[%s3437 + $0xc] sm:$0xf]
  %v7100 = vld [vmem:[%s3437 + $0x10] sm:$0xf]
  %v7101 = vld [vmem:[%s3437 + $0x14] sm:$0xf]
  %v7102 = vld [vmem:[%s3437 + $0x18] sm:$0xf]
  %v7103 = vld [vmem:[%s3437 + $0x1c] sm:$0xf]
  %v7104 = vld [vmem:[%s5048] sm:$0xf]
  %v7105 = vld [vmem:[%s5048 + $0x4] sm:$0xf]
  %v7106 = vld [vmem:[%s5048 + $0x8] sm:$0xf]
  %v7107 = vld [vmem:[%s5048 + $0xc] sm:$0xf]
  %v7108 = vld [vmem:[%s5048 + $0x10] sm:$0xf]
  %v7109 = vld [vmem:[%s5048 + $0x14] sm:$0xf]
  %v7110 = vld [vmem:[%s5048 + $0x18] sm:$0xf]
  %v7111 = vld [vmem:[%s5048 + $0x1c] sm:$0xf]
  %v7120 = vunpack.c.l.b16 %v7096
  %v7121 = vunpack.c.l.b16 %v7097
  %v7122 = vunpack.c.l.b16 %v7098
  %v7123 = vunpack.c.l.b16 %v7099
  %v7124 = vunpack.c.l.b16 %v7100
  %v7125 = vunpack.c.l.b16 %v7101
  %v7126 = vunpack.c.l.b16 %v7102
  %v7127 = vunpack.c.l.b16 %v7103
  %v7128 = vpack.c.b16 %v7121, %v7120
  %v7129 = vpack.c.b16 %v7123, %v7122
  %v7130 = vpack.c.b16 %v7125, %v7124
  %v7131 = vpack.c.b16 %v7127, %v7126
  %v7140 = vunpack.c.l.b16 %v7104
  %v7141 = vunpack.c.l.b16 %v7105
  %v7142 = vunpack.c.l.b16 %v7106
  %v7143 = vunpack.c.l.b16 %v7107
  %v7144 = vunpack.c.l.b16 %v7108
  %v7145 = vunpack.c.l.b16 %v7109
  %v7146 = vunpack.c.l.b16 %v7110
  %v7147 = vunpack.c.l.b16 %v7111
  %v7148 = vpack.c.b16 %v7141, %v7140
  %v7149 = vpack.c.b16 %v7143, %v7142
  %v7150 = vpack.c.b16 %v7145, %v7144
  %v7151 = vpack.c.b16 %v7147, %v7146
  %v7157 = vsel %vm4360, %v7128, 0
  %v7160 = vsel %vm4360, %v7129, 0
  %v7163 = vsel %vm4360, %v7130, 0
  %v7166 = vsel %vm4360, %v7131, 0
  %7168 = vmatpush.bf16.msra.mxu0 0
  %7169 = vmatpush.bf16.msra.mxu0 0
  %7170 = vmatpush.bf16.msra.mxu0 0
  %7171 = vmatpush.bf16.msra.mxu0 0
  %7172 = vmatpush.bf16.msra.mxu0 %v7151
  %7173 = vmatpush.bf16.msra.mxu0 %v7150
  %7174 = vmatpush.bf16.msra.mxu0 %v7149
  %7175 = vmatpush.bf16.msra.mxu0 %v7148
  %7176 = vmatmul.bf16.gmra.mxu0 %v7157
  %v7177 = vpop.f32.mrf.mxu0
  %v7178 = vadd.f32 0.0, %v7177
  %v7179 = vpop.f32.mrf.mxu0
  %v7180 = vadd.f32 0.0, %v7179
  %7181 = vmatmul.bf16.gmra.mxu0 %v7160
  %v7182 = vpop.f32.mrf.mxu0
  %v7183 = vadd.f32 0.0, %v7182
  %v7184 = vpop.f32.mrf.mxu0
  %v7185 = vadd.f32 0.0, %v7184
  %7186 = vmatmul.bf16.gmra.mxu0 %v7163
  %v7187 = vpop.f32.mrf.mxu0
  %v7188 = vadd.f32 0.0, %v7187
  %v7189 = vpop.f32.mrf.mxu0
  %v7190 = vadd.f32 0.0, %v7189
  %7191 = vmatmul.bf16.gmra.mxu0 %v7166
  %v7192 = vpop.f32.mrf.mxu0
  %v7193 = vadd.f32 0.0, %v7192
  %v7194 = vpop.f32.mrf.mxu0
  %v7195 = vadd.f32 0.0, %v7194
  %7196 = vdwg.mxu0
  %v7197 = vld [vmem:[%s6462] sm:$0xff]
  %v7198 = vld [vmem:[%s6462 + $0x8] sm:$0xff]
  %v7199 = vld [vmem:[%s6462 + $0x10] sm:$0xff]
  %v7200 = vld [vmem:[%s6462 + $0x18] sm:$0xff]
  %v7201 = vld [vmem:[%s6462 + $0x20] sm:$0xff]
  %v7202 = vld [vmem:[%s6462 + $0x28] sm:$0xff]
  %v7203 = vld [vmem:[%s6462 + $0x30] sm:$0xff]
  %v7204 = vld [vmem:[%s6462 + $0x38] sm:$0xff]
  %v7205 = vadd.f32 %v7197, %v7178
  %v7206 = vadd.f32 %v7198, %v7180
  %v7207 = vadd.f32 %v7199, %v7183
  %v7208 = vadd.f32 %v7200, %v7185
  %v7209 = vadd.f32 %v7201, %v7188
  %v7210 = vadd.f32 %v7202, %v7190
  %v7211 = vadd.f32 %v7203, %v7193
  %v7212 = vadd.f32 %v7204, %v7195
  %7213 = vst.msk [vmem:[%s6462] sm:$0xff] %vm4360, %v7205
  %7214 = vst.msk [vmem:[%s6462 + $0x8] sm:$0xff] %vm4360, %v7206
  %7215 = vst.msk [vmem:[%s6462 + $0x10] sm:$0xff] %vm4360, %v7207
  %7216 = vst.msk [vmem:[%s6462 + $0x18] sm:$0xff] %vm4360, %v7208
  %7217 = vst.msk [vmem:[%s6462 + $0x20] sm:$0xff] %vm4360, %v7209
  %7218 = vst.msk [vmem:[%s6462 + $0x28] sm:$0xff] %vm4360, %v7210
  %7219 = vst.msk [vmem:[%s6462 + $0x30] sm:$0xff] %vm4360, %v7211
  %7220 = vst.msk [vmem:[%s6462 + $0x38] sm:$0xff] %vm4360, %v7212
  %v7221 = vld [vmem:[%s3437 + $0x8] sm:$0xf]
  %v7222 = vld [vmem:[%s3437 + $0xc] sm:$0xf]
  %v7223 = vld [vmem:[%s3437 + $0x10] sm:$0xf]
  %v7224 = vld [vmem:[%s3437 + $0x14] sm:$0xf]
  %v7225 = vld [vmem:[%s3437 + $0x18] sm:$0xf]
  %v7226 = vld [vmem:[%s3437 + $0x1c] sm:$0xf]
  %v7227 = vld [vmem:[%s3437 + $0x20] sm:$0xf]
  %v7228 = vld [vmem:[%s3437 + $0x24] sm:$0xf]
  %v7229 = vld [vmem:[%s5174] sm:$0xf]
  %v7230 = vld [vmem:[%s5174 + $0x4] sm:$0xf]
  %v7231 = vld [vmem:[%s5174 + $0x8] sm:$0xf]
  %v7232 = vld [vmem:[%s5174 + $0xc] sm:$0xf]
  %v7233 = vld [vmem:[%s5174 + $0x10] sm:$0xf]
  %v7234 = vld [vmem:[%s5174 + $0x14] sm:$0xf]
  %v7235 = vld [vmem:[%s5174 + $0x18] sm:$0xf]
  %v7236 = vld [vmem:[%s5174 + $0x1c] sm:$0xf]
  %v7245 = vunpack.c.l.b16 %v7221
  %v7246 = vunpack.c.l.b16 %v7222
  %v7247 = vunpack.c.l.b16 %v7223
  %v7248 = vunpack.c.l.b16 %v7224
  %v7249 = vunpack.c.l.b16 %v7225
  %v7250 = vunpack.c.l.b16 %v7226
  %v7251 = vunpack.c.l.b16 %v7227
  %v7252 = vunpack.c.l.b16 %v7228
  %v7253 = vpack.c.b16 %v7246, %v7245
  %v7254 = vpack.c.b16 %v7248, %v7247
  %v7255 = vpack.c.b16 %v7250, %v7249
  %v7256 = vpack.c.b16 %v7252, %v7251
  %v7265 = vunpack.c.l.b16 %v7229
  %v7266 = vunpack.c.l.b16 %v7230
  %v7267 = vunpack.c.l.b16 %v7231
  %v7268 = vunpack.c.l.b16 %v7232
  %v7269 = vunpack.c.l.b16 %v7233
  %v7270 = vunpack.c.l.b16 %v7234
  %v7271 = vunpack.c.l.b16 %v7235
  %v7272 = vunpack.c.l.b16 %v7236
  %v7273 = vpack.c.b16 %v7266, %v7265
  %v7274 = vpack.c.b16 %v7268, %v7267
  %v7275 = vpack.c.b16 %v7270, %v7269
  %v7276 = vpack.c.b16 %v7272, %v7271
  %v7282 = vsel %vm4360, %v7253, 0
  %v7285 = vsel %vm4360, %v7254, 0
  %v7288 = vsel %vm4360, %v7255, 0
  %v7291 = vsel %vm4360, %v7256, 0
  %7293 = vmatpush.bf16.msra.mxu0 0
  %7294 = vmatpush.bf16.msra.mxu0 0
  %7295 = vmatpush.bf16.msra.mxu0 0
  %7296 = vmatpush.bf16.msra.mxu0 0
  %7297 = vmatpush.bf16.msra.mxu0 %v7276
  %7298 = vmatpush.bf16.msra.mxu0 %v7275
  %7299 = vmatpush.bf16.msra.mxu0 %v7274
  %7300 = vmatpush.bf16.msra.mxu0 %v7273
  %7301 = vmatmul.bf16.gmra.mxu0 %v7282
  %v7302 = vpop.f32.mrf.mxu0
  %v7303 = vadd.f32 0.0, %v7302
  %v7304 = vpop.f32.mrf.mxu0
  %v7305 = vadd.f32 0.0, %v7304
  %7306 = vmatmul.bf16.gmra.mxu0 %v7285
  %v7307 = vpop.f32.mrf.mxu0
  %v7308 = vadd.f32 0.0, %v7307
  %v7309 = vpop.f32.mrf.mxu0
  %v7310 = vadd.f32 0.0, %v7309
  %7311 = vmatmul.bf16.gmra.mxu0 %v7288
  %v7312 = vpop.f32.mrf.mxu0
  %v7313 = vadd.f32 0.0, %v7312
  %v7314 = vpop.f32.mrf.mxu0
  %v7315 = vadd.f32 0.0, %v7314
  %7316 = vmatmul.bf16.gmra.mxu0 %v7291
  %v7317 = vpop.f32.mrf.mxu0
  %v7318 = vadd.f32 0.0, %v7317
  %v7319 = vpop.f32.mrf.mxu0
  %v7320 = vadd.f32 0.0, %v7319
  %7321 = vdwg.mxu0
  %v7322 = vld [vmem:[%s6462] sm:$0xff]
  %v7323 = vld [vmem:[%s6462 + $0x8] sm:$0xff]
  %v7324 = vld [vmem:[%s6462 + $0x10] sm:$0xff]
  %v7325 = vld [vmem:[%s6462 + $0x18] sm:$0xff]
  %v7326 = vld [vmem:[%s6462 + $0x20] sm:$0xff]
  %v7327 = vld [vmem:[%s6462 + $0x28] sm:$0xff]
  %v7328 = vld [vmem:[%s6462 + $0x30] sm:$0xff]
  %v7329 = vld [vmem:[%s6462 + $0x38] sm:$0xff]
  %v7330 = vadd.f32 %v7322, %v7303
  %v7331 = vadd.f32 %v7323, %v7305
  %v7332 = vadd.f32 %v7324, %v7308
  %v7333 = vadd.f32 %v7325, %v7310
  %v7334 = vadd.f32 %v7326, %v7313
  %v7335 = vadd.f32 %v7327, %v7315
  %v7336 = vadd.f32 %v7328, %v7318
  %v7337 = vadd.f32 %v7329, %v7320
  %7338 = vst.msk [vmem:[%s6462] sm:$0xff] %vm4360, %v7330
  %7339 = vst.msk [vmem:[%s6462 + $0x8] sm:$0xff] %vm4360, %v7331
  %7340 = vst.msk [vmem:[%s6462 + $0x10] sm:$0xff] %vm4360, %v7332
  %7341 = vst.msk [vmem:[%s6462 + $0x18] sm:$0xff] %vm4360, %v7333
  %7342 = vst.msk [vmem:[%s6462 + $0x20] sm:$0xff] %vm4360, %v7334
  %7343 = vst.msk [vmem:[%s6462 + $0x28] sm:$0xff] %vm4360, %v7335
  %7344 = vst.msk [vmem:[%s6462 + $0x30] sm:$0xff] %vm4360, %v7336
  %7345 = vst.msk [vmem:[%s6462 + $0x38] sm:$0xff] %vm4360, %v7337
  %v7346 = vld [vmem:[%s6462] sm:$0xff]
  %v7347 = vld [vmem:[%s6462 + $0x8] sm:$0xff]
  %v7348 = vld [vmem:[%s6462 + $0x10] sm:$0xff]
  %v7349 = vld [vmem:[%s6462 + $0x18] sm:$0xff]
  %v7350 = vld [vmem:[%s6462 + $0x20] sm:$0xff]
  %v7351 = vld [vmem:[%s6462 + $0x28] sm:$0xff]
  %v7352 = vld [vmem:[%s6462 + $0x30] sm:$0xff]
  %v7353 = vld [vmem:[%s6462 + $0x38] sm:$0xff]
  %v7354 = vadd.f32 %v7346, %v5301
  %v7355 = vadd.f32 %v7347, %v5301
  %v7356 = vadd.f32 %v7348, %v5301
  %v7357 = vadd.f32 %v7349, %v5301
  %v7358 = vadd.f32 %v7350, %v5301
  %v7359 = vadd.f32 %v7351, %v5301
  %v7360 = vadd.f32 %v7352, %v5301
  %v7361 = vadd.f32 %v7353, %v5301
  %v7362 = vmax.f32 %v7354, 0.0
  %v7363 = vmax.f32 %v7355, 0.0
  %v7364 = vmax.f32 %v7356, 0.0
  %v7365 = vmax.f32 %v7357, 0.0
  %v7366 = vmax.f32 %v7358, 0.0
  %v7367 = vmax.f32 %v7359, 0.0
  %v7368 = vmax.f32 %v7360, 0.0
  %v7369 = vmax.f32 %v7361, 0.0
  %v7370 = vpack.c.bf16 %v7362, %v7362
  %v7371 = vpack.c.bf16 %v7363, %v7363
  %v7372 = vpack.c.bf16 %v7364, %v7364
  %v7373 = vpack.c.bf16 %v7365, %v7365
  %v7374 = vpack.c.bf16 %v7366, %v7366
  %v7375 = vpack.c.bf16 %v7367, %v7367
  %v7376 = vpack.c.bf16 %v7368, %v7368
  %v7377 = vpack.c.bf16 %v7369, %v7369
  %s7378 = scalar_lea.vmem [#allocation4], 64
  %7379 = vst.msk [vmem:[%s7378] sm:$0xf] %vm455, %v7370
  %7380 = vst.msk [vmem:[%s7378 + $0x4] sm:$0xf] %vm455, %v7371
  %7381 = vst.msk [vmem:[%s7378 + $0x8] sm:$0xf] %vm455, %v7372
  %7382 = vst.msk [vmem:[%s7378 + $0xc] sm:$0xf] %vm455, %v7373
  %7383 = vst.msk [vmem:[%s7378 + $0x10] sm:$0xf] %vm455, %v7374
  %7384 = vst.msk [vmem:[%s7378 + $0x14] sm:$0xf] %vm455, %v7375
  %7385 = vst.msk [vmem:[%s7378 + $0x18] sm:$0xf] %vm455, %v7376
  %7386 = vst.msk [vmem:[%s7378 + $0x1c] sm:$0xf] %vm455, %v7377
  %v7387 = vld [vmem:[%s3011] sm:$0xf]
  %v7388 = vld [vmem:[%s3011 + $0x4] sm:$0xf]
  %v7389 = vld [vmem:[%s3011 + $0x8] sm:$0xf]
  %v7390 = vld [vmem:[%s3011 + $0xc] sm:$0xf]
  %v7391 = vld [vmem:[%s3011 + $0x10] sm:$0xf]
  %v7392 = vld [vmem:[%s3011 + $0x14] sm:$0xf]
  %v7393 = vld [vmem:[%s3011 + $0x18] sm:$0xf]
  %v7394 = vld [vmem:[%s3011 + $0x1c] sm:$0xf]
  %v7395 = vld [vmem:[%s3] sm:$0xf]
  %v7396 = vld [vmem:[%s3 + $0x4] sm:$0xf]
  %v7397 = vld [vmem:[%s3 + $0x8] sm:$0xf]
  %v7398 = vld [vmem:[%s3 + $0xc] sm:$0xf]
  %v7399 = vld [vmem:[%s3 + $0x10] sm:$0xf]
  %v7400 = vld [vmem:[%s3 + $0x14] sm:$0xf]
  %v7401 = vld [vmem:[%s3 + $0x18] sm:$0xf]
  %v7402 = vld [vmem:[%s3 + $0x1c] sm:$0xf]
  %v7411 = vunpack.c.l.b16 %v7387
  %v7412 = vunpack.c.l.b16 %v7388
  %v7413 = vunpack.c.l.b16 %v7389
  %v7414 = vunpack.c.l.b16 %v7390
  %v7415 = vunpack.c.l.b16 %v7391
  %v7416 = vunpack.c.l.b16 %v7392
  %v7417 = vunpack.c.l.b16 %v7393
  %v7418 = vunpack.c.l.b16 %v7394
  %v7419 = vpack.c.b16 %v7412, %v7411
  %v7420 = vpack.c.b16 %v7414, %v7413
  %v7421 = vpack.c.b16 %v7416, %v7415
  %v7422 = vpack.c.b16 %v7418, %v7417
  %v7431 = vunpack.c.l.b16 %v7395
  %v7432 = vunpack.c.l.b16 %v7396
  %v7433 = vunpack.c.l.b16 %v7397
  %v7434 = vunpack.c.l.b16 %v7398
  %v7435 = vunpack.c.l.b16 %v7399
  %v7436 = vunpack.c.l.b16 %v7400
  %v7437 = vunpack.c.l.b16 %v7401
  %v7438 = vunpack.c.l.b16 %v7402
  %v7439 = vpack.c.b16 %v7432, %v7431
  %v7440 = vpack.c.b16 %v7434, %v7433
  %v7441 = vpack.c.b16 %v7436, %v7435
  %v7442 = vpack.c.b16 %v7438, %v7437
  %v7448 = vsel %vm4360, %v7419, 0
  %v7451 = vsel %vm4360, %v7420, 0
  %v7454 = vsel %vm4360, %v7421, 0
  %v7457 = vsel %vm4360, %v7422, 0
  %7459 = vmatpush.bf16.msra.mxu0 0
  %7460 = vmatpush.bf16.msra.mxu0 0
  %7461 = vmatpush.bf16.msra.mxu0 0
  %7462 = vmatpush.bf16.msra.mxu0 0
  %7463 = vmatpush.bf16.msra.mxu0 %v7442
  %7464 = vmatpush.bf16.msra.mxu0 %v7441
  %7465 = vmatpush.bf16.msra.mxu0 %v7440
  %7466 = vmatpush.bf16.msra.mxu0 %v7439
  %7467 = vmatmul.bf16.gmra.mxu0 %v7448
  %v7468 = vpop.f32.mrf.mxu0
  %v7469 = vadd.f32 0.0, %v7468
  %v7470 = vpop.f32.mrf.mxu0
  %v7471 = vadd.f32 0.0, %v7470
  %7472 = vmatmul.bf16.gmra.mxu0 %v7451
  %v7473 = vpop.f32.mrf.mxu0
  %v7474 = vadd.f32 0.0, %v7473
  %v7475 = vpop.f32.mrf.mxu0
  %v7476 = vadd.f32 0.0, %v7475
  %7477 = vmatmul.bf16.gmra.mxu0 %v7454
  %v7478 = vpop.f32.mrf.mxu0
  %v7479 = vadd.f32 0.0, %v7478
  %v7480 = vpop.f32.mrf.mxu0
  %v7481 = vadd.f32 0.0, %v7480
  %7482 = vmatmul.bf16.gmra.mxu0 %v7457
  %v7483 = vpop.f32.mrf.mxu0
  %v7484 = vadd.f32 0.0, %v7483
  %v7485 = vpop.f32.mrf.mxu0
  %v7486 = vadd.f32 0.0, %v7485
  %7487 = vdwg.mxu0
  %s7488 = scalar_lea.vmem [#allocation3], 192
  %7489 = vst.msk [vmem:[%s7488] sm:$0xff] %vm4360, %v7469
  %7490 = vst.msk [vmem:[%s7488 + $0x8] sm:$0xff] %vm4360, %v7471
  %7491 = vst.msk [vmem:[%s7488 + $0x10] sm:$0xff] %vm4360, %v7474
  %7492 = vst.msk [vmem:[%s7488 + $0x18] sm:$0xff] %vm4360, %v7476
  %7493 = vst.msk [vmem:[%s7488 + $0x20] sm:$0xff] %vm4360, %v7479
  %7494 = vst.msk [vmem:[%s7488 + $0x28] sm:$0xff] %vm4360, %v7481
  %7495 = vst.msk [vmem:[%s7488 + $0x30] sm:$0xff] %vm4360, %v7484
  %7496 = vst.msk [vmem:[%s7488 + $0x38] sm:$0xff] %vm4360, %v7486
  %v7497 = vld [vmem:[%s3011 + $0x8] sm:$0xf]
  %v7498 = vld [vmem:[%s3011 + $0xc] sm:$0xf]
  %v7499 = vld [vmem:[%s3011 + $0x10] sm:$0xf]
  %v7500 = vld [vmem:[%s3011 + $0x14] sm:$0xf]
  %v7501 = vld [vmem:[%s3011 + $0x18] sm:$0xf]
  %v7502 = vld [vmem:[%s3011 + $0x1c] sm:$0xf]
  %v7503 = vld [vmem:[%s3011 + $0x20] sm:$0xf]
  %v7504 = vld [vmem:[%s3011 + $0x24] sm:$0xf]
  %v7505 = vld [vmem:[%s4418] sm:$0xf]
  %v7506 = vld [vmem:[%s4418 + $0x4] sm:$0xf]
  %v7507 = vld [vmem:[%s4418 + $0x8] sm:$0xf]
  %v7508 = vld [vmem:[%s4418 + $0xc] sm:$0xf]
  %v7509 = vld [vmem:[%s4418 + $0x10] sm:$0xf]
  %v7510 = vld [vmem:[%s4418 + $0x14] sm:$0xf]
  %v7511 = vld [vmem:[%s4418 + $0x18] sm:$0xf]
  %v7512 = vld [vmem:[%s4418 + $0x1c] sm:$0xf]
  %v7521 = vunpack.c.l.b16 %v7497
  %v7522 = vunpack.c.l.b16 %v7498
  %v7523 = vunpack.c.l.b16 %v7499
  %v7524 = vunpack.c.l.b16 %v7500
  %v7525 = vunpack.c.l.b16 %v7501
  %v7526 = vunpack.c.l.b16 %v7502
  %v7527 = vunpack.c.l.b16 %v7503
  %v7528 = vunpack.c.l.b16 %v7504
  %v7529 = vpack.c.b16 %v7522, %v7521
  %v7530 = vpack.c.b16 %v7524, %v7523
  %v7531 = vpack.c.b16 %v7526, %v7525
  %v7532 = vpack.c.b16 %v7528, %v7527
  %v7541 = vunpack.c.l.b16 %v7505
  %v7542 = vunpack.c.l.b16 %v7506
  %v7543 = vunpack.c.l.b16 %v7507
  %v7544 = vunpack.c.l.b16 %v7508
  %v7545 = vunpack.c.l.b16 %v7509
  %v7546 = vunpack.c.l.b16 %v7510
  %v7547 = vunpack.c.l.b16 %v7511
  %v7548 = vunpack.c.l.b16 %v7512
  %v7549 = vpack.c.b16 %v7542, %v7541
  %v7550 = vpack.c.b16 %v7544, %v7543
  %v7551 = vpack.c.b16 %v7546, %v7545
  %v7552 = vpack.c.b16 %v7548, %v7547
  %v7558 = vsel %vm4360, %v7529, 0
  %v7561 = vsel %vm4360, %v7530, 0
  %v7564 = vsel %vm4360, %v7531, 0
  %v7567 = vsel %vm4360, %v7532, 0
  %7569 = vmatpush.bf16.msra.mxu0 0
  %7570 = vmatpush.bf16.msra.mxu0 0
  %7571 = vmatpush.bf16.msra.mxu0 0
  %7572 = vmatpush.bf16.msra.mxu0 0
  %7573 = vmatpush.bf16.msra.mxu0 %v7552
  %7574 = vmatpush.bf16.msra.mxu0 %v7551
  %7575 = vmatpush.bf16.msra.mxu0 %v7550
  %7576 = vmatpush.bf16.msra.mxu0 %v7549
  %7577 = vmatmul.bf16.gmra.mxu0 %v7558
  %v7578 = vpop.f32.mrf.mxu0
  %v7579 = vadd.f32 0.0, %v7578
  %v7580 = vpop.f32.mrf.mxu0
  %v7581 = vadd.f32 0.0, %v7580
  %7582 = vmatmul.bf16.gmra.mxu0 %v7561
  %v7583 = vpop.f32.mrf.mxu0
  %v7584 = vadd.f32 0.0, %v7583
  %v7585 = vpop.f32.mrf.mxu0
  %v7586 = vadd.f32 0.0, %v7585
  %7587 = vmatmul.bf16.gmra.mxu0 %v7564
  %v7588 = vpop.f32.mrf.mxu0
  %v7589 = vadd.f32 0.0, %v7588
  %v7590 = vpop.f32.mrf.mxu0
  %v7591 = vadd.f32 0.0, %v7590
  %7592 = vmatmul.bf16.gmra.mxu0 %v7567
  %v7593 = vpop.f32.mrf.mxu0
  %v7594 = vadd.f32 0.0, %v7593
  %v7595 = vpop.f32.mrf.mxu0
  %v7596 = vadd.f32 0.0, %v7595
  %7597 = vdwg.mxu0
  %v7598 = vld [vmem:[%s7488] sm:$0xff]
  %v7599 = vld [vmem:[%s7488 + $0x8] sm:$0xff]
  %v7600 = vld [vmem:[%s7488 + $0x10] sm:$0xff]
  %v7601 = vld [vmem:[%s7488 + $0x18] sm:$0xff]
  %v7602 = vld [vmem:[%s7488 + $0x20] sm:$0xff]
  %v7603 = vld [vmem:[%s7488 + $0x28] sm:$0xff]
  %v7604 = vld [vmem:[%s7488 + $0x30] sm:$0xff]
  %v7605 = vld [vmem:[%s7488 + $0x38] sm:$0xff]
  %v7606 = vadd.f32 %v7598, %v7579
  %v7607 = vadd.f32 %v7599, %v7581
  %v7608 = vadd.f32 %v7600, %v7584
  %v7609 = vadd.f32 %v7601, %v7586
  %v7610 = vadd.f32 %v7602, %v7589
  %v7611 = vadd.f32 %v7603, %v7591
  %v7612 = vadd.f32 %v7604, %v7594
  %v7613 = vadd.f32 %v7605, %v7596
  %7614 = vst.msk [vmem:[%s7488] sm:$0xff] %vm4360, %v7606
  %7615 = vst.msk [vmem:[%s7488 + $0x8] sm:$0xff] %vm4360, %v7607
  %7616 = vst.msk [vmem:[%s7488 + $0x10] sm:$0xff] %vm4360, %v7608
  %7617 = vst.msk [vmem:[%s7488 + $0x18] sm:$0xff] %vm4360, %v7609
  %7618 = vst.msk [vmem:[%s7488 + $0x20] sm:$0xff] %vm4360, %v7610
  %7619 = vst.msk [vmem:[%s7488 + $0x28] sm:$0xff] %vm4360, %v7611
  %7620 = vst.msk [vmem:[%s7488 + $0x30] sm:$0xff] %vm4360, %v7612
  %7621 = vst.msk [vmem:[%s7488 + $0x38] sm:$0xff] %vm4360, %v7613
  %v7622 = vld [vmem:[%s3437] sm:$0xf]
  %v7623 = vld [vmem:[%s3437 + $0x4] sm:$0xf]
  %v7624 = vld [vmem:[%s3437 + $0x8] sm:$0xf]
  %v7625 = vld [vmem:[%s3437 + $0xc] sm:$0xf]
  %v7626 = vld [vmem:[%s3437 + $0x10] sm:$0xf]
  %v7627 = vld [vmem:[%s3437 + $0x14] sm:$0xf]
  %v7628 = vld [vmem:[%s3437 + $0x18] sm:$0xf]
  %v7629 = vld [vmem:[%s3437 + $0x1c] sm:$0xf]
  %v7630 = vld [vmem:[%s4544] sm:$0xf]
  %v7631 = vld [vmem:[%s4544 + $0x4] sm:$0xf]
  %v7632 = vld [vmem:[%s4544 + $0x8] sm:$0xf]
  %v7633 = vld [vmem:[%s4544 + $0xc] sm:$0xf]
  %v7634 = vld [vmem:[%s4544 + $0x10] sm:$0xf]
  %v7635 = vld [vmem:[%s4544 + $0x14] sm:$0xf]
  %v7636 = vld [vmem:[%s4544 + $0x18] sm:$0xf]
  %v7637 = vld [vmem:[%s4544 + $0x1c] sm:$0xf]
  %v7646 = vunpack.c.l.b16 %v7622
  %v7647 = vunpack.c.l.b16 %v7623
  %v7648 = vunpack.c.l.b16 %v7624
  %v7649 = vunpack.c.l.b16 %v7625
  %v7650 = vunpack.c.l.b16 %v7626
  %v7651 = vunpack.c.l.b16 %v7627
  %v7652 = vunpack.c.l.b16 %v7628
  %v7653 = vunpack.c.l.b16 %v7629
  %v7654 = vpack.c.b16 %v7647, %v7646
  %v7655 = vpack.c.b16 %v7649, %v7648
  %v7656 = vpack.c.b16 %v7651, %v7650
  %v7657 = vpack.c.b16 %v7653, %v7652
  %v7666 = vunpack.c.l.b16 %v7630
  %v7667 = vunpack.c.l.b16 %v7631
  %v7668 = vunpack.c.l.b16 %v7632
  %v7669 = vunpack.c.l.b16 %v7633
  %v7670 = vunpack.c.l.b16 %v7634
  %v7671 = vunpack.c.l.b16 %v7635
  %v7672 = vunpack.c.l.b16 %v7636
  %v7673 = vunpack.c.l.b16 %v7637
  %v7674 = vpack.c.b16 %v7667, %v7666
  %v7675 = vpack.c.b16 %v7669, %v7668
  %v7676 = vpack.c.b16 %v7671, %v7670
  %v7677 = vpack.c.b16 %v7673, %v7672
  %v7683 = vsel %vm4360, %v7654, 0
  %v7686 = vsel %vm4360, %v7655, 0
  %v7689 = vsel %vm4360, %v7656, 0
  %v7692 = vsel %vm4360, %v7657, 0
  %7694 = vmatpush.bf16.msra.mxu0 0
  %7695 = vmatpush.bf16.msra.mxu0 0
  %7696 = vmatpush.bf16.msra.mxu0 0
  %7697 = vmatpush.bf16.msra.mxu0 0
  %7698 = vmatpush.bf16.msra.mxu0 %v7677
  %7699 = vmatpush.bf16.msra.mxu0 %v7676
  %7700 = vmatpush.bf16.msra.mxu0 %v7675
  %7701 = vmatpush.bf16.msra.mxu0 %v7674
  %7702 = vmatmul.bf16.gmra.mxu0 %v7683
  %v7703 = vpop.f32.mrf.mxu0
  %v7704 = vadd.f32 0.0, %v7703
  %v7705 = vpop.f32.mrf.mxu0
  %v7706 = vadd.f32 0.0, %v7705
  %7707 = vmatmul.bf16.gmra.mxu0 %v7686
  %v7708 = vpop.f32.mrf.mxu0
  %v7709 = vadd.f32 0.0, %v7708
  %v7710 = vpop.f32.mrf.mxu0
  %v7711 = vadd.f32 0.0, %v7710
  %7712 = vmatmul.bf16.gmra.mxu0 %v7689
  %v7713 = vpop.f32.mrf.mxu0
  %v7714 = vadd.f32 0.0, %v7713
  %v7715 = vpop.f32.mrf.mxu0
  %v7716 = vadd.f32 0.0, %v7715
  %7717 = vmatmul.bf16.gmra.mxu0 %v7692
  %v7718 = vpop.f32.mrf.mxu0
  %v7719 = vadd.f32 0.0, %v7718
  %v7720 = vpop.f32.mrf.mxu0
  %v7721 = vadd.f32 0.0, %v7720
  %7722 = vdwg.mxu0
  %v7723 = vld [vmem:[%s7488] sm:$0xff]
  %v7724 = vld [vmem:[%s7488 + $0x8] sm:$0xff]
  %v7725 = vld [vmem:[%s7488 + $0x10] sm:$0xff]
  %v7726 = vld [vmem:[%s7488 + $0x18] sm:$0xff]
  %v7727 = vld [vmem:[%s7488 + $0x20] sm:$0xff]
  %v7728 = vld [vmem:[%s7488 + $0x28] sm:$0xff]
  %v7729 = vld [vmem:[%s7488 + $0x30] sm:$0xff]
  %v7730 = vld [vmem:[%s7488 + $0x38] sm:$0xff]
  %v7731 = vadd.f32 %v7723, %v7704
  %v7732 = vadd.f32 %v7724, %v7706
  %v7733 = vadd.f32 %v7725, %v7709
  %v7734 = vadd.f32 %v7726, %v7711
  %v7735 = vadd.f32 %v7727, %v7714
  %v7736 = vadd.f32 %v7728, %v7716
  %v7737 = vadd.f32 %v7729, %v7719
  %v7738 = vadd.f32 %v7730, %v7721
  %7739 = vst.msk [vmem:[%s7488] sm:$0xff] %vm4360, %v7731
  %7740 = vst.msk [vmem:[%s7488 + $0x8] sm:$0xff] %vm4360, %v7732
  %7741 = vst.msk [vmem:[%s7488 + $0x10] sm:$0xff] %vm4360, %v7733
  %7742 = vst.msk [vmem:[%s7488 + $0x18] sm:$0xff] %vm4360, %v7734
  %7743 = vst.msk [vmem:[%s7488 + $0x20] sm:$0xff] %vm4360, %v7735
  %7744 = vst.msk [vmem:[%s7488 + $0x28] sm:$0xff] %vm4360, %v7736
  %7745 = vst.msk [vmem:[%s7488 + $0x30] sm:$0xff] %vm4360, %v7737
  %7746 = vst.msk [vmem:[%s7488 + $0x38] sm:$0xff] %vm4360, %v7738
  %v7747 = vld [vmem:[%s3437 + $0x8] sm:$0xf]
  %v7748 = vld [vmem:[%s3437 + $0xc] sm:$0xf]
  %v7749 = vld [vmem:[%s3437 + $0x10] sm:$0xf]
  %v7750 = vld [vmem:[%s3437 + $0x14] sm:$0xf]
  %v7751 = vld [vmem:[%s3437 + $0x18] sm:$0xf]
  %v7752 = vld [vmem:[%s3437 + $0x1c] sm:$0xf]
  %v7753 = vld [vmem:[%s3437 + $0x20] sm:$0xf]
  %v7754 = vld [vmem:[%s3437 + $0x24] sm:$0xf]
  %v7755 = vld [vmem:[%s4670] sm:$0xf]
  %v7756 = vld [vmem:[%s4670 + $0x4] sm:$0xf]
  %v7757 = vld [vmem:[%s4670 + $0x8] sm:$0xf]
  %v7758 = vld [vmem:[%s4670 + $0xc] sm:$0xf]
  %v7759 = vld [vmem:[%s4670 + $0x10] sm:$0xf]
  %v7760 = vld [vmem:[%s4670 + $0x14] sm:$0xf]
  %v7761 = vld [vmem:[%s4670 + $0x18] sm:$0xf]
  %v7762 = vld [vmem:[%s4670 + $0x1c] sm:$0xf]
  %v7771 = vunpack.c.l.b16 %v7747
  %v7772 = vunpack.c.l.b16 %v7748
  %v7773 = vunpack.c.l.b16 %v7749
  %v7774 = vunpack.c.l.b16 %v7750
  %v7775 = vunpack.c.l.b16 %v7751
  %v7776 = vunpack.c.l.b16 %v7752
  %v7777 = vunpack.c.l.b16 %v7753
  %v7778 = vunpack.c.l.b16 %v7754
  %v7779 = vpack.c.b16 %v7772, %v7771
  %v7780 = vpack.c.b16 %v7774, %v7773
  %v7781 = vpack.c.b16 %v7776, %v7775
  %v7782 = vpack.c.b16 %v7778, %v7777
  %v7791 = vunpack.c.l.b16 %v7755
  %v7792 = vunpack.c.l.b16 %v7756
  %v7793 = vunpack.c.l.b16 %v7757
  %v7794 = vunpack.c.l.b16 %v7758
  %v7795 = vunpack.c.l.b16 %v7759
  %v7796 = vunpack.c.l.b16 %v7760
  %v7797 = vunpack.c.l.b16 %v7761
  %v7798 = vunpack.c.l.b16 %v7762
  %v7799 = vpack.c.b16 %v7792, %v7791
  %v7800 = vpack.c.b16 %v7794, %v7793
  %v7801 = vpack.c.b16 %v7796, %v7795
  %v7802 = vpack.c.b16 %v7798, %v7797
  %v7808 = vsel %vm4360, %v7779, 0
  %v7811 = vsel %vm4360, %v7780, 0
  %v7814 = vsel %vm4360, %v7781, 0
  %v7817 = vsel %vm4360, %v7782, 0
  %7819 = vmatpush.bf16.msra.mxu0 0
  %7820 = vmatpush.bf16.msra.mxu0 0
  %7821 = vmatpush.bf16.msra.mxu0 0
  %7822 = vmatpush.bf16.msra.mxu0 0
  %7823 = vmatpush.bf16.msra.mxu0 %v7802
  %7824 = vmatpush.bf16.msra.mxu0 %v7801
  %7825 = vmatpush.bf16.msra.mxu0 %v7800
  %7826 = vmatpush.bf16.msra.mxu0 %v7799
  %7827 = vmatmul.bf16.gmra.mxu0 %v7808
  %v7828 = vpop.f32.mrf.mxu0
  %v7829 = vadd.f32 0.0, %v7828
  %v7830 = vpop.f32.mrf.mxu0
  %v7831 = vadd.f32 0.0, %v7830
  %7832 = vmatmul.bf16.gmra.mxu0 %v7811
  %v7833 = vpop.f32.mrf.mxu0
  %v7834 = vadd.f32 0.0, %v7833
  %v7835 = vpop.f32.mrf.mxu0
  %v7836 = vadd.f32 0.0, %v7835
  %7837 = vmatmul.bf16.gmra.mxu0 %v7814
  %v7838 = vpop.f32.mrf.mxu0
  %v7839 = vadd.f32 0.0, %v7838
  %v7840 = vpop.f32.mrf.mxu0
  %v7841 = vadd.f32 0.0, %v7840
  %7842 = vmatmul.bf16.gmra.mxu0 %v7817
  %v7843 = vpop.f32.mrf.mxu0
  %v7844 = vadd.f32 0.0, %v7843
  %v7845 = vpop.f32.mrf.mxu0
  %v7846 = vadd.f32 0.0, %v7845
  %7847 = vdwg.mxu0
  %v7848 = vld [vmem:[%s7488] sm:$0xff]
  %v7849 = vld [vmem:[%s7488 + $0x8] sm:$0xff]
  %v7850 = vld [vmem:[%s7488 + $0x10] sm:$0xff]
  %v7851 = vld [vmem:[%s7488 + $0x18] sm:$0xff]
  %v7852 = vld [vmem:[%s7488 + $0x20] sm:$0xff]
  %v7853 = vld [vmem:[%s7488 + $0x28] sm:$0xff]
  %v7854 = vld [vmem:[%s7488 + $0x30] sm:$0xff]
  %v7855 = vld [vmem:[%s7488 + $0x38] sm:$0xff]
  %v7856 = vadd.f32 %v7848, %v7829
  %v7857 = vadd.f32 %v7849, %v7831
  %v7858 = vadd.f32 %v7850, %v7834
  %v7859 = vadd.f32 %v7851, %v7836
  %v7860 = vadd.f32 %v7852, %v7839
  %v7861 = vadd.f32 %v7853, %v7841
  %v7862 = vadd.f32 %v7854, %v7844
  %v7863 = vadd.f32 %v7855, %v7846
  %7864 = vst.msk [vmem:[%s7488] sm:$0xff] %vm4360, %v7856
  %7865 = vst.msk [vmem:[%s7488 + $0x8] sm:$0xff] %vm4360, %v7857
  %7866 = vst.msk [vmem:[%s7488 + $0x10] sm:$0xff] %vm4360, %v7858
  %7867 = vst.msk [vmem:[%s7488 + $0x18] sm:$0xff] %vm4360, %v7859
  %7868 = vst.msk [vmem:[%s7488 + $0x20] sm:$0xff] %vm4360, %v7860
  %7869 = vst.msk [vmem:[%s7488 + $0x28] sm:$0xff] %vm4360, %v7861
  %7870 = vst.msk [vmem:[%s7488 + $0x30] sm:$0xff] %vm4360, %v7862
  %7871 = vst.msk [vmem:[%s7488 + $0x38] sm:$0xff] %vm4360, %v7863
  %v7872 = vld [vmem:[%s3863] sm:$0xf]
  %v7873 = vld [vmem:[%s3863 + $0x4] sm:$0xf]
  %v7874 = vld [vmem:[%s3863 + $0x8] sm:$0xf]
  %v7875 = vld [vmem:[%s3863 + $0xc] sm:$0xf]
  %v7876 = vld [vmem:[%s3863 + $0x10] sm:$0xf]
  %v7877 = vld [vmem:[%s3863 + $0x14] sm:$0xf]
  %v7878 = vld [vmem:[%s3863 + $0x18] sm:$0xf]
  %v7879 = vld [vmem:[%s3863 + $0x1c] sm:$0xf]
  %v7880 = vld [vmem:[%s4796] sm:$0xf]
  %v7881 = vld [vmem:[%s4796 + $0x4] sm:$0xf]
  %v7882 = vld [vmem:[%s4796 + $0x8] sm:$0xf]
  %v7883 = vld [vmem:[%s4796 + $0xc] sm:$0xf]
  %v7884 = vld [vmem:[%s4796 + $0x10] sm:$0xf]
  %v7885 = vld [vmem:[%s4796 + $0x14] sm:$0xf]
  %v7886 = vld [vmem:[%s4796 + $0x18] sm:$0xf]
  %v7887 = vld [vmem:[%s4796 + $0x1c] sm:$0xf]
  %v7896 = vunpack.c.l.b16 %v7872
  %v7897 = vunpack.c.l.b16 %v7873
  %v7898 = vunpack.c.l.b16 %v7874
  %v7899 = vunpack.c.l.b16 %v7875
  %v7900 = vunpack.c.l.b16 %v7876
  %v7901 = vunpack.c.l.b16 %v7877
  %v7902 = vunpack.c.l.b16 %v7878
  %v7903 = vunpack.c.l.b16 %v7879
  %v7904 = vpack.c.b16 %v7897, %v7896
  %v7905 = vpack.c.b16 %v7899, %v7898
  %v7906 = vpack.c.b16 %v7901, %v7900
  %v7907 = vpack.c.b16 %v7903, %v7902
  %v7916 = vunpack.c.l.b16 %v7880
  %v7917 = vunpack.c.l.b16 %v7881
  %v7918 = vunpack.c.l.b16 %v7882
  %v7919 = vunpack.c.l.b16 %v7883
  %v7920 = vunpack.c.l.b16 %v7884
  %v7921 = vunpack.c.l.b16 %v7885
  %v7922 = vunpack.c.l.b16 %v7886
  %v7923 = vunpack.c.l.b16 %v7887
  %v7924 = vpack.c.b16 %v7917, %v7916
  %v7925 = vpack.c.b16 %v7919, %v7918
  %v7926 = vpack.c.b16 %v7921, %v7920
  %v7927 = vpack.c.b16 %v7923, %v7922
  %v7933 = vsel %vm4360, %v7904, 0
  %v7936 = vsel %vm4360, %v7905, 0
  %v7939 = vsel %vm4360, %v7906, 0
  %v7942 = vsel %vm4360, %v7907, 0
  %7944 = vmatpush.bf16.msra.mxu0 0
  %7945 = vmatpush.bf16.msra.mxu0 0
  %7946 = vmatpush.bf16.msra.mxu0 0
  %7947 = vmatpush.bf16.msra.mxu0 0
  %7948 = vmatpush.bf16.msra.mxu0 %v7927
  %7949 = vmatpush.bf16.msra.mxu0 %v7926
  %7950 = vmatpush.bf16.msra.mxu0 %v7925
  %7951 = vmatpush.bf16.msra.mxu0 %v7924
  %7952 = vmatmul.bf16.gmra.mxu0 %v7933
  %v7953 = vpop.f32.mrf.mxu0
  %v7954 = vadd.f32 0.0, %v7953
  %v7955 = vpop.f32.mrf.mxu0
  %v7956 = vadd.f32 0.0, %v7955
  %7957 = vmatmul.bf16.gmra.mxu0 %v7936
  %v7958 = vpop.f32.mrf.mxu0
  %v7959 = vadd.f32 0.0, %v7958
  %v7960 = vpop.f32.mrf.mxu0
  %v7961 = vadd.f32 0.0, %v7960
  %7962 = vmatmul.bf16.gmra.mxu0 %v7939
  %v7963 = vpop.f32.mrf.mxu0
  %v7964 = vadd.f32 0.0, %v7963
  %v7965 = vpop.f32.mrf.mxu0
  %v7966 = vadd.f32 0.0, %v7965
  %7967 = vmatmul.bf16.gmra.mxu0 %v7942
  %v7968 = vpop.f32.mrf.mxu0
  %v7969 = vadd.f32 0.0, %v7968
  %v7970 = vpop.f32.mrf.mxu0
  %v7971 = vadd.f32 0.0, %v7970
  %7972 = vdwg.mxu0
  %v7973 = vld [vmem:[%s7488] sm:$0xff]
  %v7974 = vld [vmem:[%s7488 + $0x8] sm:$0xff]
  %v7975 = vld [vmem:[%s7488 + $0x10] sm:$0xff]
  %v7976 = vld [vmem:[%s7488 + $0x18] sm:$0xff]
  %v7977 = vld [vmem:[%s7488 + $0x20] sm:$0xff]
  %v7978 = vld [vmem:[%s7488 + $0x28] sm:$0xff]
  %v7979 = vld [vmem:[%s7488 + $0x30] sm:$0xff]
  %v7980 = vld [vmem:[%s7488 + $0x38] sm:$0xff]
  %v7981 = vadd.f32 %v7973, %v7954
  %v7982 = vadd.f32 %v7974, %v7956
  %v7983 = vadd.f32 %v7975, %v7959
  %v7984 = vadd.f32 %v7976, %v7961
  %v7985 = vadd.f32 %v7977, %v7964
  %v7986 = vadd.f32 %v7978, %v7966
  %v7987 = vadd.f32 %v7979, %v7969
  %v7988 = vadd.f32 %v7980, %v7971
  %7989 = vst.msk [vmem:[%s7488] sm:$0xff] %vm4360, %v7981
  %7990 = vst.msk [vmem:[%s7488 + $0x8] sm:$0xff] %vm4360, %v7982
  %7991 = vst.msk [vmem:[%s7488 + $0x10] sm:$0xff] %vm4360, %v7983
  %7992 = vst.msk [vmem:[%s7488 + $0x18] sm:$0xff] %vm4360, %v7984
  %7993 = vst.msk [vmem:[%s7488 + $0x20] sm:$0xff] %vm4360, %v7985
  %7994 = vst.msk [vmem:[%s7488 + $0x28] sm:$0xff] %vm4360, %v7986
  %7995 = vst.msk [vmem:[%s7488 + $0x30] sm:$0xff] %vm4360, %v7987
  %7996 = vst.msk [vmem:[%s7488 + $0x38] sm:$0xff] %vm4360, %v7988
  %v7997 = vld [vmem:[%s3863 + $0x8] sm:$0xf]
  %v7998 = vld [vmem:[%s3863 + $0xc] sm:$0xf]
  %v7999 = vld [vmem:[%s3863 + $0x10] sm:$0xf]
  %v8000 = vld [vmem:[%s3863 + $0x14] sm:$0xf]
  %v8001 = vld [vmem:[%s3863 + $0x18] sm:$0xf]
  %v8002 = vld [vmem:[%s3863 + $0x1c] sm:$0xf]
  %v8003 = vld [vmem:[%s3863 + $0x20] sm:$0xf]
  %v8004 = vld [vmem:[%s3863 + $0x24] sm:$0xf]
  %v8005 = vld [vmem:[%s4922] sm:$0xf]
  %v8006 = vld [vmem:[%s4922 + $0x4] sm:$0xf]
  %v8007 = vld [vmem:[%s4922 + $0x8] sm:$0xf]
  %v8008 = vld [vmem:[%s4922 + $0xc] sm:$0xf]
  %v8009 = vld [vmem:[%s4922 + $0x10] sm:$0xf]
  %v8010 = vld [vmem:[%s4922 + $0x14] sm:$0xf]
  %v8011 = vld [vmem:[%s4922 + $0x18] sm:$0xf]
  %v8012 = vld [vmem:[%s4922 + $0x1c] sm:$0xf]
  %v8021 = vunpack.c.l.b16 %v7997
  %v8022 = vunpack.c.l.b16 %v7998
  %v8023 = vunpack.c.l.b16 %v7999
  %v8024 = vunpack.c.l.b16 %v8000
  %v8025 = vunpack.c.l.b16 %v8001
  %v8026 = vunpack.c.l.b16 %v8002
  %v8027 = vunpack.c.l.b16 %v8003
  %v8028 = vunpack.c.l.b16 %v8004
  %v8029 = vpack.c.b16 %v8022, %v8021
  %v8030 = vpack.c.b16 %v8024, %v8023
  %v8031 = vpack.c.b16 %v8026, %v8025
  %v8032 = vpack.c.b16 %v8028, %v8027
  %v8041 = vunpack.c.l.b16 %v8005
  %v8042 = vunpack.c.l.b16 %v8006
  %v8043 = vunpack.c.l.b16 %v8007
  %v8044 = vunpack.c.l.b16 %v8008
  %v8045 = vunpack.c.l.b16 %v8009
  %v8046 = vunpack.c.l.b16 %v8010
  %v8047 = vunpack.c.l.b16 %v8011
  %v8048 = vunpack.c.l.b16 %v8012
  %v8049 = vpack.c.b16 %v8042, %v8041
  %v8050 = vpack.c.b16 %v8044, %v8043
  %v8051 = vpack.c.b16 %v8046, %v8045
  %v8052 = vpack.c.b16 %v8048, %v8047
  %v8058 = vsel %vm4360, %v8029, 0
  %v8061 = vsel %vm4360, %v8030, 0
  %v8064 = vsel %vm4360, %v8031, 0
  %v8067 = vsel %vm4360, %v8032, 0
  %8069 = vmatpush.bf16.msra.mxu0 0
  %8070 = vmatpush.bf16.msra.mxu0 0
  %8071 = vmatpush.bf16.msra.mxu0 0
  %8072 = vmatpush.bf16.msra.mxu0 0
  %8073 = vmatpush.bf16.msra.mxu0 %v8052
  %8074 = vmatpush.bf16.msra.mxu0 %v8051
  %8075 = vmatpush.bf16.msra.mxu0 %v8050
  %8076 = vmatpush.bf16.msra.mxu0 %v8049
  %8077 = vmatmul.bf16.gmra.mxu0 %v8058
  %v8078 = vpop.f32.mrf.mxu0
  %v8079 = vadd.f32 0.0, %v8078
  %v8080 = vpop.f32.mrf.mxu0
  %v8081 = vadd.f32 0.0, %v8080
  %8082 = vmatmul.bf16.gmra.mxu0 %v8061
  %v8083 = vpop.f32.mrf.mxu0
  %v8084 = vadd.f32 0.0, %v8083
  %v8085 = vpop.f32.mrf.mxu0
  %v8086 = vadd.f32 0.0, %v8085
  %8087 = vmatmul.bf16.gmra.mxu0 %v8064
  %v8088 = vpop.f32.mrf.mxu0
  %v8089 = vadd.f32 0.0, %v8088
  %v8090 = vpop.f32.mrf.mxu0
  %v8091 = vadd.f32 0.0, %v8090
  %8092 = vmatmul.bf16.gmra.mxu0 %v8067
  %v8093 = vpop.f32.mrf.mxu0
  %v8094 = vadd.f32 0.0, %v8093
  %v8095 = vpop.f32.mrf.mxu0
  %v8096 = vadd.f32 0.0, %v8095
  %8097 = vdwg.mxu0
  %v8098 = vld [vmem:[%s7488] sm:$0xff]
  %v8099 = vld [vmem:[%s7488 + $0x8] sm:$0xff]
  %v8100 = vld [vmem:[%s7488 + $0x10] sm:$0xff]
  %v8101 = vld [vmem:[%s7488 + $0x18] sm:$0xff]
  %v8102 = vld [vmem:[%s7488 + $0x20] sm:$0xff]
  %v8103 = vld [vmem:[%s7488 + $0x28] sm:$0xff]
  %v8104 = vld [vmem:[%s7488 + $0x30] sm:$0xff]
  %v8105 = vld [vmem:[%s7488 + $0x38] sm:$0xff]
  %v8106 = vadd.f32 %v8098, %v8079
  %v8107 = vadd.f32 %v8099, %v8081
  %v8108 = vadd.f32 %v8100, %v8084
  %v8109 = vadd.f32 %v8101, %v8086
  %v8110 = vadd.f32 %v8102, %v8089
  %v8111 = vadd.f32 %v8103, %v8091
  %v8112 = vadd.f32 %v8104, %v8094
  %v8113 = vadd.f32 %v8105, %v8096
  %8114 = vst.msk [vmem:[%s7488] sm:$0xff] %vm4360, %v8106
  %8115 = vst.msk [vmem:[%s7488 + $0x8] sm:$0xff] %vm4360, %v8107
  %8116 = vst.msk [vmem:[%s7488 + $0x10] sm:$0xff] %vm4360, %v8108
  %8117 = vst.msk [vmem:[%s7488 + $0x18] sm:$0xff] %vm4360, %v8109
  %8118 = vst.msk [vmem:[%s7488 + $0x20] sm:$0xff] %vm4360, %v8110
  %8119 = vst.msk [vmem:[%s7488 + $0x28] sm:$0xff] %vm4360, %v8111
  %8120 = vst.msk [vmem:[%s7488 + $0x30] sm:$0xff] %vm4360, %v8112
  %8121 = vst.msk [vmem:[%s7488 + $0x38] sm:$0xff] %vm4360, %v8113
  %v8122 = vld [vmem:[%s4289] sm:$0xf]
  %v8123 = vld [vmem:[%s4289 + $0x4] sm:$0xf]
  %v8124 = vld [vmem:[%s4289 + $0x8] sm:$0xf]
  %v8125 = vld [vmem:[%s4289 + $0xc] sm:$0xf]
  %v8126 = vld [vmem:[%s4289 + $0x10] sm:$0xf]
  %v8127 = vld [vmem:[%s4289 + $0x14] sm:$0xf]
  %v8128 = vld [vmem:[%s4289 + $0x18] sm:$0xf]
  %v8129 = vld [vmem:[%s4289 + $0x1c] sm:$0xf]
  %v8130 = vld [vmem:[%s5048] sm:$0xf]
  %v8131 = vld [vmem:[%s5048 + $0x4] sm:$0xf]
  %v8132 = vld [vmem:[%s5048 + $0x8] sm:$0xf]
  %v8133 = vld [vmem:[%s5048 + $0xc] sm:$0xf]
  %v8134 = vld [vmem:[%s5048 + $0x10] sm:$0xf]
  %v8135 = vld [vmem:[%s5048 + $0x14] sm:$0xf]
  %v8136 = vld [vmem:[%s5048 + $0x18] sm:$0xf]
  %v8137 = vld [vmem:[%s5048 + $0x1c] sm:$0xf]
  %v8146 = vunpack.c.l.b16 %v8122
  %v8147 = vunpack.c.l.b16 %v8123
  %v8148 = vunpack.c.l.b16 %v8124
  %v8149 = vunpack.c.l.b16 %v8125
  %v8150 = vunpack.c.l.b16 %v8126
  %v8151 = vunpack.c.l.b16 %v8127
  %v8152 = vunpack.c.l.b16 %v8128
  %v8153 = vunpack.c.l.b16 %v8129
  %v8154 = vpack.c.b16 %v8147, %v8146
  %v8155 = vpack.c.b16 %v8149, %v8148
  %v8156 = vpack.c.b16 %v8151, %v8150
  %v8157 = vpack.c.b16 %v8153, %v8152
  %v8166 = vunpack.c.l.b16 %v8130
  %v8167 = vunpack.c.l.b16 %v8131
  %v8168 = vunpack.c.l.b16 %v8132
  %v8169 = vunpack.c.l.b16 %v8133
  %v8170 = vunpack.c.l.b16 %v8134
  %v8171 = vunpack.c.l.b16 %v8135
  %v8172 = vunpack.c.l.b16 %v8136
  %v8173 = vunpack.c.l.b16 %v8137
  %v8174 = vpack.c.b16 %v8167, %v8166
  %v8175 = vpack.c.b16 %v8169, %v8168
  %v8176 = vpack.c.b16 %v8171, %v8170
  %v8177 = vpack.c.b16 %v8173, %v8172
  %v8183 = vsel %vm4360, %v8154, 0
  %v8186 = vsel %vm4360, %v8155, 0
  %v8189 = vsel %vm4360, %v8156, 0
  %v8192 = vsel %vm4360, %v8157, 0
  %8194 = vmatpush.bf16.msra.mxu0 0
  %8195 = vmatpush.bf16.msra.mxu0 0
  %8196 = vmatpush.bf16.msra.mxu0 0
  %8197 = vmatpush.bf16.msra.mxu0 0
  %8198 = vmatpush.bf16.msra.mxu0 %v8177
  %8199 = vmatpush.bf16.msra.mxu0 %v8176
  %8200 = vmatpush.bf16.msra.mxu0 %v8175
  %8201 = vmatpush.bf16.msra.mxu0 %v8174
  %8202 = vmatmul.bf16.gmra.mxu0 %v8183
  %v8203 = vpop.f32.mrf.mxu0
  %v8204 = vadd.f32 0.0, %v8203
  %v8205 = vpop.f32.mrf.mxu0
  %v8206 = vadd.f32 0.0, %v8205
  %8207 = vmatmul.bf16.gmra.mxu0 %v8186
  %v8208 = vpop.f32.mrf.mxu0
  %v8209 = vadd.f32 0.0, %v8208
  %v8210 = vpop.f32.mrf.mxu0
  %v8211 = vadd.f32 0.0, %v8210
  %8212 = vmatmul.bf16.gmra.mxu0 %v8189
  %v8213 = vpop.f32.mrf.mxu0
  %v8214 = vadd.f32 0.0, %v8213
  %v8215 = vpop.f32.mrf.mxu0
  %v8216 = vadd.f32 0.0, %v8215
  %8217 = vmatmul.bf16.gmra.mxu0 %v8192
  %v8218 = vpop.f32.mrf.mxu0
  %v8219 = vadd.f32 0.0, %v8218
  %v8220 = vpop.f32.mrf.mxu0
  %v8221 = vadd.f32 0.0, %v8220
  %8222 = vdwg.mxu0
  %v8223 = vld [vmem:[%s7488] sm:$0xff]
  %v8224 = vld [vmem:[%s7488 + $0x8] sm:$0xff]
  %v8225 = vld [vmem:[%s7488 + $0x10] sm:$0xff]
  %v8226 = vld [vmem:[%s7488 + $0x18] sm:$0xff]
  %v8227 = vld [vmem:[%s7488 + $0x20] sm:$0xff]
  %v8228 = vld [vmem:[%s7488 + $0x28] sm:$0xff]
  %v8229 = vld [vmem:[%s7488 + $0x30] sm:$0xff]
  %v8230 = vld [vmem:[%s7488 + $0x38] sm:$0xff]
  %v8231 = vadd.f32 %v8223, %v8204
  %v8232 = vadd.f32 %v8224, %v8206
  %v8233 = vadd.f32 %v8225, %v8209
  %v8234 = vadd.f32 %v8226, %v8211
  %v8235 = vadd.f32 %v8227, %v8214
  %v8236 = vadd.f32 %v8228, %v8216
  %v8237 = vadd.f32 %v8229, %v8219
  %v8238 = vadd.f32 %v8230, %v8221
  %8239 = vst.msk [vmem:[%s7488] sm:$0xff] %vm4360, %v8231
  %8240 = vst.msk [vmem:[%s7488 + $0x8] sm:$0xff] %vm4360, %v8232
  %8241 = vst.msk [vmem:[%s7488 + $0x10] sm:$0xff] %vm4360, %v8233
  %8242 = vst.msk [vmem:[%s7488 + $0x18] sm:$0xff] %vm4360, %v8234
  %8243 = vst.msk [vmem:[%s7488 + $0x20] sm:$0xff] %vm4360, %v8235
  %8244 = vst.msk [vmem:[%s7488 + $0x28] sm:$0xff] %vm4360, %v8236
  %8245 = vst.msk [vmem:[%s7488 + $0x30] sm:$0xff] %vm4360, %v8237
  %8246 = vst.msk [vmem:[%s7488 + $0x38] sm:$0xff] %vm4360, %v8238
  %v8247 = vld [vmem:[%s4289 + $0x8] sm:$0xf]
  %v8248 = vld [vmem:[%s4289 + $0xc] sm:$0xf]
  %v8249 = vld [vmem:[%s4289 + $0x10] sm:$0xf]
  %v8250 = vld [vmem:[%s4289 + $0x14] sm:$0xf]
  %v8251 = vld [vmem:[%s4289 + $0x18] sm:$0xf]
  %v8252 = vld [vmem:[%s4289 + $0x1c] sm:$0xf]
  %v8253 = vld [vmem:[%s4289 + $0x20] sm:$0xf]
  %v8254 = vld [vmem:[%s4289 + $0x24] sm:$0xf]
  %v8255 = vld [vmem:[%s5174] sm:$0xf]
  %v8256 = vld [vmem:[%s5174 + $0x4] sm:$0xf]
  %v8257 = vld [vmem:[%s5174 + $0x8] sm:$0xf]
  %v8258 = vld [vmem:[%s5174 + $0xc] sm:$0xf]
  %v8259 = vld [vmem:[%s5174 + $0x10] sm:$0xf]
  %v8260 = vld [vmem:[%s5174 + $0x14] sm:$0xf]
  %v8261 = vld [vmem:[%s5174 + $0x18] sm:$0xf]
  %v8262 = vld [vmem:[%s5174 + $0x1c] sm:$0xf]
  %v8271 = vunpack.c.l.b16 %v8247
  %v8272 = vunpack.c.l.b16 %v8248
  %v8273 = vunpack.c.l.b16 %v8249
  %v8274 = vunpack.c.l.b16 %v8250
  %v8275 = vunpack.c.l.b16 %v8251
  %v8276 = vunpack.c.l.b16 %v8252
  %v8277 = vunpack.c.l.b16 %v8253
  %v8278 = vunpack.c.l.b16 %v8254
  %v8279 = vpack.c.b16 %v8272, %v8271
  %v8280 = vpack.c.b16 %v8274, %v8273
  %v8281 = vpack.c.b16 %v8276, %v8275
  %v8282 = vpack.c.b16 %v8278, %v8277
  %v8291 = vunpack.c.l.b16 %v8255
  %v8292 = vunpack.c.l.b16 %v8256
  %v8293 = vunpack.c.l.b16 %v8257
  %v8294 = vunpack.c.l.b16 %v8258
  %v8295 = vunpack.c.l.b16 %v8259
  %v8296 = vunpack.c.l.b16 %v8260
  %v8297 = vunpack.c.l.b16 %v8261
  %v8298 = vunpack.c.l.b16 %v8262
  %v8299 = vpack.c.b16 %v8292, %v8291
  %v8300 = vpack.c.b16 %v8294, %v8293
  %v8301 = vpack.c.b16 %v8296, %v8295
  %v8302 = vpack.c.b16 %v8298, %v8297
  %v8308 = vsel %vm4360, %v8279, 0
  %v8311 = vsel %vm4360, %v8280, 0
  %v8314 = vsel %vm4360, %v8281, 0
  %v8317 = vsel %vm4360, %v8282, 0
  %8319 = vmatpush.bf16.msra.mxu0 0
  %8320 = vmatpush.bf16.msra.mxu0 0
  %8321 = vmatpush.bf16.msra.mxu0 0
  %8322 = vmatpush.bf16.msra.mxu0 0
  %8323 = vmatpush.bf16.msra.mxu0 %v8302
  %8324 = vmatpush.bf16.msra.mxu0 %v8301
  %8325 = vmatpush.bf16.msra.mxu0 %v8300
  %8326 = vmatpush.bf16.msra.mxu0 %v8299
  %8327 = vmatmul.bf16.gmra.mxu0 %v8308
  %v8328 = vpop.f32.mrf.mxu0
  %v8329 = vadd.f32 0.0, %v8328
  %v8330 = vpop.f32.mrf.mxu0
  %v8331 = vadd.f32 0.0, %v8330
  %8332 = vmatmul.bf16.gmra.mxu0 %v8311
  %v8333 = vpop.f32.mrf.mxu0
  %v8334 = vadd.f32 0.0, %v8333
  %v8335 = vpop.f32.mrf.mxu0
  %v8336 = vadd.f32 0.0, %v8335
  %8337 = vmatmul.bf16.gmra.mxu0 %v8314
  %v8338 = vpop.f32.mrf.mxu0
  %v8339 = vadd.f32 0.0, %v8338
  %v8340 = vpop.f32.mrf.mxu0
  %v8341 = vadd.f32 0.0, %v8340
  %8342 = vmatmul.bf16.gmra.mxu0 %v8317
  %v8343 = vpop.f32.mrf.mxu0
  %v8344 = vadd.f32 0.0, %v8343
  %v8345 = vpop.f32.mrf.mxu0
  %v8346 = vadd.f32 0.0, %v8345
  %8347 = vdwg.mxu0
  %v8348 = vld [vmem:[%s7488] sm:$0xff]
  %v8349 = vld [vmem:[%s7488 + $0x8] sm:$0xff]
  %v8350 = vld [vmem:[%s7488 + $0x10] sm:$0xff]
  %v8351 = vld [vmem:[%s7488 + $0x18] sm:$0xff]
  %v8352 = vld [vmem:[%s7488 + $0x20] sm:$0xff]
  %v8353 = vld [vmem:[%s7488 + $0x28] sm:$0xff]
  %v8354 = vld [vmem:[%s7488 + $0x30] sm:$0xff]
  %v8355 = vld [vmem:[%s7488 + $0x38] sm:$0xff]
  %v8356 = vadd.f32 %v8348, %v8329
  %v8357 = vadd.f32 %v8349, %v8331
  %v8358 = vadd.f32 %v8350, %v8334
  %v8359 = vadd.f32 %v8351, %v8336
  %v8360 = vadd.f32 %v8352, %v8339
  %v8361 = vadd.f32 %v8353, %v8341
  %v8362 = vadd.f32 %v8354, %v8344
  %v8363 = vadd.f32 %v8355, %v8346
  %8364 = vst.msk [vmem:[%s7488] sm:$0xff] %vm4360, %v8356
  %8365 = vst.msk [vmem:[%s7488 + $0x8] sm:$0xff] %vm4360, %v8357
  %8366 = vst.msk [vmem:[%s7488 + $0x10] sm:$0xff] %vm4360, %v8358
  %8367 = vst.msk [vmem:[%s7488 + $0x18] sm:$0xff] %vm4360, %v8359
  %8368 = vst.msk [vmem:[%s7488 + $0x20] sm:$0xff] %vm4360, %v8360
  %8369 = vst.msk [vmem:[%s7488 + $0x28] sm:$0xff] %vm4360, %v8361
  %8370 = vst.msk [vmem:[%s7488 + $0x30] sm:$0xff] %vm4360, %v8362
  %8371 = vst.msk [vmem:[%s7488 + $0x38] sm:$0xff] %vm4360, %v8363
  %v8372 = vld [vmem:[%s7488] sm:$0xff]
  %v8373 = vld [vmem:[%s7488 + $0x8] sm:$0xff]
  %v8374 = vld [vmem:[%s7488 + $0x10] sm:$0xff]
  %v8375 = vld [vmem:[%s7488 + $0x18] sm:$0xff]
  %v8376 = vld [vmem:[%s7488 + $0x20] sm:$0xff]
  %v8377 = vld [vmem:[%s7488 + $0x28] sm:$0xff]
  %v8378 = vld [vmem:[%s7488 + $0x30] sm:$0xff]
  %v8379 = vld [vmem:[%s7488 + $0x38] sm:$0xff]
  %v8380 = vadd.f32 %v8372, %v5301
  %v8381 = vadd.f32 %v8373, %v5301
  %v8382 = vadd.f32 %v8374, %v5301
  %v8383 = vadd.f32 %v8375, %v5301
  %v8384 = vadd.f32 %v8376, %v5301
  %v8385 = vadd.f32 %v8377, %v5301
  %v8386 = vadd.f32 %v8378, %v5301
  %v8387 = vadd.f32 %v8379, %v5301
  %v8388 = vmax.f32 %v8380, 0.0
  %v8389 = vmax.f32 %v8381, 0.0
  %v8390 = vmax.f32 %v8382, 0.0
  %v8391 = vmax.f32 %v8383, 0.0
  %v8392 = vmax.f32 %v8384, 0.0
  %v8393 = vmax.f32 %v8385, 0.0
  %v8394 = vmax.f32 %v8386, 0.0
  %v8395 = vmax.f32 %v8387, 0.0
  %v8396 = vpack.c.bf16 %v8388, %v8388
  %v8397 = vpack.c.bf16 %v8389, %v8389
  %v8398 = vpack.c.bf16 %v8390, %v8390
  %v8399 = vpack.c.bf16 %v8391, %v8391
  %v8400 = vpack.c.bf16 %v8392, %v8392
  %v8401 = vpack.c.bf16 %v8393, %v8393
  %v8402 = vpack.c.bf16 %v8394, %v8394
  %v8403 = vpack.c.bf16 %v8395, %v8395
  %s8404 = scalar_lea.vmem [#allocation4], 96
  %8405 = vst.msk [vmem:[%s8404] sm:$0xf] %vm455, %v8396
  %8406 = vst.msk [vmem:[%s8404 + $0x4] sm:$0xf] %vm455, %v8397
  %8407 = vst.msk [vmem:[%s8404 + $0x8] sm:$0xf] %vm455, %v8398
  %8408 = vst.msk [vmem:[%s8404 + $0xc] sm:$0xf] %vm455, %v8399
  %8409 = vst.msk [vmem:[%s8404 + $0x10] sm:$0xf] %vm455, %v8400
  %8410 = vst.msk [vmem:[%s8404 + $0x14] sm:$0xf] %vm455, %v8401
  %8411 = vst.msk [vmem:[%s8404 + $0x18] sm:$0xf] %vm455, %v8402
  %8412 = vst.msk [vmem:[%s8404 + $0x1c] sm:$0xf] %vm455, %v8403
  %v8413 = vld [vmem:[%s7] sm:$0x1]
  %v8414 = vld [vmem:[%s7 + $0x1] sm:$0x1]
  %v8415 = vld [vmem:[%s7 + $0x2] sm:$0x1]
  %v8416 = vld [vmem:[%s7 + $0x3] sm:$0x1]
  %v8417 = vld [vmem:[#allocation4] sm:$0xf]
  %v8418 = vld [vmem:[#allocation4 + $0x4] sm:$0xf]
  %v8419 = vld [vmem:[#allocation4 + $0x8] sm:$0xf]
  %v8420 = vld [vmem:[#allocation4 + $0xc] sm:$0xf]
  %v8421 = vld [vmem:[%s5] sm:$0xf]
  %v8422 = vld [vmem:[%s5 + $0x4] sm:$0xf]
  %v8423 = vld [vmem:[%s5 + $0x8] sm:$0xf]
  %v8424 = vld [vmem:[%s5 + $0xc] sm:$0xf]
  %v8425 = vld [vmem:[%s5 + $0x10] sm:$0xf]
  %v8426 = vld [vmem:[%s5 + $0x14] sm:$0xf]
  %v8427 = vld [vmem:[%s5 + $0x18] sm:$0xf]
  %v8428 = vld [vmem:[%s5 + $0x1c] sm:$0xf]
  %v8429 = vld [vmem:[#allocation4 + $0x10] sm:$0xf]
  %v8430 = vld [vmem:[#allocation4 + $0x14] sm:$0xf]
  %s8431 = scalar_lea.vmem %s5, 32
  %v8432 = vld [vmem:[%s8431] sm:$0xf]
  %v8433 = vld [vmem:[%s8431 + $0x4] sm:$0xf]
  %v8434 = vld [vmem:[%s8431 + $0x8] sm:$0xf]
  %v8435 = vld [vmem:[%s8431 + $0xc] sm:$0xf]
  %v8436 = vld [vmem:[%s8431 + $0x10] sm:$0xf]
  %v8437 = vld [vmem:[%s8431 + $0x14] sm:$0xf]
  %v8438 = vld [vmem:[%s8431 + $0x18] sm:$0xf]
  %v8439 = vld [vmem:[%s8431 + $0x1c] sm:$0xf]
  %v8444 = vunpack.c.l.b16 %v8419
  %v8445 = vunpack.c.l.b16 %v8420
  %v8446 = vunpack.c.l.b16 %v8429
  %v8447 = vunpack.c.l.b16 %v8430
  %v8448 = vpack.c.b16 %v8445, %v8444
  %v8449 = vpack.c.b16 %v8447, %v8446
  %v8458 = vunpack.c.l.b16 %v8432
  %v8459 = vunpack.c.l.b16 %v8433
  %v8460 = vunpack.c.l.b16 %v8434
  %v8461 = vunpack.c.l.b16 %v8435
  %v8462 = vunpack.c.l.b16 %v8436
  %v8463 = vunpack.c.l.b16 %v8437
  %v8464 = vunpack.c.l.b16 %v8438
  %v8465 = vunpack.c.l.b16 %v8439
  %v8466 = vpack.c.b16 %v8459, %v8458
  %v8467 = vpack.c.b16 %v8461, %v8460
  %v8468 = vpack.c.b16 %v8463, %v8462
  %v8469 = vpack.c.b16 %v8465, %v8464
  %v8475 = vsel %vm4360, %v8448, 0
  %v8478 = vsel %vm4360, %v8449, 0
  %8480 = vmatpush.bf16.msra.mxu0 0
  %8481 = vmatpush.bf16.msra.mxu0 0
  %8482 = vmatpush.bf16.msra.mxu0 0
  %8483 = vmatpush.bf16.msra.mxu0 0
  %8484 = vmatpush.bf16.msra.mxu0 %v8469
  %8485 = vmatpush.bf16.msra.mxu0 %v8468
  %8486 = vmatpush.bf16.msra.mxu0 %v8467
  %8487 = vmatpush.bf16.msra.mxu0 %v8466
  %8488 = vmatmul.bf16.gmra.mxu0 %v8475
  %v8489 = vpop.f32.mrf.mxu0
  %v8490 = vadd.f32 0.0, %v8489
  %v8491 = vpop.f32.mrf.mxu0
  %v8492 = vadd.f32 0.0, %v8491
  %8493 = vmatmul.bf16.gmra.mxu0 %v8478
  %v8494 = vpop.f32.mrf.mxu0
  %v8495 = vadd.f32 0.0, %v8494
  %v8496 = vpop.f32.mrf.mxu0
  %v8497 = vadd.f32 0.0, %v8496
  %8498 = vdwg.mxu0
  %v8501 = vunpack.c.l.b16 %v8417
  %v8502 = vunpack.c.l.b16 %v8418
  %v8503 = vpack.c.b16 %v8502, %v8501
  %v8512 = vunpack.c.l.b16 %v8421
  %v8513 = vunpack.c.l.b16 %v8422
  %v8514 = vunpack.c.l.b16 %v8423
  %v8515 = vunpack.c.l.b16 %v8424
  %v8516 = vunpack.c.l.b16 %v8425
  %v8517 = vunpack.c.l.b16 %v8426
  %v8518 = vunpack.c.l.b16 %v8427
  %v8519 = vunpack.c.l.b16 %v8428
  %v8520 = vpack.c.b16 %v8513, %v8512
  %v8521 = vpack.c.b16 %v8515, %v8514
  %v8522 = vpack.c.b16 %v8517, %v8516
  %v8523 = vpack.c.b16 %v8519, %v8518
  %v8529 = vsel %vm4360, %v8503, 0
  %8531 = vmatpush.bf16.msra.mxu0 0
  %8532 = vmatpush.bf16.msra.mxu0 0
  %8533 = vmatpush.bf16.msra.mxu0 0
  %8534 = vmatpush.bf16.msra.mxu0 0
  %8535 = vmatpush.bf16.msra.mxu0 %v8523
  %8536 = vmatpush.bf16.msra.mxu0 %v8522
  %8537 = vmatpush.bf16.msra.mxu0 %v8521
  %8538 = vmatpush.bf16.msra.mxu0 %v8520
  %8539 = vmatmul.bf16.gmra.mxu0 %v8529
  %v8540 = vpop.f32.mrf.mxu0
  %v8541 = vadd.f32 %v8490, %v8540
  %v8542 = vpop.f32.mrf.mxu0
  %v8543 = vadd.f32 %v8492, %v8542
  %8544 = vmatmul.bf16.gmra.mxu0 %v8475
  %v8545 = vpop.f32.mrf.mxu0
  %v8546 = vadd.f32 %v8495, %v8545
  %v8547 = vpop.f32.mrf.mxu0
  %v8548 = vadd.f32 %v8497, %v8547
  %8549 = vdwg.mxu0
  %v8550 = vld [vmem:[#allocation4 + $0x10] sm:$0xf]
  %v8551 = vld [vmem:[#allocation4 + $0x14] sm:$0xf]
  %v8552 = vld [vmem:[#allocation4 + $0x18] sm:$0xf]
  %v8553 = vld [vmem:[#allocation4 + $0x1c] sm:$0xf]
  %s8554 = scalar_lea.vmem %s5, 64
  %v8555 = vld [vmem:[%s8554] sm:$0xf]
  %v8556 = vld [vmem:[%s8554 + $0x4] sm:$0xf]
  %v8557 = vld [vmem:[%s8554 + $0x8] sm:$0xf]
  %v8558 = vld [vmem:[%s8554 + $0xc] sm:$0xf]
  %v8559 = vld [vmem:[%s8554 + $0x10] sm:$0xf]
  %v8560 = vld [vmem:[%s8554 + $0x14] sm:$0xf]
  %v8561 = vld [vmem:[%s8554 + $0x18] sm:$0xf]
  %v8562 = vld [vmem:[%s8554 + $0x1c] sm:$0xf]
  %v8567 = vunpack.c.l.b16 %v8550
  %v8568 = vunpack.c.l.b16 %v8551
  %v8569 = vunpack.c.l.b16 %v8552
  %v8570 = vunpack.c.l.b16 %v8553
  %v8571 = vpack.c.b16 %v8568, %v8567
  %v8572 = vpack.c.b16 %v8570, %v8569
  %v8581 = vunpack.c.l.b16 %v8555
  %v8582 = vunpack.c.l.b16 %v8556
  %v8583 = vunpack.c.l.b16 %v8557
  %v8584 = vunpack.c.l.b16 %v8558
  %v8585 = vunpack.c.l.b16 %v8559
  %v8586 = vunpack.c.l.b16 %v8560
  %v8587 = vunpack.c.l.b16 %v8561
  %v8588 = vunpack.c.l.b16 %v8562
  %v8589 = vpack.c.b16 %v8582, %v8581
  %v8590 = vpack.c.b16 %v8584, %v8583
  %v8591 = vpack.c.b16 %v8586, %v8585
  %v8592 = vpack.c.b16 %v8588, %v8587
  %v8598 = vsel %vm4360, %v8571, 0
  %v8601 = vsel %vm4360, %v8572, 0
  %8603 = vmatpush.bf16.msra.mxu0 0
  %8604 = vmatpush.bf16.msra.mxu0 0
  %8605 = vmatpush.bf16.msra.mxu0 0
  %8606 = vmatpush.bf16.msra.mxu0 0
  %8607 = vmatpush.bf16.msra.mxu0 %v8592
  %8608 = vmatpush.bf16.msra.mxu0 %v8591
  %8609 = vmatpush.bf16.msra.mxu0 %v8590
  %8610 = vmatpush.bf16.msra.mxu0 %v8589
  %8611 = vmatmul.bf16.gmra.mxu0 %v8598
  %v8612 = vpop.f32.mrf.mxu0
  %v8613 = vadd.f32 0.0, %v8612
  %v8614 = vpop.f32.mrf.mxu0
  %v8615 = vadd.f32 0.0, %v8614
  %8616 = vmatmul.bf16.gmra.mxu0 %v8601
  %v8617 = vpop.f32.mrf.mxu0
  %v8618 = vadd.f32 0.0, %v8617
  %v8619 = vpop.f32.mrf.mxu0
  %v8620 = vadd.f32 0.0, %v8619
  %8621 = vdwg.mxu0
  %v8622 = vadd.f32 %v8541, %v8613
  %v8623 = vadd.f32 %v8543, %v8615
  %v8624 = vadd.f32 %v8546, %v8618
  %v8625 = vadd.f32 %v8548, %v8620
  %v8626 = vld [vmem:[%s6352] sm:$0xf]
  %v8627 = vld [vmem:[%s6352 + $0x4] sm:$0xf]
  %v8628 = vld [vmem:[%s6352 + $0x8] sm:$0xf]
  %v8629 = vld [vmem:[%s6352 + $0xc] sm:$0xf]
  %s8630 = scalar_lea.vmem %s5, 96
  %v8631 = vld [vmem:[%s8630] sm:$0xf]
  %v8632 = vld [vmem:[%s8630 + $0x4] sm:$0xf]
  %v8633 = vld [vmem:[%s8630 + $0x8] sm:$0xf]
  %v8634 = vld [vmem:[%s8630 + $0xc] sm:$0xf]
  %v8635 = vld [vmem:[%s8630 + $0x10] sm:$0xf]
  %v8636 = vld [vmem:[%s8630 + $0x14] sm:$0xf]
  %v8637 = vld [vmem:[%s8630 + $0x18] sm:$0xf]
  %v8638 = vld [vmem:[%s8630 + $0x1c] sm:$0xf]
  %v8643 = vunpack.c.l.b16 %v8626
  %v8644 = vunpack.c.l.b16 %v8627
  %v8645 = vunpack.c.l.b16 %v8628
  %v8646 = vunpack.c.l.b16 %v8629
  %v8647 = vpack.c.b16 %v8644, %v8643
  %v8648 = vpack.c.b16 %v8646, %v8645
  %v8657 = vunpack.c.l.b16 %v8631
  %v8658 = vunpack.c.l.b16 %v8632
  %v8659 = vunpack.c.l.b16 %v8633
  %v8660 = vunpack.c.l.b16 %v8634
  %v8661 = vunpack.c.l.b16 %v8635
  %v8662 = vunpack.c.l.b16 %v8636
  %v8663 = vunpack.c.l.b16 %v8637
  %v8664 = vunpack.c.l.b16 %v8638
  %v8665 = vpack.c.b16 %v8658, %v8657
  %v8666 = vpack.c.b16 %v8660, %v8659
  %v8667 = vpack.c.b16 %v8662, %v8661
  %v8668 = vpack.c.b16 %v8664, %v8663
  %v8674 = vsel %vm4360, %v8647, 0
  %v8677 = vsel %vm4360, %v8648, 0
  %8679 = vmatpush.bf16.msra.mxu0 0
  %8680 = vmatpush.bf16.msra.mxu0 0
  %8681 = vmatpush.bf16.msra.mxu0 0
  %8682 = vmatpush.bf16.msra.mxu0 0
  %8683 = vmatpush.bf16.msra.mxu0 %v8668
  %8684 = vmatpush.bf16.msra.mxu0 %v8667
  %8685 = vmatpush.bf16.msra.mxu0 %v8666
  %8686 = vmatpush.bf16.msra.mxu0 %v8665
  %8687 = vmatmul.bf16.gmra.mxu0 %v8674
  %v8688 = vpop.f32.mrf.mxu0
  %v8689 = vadd.f32 0.0, %v8688
  %v8690 = vpop.f32.mrf.mxu0
  %v8691 = vadd.f32 0.0, %v8690
  %8692 = vmatmul.bf16.gmra.mxu0 %v8677
  %v8693 = vpop.f32.mrf.mxu0
  %v8694 = vadd.f32 0.0, %v8693
  %v8695 = vpop.f32.mrf.mxu0
  %v8696 = vadd.f32 0.0, %v8695
  %8697 = vdwg.mxu0
  %v8698 = vadd.f32 %v8622, %v8689
  %v8699 = vadd.f32 %v8623, %v8691
  %v8700 = vadd.f32 %v8624, %v8694
  %v8701 = vadd.f32 %v8625, %v8696
  %v8702 = vld [vmem:[%s6352 + $0x8] sm:$0xf]
  %v8703 = vld [vmem:[%s6352 + $0xc] sm:$0xf]
  %v8704 = vld [vmem:[%s6352 + $0x10] sm:$0xf]
  %v8705 = vld [vmem:[%s6352 + $0x14] sm:$0xf]
  %s8706 = scalar_lea.vmem %s5, 128
  %v8707 = vld [vmem:[%s8706] sm:$0xf]
  %v8708 = vld [vmem:[%s8706 + $0x4] sm:$0xf]
  %v8709 = vld [vmem:[%s8706 + $0x8] sm:$0xf]
  %v8710 = vld [vmem:[%s8706 + $0xc] sm:$0xf]
  %v8711 = vld [vmem:[%s8706 + $0x10] sm:$0xf]
  %v8712 = vld [vmem:[%s8706 + $0x14] sm:$0xf]
  %v8713 = vld [vmem:[%s8706 + $0x18] sm:$0xf]
  %v8714 = vld [vmem:[%s8706 + $0x1c] sm:$0xf]
  %v8719 = vunpack.c.l.b16 %v8702
  %v8720 = vunpack.c.l.b16 %v8703
  %v8721 = vunpack.c.l.b16 %v8704
  %v8722 = vunpack.c.l.b16 %v8705
  %v8723 = vpack.c.b16 %v8720, %v8719
  %v8724 = vpack.c.b16 %v8722, %v8721
  %v8733 = vunpack.c.l.b16 %v8707
  %v8734 = vunpack.c.l.b16 %v8708
  %v8735 = vunpack.c.l.b16 %v8709
  %v8736 = vunpack.c.l.b16 %v8710
  %v8737 = vunpack.c.l.b16 %v8711
  %v8738 = vunpack.c.l.b16 %v8712
  %v8739 = vunpack.c.l.b16 %v8713
  %v8740 = vunpack.c.l.b16 %v8714
  %v8741 = vpack.c.b16 %v8734, %v8733
  %v8742 = vpack.c.b16 %v8736, %v8735
  %v8743 = vpack.c.b16 %v8738, %v8737
  %v8744 = vpack.c.b16 %v8740, %v8739
  %v8750 = vsel %vm4360, %v8723, 0
  %v8753 = vsel %vm4360, %v8724, 0
  %8755 = vmatpush.bf16.msra.mxu0 0
  %8756 = vmatpush.bf16.msra.mxu0 0
  %8757 = vmatpush.bf16.msra.mxu0 0
  %8758 = vmatpush.bf16.msra.mxu0 0
  %8759 = vmatpush.bf16.msra.mxu0 %v8744
  %8760 = vmatpush.bf16.msra.mxu0 %v8743
  %8761 = vmatpush.bf16.msra.mxu0 %v8742
  %8762 = vmatpush.bf16.msra.mxu0 %v8741
  %8763 = vmatmul.bf16.gmra.mxu0 %v8750
  %v8764 = vpop.f32.mrf.mxu0
  %v8765 = vadd.f32 0.0, %v8764
  %v8766 = vpop.f32.mrf.mxu0
  %v8767 = vadd.f32 0.0, %v8766
  %8768 = vmatmul.bf16.gmra.mxu0 %v8753
  %v8769 = vpop.f32.mrf.mxu0
  %v8770 = vadd.f32 0.0, %v8769
  %v8771 = vpop.f32.mrf.mxu0
  %v8772 = vadd.f32 0.0, %v8771
  %8773 = vdwg.mxu0
  %v8774 = vadd.f32 %v8698, %v8765
  %v8775 = vadd.f32 %v8699, %v8767
  %v8776 = vadd.f32 %v8700, %v8770
  %v8777 = vadd.f32 %v8701, %v8772
  %v8778 = vld [vmem:[%s6352 + $0x10] sm:$0xf]
  %v8779 = vld [vmem:[%s6352 + $0x14] sm:$0xf]
  %v8780 = vld [vmem:[%s6352 + $0x18] sm:$0xf]
  %v8781 = vld [vmem:[%s6352 + $0x1c] sm:$0xf]
  %s8782 = scalar_lea.vmem %s5, 160
  %v8783 = vld [vmem:[%s8782] sm:$0xf]
  %v8784 = vld [vmem:[%s8782 + $0x4] sm:$0xf]
  %v8785 = vld [vmem:[%s8782 + $0x8] sm:$0xf]
  %v8786 = vld [vmem:[%s8782 + $0xc] sm:$0xf]
  %v8787 = vld [vmem:[%s8782 + $0x10] sm:$0xf]
  %v8788 = vld [vmem:[%s8782 + $0x14] sm:$0xf]
  %v8789 = vld [vmem:[%s8782 + $0x18] sm:$0xf]
  %v8790 = vld [vmem:[%s8782 + $0x1c] sm:$0xf]
  %v8795 = vunpack.c.l.b16 %v8778
  %v8796 = vunpack.c.l.b16 %v8779
  %v8797 = vunpack.c.l.b16 %v8780
  %v8798 = vunpack.c.l.b16 %v8781
  %v8799 = vpack.c.b16 %v8796, %v8795
  %v8800 = vpack.c.b16 %v8798, %v8797
  %v8809 = vunpack.c.l.b16 %v8783
  %v8810 = vunpack.c.l.b16 %v8784
  %v8811 = vunpack.c.l.b16 %v8785
  %v8812 = vunpack.c.l.b16 %v8786
  %v8813 = vunpack.c.l.b16 %v8787
  %v8814 = vunpack.c.l.b16 %v8788
  %v8815 = vunpack.c.l.b16 %v8789
  %v8816 = vunpack.c.l.b16 %v8790
  %v8817 = vpack.c.b16 %v8810, %v8809
  %v8818 = vpack.c.b16 %v8812, %v8811
  %v8819 = vpack.c.b16 %v8814, %v8813
  %v8820 = vpack.c.b16 %v8816, %v8815
  %v8826 = vsel %vm4360, %v8799, 0
  %v8829 = vsel %vm4360, %v8800, 0
  %8831 = vmatpush.bf16.msra.mxu0 0
  %8832 = vmatpush.bf16.msra.mxu0 0
  %8833 = vmatpush.bf16.msra.mxu0 0
  %8834 = vmatpush.bf16.msra.mxu0 0
  %8835 = vmatpush.bf16.msra.mxu0 %v8820
  %8836 = vmatpush.bf16.msra.mxu0 %v8819
  %8837 = vmatpush.bf16.msra.mxu0 %v8818
  %8838 = vmatpush.bf16.msra.mxu0 %v8817
  %8839 = vmatmul.bf16.gmra.mxu0 %v8826
  %v8840 = vpop.f32.mrf.mxu0
  %v8841 = vadd.f32 0.0, %v8840
  %v8842 = vpop.f32.mrf.mxu0
  %v8843 = vadd.f32 0.0, %v8842
  %8844 = vmatmul.bf16.gmra.mxu0 %v8829
  %v8845 = vpop.f32.mrf.mxu0
  %v8846 = vadd.f32 0.0, %v8845
  %v8847 = vpop.f32.mrf.mxu0
  %v8848 = vadd.f32 0.0, %v8847
  %8849 = vdwg.mxu0
  %v8850 = vadd.f32 %v8774, %v8841
  %v8851 = vadd.f32 %v8775, %v8843
  %v8852 = vadd.f32 %v8776, %v8846
  %v8853 = vadd.f32 %v8777, %v8848
  %v8854 = vld [vmem:[%s7378] sm:$0xf]
  %v8855 = vld [vmem:[%s7378 + $0x4] sm:$0xf]
  %v8856 = vld [vmem:[%s7378 + $0x8] sm:$0xf]
  %v8857 = vld [vmem:[%s7378 + $0xc] sm:$0xf]
  %s8858 = scalar_lea.vmem %s5, 192
  %v8859 = vld [vmem:[%s8858] sm:$0xf]
  %v8860 = vld [vmem:[%s8858 + $0x4] sm:$0xf]
  %v8861 = vld [vmem:[%s8858 + $0x8] sm:$0xf]
  %v8862 = vld [vmem:[%s8858 + $0xc] sm:$0xf]
  %v8863 = vld [vmem:[%s8858 + $0x10] sm:$0xf]
  %v8864 = vld [vmem:[%s8858 + $0x14] sm:$0xf]
  %v8865 = vld [vmem:[%s8858 + $0x18] sm:$0xf]
  %v8866 = vld [vmem:[%s8858 + $0x1c] sm:$0xf]
  %v8871 = vunpack.c.l.b16 %v8854
  %v8872 = vunpack.c.l.b16 %v8855
  %v8873 = vunpack.c.l.b16 %v8856
  %v8874 = vunpack.c.l.b16 %v8857
  %v8875 = vpack.c.b16 %v8872, %v8871
  %v8876 = vpack.c.b16 %v8874, %v8873
  %v8885 = vunpack.c.l.b16 %v8859
  %v8886 = vunpack.c.l.b16 %v8860
  %v8887 = vunpack.c.l.b16 %v8861
  %v8888 = vunpack.c.l.b16 %v8862
  %v8889 = vunpack.c.l.b16 %v8863
  %v8890 = vunpack.c.l.b16 %v8864
  %v8891 = vunpack.c.l.b16 %v8865
  %v8892 = vunpack.c.l.b16 %v8866
  %v8893 = vpack.c.b16 %v8886, %v8885
  %v8894 = vpack.c.b16 %v8888, %v8887
  %v8895 = vpack.c.b16 %v8890, %v8889
  %v8896 = vpack.c.b16 %v8892, %v8891
  %v8902 = vsel %vm4360, %v8875, 0
  %v8905 = vsel %vm4360, %v8876, 0
  %8907 = vmatpush.bf16.msra.mxu0 0
  %8908 = vmatpush.bf16.msra.mxu0 0
  %8909 = vmatpush.bf16.msra.mxu0 0
  %8910 = vmatpush.bf16.msra.mxu0 0
  %8911 = vmatpush.bf16.msra.mxu0 %v8896
  %8912 = vmatpush.bf16.msra.mxu0 %v8895
  %8913 = vmatpush.bf16.msra.mxu0 %v8894
  %8914 = vmatpush.bf16.msra.mxu0 %v8893
  %8915 = vmatmul.bf16.gmra.mxu0 %v8902
  %v8916 = vpop.f32.mrf.mxu0
  %v8917 = vadd.f32 0.0, %v8916
  %v8918 = vpop.f32.mrf.mxu0
  %v8919 = vadd.f32 0.0, %v8918
  %8920 = vmatmul.bf16.gmra.mxu0 %v8905
  %v8921 = vpop.f32.mrf.mxu0
  %v8922 = vadd.f32 0.0, %v8921
  %v8923 = vpop.f32.mrf.mxu0
  %v8924 = vadd.f32 0.0, %v8923
  %8925 = vdwg.mxu0
  %v8926 = vadd.f32 %v8850, %v8917
  %v8927 = vadd.f32 %v8851, %v8919
  %v8928 = vadd.f32 %v8852, %v8922
  %v8929 = vadd.f32 %v8853, %v8924
  %v8930 = vld [vmem:[%s7378 + $0x8] sm:$0xf]
  %v8931 = vld [vmem:[%s7378 + $0xc] sm:$0xf]
  %v8932 = vld [vmem:[%s7378 + $0x10] sm:$0xf]
  %v8933 = vld [vmem:[%s7378 + $0x14] sm:$0xf]
  %s8934 = scalar_lea.vmem %s5, 224
  %v8935 = vld [vmem:[%s8934] sm:$0xf]
  %v8936 = vld [vmem:[%s8934 + $0x4] sm:$0xf]
  %v8937 = vld [vmem:[%s8934 + $0x8] sm:$0xf]
  %v8938 = vld [vmem:[%s8934 + $0xc] sm:$0xf]
  %v8939 = vld [vmem:[%s8934 + $0x10] sm:$0xf]
  %v8940 = vld [vmem:[%s8934 + $0x14] sm:$0xf]
  %v8941 = vld [vmem:[%s8934 + $0x18] sm:$0xf]
  %v8942 = vld [vmem:[%s8934 + $0x1c] sm:$0xf]
  %v8947 = vunpack.c.l.b16 %v8930
  %v8948 = vunpack.c.l.b16 %v8931
  %v8949 = vunpack.c.l.b16 %v8932
  %v8950 = vunpack.c.l.b16 %v8933
  %v8951 = vpack.c.b16 %v8948, %v8947
  %v8952 = vpack.c.b16 %v8950, %v8949
  %v8961 = vunpack.c.l.b16 %v8935
  %v8962 = vunpack.c.l.b16 %v8936
  %v8963 = vunpack.c.l.b16 %v8937
  %v8964 = vunpack.c.l.b16 %v8938
  %v8965 = vunpack.c.l.b16 %v8939
  %v8966 = vunpack.c.l.b16 %v8940
  %v8967 = vunpack.c.l.b16 %v8941
  %v8968 = vunpack.c.l.b16 %v8942
  %v8969 = vpack.c.b16 %v8962, %v8961
  %v8970 = vpack.c.b16 %v8964, %v8963
  %v8971 = vpack.c.b16 %v8966, %v8965
  %v8972 = vpack.c.b16 %v8968, %v8967
  %v8978 = vsel %vm4360, %v8951, 0
  %v8981 = vsel %vm4360, %v8952, 0
  %8983 = vmatpush.bf16.msra.mxu0 0
  %8984 = vmatpush.bf16.msra.mxu0 0
  %8985 = vmatpush.bf16.msra.mxu0 0
  %8986 = vmatpush.bf16.msra.mxu0 0
  %8987 = vmatpush.bf16.msra.mxu0 %v8972
  %8988 = vmatpush.bf16.msra.mxu0 %v8971
  %8989 = vmatpush.bf16.msra.mxu0 %v8970
  %8990 = vmatpush.bf16.msra.mxu0 %v8969
  %8991 = vmatmul.bf16.gmra.mxu0 %v8978
  %v8992 = vpop.f32.mrf.mxu0
  %v8993 = vadd.f32 0.0, %v8992
  %v8994 = vpop.f32.mrf.mxu0
  %v8995 = vadd.f32 0.0, %v8994
  %8996 = vmatmul.bf16.gmra.mxu0 %v8981
  %v8997 = vpop.f32.mrf.mxu0
  %v8998 = vadd.f32 0.0, %v8997
  %v8999 = vpop.f32.mrf.mxu0
  %v9000 = vadd.f32 0.0, %v8999
  %9001 = vdwg.mxu0
  %v9002 = vadd.f32 %v8926, %v8993
  %v9003 = vadd.f32 %v8927, %v8995
  %v9004 = vadd.f32 %v8928, %v8998
  %v9005 = vadd.f32 %v8929, %v9000
  %v9006 = vld [vmem:[%s7378 + $0x10] sm:$0xf]
  %v9007 = vld [vmem:[%s7378 + $0x14] sm:$0xf]
  %v9008 = vld [vmem:[%s7378 + $0x18] sm:$0xf]
  %v9009 = vld [vmem:[%s7378 + $0x1c] sm:$0xf]
  %s9010 = scalar_lea.vmem %s5, 256
  %v9011 = vld [vmem:[%s9010] sm:$0xf]
  %v9012 = vld [vmem:[%s9010 + $0x4] sm:$0xf]
  %v9013 = vld [vmem:[%s9010 + $0x8] sm:$0xf]
  %v9014 = vld [vmem:[%s9010 + $0xc] sm:$0xf]
  %v9015 = vld [vmem:[%s9010 + $0x10] sm:$0xf]
  %v9016 = vld [vmem:[%s9010 + $0x14] sm:$0xf]
  %v9017 = vld [vmem:[%s9010 + $0x18] sm:$0xf]
  %v9018 = vld [vmem:[%s9010 + $0x1c] sm:$0xf]
  %v9023 = vunpack.c.l.b16 %v9006
  %v9024 = vunpack.c.l.b16 %v9007
  %v9025 = vunpack.c.l.b16 %v9008
  %v9026 = vunpack.c.l.b16 %v9009
  %v9027 = vpack.c.b16 %v9024, %v9023
  %v9028 = vpack.c.b16 %v9026, %v9025
  %v9037 = vunpack.c.l.b16 %v9011
  %v9038 = vunpack.c.l.b16 %v9012
  %v9039 = vunpack.c.l.b16 %v9013
  %v9040 = vunpack.c.l.b16 %v9014
  %v9041 = vunpack.c.l.b16 %v9015
  %v9042 = vunpack.c.l.b16 %v9016
  %v9043 = vunpack.c.l.b16 %v9017
  %v9044 = vunpack.c.l.b16 %v9018
  %v9045 = vpack.c.b16 %v9038, %v9037
  %v9046 = vpack.c.b16 %v9040, %v9039
  %v9047 = vpack.c.b16 %v9042, %v9041
  %v9048 = vpack.c.b16 %v9044, %v9043
  %v9054 = vsel %vm4360, %v9027, 0
  %v9057 = vsel %vm4360, %v9028, 0
  %9059 = vmatpush.bf16.msra.mxu0 0
  %9060 = vmatpush.bf16.msra.mxu0 0
  %9061 = vmatpush.bf16.msra.mxu0 0
  %9062 = vmatpush.bf16.msra.mxu0 0
  %9063 = vmatpush.bf16.msra.mxu0 %v9048
  %9064 = vmatpush.bf16.msra.mxu0 %v9047
  %9065 = vmatpush.bf16.msra.mxu0 %v9046
  %9066 = vmatpush.bf16.msra.mxu0 %v9045
  %9067 = vmatmul.bf16.gmra.mxu0 %v9054
  %v9068 = vpop.f32.mrf.mxu0
  %v9069 = vadd.f32 0.0, %v9068
  %v9070 = vpop.f32.mrf.mxu0
  %v9071 = vadd.f32 0.0, %v9070
  %9072 = vmatmul.bf16.gmra.mxu0 %v9057
  %v9073 = vpop.f32.mrf.mxu0
  %v9074 = vadd.f32 0.0, %v9073
  %v9075 = vpop.f32.mrf.mxu0
  %v9076 = vadd.f32 0.0, %v9075
  %9077 = vdwg.mxu0
  %v9078 = vadd.f32 %v9002, %v9069
  %v9079 = vadd.f32 %v9003, %v9071
  %v9080 = vadd.f32 %v9004, %v9074
  %v9081 = vadd.f32 %v9005, %v9076
  %v9083 = vperm.slane %v37, 0
  %v9085 = vadd.f32 %v9078, %v9083
  %v9086 = vadd.f32 %v9079, %v9083
  %v9087 = vadd.f32 %v9080, %v9083
  %v9088 = vadd.f32 %v9081, %v9083
  %v9089 = vmax.f32 %v9085, 0.0
  %v9090 = vmax.f32 %v9086, 0.0
  %v9091 = vmax.f32 %v9087, 0.0
  %v9092 = vmax.f32 %v9088, 0.0
  %v9095 = vperm.slane %v8413, 0
  %v9096 = vperm.slane %v8414, 0
  %v9099 = vmul.f32 %v9089, %v9095
  %v9100 = vmul.f32 %v9090, %v9095
  %v9101 = vmul.f32 %v9091, %v9096
  %v9102 = vmul.f32 %v9092, %v9096
  %v9103 = vsel %vm4360, %v9099, 0.0
  %9104 = vadd.xlane.f32.xlu0 %v9103
  %v9105 = vpop.xlane.xlu0 %9104
  %v9106 = vsel %vm4360, %v9100, 0.0
  %9107 = vadd.xlane.f32.xlu0 %v9106
  %v9108 = vpop.xlane.xlu0 %9107
  %v9109 = vsel %vm4360, %v9101, 0.0
  %9110 = vadd.xlane.f32.xlu0 %v9109
  %v9111 = vpop.xlane.xlu0 %9110
  %v9112 = vsel %vm4360, %v9102, 0.0
  %9113 = vadd.xlane.f32.xlu0 %v9112
  %v9114 = vpop.xlane.xlu0 %9113
  %v9115 = vadd.f32 %v9105, %v9111
  %v9116 = vadd.f32 %v9108, %v9114
  %v9117 = vadd.f32 %v9115, 0.0
  %v9118 = vadd.f32 %v9116, 0.0
  %9119 = vmatpush.bf16.msra.mxu0 0
  %9120 = vmatpush.bf16.msra.mxu0 0
  %9121 = vmatpush.bf16.msra.mxu0 0
  %9122 = vmatpush.bf16.msra.mxu0 0
  %9123 = vmatpush.bf16.msra.mxu0 %v8469
  %9124 = vmatpush.bf16.msra.mxu0 %v8468
  %9125 = vmatpush.bf16.msra.mxu0 %v8467
  %9126 = vmatpush.bf16.msra.mxu0 %v8466
  %9127 = vmatmul.bf16.gmra.mxu0 %v8750
  %v9128 = vpop.f32.mrf.mxu0
  %v9129 = vadd.f32 0.0, %v9128
  %v9130 = vpop.f32.mrf.mxu0
  %v9131 = vadd.f32 0.0, %v9130
  %9132 = vmatmul.bf16.gmra.mxu0 %v8753
  %v9133 = vpop.f32.mrf.mxu0
  %v9134 = vadd.f32 0.0, %v9133
  %v9135 = vpop.f32.mrf.mxu0
  %v9136 = vadd.f32 0.0, %v9135
  %9137 = vdwg.mxu0
  %9138 = vmatpush.bf16.msra.mxu0 0
  %9139 = vmatpush.bf16.msra.mxu0 0
  %9140 = vmatpush.bf16.msra.mxu0 0
  %9141 = vmatpush.bf16.msra.mxu0 0
  %9142 = vmatpush.bf16.msra.mxu0 %v8523
  %9143 = vmatpush.bf16.msra.mxu0 %v8522
  %9144 = vmatpush.bf16.msra.mxu0 %v8521
  %9145 = vmatpush.bf16.msra.mxu0 %v8520
  %9146 = vmatmul.bf16.gmra.mxu0 %v8674
  %v9147 = vpop.f32.mrf.mxu0
  %v9148 = vadd.f32 %v9129, %v9147
  %v9149 = vpop.f32.mrf.mxu0
  %v9150 = vadd.f32 %v9131, %v9149
  %9151 = vmatmul.bf16.gmra.mxu0 %v8677
  %v9152 = vpop.f32.mrf.mxu0
  %v9153 = vadd.f32 %v9134, %v9152
  %v9154 = vpop.f32.mrf.mxu0
  %v9155 = vadd.f32 %v9136, %v9154
  %9156 = vdwg.mxu0
  %9157 = vmatpush.bf16.msra.mxu0 0
  %9158 = vmatpush.bf16.msra.mxu0 0
  %9159 = vmatpush.bf16.msra.mxu0 0
  %9160 = vmatpush.bf16.msra.mxu0 0
  %9161 = vmatpush.bf16.msra.mxu0 %v8592
  %9162 = vmatpush.bf16.msra.mxu0 %v8591
  %9163 = vmatpush.bf16.msra.mxu0 %v8590
  %9164 = vmatpush.bf16.msra.mxu0 %v8589
  %9165 = vmatmul.bf16.gmra.mxu0 %v8826
  %v9166 = vpop.f32.mrf.mxu0
  %v9167 = vadd.f32 0.0, %v9166
  %v9168 = vpop.f32.mrf.mxu0
  %v9169 = vadd.f32 0.0, %v9168
  %9170 = vmatmul.bf16.gmra.mxu0 %v8829
  %v9171 = vpop.f32.mrf.mxu0
  %v9172 = vadd.f32 0.0, %v9171
  %v9173 = vpop.f32.mrf.mxu0
  %v9174 = vadd.f32 0.0, %v9173
  %9175 = vdwg.mxu0
  %v9176 = vadd.f32 %v9148, %v9167
  %v9177 = vadd.f32 %v9150, %v9169
  %v9178 = vadd.f32 %v9153, %v9172
  %v9179 = vadd.f32 %v9155, %v9174
  %9180 = vmatpush.bf16.msra.mxu0 0
  %9181 = vmatpush.bf16.msra.mxu0 0
  %9182 = vmatpush.bf16.msra.mxu0 0
  %9183 = vmatpush.bf16.msra.mxu0 0
  %9184 = vmatpush.bf16.msra.mxu0 %v8668
  %9185 = vmatpush.bf16.msra.mxu0 %v8667
  %9186 = vmatpush.bf16.msra.mxu0 %v8666
  %9187 = vmatpush.bf16.msra.mxu0 %v8665
  %9188 = vmatmul.bf16.gmra.mxu0 %v8902
  %v9189 = vpop.f32.mrf.mxu0
  %v9190 = vadd.f32 0.0, %v9189
  %v9191 = vpop.f32.mrf.mxu0
  %v9192 = vadd.f32 0.0, %v9191
  %9193 = vmatmul.bf16.gmra.mxu0 %v8905
  %v9194 = vpop.f32.mrf.mxu0
  %v9195 = vadd.f32 0.0, %v9194
  %v9196 = vpop.f32.mrf.mxu0
  %v9197 = vadd.f32 0.0, %v9196
  %9198 = vdwg.mxu0
  %v9199 = vadd.f32 %v9176, %v9190
  %v9200 = vadd.f32 %v9177, %v9192
  %v9201 = vadd.f32 %v9178, %v9195
  %v9202 = vadd.f32 %v9179, %v9197
  %9203 = vmatpush.bf16.msra.mxu0 0
  %9204 = vmatpush.bf16.msra.mxu0 0
  %9205 = vmatpush.bf16.msra.mxu0 0
  %9206 = vmatpush.bf16.msra.mxu0 0
  %9207 = vmatpush.bf16.msra.mxu0 %v8744
  %9208 = vmatpush.bf16.msra.mxu0 %v8743
  %9209 = vmatpush.bf16.msra.mxu0 %v8742
  %9210 = vmatpush.bf16.msra.mxu0 %v8741
  %9211 = vmatmul.bf16.gmra.mxu0 %v8978
  %v9212 = vpop.f32.mrf.mxu0
  %v9213 = vadd.f32 0.0, %v9212
  %v9214 = vpop.f32.mrf.mxu0
  %v9215 = vadd.f32 0.0, %v9214
  %9216 = vmatmul.bf16.gmra.mxu0 %v8981
  %v9217 = vpop.f32.mrf.mxu0
  %v9218 = vadd.f32 0.0, %v9217
  %v9219 = vpop.f32.mrf.mxu0
  %v9220 = vadd.f32 0.0, %v9219
  %9221 = vdwg.mxu0
  %v9222 = vadd.f32 %v9199, %v9213
  %v9223 = vadd.f32 %v9200, %v9215
  %v9224 = vadd.f32 %v9201, %v9218
  %v9225 = vadd.f32 %v9202, %v9220
  %9226 = vmatpush.bf16.msra.mxu0 0
  %9227 = vmatpush.bf16.msra.mxu0 0
  %9228 = vmatpush.bf16.msra.mxu0 0
  %9229 = vmatpush.bf16.msra.mxu0 0
  %9230 = vmatpush.bf16.msra.mxu0 %v8820
  %9231 = vmatpush.bf16.msra.mxu0 %v8819
  %9232 = vmatpush.bf16.msra.mxu0 %v8818
  %9233 = vmatpush.bf16.msra.mxu0 %v8817
  %9234 = vmatmul.bf16.gmra.mxu0 %v9054
  %v9235 = vpop.f32.mrf.mxu0
  %v9236 = vadd.f32 0.0, %v9235
  %v9237 = vpop.f32.mrf.mxu0
  %v9238 = vadd.f32 0.0, %v9237
  %9239 = vmatmul.bf16.gmra.mxu0 %v9057
  %v9240 = vpop.f32.mrf.mxu0
  %v9241 = vadd.f32 0.0, %v9240
  %v9242 = vpop.f32.mrf.mxu0
  %v9243 = vadd.f32 0.0, %v9242
  %9244 = vdwg.mxu0
  %v9245 = vadd.f32 %v9222, %v9236
  %v9246 = vadd.f32 %v9223, %v9238
  %v9247 = vadd.f32 %v9224, %v9241
  %v9248 = vadd.f32 %v9225, %v9243
  %v9249 = vld [vmem:[%s8404] sm:$0xf]
  %v9250 = vld [vmem:[%s8404 + $0x4] sm:$0xf]
  %v9251 = vld [vmem:[%s8404 + $0x8] sm:$0xf]
  %v9252 = vld [vmem:[%s8404 + $0xc] sm:$0xf]
  %v9257 = vunpack.c.l.b16 %v9249
  %v9258 = vunpack.c.l.b16 %v9250
  %v9259 = vunpack.c.l.b16 %v9251
  %v9260 = vunpack.c.l.b16 %v9252
  %v9261 = vpack.c.b16 %v9258, %v9257
  %v9262 = vpack.c.b16 %v9260, %v9259
  %v9264 = vsel %vm4360, %v9261, 0
  %v9267 = vsel %vm4360, %v9262, 0
  %9269 = vmatpush.bf16.msra.mxu0 0
  %9270 = vmatpush.bf16.msra.mxu0 0
  %9271 = vmatpush.bf16.msra.mxu0 0
  %9272 = vmatpush.bf16.msra.mxu0 0
  %9273 = vmatpush.bf16.msra.mxu0 %v8896
  %9274 = vmatpush.bf16.msra.mxu0 %v8895
  %9275 = vmatpush.bf16.msra.mxu0 %v8894
  %9276 = vmatpush.bf16.msra.mxu0 %v8893
  %9277 = vmatmul.bf16.gmra.mxu0 %v9264
  %v9278 = vpop.f32.mrf.mxu0
  %v9279 = vadd.f32 0.0, %v9278
  %v9280 = vpop.f32.mrf.mxu0
  %v9281 = vadd.f32 0.0, %v9280
  %9282 = vmatmul.bf16.gmra.mxu0 %v9267
  %v9283 = vpop.f32.mrf.mxu0
  %v9284 = vadd.f32 0.0, %v9283
  %v9285 = vpop.f32.mrf.mxu0
  %v9286 = vadd.f32 0.0, %v9285
  %9287 = vdwg.mxu0
  %v9288 = vadd.f32 %v9245, %v9279
  %v9289 = vadd.f32 %v9246, %v9281
  %v9290 = vadd.f32 %v9247, %v9284
  %v9291 = vadd.f32 %v9248, %v9286
  %v9292 = vld [vmem:[%s8404 + $0x8] sm:$0xf]
  %v9293 = vld [vmem:[%s8404 + $0xc] sm:$0xf]
  %v9294 = vld [vmem:[%s8404 + $0x10] sm:$0xf]
  %v9295 = vld [vmem:[%s8404 + $0x14] sm:$0xf]
  %v9300 = vunpack.c.l.b16 %v9292
  %v9301 = vunpack.c.l.b16 %v9293
  %v9302 = vunpack.c.l.b16 %v9294
  %v9303 = vunpack.c.l.b16 %v9295
  %v9304 = vpack.c.b16 %v9301, %v9300
  %v9305 = vpack.c.b16 %v9303, %v9302
  %v9307 = vsel %vm4360, %v9304, 0
  %v9310 = vsel %vm4360, %v9305, 0
  %9312 = vmatpush.bf16.msra.mxu0 0
  %9313 = vmatpush.bf16.msra.mxu0 0
  %9314 = vmatpush.bf16.msra.mxu0 0
  %9315 = vmatpush.bf16.msra.mxu0 0
  %9316 = vmatpush.bf16.msra.mxu0 %v8972
  %9317 = vmatpush.bf16.msra.mxu0 %v8971
  %9318 = vmatpush.bf16.msra.mxu0 %v8970
  %9319 = vmatpush.bf16.msra.mxu0 %v8969
  %9320 = vmatmul.bf16.gmra.mxu0 %v9307
  %v9321 = vpop.f32.mrf.mxu0
  %v9322 = vadd.f32 0.0, %v9321
  %v9323 = vpop.f32.mrf.mxu0
  %v9324 = vadd.f32 0.0, %v9323
  %9325 = vmatmul.bf16.gmra.mxu0 %v9310
  %v9326 = vpop.f32.mrf.mxu0
  %v9327 = vadd.f32 0.0, %v9326
  %v9328 = vpop.f32.mrf.mxu0
  %v9329 = vadd.f32 0.0, %v9328
  %9330 = vdwg.mxu0
  %v9331 = vadd.f32 %v9288, %v9322
  %v9332 = vadd.f32 %v9289, %v9324
  %v9333 = vadd.f32 %v9290, %v9327
  %v9334 = vadd.f32 %v9291, %v9329
  %v9335 = vld [vmem:[%s8404 + $0x10] sm:$0xf]
  %v9336 = vld [vmem:[%s8404 + $0x14] sm:$0xf]
  %v9337 = vld [vmem:[%s8404 + $0x18] sm:$0xf]
  %v9338 = vld [vmem:[%s8404 + $0x1c] sm:$0xf]
  %v9343 = vunpack.c.l.b16 %v9335
  %v9344 = vunpack.c.l.b16 %v9336
  %v9345 = vunpack.c.l.b16 %v9337
  %v9346 = vunpack.c.l.b16 %v9338
  %v9347 = vpack.c.b16 %v9344, %v9343
  %v9348 = vpack.c.b16 %v9346, %v9345
  %v9350 = vsel %vm4360, %v9347, 0
  %v9353 = vsel %vm4360, %v9348, 0
  %9355 = vmatpush.bf16.msra.mxu0 0
  %9356 = vmatpush.bf16.msra.mxu0 0
  %9357 = vmatpush.bf16.msra.mxu0 0
  %9358 = vmatpush.bf16.msra.mxu0 0
  %9359 = vmatpush.bf16.msra.mxu0 %v9048
  %9360 = vmatpush.bf16.msra.mxu0 %v9047
  %9361 = vmatpush.bf16.msra.mxu0 %v9046
  %9362 = vmatpush.bf16.msra.mxu0 %v9045
  %9363 = vmatmul.bf16.gmra.mxu0 %v9350
  %v9364 = vpop.f32.mrf.mxu0
  %v9365 = vadd.f32 0.0, %v9364
  %v9366 = vpop.f32.mrf.mxu0
  %v9367 = vadd.f32 0.0, %v9366
  %9368 = vmatmul.bf16.gmra.mxu0 %v9353
  %v9369 = vpop.f32.mrf.mxu0
  %v9370 = vadd.f32 0.0, %v9369
  %v9371 = vpop.f32.mrf.mxu0
  %v9372 = vadd.f32 0.0, %v9371
  %9373 = vdwg.mxu0
  %v9374 = vadd.f32 %v9331, %v9365
  %v9375 = vadd.f32 %v9332, %v9367
  %v9376 = vadd.f32 %v9333, %v9370
  %v9377 = vadd.f32 %v9334, %v9372
  %v9378 = vadd.f32 %v9374, %v9083
  %v9379 = vadd.f32 %v9375, %v9083
  %v9380 = vadd.f32 %v9376, %v9083
  %v9381 = vadd.f32 %v9377, %v9083
  %v9382 = vmax.f32 %v9378, 0.0
  %v9383 = vmax.f32 %v9379, 0.0
  %v9384 = vmax.f32 %v9380, 0.0
  %v9385 = vmax.f32 %v9381, 0.0
  %v9388 = vperm.slane %v8415, 0
  %v9389 = vperm.slane %v8416, 0
  %v9392 = vmul.f32 %v9382, %v9388
  %v9393 = vmul.f32 %v9383, %v9388
  %v9394 = vmul.f32 %v9384, %v9389
  %v9395 = vmul.f32 %v9385, %v9389
  %v9396 = vsel %vm4360, %v9392, 0.0
  %9397 = vadd.xlane.f32.xlu0 %v9396
  %v9398 = vpop.xlane.xlu0 %9397
  %v9399 = vsel %vm4360, %v9393, 0.0
  %9400 = vadd.xlane.f32.xlu0 %v9399
  %v9401 = vpop.xlane.xlu0 %9400
  %v9402 = vsel %vm4360, %v9394, 0.0
  %9403 = vadd.xlane.f32.xlu0 %v9402
  %v9404 = vpop.xlane.xlu0 %9403
  %v9405 = vsel %vm4360, %v9395, 0.0
  %9406 = vadd.xlane.f32.xlu0 %v9405
  %v9407 = vpop.xlane.xlu0 %9406
  %v9408 = vadd.f32 %v9398, %v9404
  %v9409 = vadd.f32 %v9401, %v9407
  %v9410 = vadd.f32 %v9117, %v9408
  %v9411 = vadd.f32 %v9118, %v9409
  %v9412 = vld [vmem:[#allocation5] sm:$0x1]
  %v9414 = vperm.slane %v9412, 0
  %v9416 = vadd.f32 %v9410, %v9414
  %v9417 = vadd.f32 %v9411, %v9414
  %v9418 = vtanh.pop %v9416
  %v9419 = vtanh.pop %v9417
  %vm9420 = vcmask 7168
  %9421 = vst.msk [vmem:[%s9] sm:$0xff] %vm9420, %v9418
  %9422 = vst.msk [vmem:[%s9 + $0x8] sm:$0xff] %vm9420, %v9419
  // Predicated region
  $region38: #{mlp_central_critic_v2_forward.1} parent=0 // pred_check
    _
  $region39: #{mlp_central_critic_v2_forward.1} parent=0 // pred_check_branch
    %9424 = sbr.rel (0) target = $region41
  $region40: #{mlp_central_critic_v2_forward.1} parent=0 // pred_region
    _
  $region41: #{mlp_central_critic_v2_forward.1} parent=0 // pred_fallthru
    _
  // Predicated region
  $region42: #{mlp_central_critic_v2_forward.1} parent=0 // pred_check
    _
  $region43: #{mlp_central_critic_v2_forward.1} parent=0 // pred_check_branch
    %9426 = sbr.rel (0) target = $region45
  $region44: #{mlp_central_critic_v2_forward.1} parent=0 // pred_region
    _
  $region45: #{mlp_central_critic_v2_forward.1} parent=0 // pred_fallthru
    _

</llo_original>
